<compile_context>
chip_gen: v6e
topology: v6e:2x2x1
jax: 0.10.0
libtpu: 0.0.40
codegen_flags: <defaults>
</compile_context>

<pallas_src>
import jax
import jax.numpy as jnp
from jax.experimental import pallas as pl
from jax.experimental.pallas import tpu as pltpu


COUT_PAD = 128  # lane-dense channel padding for all conv stages / head output


# ----------------------------------------------------------------------------
# Kernels
# ----------------------------------------------------------------------------
def _make_conv_pool_kernel(H, W):
    """Fused Conv2d(5, stride 1, pad 2) + MaxPool2d(2) for one image.

    Kernel refs (batch dim squeezed away by the BlockSpec):
      x_ref : [H+4, W, 5*Cin] bf16  spatially padded activation with the 5
                                    width taps pre-packed on the lane axis and
                                    the width axis ordered [even cols | odd cols]
      w_ref : [5, 5*Cin, 128] bf16  per-kh weight matrices, Cout padded to 128
      b_ref : [1, 128]        f32   bias (padded channels are 0)
      o_ref : [H/2, W/2, 128] bf16  pooled conv output
    """
    H2, W2 = H // 2, W // 2

    def kernel(x_ref, w_ref, b_ref, o_ref):
        x = x_ref[...]                                  # [H+4, W, KC] bf16
        kc = x.shape[-1]

        # 5 per-kh K-packed matmuls accumulated in f32 (single MXU K-pass each).
        # The leading-dim slice is free; the (H, W)->(H*W) merge is a no-op
        # relayout when W is a multiple of 16 (true for conv1/conv2; conv3's
        # W=8 incurs a tiny in-VMEM copy).
        acc = jnp.dot(x[0:H].reshape(H * W, kc), w_ref[0],
                      preferred_element_type=jnp.float32)
        for kh in range(1, 5):
            acc = acc + jnp.dot(x[kh:kh + H].reshape(H * W, kc), w_ref[kh],
                                preferred_element_type=jnp.float32)

        # 2x2 max-pool.  Width pairs live in the two halves of the width axis
        # (even|odd packing done in the XLA prep), so the width pool is a max
        # of two contiguous slabs; the height pool is a max over a leading dim.
        y = acc.reshape(H, W, COUT_PAD)                 # split leading dim: free
        wp = jnp.maximum(y[:, :W2, :], y[:, W2:, :])    # [H, W2, 128]
        z = wp.reshape(H2, 2, W2, COUT_PAD)             # split leading dim: free
        p = jnp.maximum(z[:, 0], z[:, 1])               # [H2, W2, 128]

        # Per-channel bias commutes with max -> add once after pooling (exact).
        o_ref[...] = (p + b_ref[...]).astype(o_ref.dtype)

    return kernel


def _head_kernel(x_ref, w_ref, b_ref, o_ref):
    """Folded classifier head: o = x @ Wc + bc (single lane-dense matmul)."""
    o_ref[...] = jnp.dot(x_ref[...], w_ref[...],
                         preferred_element_type=jnp.float32) + b_ref[...]


# ----------------------------------------------------------------------------
# Wrappers (thin XLA glue: pad + width-window pack, all fused by XLA)
# ----------------------------------------------------------------------------
def conv2d_maxpool(x_nhwc, w_kh, b_row, cin):
    """Conv2d(5,1,2) + MaxPool2d(2). x_nhwc: [B,H,W,C>=cin]; out [B,H/2,W/2,128] bf16."""
    B, H, W, _ = x_nhwc.shape
    H2, W2 = H // 2, W // 2
    KC = 5 * cin

    xr = x_nhwc[..., :cin].astype(jnp.bfloat16)                       # real channels
    xp = jnp.pad(xr, ((0, 0), (2, 2), (2, 2), (0, 0)))                # [B,H+4,W+4,cin]
    # Pack the 5 kw taps onto the lane axis: xc[..., w, kw*cin+ci] = xp[..., w+kw, ci]
    xc = jnp.concatenate([xp[:, :, kw:kw + W, :] for kw in range(5)], axis=-1)
    # Reorder width to [even cols | odd cols] so the 2x2 pool's width partners
    # are contiguous row slabs inside the kernel.
    xc = jnp.concatenate([xc[:, :, 0::2, :], xc[:, :, 1::2, :]], axis=2)  # [B,H+4,W,KC]

    return pl.pallas_call(
        _make_conv_pool_kernel(H, W),
        out_shape=jax.ShapeDtypeStruct((B, H2, W2, COUT_PAD), jnp.bfloat16),
        grid=(B,),
        in_specs=[
            pl.BlockSpec((None, H + 4, W, KC), lambda i: (i, 0, 0, 0)),
            pl.BlockSpec((5, KC, COUT_PAD), lambda i: (0, 0, 0)),
            pl.BlockSpec((1, COUT_PAD), lambda i: (0, 0)),
        ],
        out_specs=pl.BlockSpec((None, H2, W2, COUT_PAD), lambda i: (i, 0, 0, 0)),
        compiler_params=pltpu.CompilerParams(
            dimension_semantics=("parallel",),
            vmem_limit_bytes=32 * 1024 * 1024),
    )(xc, w_kh, b_row)


def mlp_head(x_flat, w_mat, b_mat):
    """Folded Linear(1024,64)->Linear(64,10) as one lane-dense Pallas matmul."""
    B = x_flat.shape[0]
    vmem = pl.BlockSpec(memory_space=pltpu.MemorySpace.VMEM)
    return pl.pallas_call(
        _head_kernel,
        out_shape=jax.ShapeDtypeStruct((B, w_mat.shape[1]), jnp.float32),
        in_specs=[vmem] * 3,
        out_specs=vmem,
    )(x_flat.astype(jnp.bfloat16), w_mat, b_mat)


def prepare_params(p):
    """One-time weight prep: conv weights -> per-kh [(kw,cin) x 128] matmul form
    (Cout zero-padded to 128), biases padded to [1,128]; the two Linear layers
    folded into one [2048,128] matmul whose rows match the channel-padded NHWC
    flatten of conv3's output and whose N is padded 10->128."""
    def conv_w(w_oihw):
        Cout, Cin, K, _ = w_oihw.shape
        w = jnp.transpose(w_oihw, (2, 3, 1, 0)).reshape(K, K * Cin, Cout)  # [kh,(kw,ci),co]
        w = jnp.pad(w, ((0, 0), (0, 0), (0, COUT_PAD - Cout)))
        return w.astype(jnp.bfloat16)

    def conv_b(b):
        return jnp.pad(b, (0, COUT_PAD - b.shape[0])).reshape(1, COUT_PAD).astype(jnp.float32)

    # Fold: (x @ W1^T + b1) @ W2^T + b2 == x @ (W1^T W2^T) + (b1 W2^T + b2)
    wc = p["f1w"].T @ p["f2w"].T                                 # [1024, 10]
    bc = p["f1b"] @ p["f2w"].T + p["f2b"]                        # [10]
    # Rows of wc index the NCHW flatten (c*16 + h*4 + w); remap to the padded
    # NHWC flatten (h*512 + w*128 + c) produced by reshaping conv3's output.
    wc = wc.reshape(64, 4, 4, 10).transpose(1, 2, 0, 3)          # [h, w, c, n]
    wc = jnp.pad(wc, ((0, 0), (0, 0), (0, COUT_PAD - 64), (0, COUT_PAD - 10)))
    wc = wc.reshape(4 * 4 * COUT_PAD, COUT_PAD).astype(jnp.bfloat16)   # [2048, 128]
    bc = jnp.pad(bc, (0, COUT_PAD - 10)).reshape(1, COUT_PAD).astype(jnp.float32)

    return {
        "c1w": conv_w(p["c1w"]), "c1b": conv_b(p["c1b"]),
        "c2w": conv_w(p["c2w"]), "c2b": conv_b(p["c2b"]),
        "c3w": conv_w(p["c3w"]), "c3b": conv_b(p["c3b"]),
        "fw": wc, "fb": bc,
    }


def test_forward(x_nchw, pp):
    """Forward pass of the PyTorch `Test` module. x_nchw: [B,3,32,32] f32."""
    x = jnp.transpose(x_nchw, (0, 2, 3, 1))                  # NCHW -> NHWC
    x = conv2d_maxpool(x, pp["c1w"], pp["c1b"], cin=3)       # [B,16,16,128] bf16
    x = conv2d_maxpool(x, pp["c2w"], pp["c2b"], cin=32)      # [B, 8, 8,128] bf16
    x = conv2d_maxpool(x, pp["c3w"], pp["c3b"], cin=32)      # [B, 4, 4,128] bf16
    x = x.reshape(x.shape[0], -1)                            # free reshape -> [B,2048]
    logits = mlp_head(x, pp["fw"], pp["fb"])                 # [B, 128] f32
    return logits[:, :10]                                    # real logits


# ----------------------------------------------------------------------------
# Pure-JAX reference (for the correctness check)
# ----------------------------------------------------------------------------
def _reference(x, p):
    def conv(x, w, b):
        y = jax.lax.conv_general_dilated(
            x, w, (1, 1), ((2, 2), (2, 2)),
            dimension_numbers=("NCHW", "OIHW", "NCHW"),
            precision=jax.lax.Precision.HIGHEST)
        return y + b[None, :, None, None]

    def pool(x):
        return jax.lax.reduce_window(x, -jnp.inf, jax.lax.max,
                                     (1, 1, 2, 2), (1, 1, 2, 2), "VALID")

    x = pool(conv(x, p["c1w"], p["c1b"]))
    x = pool(conv(x, p["c2w"], p["c2b"]))
    x = pool(conv(x, p["c3w"], p["c3b"]))
    x = x.reshape(x.shape[0], -1)
    x = x @ p["f1w"].T + p["f1b"]
    return x @ p["f2w"].T + p["f2b"]


# ----------------------------------------------------------------------------
# Main
# ----------------------------------------------------------------------------
if __name__ == "__main__":
    key = jax.random.PRNGKey(0)
    ks = jax.random.split(key, 11)

    def rnd(k, shape, scale=0.05):
        return scale * jax.random.normal(k, shape, jnp.float32)

    params = {
        "c1w": rnd(ks[0], (32, 3, 5, 5)),    "c1b": rnd(ks[1], (32,)),
        "c2w": rnd(ks[2], (32, 32, 5, 5)),   "c2b": rnd(ks[3], (32,)),
        "c3w": rnd(ks[4], (64, 32, 5, 5)),   "c3b": rnd(ks[5], (64,)),
        "f1w": rnd(ks[6], (64, 64 * 4 * 4)), "f1b": rnd(ks[7], (64,)),
        "f2w": rnd(ks[8], (10, 64)),         "f2b": rnd(ks[9], (10,)),
    }

    x = jax.random.normal(ks[10], (2, 3, 32, 32), jnp.float32)

    pp = prepare_params(params)          # one-time weight folding / packing
    fwd = jax.jit(test_forward)

    out = jax.block_until_ready(fwd(x, pp))
    assert out.shape == (2, 10), out.shape

    ref = jax.block_until_ready(_reference(x, params))
    # bf16 matmul inputs (f32 accumulation) -> slightly looser tolerance.
    assert jnp.allclose(out, ref, rtol=2e-2, atol=2e-2), (
        "mismatch vs reference", float(jnp.max(jnp.abs(out - ref))))

    print("KERNEL_OK")
</pallas_src>

<mosaic_0001>
module attributes {stable_mosaic.version = 11 : i64} {
  func.func @kernel(%arg0: i32, %arg1: memref<1x36x32x15xbf16, #tpu.memory_space<vmem>>, %arg2: memref<5x15x128xbf16, #tpu.memory_space<vmem>>, %arg3: memref<1x128xf32, #tpu.memory_space<vmem>>, %arg4: memref<1x16x16x128xbf16, #tpu.memory_space<vmem>>) attributes {dimension_semantics = [#tpu.dimension_semantics<parallel>], iteration_bounds = array<i64: 2>, scalar_prefetch = 0 : i64, scratch_operands = 0 : i64, tpu.core_type = #tpu.core_type<tc>, window_params = [{transform_indices = @transform_0, window_bounds = array<i64: 1, 36, 32, 15>}, {pipeline_mode = #tpu.pipeline_mode<synchronous>, transform_indices = @transform_1, window_bounds = array<i64: 5, 15, 128>}, {pipeline_mode = #tpu.pipeline_mode<synchronous>, transform_indices = @transform_2, window_bounds = array<i64: 1, 128>}, {transform_indices = @transform_3, window_bounds = array<i64: 1, 16, 16, 128>}]} {
    %c0 = arith.constant 0 : index
    %c0_0 = arith.constant 0 : index
    %c0_1 = arith.constant 0 : index
    %c0_2 = arith.constant 0 : index
    %0 = vector.load %arg1[%c0, %c0_0, %c0_1, %c0_2] : memref<1x36x32x15xbf16, #tpu.memory_space<vmem>>, vector<1x36x32x15xbf16>
    %1 = vector.shape_cast %0 : vector<1x36x32x15xbf16> to vector<36x32x15xbf16>
    %2 = vector.extract_strided_slice %1 {offsets = [0, 0, 0], sizes = [32, 32, 15], strides = [1, 1, 1]} : vector<36x32x15xbf16> to vector<32x32x15xbf16>
    %3 = vector.shape_cast %2 : vector<32x32x15xbf16> to vector<1024x15xbf16>
    %c0_3 = arith.constant 0 : index
    %c0_4 = arith.constant 0 : index
    %c0_5 = arith.constant 0 : index
    %4 = vector.load %arg2[%c0_3, %c0_4, %c0_5] : memref<5x15x128xbf16, #tpu.memory_space<vmem>>, vector<1x15x128xbf16>
    %5 = vector.shape_cast %4 : vector<1x15x128xbf16> to vector<15x128xbf16>
    %cst = arith.constant dense<0.000000e+00> : vector<1024x128xf32>
    %6 = tpu.matmul %3, %5, %cst {dimension_numbers = #tpu.dot_dimension_numbers<[1], [0], [0], [1], [0, 0, 1, 1], [], []>} : vector<1024x15xbf16>, vector<15x128xbf16>, vector<1024x128xf32> -> vector<1024x128xf32>
    %7 = vector.extract_strided_slice %1 {offsets = [1, 0, 0], sizes = [32, 32, 15], strides = [1, 1, 1]} : vector<36x32x15xbf16> to vector<32x32x15xbf16>
    %8 = vector.shape_cast %7 : vector<32x32x15xbf16> to vector<1024x15xbf16>
    %c1 = arith.constant 1 : index
    %c0_6 = arith.constant 0 : index
    %c0_7 = arith.constant 0 : index
    %9 = vector.load %arg2[%c1, %c0_6, %c0_7] : memref<5x15x128xbf16, #tpu.memory_space<vmem>>, vector<1x15x128xbf16>
    %10 = vector.shape_cast %9 : vector<1x15x128xbf16> to vector<15x128xbf16>
    %cst_8 = arith.constant dense<0.000000e+00> : vector<1024x128xf32>
    %11 = tpu.matmul %8, %10, %cst_8 {dimension_numbers = #tpu.dot_dimension_numbers<[1], [0], [0], [1], [0, 0, 1, 1], [], []>} : vector<1024x15xbf16>, vector<15x128xbf16>, vector<1024x128xf32> -> vector<1024x128xf32>
    %12 = arith.addf %6, %11 : vector<1024x128xf32>
    %13 = vector.extract_strided_slice %1 {offsets = [2, 0, 0], sizes = [32, 32, 15], strides = [1, 1, 1]} : vector<36x32x15xbf16> to vector<32x32x15xbf16>
    %14 = vector.shape_cast %13 : vector<32x32x15xbf16> to vector<1024x15xbf16>
    %c2 = arith.constant 2 : index
    %c0_9 = arith.constant 0 : index
    %c0_10 = arith.constant 0 : index
    %15 = vector.load %arg2[%c2, %c0_9, %c0_10] : memref<5x15x128xbf16, #tpu.memory_space<vmem>>, vector<1x15x128xbf16>
    %16 = vector.shape_cast %15 : vector<1x15x128xbf16> to vector<15x128xbf16>
    %cst_11 = arith.constant dense<0.000000e+00> : vector<1024x128xf32>
    %17 = tpu.matmul %14, %16, %cst_11 {dimension_numbers = #tpu.dot_dimension_numbers<[1], [0], [0], [1], [0, 0, 1, 1], [], []>} : vector<1024x15xbf16>, vector<15x128xbf16>, vector<1024x128xf32> -> vector<1024x128xf32>
    %18 = arith.addf %12, %17 : vector<1024x128xf32>
    %19 = vector.extract_strided_slice %1 {offsets = [3, 0, 0], sizes = [32, 32, 15], strides = [1, 1, 1]} : vector<36x32x15xbf16> to vector<32x32x15xbf16>
    %20 = vector.shape_cast %19 : vector<32x32x15xbf16> to vector<1024x15xbf16>
    %c3 = arith.constant 3 : index
    %c0_12 = arith.constant 0 : index
    %c0_13 = arith.constant 0 : index
    %21 = vector.load %arg2[%c3, %c0_12, %c0_13] : memref<5x15x128xbf16, #tpu.memory_space<vmem>>, vector<1x15x128xbf16>
    %22 = vector.shape_cast %21 : vector<1x15x128xbf16> to vector<15x128xbf16>
    %cst_14 = arith.constant dense<0.000000e+00> : vector<1024x128xf32>
    %23 = tpu.matmul %20, %22, %cst_14 {dimension_numbers = #tpu.dot_dimension_numbers<[1], [0], [0], [1], [0, 0, 1, 1], [], []>} : vector<1024x15xbf16>, vector<15x128xbf16>, vector<1024x128xf32> -> vector<1024x128xf32>
    %24 = arith.addf %18, %23 : vector<1024x128xf32>
    %25 = vector.extract_strided_slice %1 {offsets = [4, 0, 0], sizes = [32, 32, 15], strides = [1, 1, 1]} : vector<36x32x15xbf16> to vector<32x32x15xbf16>
    %26 = vector.shape_cast %25 : vector<32x32x15xbf16> to vector<1024x15xbf16>
    %c4 = arith.constant 4 : index
    %c0_15 = arith.constant 0 : index
    %c0_16 = arith.constant 0 : index
    %27 = vector.load %arg2[%c4, %c0_15, %c0_16] : memref<5x15x128xbf16, #tpu.memory_space<vmem>>, vector<1x15x128xbf16>
    %28 = vector.shape_cast %27 : vector<1x15x128xbf16> to vector<15x128xbf16>
    %cst_17 = arith.constant dense<0.000000e+00> : vector<1024x128xf32>
    %29 = tpu.matmul %26, %28, %cst_17 {dimension_numbers = #tpu.dot_dimension_numbers<[1], [0], [0], [1], [0, 0, 1, 1], [], []>} : vector<1024x15xbf16>, vector<15x128xbf16>, vector<1024x128xf32> -> vector<1024x128xf32>
    %30 = arith.addf %24, %29 : vector<1024x128xf32>
    %31 = vector.shape_cast %30 : vector<1024x128xf32> to vector<32x32x128xf32>
    %32 = vector.extract_strided_slice %31 {offsets = [0, 0, 0], sizes = [32, 16, 128], strides = [1, 1, 1]} : vector<32x32x128xf32> to vector<32x16x128xf32>
    %33 = vector.extract_strided_slice %31 {offsets = [0, 16, 0], sizes = [32, 16, 128], strides = [1, 1, 1]} : vector<32x32x128xf32> to vector<32x16x128xf32>
    %34 = arith.maximumf %32, %33 : vector<32x16x128xf32>
    %35 = vector.shape_cast %34 : vector<32x16x128xf32> to vector<16x2x16x128xf32>
    %36 = vector.extract_strided_slice %35 {offsets = [0, 0, 0, 0], sizes = [16, 1, 16, 128], strides = [1, 1, 1, 1]} : vector<16x2x16x128xf32> to vector<16x1x16x128xf32>
    %37 = vector.shape_cast %36 : vector<16x1x16x128xf32> to vector<16x16x128xf32>
    %38 = vector.extract_strided_slice %35 {offsets = [0, 1, 0, 0], sizes = [16, 1, 16, 128], strides = [1, 1, 1, 1]} : vector<16x2x16x128xf32> to vector<16x1x16x128xf32>
    %39 = vector.shape_cast %38 : vector<16x1x16x128xf32> to vector<16x16x128xf32>
    %40 = arith.maximumf %37, %39 : vector<16x16x128xf32>
    %c0_18 = arith.constant 0 : index
    %c0_19 = arith.constant 0 : index
    %41 = vector.load %arg3[%c0_18, %c0_19] : memref<1x128xf32, #tpu.memory_space<vmem>>, vector<1x128xf32>
    %42 = vector.shape_cast %41 : vector<1x128xf32> to vector<1x1x128xf32>
    %43 = vector.broadcast %42 : vector<1x1x128xf32> to vector<16x16x128xf32>
    %44 = arith.addf %40, %43 : vector<16x16x128xf32>
    %45 = arith.truncf %44 : vector<16x16x128xf32> to vector<16x16x128xbf16>
    %c0_20 = arith.constant 0 : index
    %c0_21 = arith.constant 0 : index
    %c0_22 = arith.constant 0 : index
    %c0_23 = arith.constant 0 : index
    %46 = vector.load %arg4[%c0_20, %c0_21, %c0_22, %c0_23] : memref<1x16x16x128xbf16, #tpu.memory_space<vmem>>, vector<1x16x16x128xbf16>
    %47 = vector.shape_cast %46 : vector<1x16x16x128xbf16> to vector<16x16x128xbf16>
    %48 = vector.shape_cast %45 : vector<16x16x128xbf16> to vector<1x16x16x128xbf16>
    tpu.vector_store %arg4[%c0_20, %c0_21, %c0_22, %c0_23], %48 {strides = array<i32>} : memref<1x16x16x128xbf16, #tpu.memory_space<vmem>>, vector<1x16x16x128xbf16>,
    return
  }
  func.func @transform_0(%arg0: i32) -> (i32, i32, i32, i32) {
    %c0_i32 = arith.constant 0 : i32
    %c0_i32_0 = arith.constant 0 : i32
    %c0_i32_1 = arith.constant 0 : i32
    %c0_i32_2 = arith.constant 0 : i32
    return %arg0, %c0_i32, %c0_i32_0, %c0_i32_1 : i32, i32, i32, i32
  }
  func.func @transform_1(%arg0: i32) -> (i32, i32, i32) {
    %c0_i32 = arith.constant 0 : i32
    %c0_i32_0 = arith.constant 0 : i32
    %c0_i32_1 = arith.constant 0 : i32
    %c0_i32_2 = arith.constant 0 : i32
    return %c0_i32, %c0_i32_0, %c0_i32_1 : i32, i32, i32
  }
  func.func @transform_2(%arg0: i32) -> (i32, i32) {
    %c0_i32 = arith.constant 0 : i32
    %c0_i32_0 = arith.constant 0 : i32
    %c0_i32_1 = arith.constant 0 : i32
    return %c0_i32, %c0_i32_0 : i32, i32
  }
  func.func @transform_3(%arg0: i32) -> (i32, i32, i32, i32) {
    %c0_i32 = arith.constant 0 : i32
    %c0_i32_0 = arith.constant 0 : i32
    %c0_i32_1 = arith.constant 0 : i32
    %c0_i32_2 = arith.constant 0 : i32
    return %arg0, %c0_i32, %c0_i32_0, %c0_i32_1 : i32, i32, i32, i32
  }
}

module attributes {stable_mosaic.version = 11 : i64} {
  func.func @kernel(%arg0: i32, %arg1: memref<1x20x16x160xbf16, #tpu.memory_space<vmem>>, %arg2: memref<5x160x128xbf16, #tpu.memory_space<vmem>>, %arg3: memref<1x128xf32, #tpu.memory_space<vmem>>, %arg4: memref<1x8x8x128xbf16, #tpu.memory_space<vmem>>) attributes {dimension_semantics = [#tpu.dimension_semantics<parallel>], iteration_bounds = array<i64: 2>, scalar_prefetch = 0 : i64, scratch_operands = 0 : i64, tpu.core_type = #tpu.core_type<tc>, window_params = [{transform_indices = @transform_0, window_bounds = array<i64: 1, 20, 16, 160>}, {pipeline_mode = #tpu.pipeline_mode<synchronous>, transform_indices = @transform_1, window_bounds = array<i64: 5, 160, 128>}, {pipeline_mode = #tpu.pipeline_mode<synchronous>, transform_indices = @transform_2, window_bounds = array<i64: 1, 128>}, {transform_indices = @transform_3, window_bounds = array<i64: 1, 8, 8, 128>}]} {
    %c0 = arith.constant 0 : index
    %c0_0 = arith.constant 0 : index
    %c0_1 = arith.constant 0 : index
    %c0_2 = arith.constant 0 : index
    %0 = vector.load %arg1[%c0, %c0_0, %c0_1, %c0_2] : memref<1x20x16x160xbf16, #tpu.memory_space<vmem>>, vector<1x20x16x160xbf16>
    %1 = vector.shape_cast %0 : vector<1x20x16x160xbf16> to vector<20x16x160xbf16>
    %2 = vector.extract_strided_slice %1 {offsets = [0, 0, 0], sizes = [16, 16, 160], strides = [1, 1, 1]} : vector<20x16x160xbf16> to vector<16x16x160xbf16>
    %3 = vector.shape_cast %2 : vector<16x16x160xbf16> to vector<256x160xbf16>
    %c0_3 = arith.constant 0 : index
    %c0_4 = arith.constant 0 : index
    %c0_5 = arith.constant 0 : index
    %4 = vector.load %arg2[%c0_3, %c0_4, %c0_5] : memref<5x160x128xbf16, #tpu.memory_space<vmem>>, vector<1x160x128xbf16>
    %5 = vector.shape_cast %4 : vector<1x160x128xbf16> to vector<160x128xbf16>
    %cst = arith.constant dense<0.000000e+00> : vector<256x128xf32>
    %6 = tpu.matmul %3, %5, %cst {dimension_numbers = #tpu.dot_dimension_numbers<[1], [0], [0], [1], [0, 0, 1, 1], [], []>} : vector<256x160xbf16>, vector<160x128xbf16>, vector<256x128xf32> -> vector<256x128xf32>
    %7 = vector.extract_strided_slice %1 {offsets = [1, 0, 0], sizes = [16, 16, 160], strides = [1, 1, 1]} : vector<20x16x160xbf16> to vector<16x16x160xbf16>
    %8 = vector.shape_cast %7 : vector<16x16x160xbf16> to vector<256x160xbf16>
    %c1 = arith.constant 1 : index
    %c0_6 = arith.constant 0 : index
    %c0_7 = arith.constant 0 : index
    %9 = vector.load %arg2[%c1, %c0_6, %c0_7] : memref<5x160x128xbf16, #tpu.memory_space<vmem>>, vector<1x160x128xbf16>
    %10 = vector.shape_cast %9 : vector<1x160x128xbf16> to vector<160x128xbf16>
    %cst_8 = arith.constant dense<0.000000e+00> : vector<256x128xf32>
    %11 = tpu.matmul %8, %10, %cst_8 {dimension_numbers = #tpu.dot_dimension_numbers<[1], [0], [0], [1], [0, 0, 1, 1], [], []>} : vector<256x160xbf16>, vector<160x128xbf16>, vector<256x128xf32> -> vector<256x128xf32>
    %12 = arith.addf %6, %11 : vector<256x128xf32>
    %13 = vector.extract_strided_slice %1 {offsets = [2, 0, 0], sizes = [16, 16, 160], strides = [1, 1, 1]} : vector<20x16x160xbf16> to vector<16x16x160xbf16>
    %14 = vector.shape_cast %13 : vector<16x16x160xbf16> to vector<256x160xbf16>
    %c2 = arith.constant 2 : index
    %c0_9 = arith.constant 0 : index
    %c0_10 = arith.constant 0 : index
    %15 = vector.load %arg2[%c2, %c0_9, %c0_10] : memref<5x160x128xbf16, #tpu.memory_space<vmem>>, vector<1x160x128xbf16>
    %16 = vector.shape_cast %15 : vector<1x160x128xbf16> to vector<160x128xbf16>
    %cst_11 = arith.constant dense<0.000000e+00> : vector<256x128xf32>
    %17 = tpu.matmul %14, %16, %cst_11 {dimension_numbers = #tpu.dot_dimension_numbers<[1], [0], [0], [1], [0, 0, 1, 1], [], []>} : vector<256x160xbf16>, vector<160x128xbf16>, vector<256x128xf32> -> vector<256x128xf32>
    %18 = arith.addf %12, %17 : vector<256x128xf32>
    %19 = vector.extract_strided_slice %1 {offsets = [3, 0, 0], sizes = [16, 16, 160], strides = [1, 1, 1]} : vector<20x16x160xbf16> to vector<16x16x160xbf16>
    %20 = vector.shape_cast %19 : vector<16x16x160xbf16> to vector<256x160xbf16>
    %c3 = arith.constant 3 : index
    %c0_12 = arith.constant 0 : index
    %c0_13 = arith.constant 0 : index
    %21 = vector.load %arg2[%c3, %c0_12, %c0_13] : memref<5x160x128xbf16, #tpu.memory_space<vmem>>, vector<1x160x128xbf16>
    %22 = vector.shape_cast %21 : vector<1x160x128xbf16> to vector<160x128xbf16>
    %cst_14 = arith.constant dense<0.000000e+00> : vector<256x128xf32>
    %23 = tpu.matmul %20, %22, %cst_14 {dimension_numbers = #tpu.dot_dimension_numbers<[1], [0], [0], [1], [0, 0, 1, 1], [], []>} : vector<256x160xbf16>, vector<160x128xbf16>, vector<256x128xf32> -> vector<256x128xf32>
    %24 = arith.addf %18, %23 : vector<256x128xf32>
    %25 = vector.extract_strided_slice %1 {offsets = [4, 0, 0], sizes = [16, 16, 160], strides = [1, 1, 1]} : vector<20x16x160xbf16> to vector<16x16x160xbf16>
    %26 = vector.shape_cast %25 : vector<16x16x160xbf16> to vector<256x160xbf16>
    %c4 = arith.constant 4 : index
    %c0_15 = arith.constant 0 : index
    %c0_16 = arith.constant 0 : index
    %27 = vector.load %arg2[%c4, %c0_15, %c0_16] : memref<5x160x128xbf16, #tpu.memory_space<vmem>>, vector<1x160x128xbf16>
    %28 = vector.shape_cast %27 : vector<1x160x128xbf16> to vector<160x128xbf16>
    %cst_17 = arith.constant dense<0.000000e+00> : vector<256x128xf32>
    %29 = tpu.matmul %26, %28, %cst_17 {dimension_numbers = #tpu.dot_dimension_numbers<[1], [0], [0], [1], [0, 0, 1, 1], [], []>} : vector<256x160xbf16>, vector<160x128xbf16>, vector<256x128xf32> -> vector<256x128xf32>
    %30 = arith.addf %24, %29 : vector<256x128xf32>
    %31 = vector.shape_cast %30 : vector<256x128xf32> to vector<16x16x128xf32>
    %32 = vector.extract_strided_slice %31 {offsets = [0, 0, 0], sizes = [16, 8, 128], strides = [1, 1, 1]} : vector<16x16x128xf32> to vector<16x8x128xf32>
    %33 = vector.extract_strided_slice %31 {offsets = [0, 8, 0], sizes = [16, 8, 128], strides = [1, 1, 1]} : vector<16x16x128xf32> to vector<16x8x128xf32>
    %34 = arith.maximumf %32, %33 : vector<16x8x128xf32>
    %35 = vector.shape_cast %34 : vector<16x8x128xf32> to vector<8x2x8x128xf32>
    %36 = vector.extract_strided_slice %35 {offsets = [0, 0, 0, 0], sizes = [8, 1, 8, 128], strides = [1, 1, 1, 1]} : vector<8x2x8x128xf32> to vector<8x1x8x128xf32>
    %37 = vector.shape_cast %36 : vector<8x1x8x128xf32> to vector<8x8x128xf32>
    %38 = vector.extract_strided_slice %35 {offsets = [0, 1, 0, 0], sizes = [8, 1, 8, 128], strides = [1, 1, 1, 1]} : vector<8x2x8x128xf32> to vector<8x1x8x128xf32>
    %39 = vector.shape_cast %38 : vector<8x1x8x128xf32> to vector<8x8x128xf32>
    %40 = arith.maximumf %37, %39 : vector<8x8x128xf32>
    %c0_18 = arith.constant 0 : index
    %c0_19 = arith.constant 0 : index
    %41 = vector.load %arg3[%c0_18, %c0_19] : memref<1x128xf32, #tpu.memory_space<vmem>>, vector<1x128xf32>
    %42 = vector.shape_cast %41 : vector<1x128xf32> to vector<1x1x128xf32>
    %43 = vector.broadcast %42 : vector<1x1x128xf32> to vector<8x8x128xf32>
    %44 = arith.addf %40, %43 : vector<8x8x128xf32>
    %45 = arith.truncf %44 : vector<8x8x128xf32> to vector<8x8x128xbf16>
    %c0_20 = arith.constant 0 : index
    %c0_21 = arith.constant 0 : index
    %c0_22 = arith.constant 0 : index
    %c0_23 = arith.constant 0 : index
    %46 = vector.load %arg4[%c0_20, %c0_21, %c0_22, %c0_23] : memref<1x8x8x128xbf16, #tpu.memory_space<vmem>>, vector<1x8x8x128xbf16>
    %47 = vector.shape_cast %46 : vector<1x8x8x128xbf16> to vector<8x8x128xbf16>
    %48 = vector.shape_cast %45 : vector<8x8x128xbf16> to vector<1x8x8x128xbf16>
    tpu.vector_store %arg4[%c0_20, %c0_21, %c0_22, %c0_23], %48 {strides = array<i32>} : memref<1x8x8x128xbf16, #tpu.memory_space<vmem>>, vector<1x8x8x128xbf16>,
    return
  }
  func.func @transform_0(%arg0: i32) -> (i32, i32, i32, i32) {
    %c0_i32 = arith.constant 0 : i32
    %c0_i32_0 = arith.constant 0 : i32
    %c0_i32_1 = arith.constant 0 : i32
    %c0_i32_2 = arith.constant 0 : i32
    return %arg0, %c0_i32, %c0_i32_0, %c0_i32_1 : i32, i32, i32, i32
  }
  func.func @transform_1(%arg0: i32) -> (i32, i32, i32) {
    %c0_i32 = arith.constant 0 : i32
    %c0_i32_0 = arith.constant 0 : i32
    %c0_i32_1 = arith.constant 0 : i32
    %c0_i32_2 = arith.constant 0 : i32
    return %c0_i32, %c0_i32_0, %c0_i32_1 : i32, i32, i32
  }
  func.func @transform_2(%arg0: i32) -> (i32, i32) {
    %c0_i32 = arith.constant 0 : i32
    %c0_i32_0 = arith.constant 0 : i32
    %c0_i32_1 = arith.constant 0 : i32
    return %c0_i32, %c0_i32_0 : i32, i32
  }
  func.func @transform_3(%arg0: i32) -> (i32, i32, i32, i32) {
    %c0_i32 = arith.constant 0 : i32
    %c0_i32_0 = arith.constant 0 : i32
    %c0_i32_1 = arith.constant 0 : i32
    %c0_i32_2 = arith.constant 0 : i32
    return %arg0, %c0_i32, %c0_i32_0, %c0_i32_1 : i32, i32, i32, i32
  }
}

module attributes {stable_mosaic.version = 11 : i64} {
  func.func @kernel(%arg0: i32, %arg1: memref<1x12x8x160xbf16, #tpu.memory_space<vmem>>, %arg2: memref<5x160x128xbf16, #tpu.memory_space<vmem>>, %arg3: memref<1x128xf32, #tpu.memory_space<vmem>>, %arg4: memref<1x4x4x128xbf16, #tpu.memory_space<vmem>>) attributes {dimension_semantics = [#tpu.dimension_semantics<parallel>], iteration_bounds = array<i64: 2>, scalar_prefetch = 0 : i64, scratch_operands = 0 : i64, tpu.core_type = #tpu.core_type<tc>, window_params = [{transform_indices = @transform_0, window_bounds = array<i64: 1, 12, 8, 160>}, {pipeline_mode = #tpu.pipeline_mode<synchronous>, transform_indices = @transform_1, window_bounds = array<i64: 5, 160, 128>}, {pipeline_mode = #tpu.pipeline_mode<synchronous>, transform_indices = @transform_2, window_bounds = array<i64: 1, 128>}, {transform_indices = @transform_3, window_bounds = array<i64: 1, 4, 4, 128>}]} {
    %c0 = arith.constant 0 : index
    %c0_0 = arith.constant 0 : index
    %c0_1 = arith.constant 0 : index
    %c0_2 = arith.constant 0 : index
    %0 = vector.load %arg1[%c0, %c0_0, %c0_1, %c0_2] : memref<1x12x8x160xbf16, #tpu.memory_space<vmem>>, vector<1x12x8x160xbf16>
    %1 = vector.shape_cast %0 : vector<1x12x8x160xbf16> to vector<12x8x160xbf16>
    %2 = vector.extract_strided_slice %1 {offsets = [0, 0, 0], sizes = [8, 8, 160], strides = [1, 1, 1]} : vector<12x8x160xbf16> to vector<8x8x160xbf16>
    %3 = vector.shape_cast %2 : vector<8x8x160xbf16> to vector<64x160xbf16>
    %c0_3 = arith.constant 0 : index
    %c0_4 = arith.constant 0 : index
    %c0_5 = arith.constant 0 : index
    %4 = vector.load %arg2[%c0_3, %c0_4, %c0_5] : memref<5x160x128xbf16, #tpu.memory_space<vmem>>, vector<1x160x128xbf16>
    %5 = vector.shape_cast %4 : vector<1x160x128xbf16> to vector<160x128xbf16>
    %cst = arith.constant dense<0.000000e+00> : vector<64x128xf32>
    %6 = tpu.matmul %3, %5, %cst {dimension_numbers = #tpu.dot_dimension_numbers<[1], [0], [0], [1], [0, 0, 1, 1], [], []>} : vector<64x160xbf16>, vector<160x128xbf16>, vector<64x128xf32> -> vector<64x128xf32>
    %7 = vector.extract_strided_slice %1 {offsets = [1, 0, 0], sizes = [8, 8, 160], strides = [1, 1, 1]} : vector<12x8x160xbf16> to vector<8x8x160xbf16>
    %8 = vector.shape_cast %7 : vector<8x8x160xbf16> to vector<64x160xbf16>
    %c1 = arith.constant 1 : index
    %c0_6 = arith.constant 0 : index
    %c0_7 = arith.constant 0 : index
    %9 = vector.load %arg2[%c1, %c0_6, %c0_7] : memref<5x160x128xbf16, #tpu.memory_space<vmem>>, vector<1x160x128xbf16>
    %10 = vector.shape_cast %9 : vector<1x160x128xbf16> to vector<160x128xbf16>
    %cst_8 = arith.constant dense<0.000000e+00> : vector<64x128xf32>
    %11 = tpu.matmul %8, %10, %cst_8 {dimension_numbers = #tpu.dot_dimension_numbers<[1], [0], [0], [1], [0, 0, 1, 1], [], []>} : vector<64x160xbf16>, vector<160x128xbf16>, vector<64x128xf32> -> vector<64x128xf32>
    %12 = arith.addf %6, %11 : vector<64x128xf32>
    %13 = vector.extract_strided_slice %1 {offsets = [2, 0, 0], sizes = [8, 8, 160], strides = [1, 1, 1]} : vector<12x8x160xbf16> to vector<8x8x160xbf16>
    %14 = vector.shape_cast %13 : vector<8x8x160xbf16> to vector<64x160xbf16>
    %c2 = arith.constant 2 : index
    %c0_9 = arith.constant 0 : index
    %c0_10 = arith.constant 0 : index
    %15 = vector.load %arg2[%c2, %c0_9, %c0_10] : memref<5x160x128xbf16, #tpu.memory_space<vmem>>, vector<1x160x128xbf16>
    %16 = vector.shape_cast %15 : vector<1x160x128xbf16> to vector<160x128xbf16>
    %cst_11 = arith.constant dense<0.000000e+00> : vector<64x128xf32>
    %17 = tpu.matmul %14, %16, %cst_11 {dimension_numbers = #tpu.dot_dimension_numbers<[1], [0], [0], [1], [0, 0, 1, 1], [], []>} : vector<64x160xbf16>, vector<160x128xbf16>, vector<64x128xf32> -> vector<64x128xf32>
    %18 = arith.addf %12, %17 : vector<64x128xf32>
    %19 = vector.extract_strided_slice %1 {offsets = [3, 0, 0], sizes = [8, 8, 160], strides = [1, 1, 1]} : vector<12x8x160xbf16> to vector<8x8x160xbf16>
    %20 = vector.shape_cast %19 : vector<8x8x160xbf16> to vector<64x160xbf16>
    %c3 = arith.constant 3 : index
    %c0_12 = arith.constant 0 : index
    %c0_13 = arith.constant 0 : index
    %21 = vector.load %arg2[%c3, %c0_12, %c0_13] : memref<5x160x128xbf16, #tpu.memory_space<vmem>>, vector<1x160x128xbf16>
    %22 = vector.shape_cast %21 : vector<1x160x128xbf16> to vector<160x128xbf16>
    %cst_14 = arith.constant dense<0.000000e+00> : vector<64x128xf32>
    %23 = tpu.matmul %20, %22, %cst_14 {dimension_numbers = #tpu.dot_dimension_numbers<[1], [0], [0], [1], [0, 0, 1, 1], [], []>} : vector<64x160xbf16>, vector<160x128xbf16>, vector<64x128xf32> -> vector<64x128xf32>
    %24 = arith.addf %18, %23 : vector<64x128xf32>
    %25 = vector.extract_strided_slice %1 {offsets = [4, 0, 0], sizes = [8, 8, 160], strides = [1, 1, 1]} : vector<12x8x160xbf16> to vector<8x8x160xbf16>
    %26 = vector.shape_cast %25 : vector<8x8x160xbf16> to vector<64x160xbf16>
    %c4 = arith.constant 4 : index
    %c0_15 = arith.constant 0 : index
    %c0_16 = arith.constant 0 : index
    %27 = vector.load %arg2[%c4, %c0_15, %c0_16] : memref<5x160x128xbf16, #tpu.memory_space<vmem>>, vector<1x160x128xbf16>
    %28 = vector.shape_cast %27 : vector<1x160x128xbf16> to vector<160x128xbf16>
    %cst_17 = arith.constant dense<0.000000e+00> : vector<64x128xf32>
    %29 = tpu.matmul %26, %28, %cst_17 {dimension_numbers = #tpu.dot_dimension_numbers<[1], [0], [0], [1], [0, 0, 1, 1], [], []>} : vector<64x160xbf16>, vector<160x128xbf16>, vector<64x128xf32> -> vector<64x128xf32>
    %30 = arith.addf %24, %29 : vector<64x128xf32>
    %31 = vector.shape_cast %30 : vector<64x128xf32> to vector<8x8x128xf32>
    %32 = vector.extract_strided_slice %31 {offsets = [0, 0, 0], sizes = [8, 4, 128], strides = [1, 1, 1]} : vector<8x8x128xf32> to vector<8x4x128xf32>
    %33 = vector.extract_strided_slice %31 {offsets = [0, 4, 0], sizes = [8, 4, 128], strides = [1, 1, 1]} : vector<8x8x128xf32> to vector<8x4x128xf32>
    %34 = arith.maximumf %32, %33 : vector<8x4x128xf32>
    %35 = vector.shape_cast %34 : vector<8x4x128xf32> to vector<4x2x4x128xf32>
    %36 = vector.extract_strided_slice %35 {offsets = [0, 0, 0, 0], sizes = [4, 1, 4, 128], strides = [1, 1, 1, 1]} : vector<4x2x4x128xf32> to vector<4x1x4x128xf32>
    %37 = vector.shape_cast %36 : vector<4x1x4x128xf32> to vector<4x4x128xf32>
    %38 = vector.extract_strided_slice %35 {offsets = [0, 1, 0, 0], sizes = [4, 1, 4, 128], strides = [1, 1, 1, 1]} : vector<4x2x4x128xf32> to vector<4x1x4x128xf32>
    %39 = vector.shape_cast %38 : vector<4x1x4x128xf32> to vector<4x4x128xf32>
    %40 = arith.maximumf %37, %39 : vector<4x4x128xf32>
    %c0_18 = arith.constant 0 : index
    %c0_19 = arith.constant 0 : index
    %41 = vector.load %arg3[%c0_18, %c0_19] : memref<1x128xf32, #tpu.memory_space<vmem>>, vector<1x128xf32>
    %42 = vector.shape_cast %41 : vector<1x128xf32> to vector<1x1x128xf32>
    %43 = vector.broadcast %42 : vector<1x1x128xf32> to vector<4x4x128xf32>
    %44 = arith.addf %40, %43 : vector<4x4x128xf32>
    %45 = arith.truncf %44 : vector<4x4x128xf32> to vector<4x4x128xbf16>
    %c0_20 = arith.constant 0 : index
    %c0_21 = arith.constant 0 : index
    %c0_22 = arith.constant 0 : index
    %c0_23 = arith.constant 0 : index
    %46 = vector.load %arg4[%c0_20, %c0_21, %c0_22, %c0_23] : memref<1x4x4x128xbf16, #tpu.memory_space<vmem>>, vector<1x4x4x128xbf16>
    %47 = vector.shape_cast %46 : vector<1x4x4x128xbf16> to vector<4x4x128xbf16>
    %48 = vector.shape_cast %45 : vector<4x4x128xbf16> to vector<1x4x4x128xbf16>
    tpu.vector_store %arg4[%c0_20, %c0_21, %c0_22, %c0_23], %48 {strides = array<i32>} : memref<1x4x4x128xbf16, #tpu.memory_space<vmem>>, vector<1x4x4x128xbf16>,
    return
  }
  func.func @transform_0(%arg0: i32) -> (i32, i32, i32, i32) {
    %c0_i32 = arith.constant 0 : i32
    %c0_i32_0 = arith.constant 0 : i32
    %c0_i32_1 = arith.constant 0 : i32
    %c0_i32_2 = arith.constant 0 : i32
    return %arg0, %c0_i32, %c0_i32_0, %c0_i32_1 : i32, i32, i32, i32
  }
  func.func @transform_1(%arg0: i32) -> (i32, i32, i32) {
    %c0_i32 = arith.constant 0 : i32
    %c0_i32_0 = arith.constant 0 : i32
    %c0_i32_1 = arith.constant 0 : i32
    %c0_i32_2 = arith.constant 0 : i32
    return %c0_i32, %c0_i32_0, %c0_i32_1 : i32, i32, i32
  }
  func.func @transform_2(%arg0: i32) -> (i32, i32) {
    %c0_i32 = arith.constant 0 : i32
    %c0_i32_0 = arith.constant 0 : i32
    %c0_i32_1 = arith.constant 0 : i32
    return %c0_i32, %c0_i32_0 : i32, i32
  }
  func.func @transform_3(%arg0: i32) -> (i32, i32, i32, i32) {
    %c0_i32 = arith.constant 0 : i32
    %c0_i32_0 = arith.constant 0 : i32
    %c0_i32_1 = arith.constant 0 : i32
    %c0_i32_2 = arith.constant 0 : i32
    return %arg0, %c0_i32, %c0_i32_0, %c0_i32_1 : i32, i32, i32, i32
  }
}

module attributes {stable_mosaic.version = 11 : i64} {
  func.func @_head_kernel(%arg0: memref<2x2048xbf16, #tpu.memory_space<vmem>>, %arg1: memref<2048x128xbf16, #tpu.memory_space<vmem>>, %arg2: memref<1x128xf32, #tpu.memory_space<vmem>>, %arg3: memref<2x128xf32, #tpu.memory_space<vmem>>) attributes {dimension_semantics = [], scalar_prefetch = 0 : i64, scratch_operands = 0 : i64, tpu.core_type = #tpu.core_type<tc>} {
    %c0 = arith.constant 0 : index
    %c0_0 = arith.constant 0 : index
    %0 = vector.load %arg0[%c0, %c0_0] : memref<2x2048xbf16, #tpu.memory_space<vmem>>, vector<2x2048xbf16>
    %c0_1 = arith.constant 0 : index
    %c0_2 = arith.constant 0 : index
    %1 = vector.load %arg1[%c0_1, %c0_2] : memref<2048x128xbf16, #tpu.memory_space<vmem>>, vector<2048x128xbf16>
    %cst = arith.constant dense<0.000000e+00> : vector<2x128xf32>
    %2 = tpu.matmul %0, %1, %cst {dimension_numbers = #tpu.dot_dimension_numbers<[1], [0], [0], [1], [0, 0, 1, 1], [], []>} : vector<2x2048xbf16>, vector<2048x128xbf16>, vector<2x128xf32> -> vector<2x128xf32>
    %c0_3 = arith.constant 0 : index
    %c0_4 = arith.constant 0 : index
    %3 = vector.load %arg2[%c0_3, %c0_4] : memref<1x128xf32, #tpu.memory_space<vmem>>, vector<1x128xf32>
    %4 = vector.broadcast %3 : vector<1x128xf32> to vector<2x128xf32>
    %5 = arith.addf %2, %4 : vector<2x128xf32>
    %c0_5 = arith.constant 0 : index
    %c0_6 = arith.constant 0 : index
    %6 = vector.load %arg3[%c0_5, %c0_6] : memref<2x128xf32, #tpu.memory_space<vmem>>, vector<2x128xf32>
    tpu.vector_store %arg3[%c0_5, %c0_6], %5 {strides = array<i32>} : memref<2x128xf32, #tpu.memory_space<vmem>>, vector<2x128xf32>,
    return
  }
}

</mosaic_0001>

<llo_original>
// kernel: test_forward.4
$region0: #{test_forward.4}
  #allocation0 [shape = 'u32[]', space=smem, size = 0x4, offset = 0x4, fixed_abs, tag = 'smem constant byte address 0x4 - core index']
  #allocation1 [shape = 'u32[144,128]{1,0:T(1,128)}', space=vmem, size = 0x12000, scoped, tag = 'internal scratch']
  %s0 = inlined_call_operand.vmem [shape: bf16[2,36,32,15], index: 0, kind: input, shape index: {}]
  %s1 = inlined_call_operand.vmem [shape: bf16[5,15,128], index: 1, kind: input, shape index: {}]
  %s2 = inlined_call_operand.vmem [shape: f32[1,128], index: 2, kind: input, shape index: {}]
  %s3 = inlined_call_operand.vmem [shape: bf16[2,16,16,128], index: 3, kind: output, shape index: {}]
  %s4 = sld [smem:[#allocation0]]
  $region45: #{test_forward.4} parent=0
    _
  %s6 = ssub.s32 1, %s4
  %s7 = scalar_select 0, %s6, %s4
  loop: start=0, step=1, limit=4
  $region2: #{test_forward.4} parent=0 // loop_pre_header
    _
  $region3: #{test_forward.4} parent=0 // loop_header
    %s9 = sphi 0, %s13
    %p10 = scmp.ge.s32.totalorder %s9, 4
    %s19 = sphi 0, %s21
    %s22 = sphi 0, %s19
    %s23 = sphi 0, %s22
    %s39 = sphi 0, %s23
    %s43 = sphi 0, %s43
    %s45 = sphi 0, %s43
    %s46 = sphi 0, %s45
    %s60 = sphi 0, %s46
    %s64 = sphi 0, %s64
    %s66 = sphi 0, %s64
    %s67 = sphi 0, %s66
    %s81 = sphi 0, %s67
    %s87 = sphi 0, %s89
    %s90 = sphi 0, %s87
    %s91 = sphi 0, %s90
    %s107 = sphi 0, %s91
  $region4: #{test_forward.4} parent=0 // loop_header_branch
    %12 = sbr.rel (%p10) target = $region8
  $region5: #{test_forward.4} parent=0 // loop_body
    %s14 = ssub.s32 %s9, 1
    %s15 = ssub.s32 %s9, 2
    %s16 = sadd.s32 %s9, 1
    %s17 = ssub.s32 %s9, %s16
    %p18 = scmp.eq.s32.totalorder %s17, 0
    %s20 = sadd.s32 %s19, 1
    %s21 = scalar_select %p18, %s19, %s20
    %p24 = pneg %p18
    %p25 = scmp.eq.s32.totalorder %s9, 1
    %p26 = por %p24, %p25
    %p27 = scmp.ne.s32.totalorder %s19, %s22
    %p28 = scmp.eq.s32.totalorder %s9, 0
    %p29 = por %p27, %p28
    %p30 = scmp.ne.s32.totalorder %s19, %s22
    %p31 = scmp.eq.s32.totalorder %s14, 1
    %p32 = por %p30, %p31
    %p33 = scmp.ne.s32.totalorder %s22, %s23
    %p34 = scmp.eq.s32.totalorder %s14, 0
    %p35 = por %p33, %p34
    %p36 = scmp.ne.s32.totalorder %s22, %s23
    %p37 = scmp.eq.s32.totalorder %s15, 1
    %p38 = por %p36, %p37
    %p40 = scmp.ne.s32.totalorder %s23, %s39
    %p41 = scmp.eq.s32.totalorder %s15, 0
    %p42 = por %p40, %p41
    %s44 = sadd.s32 %s43, 1
    %p47 = scmp.eq.s32.totalorder %s9, 1
    %p48 = scmp.ne.s32.totalorder %s43, %s45
    %p49 = scmp.eq.s32.totalorder %s9, 0
    %p50 = por %p48, %p49
    %p51 = scmp.ne.s32.totalorder %s43, %s45
    %p52 = scmp.eq.s32.totalorder %s14, 1
    %p53 = por %p51, %p52
    %p54 = scmp.ne.s32.totalorder %s45, %s46
    %p55 = scmp.eq.s32.totalorder %s14, 0
    %p56 = por %p54, %p55
    %p57 = scmp.ne.s32.totalorder %s45, %s46
    %p58 = scmp.eq.s32.totalorder %s15, 1
    %p59 = por %p57, %p58
    %p61 = scmp.ne.s32.totalorder %s46, %s60
    %p62 = scmp.eq.s32.totalorder %s15, 0
    %p63 = por %p61, %p62
    %s65 = sadd.s32 %s64, 1
    %p68 = scmp.eq.s32.totalorder %s9, 1
    %p69 = scmp.ne.s32.totalorder %s64, %s66
    %p70 = scmp.eq.s32.totalorder %s9, 0
    %p71 = por %p69, %p70
    %p72 = scmp.ne.s32.totalorder %s64, %s66
    %p73 = scmp.eq.s32.totalorder %s14, 1
    %p74 = por %p72, %p73
    %p75 = scmp.ne.s32.totalorder %s66, %s67
    %p76 = scmp.eq.s32.totalorder %s14, 0
    %p77 = por %p75, %p76
    %p78 = scmp.ne.s32.totalorder %s66, %s67
    %p79 = scmp.eq.s32.totalorder %s15, 1
    %p80 = por %p78, %p79
    %p82 = scmp.ne.s32.totalorder %s67, %s81
    %p83 = scmp.eq.s32.totalorder %s15, 0
    %p84 = por %p82, %p83
    %s85 = ssub.s32 %s9, %s16
    %p86 = scmp.eq.s32.totalorder %s85, 0
    %s88 = sadd.s32 %s87, 1
    %s89 = scalar_select %p86, %s87, %s88
    %p92 = pneg %p86
    %p93 = scmp.eq.s32.totalorder %s9, 1
    %p94 = por %p92, %p93
    %p95 = scmp.ne.s32.totalorder %s87, %s90
    %p96 = scmp.eq.s32.totalorder %s9, 0
    %p97 = por %p95, %p96
    %p98 = scmp.ne.s32.totalorder %s87, %s90
    %p99 = scmp.eq.s32.totalorder %s14, 1
    %p100 = por %p98, %p99
    %p101 = scmp.ne.s32.totalorder %s90, %s91
    %p102 = scmp.eq.s32.totalorder %s14, 0
    %p103 = por %p101, %p102
    %p104 = scmp.ne.s32.totalorder %s90, %s91
    %p105 = scmp.eq.s32.totalorder %s15, 1
    %p106 = por %p104, %p105
    %p108 = scmp.ne.s32.totalorder %s91, %s107
    %p109 = scmp.eq.s32.totalorder %s15, 0
    %p110 = por %p108, %p109
    %p111 = scmp.le.s32.totalorder 1, %s9
    %p112 = scmp.lt.s32.totalorder %s9, 3
    %p113 = pnand %p111, %p112
    %p114 = pneg %p113
    // Predicated region
    $region9: #{test_forward.4} parent=5 // pred_check
      _
    $region10: #{test_forward.4} parent=5 // pred_check_branch
      %116 = sbr.rel (%p113) target = $region12
    $region11: #{test_forward.4} parent=5 // pred_region
      %s117 = ssub.s32 %s9, 1
      // Predicated region
      $region13: #{test_forward.4} parent=11 // pred_check
        %p118 = pneg %p56
      $region14: #{test_forward.4} parent=11 // pred_check_branch
        %120 = sbr.rel (%p118) target = $region16
      $region15: #{test_forward.4} parent=11 // pred_region
        _
      $region16: #{test_forward.4} parent=11 // pred_fallthru
        _
      // Predicated region
      $region17: #{test_forward.4} parent=11 // pred_check
        %p121 = pneg %p77
      $region18: #{test_forward.4} parent=11 // pred_check_branch
        %123 = sbr.rel (%p121) target = $region20
      $region19: #{test_forward.4} parent=11 // pred_region
        _
      $region20: #{test_forward.4} parent=11 // pred_fallthru
        _
    $region12: #{test_forward.4} parent=5 // pred_fallthru
      _
    %p124 = scmp.lt.s32.totalorder %s9, 2
    // Predicated region
    $region21: #{test_forward.4} parent=5 // pred_check
      %p125 = pneg %p124
    $region22: #{test_forward.4} parent=5 // pred_check_branch
      %127 = sbr.rel (%p125) target = $region24
    $region23: #{test_forward.4} parent=5 // pred_region
      // Predicated region
      $region25: #{test_forward.4} parent=23 // pred_check
        %p128 = pneg %p29
      $region26: #{test_forward.4} parent=23 // pred_check_branch
        %130 = sbr.rel (%p128) target = $region28
      $region27: #{test_forward.4} parent=23 // pred_region
        %p131 = scmp.lt.s32.totalorder %s9, 1
        %s132 = scalar_select %p131, %s9, 1
        %s133 = smul.addr %s132, 144
        %s134 = smul.addr %s133, 4
        %s135 = scalar_lea.vmem %s0, %s134
      $region28: #{test_forward.4} parent=23 // pred_fallthru
        _
    $region24: #{test_forward.4} parent=5 // pred_fallthru
      _
    %p136 = scmp.le.s32.totalorder 1, %s9
    %p137 = scmp.lt.s32.totalorder %s9, 3
    %p138 = pnand %p136, %p137
    %p139 = pneg %p138
    // Predicated region
    $region29: #{test_forward.4} parent=5 // pred_check
      _
    $region30: #{test_forward.4} parent=5 // pred_check_branch
      %141 = sbr.rel (%p138) target = $region32
    $region31: #{test_forward.4} parent=5 // pred_region
      %s142 = ssub.s32 %s9, 1
      %p143 = scmp.lt.s32.totalorder %s14, 1
      %s144 = scalar_select %p143, %s14, 1
      %s145 = smul.addr %s144, 144
      %s146 = smul.addr %s145, 4
      %s147 = scalar_lea.vmem %s0, %s146
      %p148 = pneg %p35
      %p149 = pneg %p32
      %p150 = pneg %p56
      %p151 = pneg %p53
      %p152 = pneg %p77
      %p153 = pneg %p74
      %p154 = pneg %p103
      %p155 = pneg %p100
      %p156 = scmp.lt.s32.totalorder %s14, 1
      %s157 = scalar_select %p156, %s14, 1
      %s158 = smul.addr %s157, 32
      %s159 = smul.addr %s158, 4
      %s160 = scalar_lea.vmem %s3, %s159
      %p161 = scmp.lt.s32.totalorder %s14, 1
      %s162 = scalar_select %p161, %s14, 1
      %s163 = smul.addr %s162, 144
      %s164 = smul.addr %s163, 4
      %s165 = scalar_lea.vmem %s0, %s164
      %p166 = scmp.lt.s32.totalorder %s14, 1
      %s167 = scalar_select %p166, %s14, 1
      %s168 = smul.addr %s167, 32
      %s169 = smul.addr %s168, 4
      %s170 = scalar_lea.vmem %s3, %s169
      %v172 = vld [vmem:[%s165] sm:$0xf]
      %v173 = vld [vmem:[%s165 + $0x4] sm:$0xf]
      %v174 = vld [vmem:[%s165 + $0x8] sm:$0xf]
      %v175 = vld [vmem:[%s165 + $0xc] sm:$0xf]
      %v176 = vld [vmem:[%s165 + $0x10] sm:$0xf]
      %v177 = vld [vmem:[%s165 + $0x14] sm:$0xf]
      %v178 = vld [vmem:[%s165 + $0x18] sm:$0xf]
      %v179 = vld [vmem:[%s165 + $0x1c] sm:$0xf]
      %v180 = vld [vmem:[%s165 + $0x20] sm:$0xf]
      %v181 = vld [vmem:[%s165 + $0x24] sm:$0xf]
      %v182 = vld [vmem:[%s165 + $0x28] sm:$0xf]
      %v183 = vld [vmem:[%s165 + $0x2c] sm:$0xf]
      %v184 = vld [vmem:[%s165 + $0x30] sm:$0xf]
      %v185 = vld [vmem:[%s165 + $0x34] sm:$0xf]
      %v186 = vld [vmem:[%s165 + $0x38] sm:$0xf]
      %v187 = vld [vmem:[%s165 + $0x3c] sm:$0xf]
      %v188 = vld [vmem:[%s165 + $0x40] sm:$0xf]
      %v189 = vld [vmem:[%s165 + $0x44] sm:$0xf]
      %v190 = vld [vmem:[%s165 + $0x48] sm:$0xf]
      %v191 = vld [vmem:[%s165 + $0x4c] sm:$0xf]
      %v192 = vld [vmem:[%s165 + $0x50] sm:$0xf]
      %v193 = vld [vmem:[%s165 + $0x54] sm:$0xf]
      %v194 = vld [vmem:[%s165 + $0x58] sm:$0xf]
      %v195 = vld [vmem:[%s165 + $0x5c] sm:$0xf]
      %v196 = vld [vmem:[%s165 + $0x60] sm:$0xf]
      %v197 = vld [vmem:[%s165 + $0x64] sm:$0xf]
      %v198 = vld [vmem:[%s165 + $0x68] sm:$0xf]
      %v199 = vld [vmem:[%s165 + $0x6c] sm:$0xf]
      %v200 = vld [vmem:[%s165 + $0x70] sm:$0xf]
      %v201 = vld [vmem:[%s165 + $0x74] sm:$0xf]
      %v202 = vld [vmem:[%s165 + $0x78] sm:$0xf]
      %v203 = vld [vmem:[%s165 + $0x7c] sm:$0xf]
      %v204 = vld [vmem:[%s165 + $0x80] sm:$0xf]
      %v205 = vld [vmem:[%s165 + $0x84] sm:$0xf]
      %v206 = vld [vmem:[%s165 + $0x88] sm:$0xf]
      %v207 = vld [vmem:[%s165 + $0x8c] sm:$0xf]
      %v208 = vld [vmem:[%s165 + $0x90] sm:$0xf]
      %v209 = vld [vmem:[%s165 + $0x94] sm:$0xf]
      %v210 = vld [vmem:[%s165 + $0x98] sm:$0xf]
      %v211 = vld [vmem:[%s165 + $0x9c] sm:$0xf]
      %v212 = vld [vmem:[%s165 + $0xa0] sm:$0xf]
      %v213 = vld [vmem:[%s165 + $0xa4] sm:$0xf]
      %v214 = vld [vmem:[%s165 + $0xa8] sm:$0xf]
      %v215 = vld [vmem:[%s165 + $0xac] sm:$0xf]
      %v216 = vld [vmem:[%s165 + $0xb0] sm:$0xf]
      %v217 = vld [vmem:[%s165 + $0xb4] sm:$0xf]
      %v218 = vld [vmem:[%s165 + $0xb8] sm:$0xf]
      %v219 = vld [vmem:[%s165 + $0xbc] sm:$0xf]
      %v220 = vld [vmem:[%s165 + $0xc0] sm:$0xf]
      %v221 = vld [vmem:[%s165 + $0xc4] sm:$0xf]
      %v222 = vld [vmem:[%s165 + $0xc8] sm:$0xf]
      %v223 = vld [vmem:[%s165 + $0xcc] sm:$0xf]
      %v224 = vld [vmem:[%s165 + $0xd0] sm:$0xf]
      %v225 = vld [vmem:[%s165 + $0xd4] sm:$0xf]
      %v226 = vld [vmem:[%s165 + $0xd8] sm:$0xf]
      %v227 = vld [vmem:[%s165 + $0xdc] sm:$0xf]
      %v228 = vld [vmem:[%s165 + $0xe0] sm:$0xf]
      %v229 = vld [vmem:[%s165 + $0xe4] sm:$0xf]
      %v230 = vld [vmem:[%s165 + $0xe8] sm:$0xf]
      %v231 = vld [vmem:[%s165 + $0xec] sm:$0xf]
      %v232 = vld [vmem:[%s165 + $0xf0] sm:$0xf]
      %v233 = vld [vmem:[%s165 + $0xf4] sm:$0xf]
      %v234 = vld [vmem:[%s165 + $0xf8] sm:$0xf]
      %v235 = vld [vmem:[%s165 + $0xfc] sm:$0xf]
      %v236 = vld [vmem:[%s165 + $0x100] sm:$0xf]
      %v237 = vld [vmem:[%s165 + $0x104] sm:$0xf]
      %v238 = vld [vmem:[%s165 + $0x108] sm:$0xf]
      %v239 = vld [vmem:[%s165 + $0x10c] sm:$0xf]
      %v240 = vld [vmem:[%s165 + $0x110] sm:$0xf]
      %v241 = vld [vmem:[%s165 + $0x114] sm:$0xf]
      %v242 = vld [vmem:[%s165 + $0x118] sm:$0xf]
      %v243 = vld [vmem:[%s165 + $0x11c] sm:$0xf]
      %v244 = vld [vmem:[%s165 + $0x120] sm:$0xf]
      %v245 = vld [vmem:[%s165 + $0x124] sm:$0xf]
      %v246 = vld [vmem:[%s165 + $0x128] sm:$0xf]
      %v247 = vld [vmem:[%s165 + $0x12c] sm:$0xf]
      %v248 = vld [vmem:[%s165 + $0x130] sm:$0xf]
      %v249 = vld [vmem:[%s165 + $0x134] sm:$0xf]
      %v250 = vld [vmem:[%s165 + $0x138] sm:$0xf]
      %v251 = vld [vmem:[%s165 + $0x13c] sm:$0xf]
      %v252 = vld [vmem:[%s165 + $0x140] sm:$0xf]
      %v253 = vld [vmem:[%s165 + $0x144] sm:$0xf]
      %v254 = vld [vmem:[%s165 + $0x148] sm:$0xf]
      %v255 = vld [vmem:[%s165 + $0x14c] sm:$0xf]
      %v256 = vld [vmem:[%s165 + $0x150] sm:$0xf]
      %v257 = vld [vmem:[%s165 + $0x154] sm:$0xf]
      %v258 = vld [vmem:[%s165 + $0x158] sm:$0xf]
      %v259 = vld [vmem:[%s165 + $0x15c] sm:$0xf]
      %v260 = vld [vmem:[%s165 + $0x160] sm:$0xf]
      %v261 = vld [vmem:[%s165 + $0x164] sm:$0xf]
      %v262 = vld [vmem:[%s165 + $0x168] sm:$0xf]
      %v263 = vld [vmem:[%s165 + $0x16c] sm:$0xf]
      %v264 = vld [vmem:[%s165 + $0x170] sm:$0xf]
      %v265 = vld [vmem:[%s165 + $0x174] sm:$0xf]
      %v266 = vld [vmem:[%s165 + $0x178] sm:$0xf]
      %v267 = vld [vmem:[%s165 + $0x17c] sm:$0xf]
      %v268 = vld [vmem:[%s165 + $0x180] sm:$0xf]
      %v269 = vld [vmem:[%s165 + $0x184] sm:$0xf]
      %v270 = vld [vmem:[%s165 + $0x188] sm:$0xf]
      %v271 = vld [vmem:[%s165 + $0x18c] sm:$0xf]
      %v272 = vld [vmem:[%s165 + $0x190] sm:$0xf]
      %v273 = vld [vmem:[%s165 + $0x194] sm:$0xf]
      %v274 = vld [vmem:[%s165 + $0x198] sm:$0xf]
      %v275 = vld [vmem:[%s165 + $0x19c] sm:$0xf]
      %v276 = vld [vmem:[%s165 + $0x1a0] sm:$0xf]
      %v277 = vld [vmem:[%s165 + $0x1a4] sm:$0xf]
      %v278 = vld [vmem:[%s165 + $0x1a8] sm:$0xf]
      %v279 = vld [vmem:[%s165 + $0x1ac] sm:$0xf]
      %v280 = vld [vmem:[%s165 + $0x1b0] sm:$0xf]
      %v281 = vld [vmem:[%s165 + $0x1b4] sm:$0xf]
      %v282 = vld [vmem:[%s165 + $0x1b8] sm:$0xf]
      %v283 = vld [vmem:[%s165 + $0x1bc] sm:$0xf]
      %v284 = vld [vmem:[%s165 + $0x1c0] sm:$0xf]
      %v285 = vld [vmem:[%s165 + $0x1c4] sm:$0xf]
      %v286 = vld [vmem:[%s165 + $0x1c8] sm:$0xf]
      %v287 = vld [vmem:[%s165 + $0x1cc] sm:$0xf]
      %v288 = vld [vmem:[%s165 + $0x1d0] sm:$0xf]
      %v289 = vld [vmem:[%s165 + $0x1d4] sm:$0xf]
      %v290 = vld [vmem:[%s165 + $0x1d8] sm:$0xf]
      %v291 = vld [vmem:[%s165 + $0x1dc] sm:$0xf]
      %v292 = vld [vmem:[%s165 + $0x1e0] sm:$0xf]
      %v293 = vld [vmem:[%s165 + $0x1e4] sm:$0xf]
      %v294 = vld [vmem:[%s165 + $0x1e8] sm:$0xf]
      %v295 = vld [vmem:[%s165 + $0x1ec] sm:$0xf]
      %v296 = vld [vmem:[%s165 + $0x1f0] sm:$0xf]
      %v297 = vld [vmem:[%s165 + $0x1f4] sm:$0xf]
      %v298 = vld [vmem:[%s165 + $0x1f8] sm:$0xf]
      %v299 = vld [vmem:[%s165 + $0x1fc] sm:$0xf]
      %v300 = vld [vmem:[%s165 + $0x200] sm:$0xf]
      %v301 = vld [vmem:[%s165 + $0x204] sm:$0xf]
      %v302 = vld [vmem:[%s165 + $0x208] sm:$0xf]
      %v303 = vld [vmem:[%s165 + $0x20c] sm:$0xf]
      %v304 = vld [vmem:[%s165 + $0x210] sm:$0xf]
      %v305 = vld [vmem:[%s165 + $0x214] sm:$0xf]
      %v306 = vld [vmem:[%s165 + $0x218] sm:$0xf]
      %v307 = vld [vmem:[%s165 + $0x21c] sm:$0xf]
      %v308 = vld [vmem:[%s165 + $0x220] sm:$0xf]
      %v309 = vld [vmem:[%s165 + $0x224] sm:$0xf]
      %v310 = vld [vmem:[%s165 + $0x228] sm:$0xf]
      %v311 = vld [vmem:[%s165 + $0x22c] sm:$0xf]
      %v312 = vld [vmem:[%s165 + $0x230] sm:$0xf]
      %v313 = vld [vmem:[%s165 + $0x234] sm:$0xf]
      %v314 = vld [vmem:[%s165 + $0x238] sm:$0xf]
      %v315 = vld [vmem:[%s165 + $0x23c] sm:$0xf]
      %v316 = vld [vmem:[%s1] sm:$0xf]
      %v317 = vld [vmem:[%s1 + $0x4] sm:$0xf]
      %s318 = scalar_lea.vmem %s1, 8
      %v319 = vld [vmem:[%s318] sm:$0xf]
      %v320 = vld [vmem:[%s318 + $0x4] sm:$0xf]
      %v449 = vunpack.c.l.b16 %v176
      %v450 = vunpack.c.l.b16 %v177
      %v451 = vunpack.c.l.b16 %v178
      %v452 = vunpack.c.l.b16 %v179
      %v453 = vunpack.c.l.b16 %v180
      %v454 = vunpack.c.l.b16 %v181
      %v455 = vunpack.c.l.b16 %v182
      %v456 = vunpack.c.l.b16 %v183
      %v457 = vunpack.c.l.b16 %v184
      %v458 = vunpack.c.l.b16 %v185
      %v459 = vunpack.c.l.b16 %v186
      %v460 = vunpack.c.l.b16 %v187
      %v461 = vunpack.c.l.b16 %v188
      %v462 = vunpack.c.l.b16 %v189
      %v463 = vunpack.c.l.b16 %v190
      %v464 = vunpack.c.l.b16 %v191
      %v465 = vunpack.c.l.b16 %v192
      %v466 = vunpack.c.l.b16 %v193
      %v467 = vunpack.c.l.b16 %v194
      %v468 = vunpack.c.l.b16 %v195
      %v469 = vunpack.c.l.b16 %v196
      %v470 = vunpack.c.l.b16 %v197
      %v471 = vunpack.c.l.b16 %v198
      %v472 = vunpack.c.l.b16 %v199
      %v473 = vunpack.c.l.b16 %v200
      %v474 = vunpack.c.l.b16 %v201
      %v475 = vunpack.c.l.b16 %v202
      %v476 = vunpack.c.l.b16 %v203
      %v477 = vunpack.c.l.b16 %v204
      %v478 = vunpack.c.l.b16 %v205
      %v479 = vunpack.c.l.b16 %v206
      %v480 = vunpack.c.l.b16 %v207
      %v481 = vunpack.c.l.b16 %v208
      %v482 = vunpack.c.l.b16 %v209
      %v483 = vunpack.c.l.b16 %v210
      %v484 = vunpack.c.l.b16 %v211
      %v485 = vunpack.c.l.b16 %v212
      %v486 = vunpack.c.l.b16 %v213
      %v487 = vunpack.c.l.b16 %v214
      %v488 = vunpack.c.l.b16 %v215
      %v489 = vunpack.c.l.b16 %v216
      %v490 = vunpack.c.l.b16 %v217
      %v491 = vunpack.c.l.b16 %v218
      %v492 = vunpack.c.l.b16 %v219
      %v493 = vunpack.c.l.b16 %v220
      %v494 = vunpack.c.l.b16 %v221
      %v495 = vunpack.c.l.b16 %v222
      %v496 = vunpack.c.l.b16 %v223
      %v497 = vunpack.c.l.b16 %v224
      %v498 = vunpack.c.l.b16 %v225
      %v499 = vunpack.c.l.b16 %v226
      %v500 = vunpack.c.l.b16 %v227
      %v501 = vunpack.c.l.b16 %v228
      %v502 = vunpack.c.l.b16 %v229
      %v503 = vunpack.c.l.b16 %v230
      %v504 = vunpack.c.l.b16 %v231
      %v505 = vunpack.c.l.b16 %v232
      %v506 = vunpack.c.l.b16 %v233
      %v507 = vunpack.c.l.b16 %v234
      %v508 = vunpack.c.l.b16 %v235
      %v509 = vunpack.c.l.b16 %v236
      %v510 = vunpack.c.l.b16 %v237
      %v511 = vunpack.c.l.b16 %v238
      %v512 = vunpack.c.l.b16 %v239
      %v513 = vunpack.c.l.b16 %v240
      %v514 = vunpack.c.l.b16 %v241
      %v515 = vunpack.c.l.b16 %v242
      %v516 = vunpack.c.l.b16 %v243
      %v517 = vunpack.c.l.b16 %v244
      %v518 = vunpack.c.l.b16 %v245
      %v519 = vunpack.c.l.b16 %v246
      %v520 = vunpack.c.l.b16 %v247
      %v521 = vunpack.c.l.b16 %v248
      %v522 = vunpack.c.l.b16 %v249
      %v523 = vunpack.c.l.b16 %v250
      %v524 = vunpack.c.l.b16 %v251
      %v525 = vunpack.c.l.b16 %v252
      %v526 = vunpack.c.l.b16 %v253
      %v527 = vunpack.c.l.b16 %v254
      %v528 = vunpack.c.l.b16 %v255
      %v529 = vunpack.c.l.b16 %v256
      %v530 = vunpack.c.l.b16 %v257
      %v531 = vunpack.c.l.b16 %v258
      %v532 = vunpack.c.l.b16 %v259
      %v533 = vunpack.c.l.b16 %v260
      %v534 = vunpack.c.l.b16 %v261
      %v535 = vunpack.c.l.b16 %v262
      %v536 = vunpack.c.l.b16 %v263
      %v537 = vunpack.c.l.b16 %v264
      %v538 = vunpack.c.l.b16 %v265
      %v539 = vunpack.c.l.b16 %v266
      %v540 = vunpack.c.l.b16 %v267
      %v541 = vunpack.c.l.b16 %v268
      %v542 = vunpack.c.l.b16 %v269
      %v543 = vunpack.c.l.b16 %v270
      %v544 = vunpack.c.l.b16 %v271
      %v545 = vunpack.c.l.b16 %v272
      %v546 = vunpack.c.l.b16 %v273
      %v547 = vunpack.c.l.b16 %v274
      %v548 = vunpack.c.l.b16 %v275
      %v549 = vunpack.c.l.b16 %v276
      %v550 = vunpack.c.l.b16 %v277
      %v551 = vunpack.c.l.b16 %v278
      %v552 = vunpack.c.l.b16 %v279
      %v553 = vunpack.c.l.b16 %v280
      %v554 = vunpack.c.l.b16 %v281
      %v555 = vunpack.c.l.b16 %v282
      %v556 = vunpack.c.l.b16 %v283
      %v557 = vunpack.c.l.b16 %v284
      %v558 = vunpack.c.l.b16 %v285
      %v559 = vunpack.c.l.b16 %v286
      %v560 = vunpack.c.l.b16 %v287
      %v561 = vunpack.c.l.b16 %v288
      %v562 = vunpack.c.l.b16 %v289
      %v563 = vunpack.c.l.b16 %v290
      %v564 = vunpack.c.l.b16 %v291
      %v565 = vunpack.c.l.b16 %v292
      %v566 = vunpack.c.l.b16 %v293
      %v567 = vunpack.c.l.b16 %v294
      %v568 = vunpack.c.l.b16 %v295
      %v569 = vunpack.c.l.b16 %v296
      %v570 = vunpack.c.l.b16 %v297
      %v571 = vunpack.c.l.b16 %v298
      %v572 = vunpack.c.l.b16 %v299
      %v573 = vunpack.c.l.b16 %v300
      %v574 = vunpack.c.l.b16 %v301
      %v575 = vunpack.c.l.b16 %v302
      %v576 = vunpack.c.l.b16 %v303
      %v577 = vpack.c.b16 %v450, %v449
      %v578 = vpack.c.b16 %v452, %v451
      %v579 = vpack.c.b16 %v454, %v453
      %v580 = vpack.c.b16 %v456, %v455
      %v581 = vpack.c.b16 %v458, %v457
      %v582 = vpack.c.b16 %v460, %v459
      %v583 = vpack.c.b16 %v462, %v461
      %v584 = vpack.c.b16 %v464, %v463
      %v585 = vpack.c.b16 %v466, %v465
      %v586 = vpack.c.b16 %v468, %v467
      %v587 = vpack.c.b16 %v470, %v469
      %v588 = vpack.c.b16 %v472, %v471
      %v589 = vpack.c.b16 %v474, %v473
      %v590 = vpack.c.b16 %v476, %v475
      %v591 = vpack.c.b16 %v478, %v477
      %v592 = vpack.c.b16 %v480, %v479
      %v593 = vpack.c.b16 %v482, %v481
      %v594 = vpack.c.b16 %v484, %v483
      %v595 = vpack.c.b16 %v486, %v485
      %v596 = vpack.c.b16 %v488, %v487
      %v597 = vpack.c.b16 %v490, %v489
      %v598 = vpack.c.b16 %v492, %v491
      %v599 = vpack.c.b16 %v494, %v493
      %v600 = vpack.c.b16 %v496, %v495
      %v601 = vpack.c.b16 %v498, %v497
      %v602 = vpack.c.b16 %v500, %v499
      %v603 = vpack.c.b16 %v502, %v501
      %v604 = vpack.c.b16 %v504, %v503
      %v605 = vpack.c.b16 %v506, %v505
      %v606 = vpack.c.b16 %v508, %v507
      %v607 = vpack.c.b16 %v510, %v509
      %v608 = vpack.c.b16 %v512, %v511
      %v609 = vpack.c.b16 %v514, %v513
      %v610 = vpack.c.b16 %v516, %v515
      %v611 = vpack.c.b16 %v518, %v517
      %v612 = vpack.c.b16 %v520, %v519
      %v613 = vpack.c.b16 %v522, %v521
      %v614 = vpack.c.b16 %v524, %v523
      %v615 = vpack.c.b16 %v526, %v525
      %v616 = vpack.c.b16 %v528, %v527
      %v617 = vpack.c.b16 %v530, %v529
      %v618 = vpack.c.b16 %v532, %v531
      %v619 = vpack.c.b16 %v534, %v533
      %v620 = vpack.c.b16 %v536, %v535
      %v621 = vpack.c.b16 %v538, %v537
      %v622 = vpack.c.b16 %v540, %v539
      %v623 = vpack.c.b16 %v542, %v541
      %v624 = vpack.c.b16 %v544, %v543
      %v625 = vpack.c.b16 %v546, %v545
      %v626 = vpack.c.b16 %v548, %v547
      %v627 = vpack.c.b16 %v550, %v549
      %v628 = vpack.c.b16 %v552, %v551
      %v629 = vpack.c.b16 %v554, %v553
      %v630 = vpack.c.b16 %v556, %v555
      %v631 = vpack.c.b16 %v558, %v557
      %v632 = vpack.c.b16 %v560, %v559
      %v633 = vpack.c.b16 %v562, %v561
      %v634 = vpack.c.b16 %v564, %v563
      %v635 = vpack.c.b16 %v566, %v565
      %v636 = vpack.c.b16 %v568, %v567
      %v637 = vpack.c.b16 %v570, %v569
      %v638 = vpack.c.b16 %v572, %v571
      %v639 = vpack.c.b16 %v574, %v573
      %v640 = vpack.c.b16 %v576, %v575
      %v643 = vunpack.c.l.b16 %v319
      %v644 = vunpack.c.l.b16 %v320
      %v645 = vpack.c.b16 %v644, %v643
      %vm646 = vcmask 121856
      %v648 = vsel %vm646, %v577, 0
      %v651 = vsel %vm646, %v578, 0
      %v654 = vsel %vm646, %v579, 0
      %v657 = vsel %vm646, %v580, 0
      %v660 = vsel %vm646, %v581, 0
      %v663 = vsel %vm646, %v582, 0
      %v666 = vsel %vm646, %v583, 0
      %v669 = vsel %vm646, %v584, 0
      %v672 = vsel %vm646, %v585, 0
      %v675 = vsel %vm646, %v586, 0
      %v678 = vsel %vm646, %v587, 0
      %v681 = vsel %vm646, %v588, 0
      %v684 = vsel %vm646, %v589, 0
      %v687 = vsel %vm646, %v590, 0
      %v690 = vsel %vm646, %v591, 0
      %v693 = vsel %vm646, %v592, 0
      %v696 = vsel %vm646, %v593, 0
      %v699 = vsel %vm646, %v594, 0
      %v702 = vsel %vm646, %v595, 0
      %v705 = vsel %vm646, %v596, 0
      %v708 = vsel %vm646, %v597, 0
      %v711 = vsel %vm646, %v598, 0
      %v714 = vsel %vm646, %v599, 0
      %v717 = vsel %vm646, %v600, 0
      %v720 = vsel %vm646, %v601, 0
      %v723 = vsel %vm646, %v602, 0
      %v726 = vsel %vm646, %v603, 0
      %v729 = vsel %vm646, %v604, 0
      %v732 = vsel %vm646, %v605, 0
      %v735 = vsel %vm646, %v606, 0
      %v738 = vsel %vm646, %v607, 0
      %v741 = vsel %vm646, %v608, 0
      %v744 = vsel %vm646, %v609, 0
      %v747 = vsel %vm646, %v610, 0
      %v750 = vsel %vm646, %v611, 0
      %v753 = vsel %vm646, %v612, 0
      %v756 = vsel %vm646, %v613, 0
      %v759 = vsel %vm646, %v614, 0
      %v762 = vsel %vm646, %v615, 0
      %v765 = vsel %vm646, %v616, 0
      %v768 = vsel %vm646, %v617, 0
      %v771 = vsel %vm646, %v618, 0
      %v774 = vsel %vm646, %v619, 0
      %v777 = vsel %vm646, %v620, 0
      %v780 = vsel %vm646, %v621, 0
      %v783 = vsel %vm646, %v622, 0
      %v786 = vsel %vm646, %v623, 0
      %v789 = vsel %vm646, %v624, 0
      %v792 = vsel %vm646, %v625, 0
      %v795 = vsel %vm646, %v626, 0
      %v798 = vsel %vm646, %v627, 0
      %v801 = vsel %vm646, %v628, 0
      %v804 = vsel %vm646, %v629, 0
      %v807 = vsel %vm646, %v630, 0
      %v810 = vsel %vm646, %v631, 0
      %v813 = vsel %vm646, %v632, 0
      %v816 = vsel %vm646, %v633, 0
      %v819 = vsel %vm646, %v634, 0
      %v822 = vsel %vm646, %v635, 0
      %v825 = vsel %vm646, %v636, 0
      %v828 = vsel %vm646, %v637, 0
      %v831 = vsel %vm646, %v638, 0
      %v834 = vsel %vm646, %v639, 0
      %v837 = vsel %vm646, %v640, 0
      %vm839 = vcmask 1046528
      %vm840 = vcmask 1047552
      %v841 = vsel %vm839, 4294967295, 65535
      %v842 = vsel %vm840, %v841, 0
      %v844 = vand.u32 %v645, %v842
      %846 = vmatprep.subr.bf16.mxu0 0
      %847 = vmatpush1.bf16.msra.mxu0 0
      %848 = vmatprep.subr.bf16.mxu0 0
      %849 = vmatpush1.bf16.msra.mxu0 0
      %850 = vmatprep.subr.bf16.mxu0 0
      %851 = vmatpush1.bf16.msra.mxu0 0
      %852 = vmatprep.subr.bf16.mxu0 0
      %853 = vmatpush1.bf16.msra.mxu0 0
      %854 = vmatprep.subr.bf16.mxu0 0
      %855 = vmatpush1.bf16.msra.mxu0 0
      %856 = vmatprep.subr.bf16.mxu0 0
      %857 = vmatpush1.bf16.msra.mxu0 0
      %858 = vmatprep.subr.bf16.mxu0 0
      %859 = vmatpush1.bf16.msra.mxu0 0
      %860 = vmatprep.subr.bf16.mxu0 0
      %861 = vmatpush1.bf16.msra.mxu0 %v844
      %862 = vmatprep.subr.bf16.mxu0 0
      %863 = vmatpush2.bf16.msra.mxu0 0
      %864 = vmatprep.subr.bf16.mxu0 0
      %865 = vmatpush2.bf16.msra.mxu0 0
      %866 = vmatprep.subr.bf16.mxu0 0
      %867 = vmatpush2.bf16.msra.mxu0 0
      %868 = vmatprep.subr.bf16.mxu0 0
      %869 = vmatpush2.bf16.msra.mxu0 0
      %870 = vmatprep.subr.bf16.mxu0 0
      %871 = vmatpush2.bf16.msra.mxu0 0
      %872 = vmatprep.subr.bf16.mxu0 0
      %873 = vmatpush2.bf16.msra.mxu0 0
      %874 = vmatprep.subr.bf16.mxu0 0
      %875 = vmatpush2.bf16.msra.mxu0 0
      %876 = vmatprep.subr.bf16.mxu0 0
      %877 = vmatpush2.bf16.msra.mxu0 0
      %878 = vmatprep.mubr.bf16.mxu0 0
      %879 = vmatmul.mubr.bf16.gmra.mxu0 %v648
      %v880 = vpop.f32.mrf.mxu0
      %v881 = vadd.f32 0.0, %v880
      %v882 = vpop.f32.mrf.mxu0
      %v883 = vpop.f32.mrf.mxu0
      %v884 = vadd.f32 0.0, %v883
      %v885 = vpop.f32.mrf.mxu0
      %886 = vmatprep.mubr.bf16.mxu0 0
      %887 = vmatmul.mubr.bf16.gmra.mxu0 %v651
      %v888 = vpop.f32.mrf.mxu0
      %v889 = vadd.f32 0.0, %v888
      %v890 = vpop.f32.mrf.mxu0
      %v891 = vpop.f32.mrf.mxu0
      %v892 = vadd.f32 0.0, %v891
      %v893 = vpop.f32.mrf.mxu0
      %894 = vmatprep.mubr.bf16.mxu0 0
      %895 = vmatmul.mubr.bf16.gmra.mxu0 %v654
      %v896 = vpop.f32.mrf.mxu0
      %v897 = vadd.f32 0.0, %v896
      %v898 = vpop.f32.mrf.mxu0
      %v899 = vpop.f32.mrf.mxu0
      %v900 = vadd.f32 0.0, %v899
      %v901 = vpop.f32.mrf.mxu0
      %902 = vmatprep.mubr.bf16.mxu0 0
      %903 = vmatmul.mubr.bf16.gmra.mxu0 %v657
      %v904 = vpop.f32.mrf.mxu0
      %v905 = vadd.f32 0.0, %v904
      %v906 = vpop.f32.mrf.mxu0
      %v907 = vpop.f32.mrf.mxu0
      %v908 = vadd.f32 0.0, %v907
      %v909 = vpop.f32.mrf.mxu0
      %910 = vmatprep.mubr.bf16.mxu0 0
      %911 = vmatmul.mubr.bf16.gmra.mxu0 %v660
      %v912 = vpop.f32.mrf.mxu0
      %v913 = vadd.f32 0.0, %v912
      %v914 = vpop.f32.mrf.mxu0
      %v915 = vpop.f32.mrf.mxu0
      %v916 = vadd.f32 0.0, %v915
      %v917 = vpop.f32.mrf.mxu0
      %918 = vmatprep.mubr.bf16.mxu0 0
      %919 = vmatmul.mubr.bf16.gmra.mxu0 %v663
      %v920 = vpop.f32.mrf.mxu0
      %v921 = vadd.f32 0.0, %v920
      %v922 = vpop.f32.mrf.mxu0
      %v923 = vpop.f32.mrf.mxu0
      %v924 = vadd.f32 0.0, %v923
      %v925 = vpop.f32.mrf.mxu0
      %926 = vmatprep.mubr.bf16.mxu0 0
      %927 = vmatmul.mubr.bf16.gmra.mxu0 %v666
      %v928 = vpop.f32.mrf.mxu0
      %v929 = vadd.f32 0.0, %v928
      %v930 = vpop.f32.mrf.mxu0
      %v931 = vpop.f32.mrf.mxu0
      %v932 = vadd.f32 0.0, %v931
      %v933 = vpop.f32.mrf.mxu0
      %934 = vmatprep.mubr.bf16.mxu0 0
      %935 = vmatmul.mubr.bf16.gmra.mxu0 %v669
      %v936 = vpop.f32.mrf.mxu0
      %v937 = vadd.f32 0.0, %v936
      %v938 = vpop.f32.mrf.mxu0
      %v939 = vpop.f32.mrf.mxu0
      %v940 = vadd.f32 0.0, %v939
      %v941 = vpop.f32.mrf.mxu0
      %942 = vmatprep.mubr.bf16.mxu0 0
      %943 = vmatmul.mubr.bf16.gmra.mxu0 %v672
      %v944 = vpop.f32.mrf.mxu0
      %v945 = vadd.f32 0.0, %v944
      %v946 = vpop.f32.mrf.mxu0
      %v947 = vpop.f32.mrf.mxu0
      %v948 = vadd.f32 0.0, %v947
      %v949 = vpop.f32.mrf.mxu0
      %950 = vmatprep.mubr.bf16.mxu0 0
      %951 = vmatmul.mubr.bf16.gmra.mxu0 %v675
      %v952 = vpop.f32.mrf.mxu0
      %v953 = vadd.f32 0.0, %v952
      %v954 = vpop.f32.mrf.mxu0
      %v955 = vpop.f32.mrf.mxu0
      %v956 = vadd.f32 0.0, %v955
      %v957 = vpop.f32.mrf.mxu0
      %958 = vmatprep.mubr.bf16.mxu0 0
      %959 = vmatmul.mubr.bf16.gmra.mxu0 %v678
      %v960 = vpop.f32.mrf.mxu0
      %v961 = vadd.f32 0.0, %v960
      %v962 = vpop.f32.mrf.mxu0
      %v963 = vpop.f32.mrf.mxu0
      %v964 = vadd.f32 0.0, %v963
      %v965 = vpop.f32.mrf.mxu0
      %966 = vmatprep.mubr.bf16.mxu0 0
      %967 = vmatmul.mubr.bf16.gmra.mxu0 %v681
      %v968 = vpop.f32.mrf.mxu0
      %v969 = vadd.f32 0.0, %v968
      %v970 = vpop.f32.mrf.mxu0
      %v971 = vpop.f32.mrf.mxu0
      %v972 = vadd.f32 0.0, %v971
      %v973 = vpop.f32.mrf.mxu0
      %974 = vmatprep.mubr.bf16.mxu0 0
      %975 = vmatmul.mubr.bf16.gmra.mxu0 %v684
      %v976 = vpop.f32.mrf.mxu0
      %v977 = vadd.f32 0.0, %v976
      %v978 = vpop.f32.mrf.mxu0
      %v979 = vpop.f32.mrf.mxu0
      %v980 = vadd.f32 0.0, %v979
      %v981 = vpop.f32.mrf.mxu0
      %982 = vmatprep.mubr.bf16.mxu0 0
      %983 = vmatmul.mubr.bf16.gmra.mxu0 %v687
      %v984 = vpop.f32.mrf.mxu0
      %v985 = vadd.f32 0.0, %v984
      %v986 = vpop.f32.mrf.mxu0
      %v987 = vpop.f32.mrf.mxu0
      %v988 = vadd.f32 0.0, %v987
      %v989 = vpop.f32.mrf.mxu0
      %990 = vmatprep.mubr.bf16.mxu0 0
      %991 = vmatmul.mubr.bf16.gmra.mxu0 %v690
      %v992 = vpop.f32.mrf.mxu0
      %v993 = vadd.f32 0.0, %v992
      %v994 = vpop.f32.mrf.mxu0
      %v995 = vpop.f32.mrf.mxu0
      %v996 = vadd.f32 0.0, %v995
      %v997 = vpop.f32.mrf.mxu0
      %998 = vmatprep.mubr.bf16.mxu0 0
      %999 = vmatmul.mubr.bf16.gmra.mxu0 %v693
      %v1000 = vpop.f32.mrf.mxu0
      %v1001 = vadd.f32 0.0, %v1000
      %v1002 = vpop.f32.mrf.mxu0
      %v1003 = vpop.f32.mrf.mxu0
      %v1004 = vadd.f32 0.0, %v1003
      %v1005 = vpop.f32.mrf.mxu0
      %1006 = vmatprep.mubr.bf16.mxu0 0
      %1007 = vmatmul.mubr.bf16.gmra.mxu0 %v696
      %v1008 = vpop.f32.mrf.mxu0
      %v1009 = vadd.f32 0.0, %v1008
      %v1010 = vpop.f32.mrf.mxu0
      %v1011 = vpop.f32.mrf.mxu0
      %v1012 = vadd.f32 0.0, %v1011
      %v1013 = vpop.f32.mrf.mxu0
      %1014 = vmatprep.mubr.bf16.mxu0 0
      %1015 = vmatmul.mubr.bf16.gmra.mxu0 %v699
      %v1016 = vpop.f32.mrf.mxu0
      %v1017 = vadd.f32 0.0, %v1016
      %v1018 = vpop.f32.mrf.mxu0
      %v1019 = vpop.f32.mrf.mxu0
      %v1020 = vadd.f32 0.0, %v1019
      %v1021 = vpop.f32.mrf.mxu0
      %1022 = vmatprep.mubr.bf16.mxu0 0
      %1023 = vmatmul.mubr.bf16.gmra.mxu0 %v702
      %v1024 = vpop.f32.mrf.mxu0
      %v1025 = vadd.f32 0.0, %v1024
      %v1026 = vpop.f32.mrf.mxu0
      %v1027 = vpop.f32.mrf.mxu0
      %v1028 = vadd.f32 0.0, %v1027
      %v1029 = vpop.f32.mrf.mxu0
      %1030 = vmatprep.mubr.bf16.mxu0 0
      %1031 = vmatmul.mubr.bf16.gmra.mxu0 %v705
      %v1032 = vpop.f32.mrf.mxu0
      %v1033 = vadd.f32 0.0, %v1032
      %v1034 = vpop.f32.mrf.mxu0
      %v1035 = vpop.f32.mrf.mxu0
      %v1036 = vadd.f32 0.0, %v1035
      %v1037 = vpop.f32.mrf.mxu0
      %1038 = vmatprep.mubr.bf16.mxu0 0
      %1039 = vmatmul.mubr.bf16.gmra.mxu0 %v708
      %v1040 = vpop.f32.mrf.mxu0
      %v1041 = vadd.f32 0.0, %v1040
      %v1042 = vpop.f32.mrf.mxu0
      %v1043 = vpop.f32.mrf.mxu0
      %v1044 = vadd.f32 0.0, %v1043
      %v1045 = vpop.f32.mrf.mxu0
      %1046 = vmatprep.mubr.bf16.mxu0 0
      %1047 = vmatmul.mubr.bf16.gmra.mxu0 %v711
      %v1048 = vpop.f32.mrf.mxu0
      %v1049 = vadd.f32 0.0, %v1048
      %v1050 = vpop.f32.mrf.mxu0
      %v1051 = vpop.f32.mrf.mxu0
      %v1052 = vadd.f32 0.0, %v1051
      %v1053 = vpop.f32.mrf.mxu0
      %1054 = vmatprep.mubr.bf16.mxu0 0
      %1055 = vmatmul.mubr.bf16.gmra.mxu0 %v714
      %v1056 = vpop.f32.mrf.mxu0
      %v1057 = vadd.f32 0.0, %v1056
      %v1058 = vpop.f32.mrf.mxu0
      %v1059 = vpop.f32.mrf.mxu0
      %v1060 = vadd.f32 0.0, %v1059
      %v1061 = vpop.f32.mrf.mxu0
      %1062 = vmatprep.mubr.bf16.mxu0 0
      %1063 = vmatmul.mubr.bf16.gmra.mxu0 %v717
      %v1064 = vpop.f32.mrf.mxu0
      %v1065 = vadd.f32 0.0, %v1064
      %v1066 = vpop.f32.mrf.mxu0
      %v1067 = vpop.f32.mrf.mxu0
      %v1068 = vadd.f32 0.0, %v1067
      %v1069 = vpop.f32.mrf.mxu0
      %1070 = vmatprep.mubr.bf16.mxu0 0
      %1071 = vmatmul.mubr.bf16.gmra.mxu0 %v720
      %v1072 = vpop.f32.mrf.mxu0
      %v1073 = vadd.f32 0.0, %v1072
      %v1074 = vpop.f32.mrf.mxu0
      %v1075 = vpop.f32.mrf.mxu0
      %v1076 = vadd.f32 0.0, %v1075
      %v1077 = vpop.f32.mrf.mxu0
      %1078 = vmatprep.mubr.bf16.mxu0 0
      %1079 = vmatmul.mubr.bf16.gmra.mxu0 %v723
      %v1080 = vpop.f32.mrf.mxu0
      %v1081 = vadd.f32 0.0, %v1080
      %v1082 = vpop.f32.mrf.mxu0
      %v1083 = vpop.f32.mrf.mxu0
      %v1084 = vadd.f32 0.0, %v1083
      %v1085 = vpop.f32.mrf.mxu0
      %1086 = vmatprep.mubr.bf16.mxu0 0
      %1087 = vmatmul.mubr.bf16.gmra.mxu0 %v726
      %v1088 = vpop.f32.mrf.mxu0
      %v1089 = vadd.f32 0.0, %v1088
      %v1090 = vpop.f32.mrf.mxu0
      %v1091 = vpop.f32.mrf.mxu0
      %v1092 = vadd.f32 0.0, %v1091
      %v1093 = vpop.f32.mrf.mxu0
      %1094 = vmatprep.mubr.bf16.mxu0 0
      %1095 = vmatmul.mubr.bf16.gmra.mxu0 %v729
      %v1096 = vpop.f32.mrf.mxu0
      %v1097 = vadd.f32 0.0, %v1096
      %v1098 = vpop.f32.mrf.mxu0
      %v1099 = vpop.f32.mrf.mxu0
      %v1100 = vadd.f32 0.0, %v1099
      %v1101 = vpop.f32.mrf.mxu0
      %1102 = vmatprep.mubr.bf16.mxu0 0
      %1103 = vmatmul.mubr.bf16.gmra.mxu0 %v732
      %v1104 = vpop.f32.mrf.mxu0
      %v1105 = vadd.f32 0.0, %v1104
      %v1106 = vpop.f32.mrf.mxu0
      %v1107 = vpop.f32.mrf.mxu0
      %v1108 = vadd.f32 0.0, %v1107
      %v1109 = vpop.f32.mrf.mxu0
      %1110 = vmatprep.mubr.bf16.mxu0 0
      %1111 = vmatmul.mubr.bf16.gmra.mxu0 %v735
      %v1112 = vpop.f32.mrf.mxu0
      %v1113 = vadd.f32 0.0, %v1112
      %v1114 = vpop.f32.mrf.mxu0
      %v1115 = vpop.f32.mrf.mxu0
      %v1116 = vadd.f32 0.0, %v1115
      %v1117 = vpop.f32.mrf.mxu0
      %1118 = vmatprep.mubr.bf16.mxu0 0
      %1119 = vmatmul.mubr.bf16.gmra.mxu0 %v738
      %v1120 = vpop.f32.mrf.mxu0
      %v1121 = vadd.f32 0.0, %v1120
      %v1122 = vpop.f32.mrf.mxu0
      %v1123 = vpop.f32.mrf.mxu0
      %v1124 = vadd.f32 0.0, %v1123
      %v1125 = vpop.f32.mrf.mxu0
      %1126 = vmatprep.mubr.bf16.mxu0 0
      %1127 = vmatmul.mubr.bf16.gmra.mxu0 %v741
      %v1128 = vpop.f32.mrf.mxu0
      %v1129 = vadd.f32 0.0, %v1128
      %v1130 = vpop.f32.mrf.mxu0
      %v1131 = vpop.f32.mrf.mxu0
      %v1132 = vadd.f32 0.0, %v1131
      %v1133 = vpop.f32.mrf.mxu0
      %1134 = vmatprep.mubr.bf16.mxu0 0
      %1135 = vmatmul.mubr.bf16.gmra.mxu0 %v744
      %v1136 = vpop.f32.mrf.mxu0
      %v1137 = vadd.f32 0.0, %v1136
      %v1138 = vpop.f32.mrf.mxu0
      %v1139 = vpop.f32.mrf.mxu0
      %v1140 = vadd.f32 0.0, %v1139
      %v1141 = vpop.f32.mrf.mxu0
      %1142 = vmatprep.mubr.bf16.mxu0 0
      %1143 = vmatmul.mubr.bf16.gmra.mxu0 %v747
      %v1144 = vpop.f32.mrf.mxu0
      %v1145 = vadd.f32 0.0, %v1144
      %v1146 = vpop.f32.mrf.mxu0
      %v1147 = vpop.f32.mrf.mxu0
      %v1148 = vadd.f32 0.0, %v1147
      %v1149 = vpop.f32.mrf.mxu0
      %1150 = vmatprep.mubr.bf16.mxu0 0
      %1151 = vmatmul.mubr.bf16.gmra.mxu0 %v750
      %v1152 = vpop.f32.mrf.mxu0
      %v1153 = vadd.f32 0.0, %v1152
      %v1154 = vpop.f32.mrf.mxu0
      %v1155 = vpop.f32.mrf.mxu0
      %v1156 = vadd.f32 0.0, %v1155
      %v1157 = vpop.f32.mrf.mxu0
      %1158 = vmatprep.mubr.bf16.mxu0 0
      %1159 = vmatmul.mubr.bf16.gmra.mxu0 %v753
      %v1160 = vpop.f32.mrf.mxu0
      %v1161 = vadd.f32 0.0, %v1160
      %v1162 = vpop.f32.mrf.mxu0
      %v1163 = vpop.f32.mrf.mxu0
      %v1164 = vadd.f32 0.0, %v1163
      %v1165 = vpop.f32.mrf.mxu0
      %1166 = vmatprep.mubr.bf16.mxu0 0
      %1167 = vmatmul.mubr.bf16.gmra.mxu0 %v756
      %v1168 = vpop.f32.mrf.mxu0
      %v1169 = vadd.f32 0.0, %v1168
      %v1170 = vpop.f32.mrf.mxu0
      %v1171 = vpop.f32.mrf.mxu0
      %v1172 = vadd.f32 0.0, %v1171
      %v1173 = vpop.f32.mrf.mxu0
      %1174 = vmatprep.mubr.bf16.mxu0 0
      %1175 = vmatmul.mubr.bf16.gmra.mxu0 %v759
      %v1176 = vpop.f32.mrf.mxu0
      %v1177 = vadd.f32 0.0, %v1176
      %v1178 = vpop.f32.mrf.mxu0
      %v1179 = vpop.f32.mrf.mxu0
      %v1180 = vadd.f32 0.0, %v1179
      %v1181 = vpop.f32.mrf.mxu0
      %1182 = vmatprep.mubr.bf16.mxu0 0
      %1183 = vmatmul.mubr.bf16.gmra.mxu0 %v762
      %v1184 = vpop.f32.mrf.mxu0
      %v1185 = vadd.f32 0.0, %v1184
      %v1186 = vpop.f32.mrf.mxu0
      %v1187 = vpop.f32.mrf.mxu0
      %v1188 = vadd.f32 0.0, %v1187
      %v1189 = vpop.f32.mrf.mxu0
      %1190 = vmatprep.mubr.bf16.mxu0 0
      %1191 = vmatmul.mubr.bf16.gmra.mxu0 %v765
      %v1192 = vpop.f32.mrf.mxu0
      %v1193 = vadd.f32 0.0, %v1192
      %v1194 = vpop.f32.mrf.mxu0
      %v1195 = vpop.f32.mrf.mxu0
      %v1196 = vadd.f32 0.0, %v1195
      %v1197 = vpop.f32.mrf.mxu0
      %1198 = vmatprep.mubr.bf16.mxu0 0
      %1199 = vmatmul.mubr.bf16.gmra.mxu0 %v768
      %v1200 = vpop.f32.mrf.mxu0
      %v1201 = vadd.f32 0.0, %v1200
      %v1202 = vpop.f32.mrf.mxu0
      %v1203 = vpop.f32.mrf.mxu0
      %v1204 = vadd.f32 0.0, %v1203
      %v1205 = vpop.f32.mrf.mxu0
      %1206 = vmatprep.mubr.bf16.mxu0 0
      %1207 = vmatmul.mubr.bf16.gmra.mxu0 %v771
      %v1208 = vpop.f32.mrf.mxu0
      %v1209 = vadd.f32 0.0, %v1208
      %v1210 = vpop.f32.mrf.mxu0
      %v1211 = vpop.f32.mrf.mxu0
      %v1212 = vadd.f32 0.0, %v1211
      %v1213 = vpop.f32.mrf.mxu0
      %1214 = vmatprep.mubr.bf16.mxu0 0
      %1215 = vmatmul.mubr.bf16.gmra.mxu0 %v774
      %v1216 = vpop.f32.mrf.mxu0
      %v1217 = vadd.f32 0.0, %v1216
      %v1218 = vpop.f32.mrf.mxu0
      %v1219 = vpop.f32.mrf.mxu0
      %v1220 = vadd.f32 0.0, %v1219
      %v1221 = vpop.f32.mrf.mxu0
      %1222 = vmatprep.mubr.bf16.mxu0 0
      %1223 = vmatmul.mubr.bf16.gmra.mxu0 %v777
      %v1224 = vpop.f32.mrf.mxu0
      %v1225 = vadd.f32 0.0, %v1224
      %v1226 = vpop.f32.mrf.mxu0
      %v1227 = vpop.f32.mrf.mxu0
      %v1228 = vadd.f32 0.0, %v1227
      %v1229 = vpop.f32.mrf.mxu0
      %1230 = vmatprep.mubr.bf16.mxu0 0
      %1231 = vmatmul.mubr.bf16.gmra.mxu0 %v780
      %v1232 = vpop.f32.mrf.mxu0
      %v1233 = vadd.f32 0.0, %v1232
      %v1234 = vpop.f32.mrf.mxu0
      %v1235 = vpop.f32.mrf.mxu0
      %v1236 = vadd.f32 0.0, %v1235
      %v1237 = vpop.f32.mrf.mxu0
      %1238 = vmatprep.mubr.bf16.mxu0 0
      %1239 = vmatmul.mubr.bf16.gmra.mxu0 %v783
      %v1240 = vpop.f32.mrf.mxu0
      %v1241 = vadd.f32 0.0, %v1240
      %v1242 = vpop.f32.mrf.mxu0
      %v1243 = vpop.f32.mrf.mxu0
      %v1244 = vadd.f32 0.0, %v1243
      %v1245 = vpop.f32.mrf.mxu0
      %1246 = vmatprep.mubr.bf16.mxu0 0
      %1247 = vmatmul.mubr.bf16.gmra.mxu0 %v786
      %v1248 = vpop.f32.mrf.mxu0
      %v1249 = vadd.f32 0.0, %v1248
      %v1250 = vpop.f32.mrf.mxu0
      %v1251 = vpop.f32.mrf.mxu0
      %v1252 = vadd.f32 0.0, %v1251
      %v1253 = vpop.f32.mrf.mxu0
      %1254 = vmatprep.mubr.bf16.mxu0 0
      %1255 = vmatmul.mubr.bf16.gmra.mxu0 %v789
      %v1256 = vpop.f32.mrf.mxu0
      %v1257 = vadd.f32 0.0, %v1256
      %v1258 = vpop.f32.mrf.mxu0
      %v1259 = vpop.f32.mrf.mxu0
      %v1260 = vadd.f32 0.0, %v1259
      %v1261 = vpop.f32.mrf.mxu0
      %1262 = vmatprep.mubr.bf16.mxu0 0
      %1263 = vmatmul.mubr.bf16.gmra.mxu0 %v792
      %v1264 = vpop.f32.mrf.mxu0
      %v1265 = vadd.f32 0.0, %v1264
      %v1266 = vpop.f32.mrf.mxu0
      %v1267 = vpop.f32.mrf.mxu0
      %v1268 = vadd.f32 0.0, %v1267
      %v1269 = vpop.f32.mrf.mxu0
      %1270 = vmatprep.mubr.bf16.mxu0 0
      %1271 = vmatmul.mubr.bf16.gmra.mxu0 %v795
      %v1272 = vpop.f32.mrf.mxu0
      %v1273 = vadd.f32 0.0, %v1272
      %v1274 = vpop.f32.mrf.mxu0
      %v1275 = vpop.f32.mrf.mxu0
      %v1276 = vadd.f32 0.0, %v1275
      %v1277 = vpop.f32.mrf.mxu0
      %1278 = vmatprep.mubr.bf16.mxu0 0
      %1279 = vmatmul.mubr.bf16.gmra.mxu0 %v798
      %v1280 = vpop.f32.mrf.mxu0
      %v1281 = vadd.f32 0.0, %v1280
      %v1282 = vpop.f32.mrf.mxu0
      %v1283 = vpop.f32.mrf.mxu0
      %v1284 = vadd.f32 0.0, %v1283
      %v1285 = vpop.f32.mrf.mxu0
      %1286 = vmatprep.mubr.bf16.mxu0 0
      %1287 = vmatmul.mubr.bf16.gmra.mxu0 %v801
      %v1288 = vpop.f32.mrf.mxu0
      %v1289 = vadd.f32 0.0, %v1288
      %v1290 = vpop.f32.mrf.mxu0
      %v1291 = vpop.f32.mrf.mxu0
      %v1292 = vadd.f32 0.0, %v1291
      %v1293 = vpop.f32.mrf.mxu0
      %1294 = vmatprep.mubr.bf16.mxu0 0
      %1295 = vmatmul.mubr.bf16.gmra.mxu0 %v804
      %v1296 = vpop.f32.mrf.mxu0
      %v1297 = vadd.f32 0.0, %v1296
      %v1298 = vpop.f32.mrf.mxu0
      %v1299 = vpop.f32.mrf.mxu0
      %v1300 = vadd.f32 0.0, %v1299
      %v1301 = vpop.f32.mrf.mxu0
      %1302 = vmatprep.mubr.bf16.mxu0 0
      %1303 = vmatmul.mubr.bf16.gmra.mxu0 %v807
      %v1304 = vpop.f32.mrf.mxu0
      %v1305 = vadd.f32 0.0, %v1304
      %v1306 = vpop.f32.mrf.mxu0
      %v1307 = vpop.f32.mrf.mxu0
      %v1308 = vadd.f32 0.0, %v1307
      %v1309 = vpop.f32.mrf.mxu0
      %1310 = vmatprep.mubr.bf16.mxu0 0
      %1311 = vmatmul.mubr.bf16.gmra.mxu0 %v810
      %v1312 = vpop.f32.mrf.mxu0
      %v1313 = vadd.f32 0.0, %v1312
      %v1314 = vpop.f32.mrf.mxu0
      %v1315 = vpop.f32.mrf.mxu0
      %v1316 = vadd.f32 0.0, %v1315
      %v1317 = vpop.f32.mrf.mxu0
      %1318 = vmatprep.mubr.bf16.mxu0 0
      %1319 = vmatmul.mubr.bf16.gmra.mxu0 %v813
      %v1320 = vpop.f32.mrf.mxu0
      %v1321 = vadd.f32 0.0, %v1320
      %v1322 = vpop.f32.mrf.mxu0
      %v1323 = vpop.f32.mrf.mxu0
      %v1324 = vadd.f32 0.0, %v1323
      %v1325 = vpop.f32.mrf.mxu0
      %1326 = vmatprep.mubr.bf16.mxu0 0
      %1327 = vmatmul.mubr.bf16.gmra.mxu0 %v816
      %v1328 = vpop.f32.mrf.mxu0
      %v1329 = vadd.f32 0.0, %v1328
      %v1330 = vpop.f32.mrf.mxu0
      %v1331 = vpop.f32.mrf.mxu0
      %v1332 = vadd.f32 0.0, %v1331
      %v1333 = vpop.f32.mrf.mxu0
      %1334 = vmatprep.mubr.bf16.mxu0 0
      %1335 = vmatmul.mubr.bf16.gmra.mxu0 %v819
      %v1336 = vpop.f32.mrf.mxu0
      %v1337 = vadd.f32 0.0, %v1336
      %v1338 = vpop.f32.mrf.mxu0
      %v1339 = vpop.f32.mrf.mxu0
      %v1340 = vadd.f32 0.0, %v1339
      %v1341 = vpop.f32.mrf.mxu0
      %1342 = vmatprep.mubr.bf16.mxu0 0
      %1343 = vmatmul.mubr.bf16.gmra.mxu0 %v822
      %v1344 = vpop.f32.mrf.mxu0
      %v1345 = vadd.f32 0.0, %v1344
      %v1346 = vpop.f32.mrf.mxu0
      %v1347 = vpop.f32.mrf.mxu0
      %v1348 = vadd.f32 0.0, %v1347
      %v1349 = vpop.f32.mrf.mxu0
      %1350 = vmatprep.mubr.bf16.mxu0 0
      %1351 = vmatmul.mubr.bf16.gmra.mxu0 %v825
      %v1352 = vpop.f32.mrf.mxu0
      %v1353 = vadd.f32 0.0, %v1352
      %v1354 = vpop.f32.mrf.mxu0
      %v1355 = vpop.f32.mrf.mxu0
      %v1356 = vadd.f32 0.0, %v1355
      %v1357 = vpop.f32.mrf.mxu0
      %1358 = vmatprep.mubr.bf16.mxu0 0
      %1359 = vmatmul.mubr.bf16.gmra.mxu0 %v828
      %v1360 = vpop.f32.mrf.mxu0
      %v1361 = vadd.f32 0.0, %v1360
      %v1362 = vpop.f32.mrf.mxu0
      %v1363 = vpop.f32.mrf.mxu0
      %v1364 = vadd.f32 0.0, %v1363
      %v1365 = vpop.f32.mrf.mxu0
      %1366 = vmatprep.mubr.bf16.mxu0 0
      %1367 = vmatmul.mubr.bf16.gmra.mxu0 %v831
      %v1368 = vpop.f32.mrf.mxu0
      %v1369 = vadd.f32 0.0, %v1368
      %v1370 = vpop.f32.mrf.mxu0
      %v1371 = vpop.f32.mrf.mxu0
      %v1372 = vadd.f32 0.0, %v1371
      %v1373 = vpop.f32.mrf.mxu0
      %1374 = vmatprep.mubr.bf16.mxu0 0
      %1375 = vmatmul.mubr.bf16.gmra.mxu0 %v834
      %v1376 = vpop.f32.mrf.mxu0
      %v1377 = vadd.f32 0.0, %v1376
      %v1378 = vpop.f32.mrf.mxu0
      %v1379 = vpop.f32.mrf.mxu0
      %v1380 = vadd.f32 0.0, %v1379
      %v1381 = vpop.f32.mrf.mxu0
      %1382 = vmatprep.mubr.bf16.mxu0 0
      %1383 = vmatmul.mubr.bf16.gmra.mxu0 %v837
      %v1384 = vpop.f32.mrf.mxu0
      %v1385 = vadd.f32 0.0, %v1384
      %v1386 = vpop.f32.mrf.mxu0
      %v1387 = vpop.f32.mrf.mxu0
      %v1388 = vadd.f32 0.0, %v1387
      %v1389 = vpop.f32.mrf.mxu0
      %1390 = vdwg.mxu0
      %v1395 = vunpack.c.l.b16 %v172
      %v1396 = vunpack.c.l.b16 %v173
      %v1397 = vunpack.c.l.b16 %v174
      %v1398 = vunpack.c.l.b16 %v175
      %v1399 = vpack.c.b16 %v1396, %v1395
      %v1400 = vpack.c.b16 %v1398, %v1397
      %v1403 = vunpack.c.l.b16 %v316
      %v1404 = vunpack.c.l.b16 %v317
      %v1405 = vpack.c.b16 %v1404, %v1403
      %v1407 = vsel %vm646, %v1399, 0
      %v1410 = vsel %vm646, %v1400, 0
      %v1413 = vand.u32 %v1405, %v842
      %1415 = vmatprep.subr.bf16.mxu0 0
      %1416 = vmatpush1.bf16.msra.mxu0 0
      %1417 = vmatprep.subr.bf16.mxu0 0
      %1418 = vmatpush1.bf16.msra.mxu0 0
      %1419 = vmatprep.subr.bf16.mxu0 0
      %1420 = vmatpush1.bf16.msra.mxu0 0
      %1421 = vmatprep.subr.bf16.mxu0 0
      %1422 = vmatpush1.bf16.msra.mxu0 0
      %1423 = vmatprep.subr.bf16.mxu0 0
      %1424 = vmatpush1.bf16.msra.mxu0 0
      %1425 = vmatprep.subr.bf16.mxu0 0
      %1426 = vmatpush1.bf16.msra.mxu0 0
      %1427 = vmatprep.subr.bf16.mxu0 0
      %1428 = vmatpush1.bf16.msra.mxu0 0
      %1429 = vmatprep.subr.bf16.mxu0 0
      %1430 = vmatpush1.bf16.msra.mxu0 %v1413
      %1431 = vmatprep.subr.bf16.mxu0 0
      %1432 = vmatpush2.bf16.msra.mxu0 0
      %1433 = vmatprep.subr.bf16.mxu0 0
      %1434 = vmatpush2.bf16.msra.mxu0 0
      %1435 = vmatprep.subr.bf16.mxu0 0
      %1436 = vmatpush2.bf16.msra.mxu0 0
      %1437 = vmatprep.subr.bf16.mxu0 0
      %1438 = vmatpush2.bf16.msra.mxu0 0
      %1439 = vmatprep.subr.bf16.mxu0 0
      %1440 = vmatpush2.bf16.msra.mxu0 0
      %1441 = vmatprep.subr.bf16.mxu0 0
      %1442 = vmatpush2.bf16.msra.mxu0 0
      %1443 = vmatprep.subr.bf16.mxu0 0
      %1444 = vmatpush2.bf16.msra.mxu0 0
      %1445 = vmatprep.subr.bf16.mxu0 0
      %1446 = vmatpush2.bf16.msra.mxu0 0
      %1447 = vmatprep.mubr.bf16.mxu0 0
      %1448 = vmatmul.mubr.bf16.gmra.mxu0 %v1407
      %v1449 = vpop.f32.mrf.mxu0
      %v1450 = vadd.f32 %v881, %v1449
      %v1451 = vpop.f32.mrf.mxu0
      %v1452 = vpop.f32.mrf.mxu0
      %v1453 = vadd.f32 %v884, %v1452
      %v1454 = vpop.f32.mrf.mxu0
      %1455 = vmatprep.mubr.bf16.mxu0 0
      %1456 = vmatmul.mubr.bf16.gmra.mxu0 %v1410
      %v1457 = vpop.f32.mrf.mxu0
      %v1458 = vadd.f32 %v889, %v1457
      %v1459 = vpop.f32.mrf.mxu0
      %v1460 = vpop.f32.mrf.mxu0
      %v1461 = vadd.f32 %v892, %v1460
      %v1462 = vpop.f32.mrf.mxu0
      %1463 = vmatprep.mubr.bf16.mxu0 0
      %1464 = vmatmul.mubr.bf16.gmra.mxu0 %v648
      %v1465 = vpop.f32.mrf.mxu0
      %v1466 = vadd.f32 %v897, %v1465
      %v1467 = vpop.f32.mrf.mxu0
      %v1468 = vpop.f32.mrf.mxu0
      %v1469 = vadd.f32 %v900, %v1468
      %v1470 = vpop.f32.mrf.mxu0
      %1471 = vmatprep.mubr.bf16.mxu0 0
      %1472 = vmatmul.mubr.bf16.gmra.mxu0 %v651
      %v1473 = vpop.f32.mrf.mxu0
      %v1474 = vadd.f32 %v905, %v1473
      %v1475 = vpop.f32.mrf.mxu0
      %v1476 = vpop.f32.mrf.mxu0
      %v1477 = vadd.f32 %v908, %v1476
      %v1478 = vpop.f32.mrf.mxu0
      %1479 = vmatprep.mubr.bf16.mxu0 0
      %1480 = vmatmul.mubr.bf16.gmra.mxu0 %v654
      %v1481 = vpop.f32.mrf.mxu0
      %v1482 = vadd.f32 %v913, %v1481
      %v1483 = vpop.f32.mrf.mxu0
      %v1484 = vpop.f32.mrf.mxu0
      %v1485 = vadd.f32 %v916, %v1484
      %v1486 = vpop.f32.mrf.mxu0
      %1487 = vmatprep.mubr.bf16.mxu0 0
      %1488 = vmatmul.mubr.bf16.gmra.mxu0 %v657
      %v1489 = vpop.f32.mrf.mxu0
      %v1490 = vadd.f32 %v921, %v1489
      %v1491 = vpop.f32.mrf.mxu0
      %v1492 = vpop.f32.mrf.mxu0
      %v1493 = vadd.f32 %v924, %v1492
      %v1494 = vpop.f32.mrf.mxu0
      %1495 = vmatprep.mubr.bf16.mxu0 0
      %1496 = vmatmul.mubr.bf16.gmra.mxu0 %v660
      %v1497 = vpop.f32.mrf.mxu0
      %v1498 = vadd.f32 %v929, %v1497
      %v1499 = vpop.f32.mrf.mxu0
      %v1500 = vpop.f32.mrf.mxu0
      %v1501 = vadd.f32 %v932, %v1500
      %v1502 = vpop.f32.mrf.mxu0
      %1503 = vmatprep.mubr.bf16.mxu0 0
      %1504 = vmatmul.mubr.bf16.gmra.mxu0 %v663
      %v1505 = vpop.f32.mrf.mxu0
      %v1506 = vadd.f32 %v937, %v1505
      %v1507 = vpop.f32.mrf.mxu0
      %v1508 = vpop.f32.mrf.mxu0
      %v1509 = vadd.f32 %v940, %v1508
      %v1510 = vpop.f32.mrf.mxu0
      %1511 = vmatprep.mubr.bf16.mxu0 0
      %1512 = vmatmul.mubr.bf16.gmra.mxu0 %v666
      %v1513 = vpop.f32.mrf.mxu0
      %v1514 = vadd.f32 %v945, %v1513
      %v1515 = vpop.f32.mrf.mxu0
      %v1516 = vpop.f32.mrf.mxu0
      %v1517 = vadd.f32 %v948, %v1516
      %v1518 = vpop.f32.mrf.mxu0
      %1519 = vmatprep.mubr.bf16.mxu0 0
      %1520 = vmatmul.mubr.bf16.gmra.mxu0 %v669
      %v1521 = vpop.f32.mrf.mxu0
      %v1522 = vadd.f32 %v953, %v1521
      %v1523 = vpop.f32.mrf.mxu0
      %v1524 = vpop.f32.mrf.mxu0
      %v1525 = vadd.f32 %v956, %v1524
      %v1526 = vpop.f32.mrf.mxu0
      %1527 = vmatprep.mubr.bf16.mxu0 0
      %1528 = vmatmul.mubr.bf16.gmra.mxu0 %v672
      %v1529 = vpop.f32.mrf.mxu0
      %v1530 = vadd.f32 %v961, %v1529
      %v1531 = vpop.f32.mrf.mxu0
      %v1532 = vpop.f32.mrf.mxu0
      %v1533 = vadd.f32 %v964, %v1532
      %v1534 = vpop.f32.mrf.mxu0
      %1535 = vmatprep.mubr.bf16.mxu0 0
      %1536 = vmatmul.mubr.bf16.gmra.mxu0 %v675
      %v1537 = vpop.f32.mrf.mxu0
      %v1538 = vadd.f32 %v969, %v1537
      %v1539 = vpop.f32.mrf.mxu0
      %v1540 = vpop.f32.mrf.mxu0
      %v1541 = vadd.f32 %v972, %v1540
      %v1542 = vpop.f32.mrf.mxu0
      %1543 = vmatprep.mubr.bf16.mxu0 0
      %1544 = vmatmul.mubr.bf16.gmra.mxu0 %v678
      %v1545 = vpop.f32.mrf.mxu0
      %v1546 = vadd.f32 %v977, %v1545
      %v1547 = vpop.f32.mrf.mxu0
      %v1548 = vpop.f32.mrf.mxu0
      %v1549 = vadd.f32 %v980, %v1548
      %v1550 = vpop.f32.mrf.mxu0
      %1551 = vmatprep.mubr.bf16.mxu0 0
      %1552 = vmatmul.mubr.bf16.gmra.mxu0 %v681
      %v1553 = vpop.f32.mrf.mxu0
      %v1554 = vadd.f32 %v985, %v1553
      %v1555 = vpop.f32.mrf.mxu0
      %v1556 = vpop.f32.mrf.mxu0
      %v1557 = vadd.f32 %v988, %v1556
      %v1558 = vpop.f32.mrf.mxu0
      %1559 = vmatprep.mubr.bf16.mxu0 0
      %1560 = vmatmul.mubr.bf16.gmra.mxu0 %v684
      %v1561 = vpop.f32.mrf.mxu0
      %v1562 = vadd.f32 %v993, %v1561
      %v1563 = vpop.f32.mrf.mxu0
      %v1564 = vpop.f32.mrf.mxu0
      %v1565 = vadd.f32 %v996, %v1564
      %v1566 = vpop.f32.mrf.mxu0
      %1567 = vmatprep.mubr.bf16.mxu0 0
      %1568 = vmatmul.mubr.bf16.gmra.mxu0 %v687
      %v1569 = vpop.f32.mrf.mxu0
      %v1570 = vadd.f32 %v1001, %v1569
      %v1571 = vpop.f32.mrf.mxu0
      %v1572 = vpop.f32.mrf.mxu0
      %v1573 = vadd.f32 %v1004, %v1572
      %v1574 = vpop.f32.mrf.mxu0
      %1575 = vmatprep.mubr.bf16.mxu0 0
      %1576 = vmatmul.mubr.bf16.gmra.mxu0 %v690
      %v1577 = vpop.f32.mrf.mxu0
      %v1578 = vadd.f32 %v1009, %v1577
      %v1579 = vpop.f32.mrf.mxu0
      %v1580 = vpop.f32.mrf.mxu0
      %v1581 = vadd.f32 %v1012, %v1580
      %v1582 = vpop.f32.mrf.mxu0
      %1583 = vmatprep.mubr.bf16.mxu0 0
      %1584 = vmatmul.mubr.bf16.gmra.mxu0 %v693
      %v1585 = vpop.f32.mrf.mxu0
      %v1586 = vadd.f32 %v1017, %v1585
      %v1587 = vpop.f32.mrf.mxu0
      %v1588 = vpop.f32.mrf.mxu0
      %v1589 = vadd.f32 %v1020, %v1588
      %v1590 = vpop.f32.mrf.mxu0
      %1591 = vmatprep.mubr.bf16.mxu0 0
      %1592 = vmatmul.mubr.bf16.gmra.mxu0 %v696
      %v1593 = vpop.f32.mrf.mxu0
      %v1594 = vadd.f32 %v1025, %v1593
      %v1595 = vpop.f32.mrf.mxu0
      %v1596 = vpop.f32.mrf.mxu0
      %v1597 = vadd.f32 %v1028, %v1596
      %v1598 = vpop.f32.mrf.mxu0
      %1599 = vmatprep.mubr.bf16.mxu0 0
      %1600 = vmatmul.mubr.bf16.gmra.mxu0 %v699
      %v1601 = vpop.f32.mrf.mxu0
      %v1602 = vadd.f32 %v1033, %v1601
      %v1603 = vpop.f32.mrf.mxu0
      %v1604 = vpop.f32.mrf.mxu0
      %v1605 = vadd.f32 %v1036, %v1604
      %v1606 = vpop.f32.mrf.mxu0
      %1607 = vmatprep.mubr.bf16.mxu0 0
      %1608 = vmatmul.mubr.bf16.gmra.mxu0 %v702
      %v1609 = vpop.f32.mrf.mxu0
      %v1610 = vadd.f32 %v1041, %v1609
      %v1611 = vpop.f32.mrf.mxu0
      %v1612 = vpop.f32.mrf.mxu0
      %v1613 = vadd.f32 %v1044, %v1612
      %v1614 = vpop.f32.mrf.mxu0
      %1615 = vmatprep.mubr.bf16.mxu0 0
      %1616 = vmatmul.mubr.bf16.gmra.mxu0 %v705
      %v1617 = vpop.f32.mrf.mxu0
      %v1618 = vadd.f32 %v1049, %v1617
      %v1619 = vpop.f32.mrf.mxu0
      %v1620 = vpop.f32.mrf.mxu0
      %v1621 = vadd.f32 %v1052, %v1620
      %v1622 = vpop.f32.mrf.mxu0
      %1623 = vmatprep.mubr.bf16.mxu0 0
      %1624 = vmatmul.mubr.bf16.gmra.mxu0 %v708
      %v1625 = vpop.f32.mrf.mxu0
      %v1626 = vadd.f32 %v1057, %v1625
      %v1627 = vpop.f32.mrf.mxu0
      %v1628 = vpop.f32.mrf.mxu0
      %v1629 = vadd.f32 %v1060, %v1628
      %v1630 = vpop.f32.mrf.mxu0
      %1631 = vmatprep.mubr.bf16.mxu0 0
      %1632 = vmatmul.mubr.bf16.gmra.mxu0 %v711
      %v1633 = vpop.f32.mrf.mxu0
      %v1634 = vadd.f32 %v1065, %v1633
      %v1635 = vpop.f32.mrf.mxu0
      %v1636 = vpop.f32.mrf.mxu0
      %v1637 = vadd.f32 %v1068, %v1636
      %v1638 = vpop.f32.mrf.mxu0
      %1639 = vmatprep.mubr.bf16.mxu0 0
      %1640 = vmatmul.mubr.bf16.gmra.mxu0 %v714
      %v1641 = vpop.f32.mrf.mxu0
      %v1642 = vadd.f32 %v1073, %v1641
      %v1643 = vpop.f32.mrf.mxu0
      %v1644 = vpop.f32.mrf.mxu0
      %v1645 = vadd.f32 %v1076, %v1644
      %v1646 = vpop.f32.mrf.mxu0
      %1647 = vmatprep.mubr.bf16.mxu0 0
      %1648 = vmatmul.mubr.bf16.gmra.mxu0 %v717
      %v1649 = vpop.f32.mrf.mxu0
      %v1650 = vadd.f32 %v1081, %v1649
      %v1651 = vpop.f32.mrf.mxu0
      %v1652 = vpop.f32.mrf.mxu0
      %v1653 = vadd.f32 %v1084, %v1652
      %v1654 = vpop.f32.mrf.mxu0
      %1655 = vmatprep.mubr.bf16.mxu0 0
      %1656 = vmatmul.mubr.bf16.gmra.mxu0 %v720
      %v1657 = vpop.f32.mrf.mxu0
      %v1658 = vadd.f32 %v1089, %v1657
      %v1659 = vpop.f32.mrf.mxu0
      %v1660 = vpop.f32.mrf.mxu0
      %v1661 = vadd.f32 %v1092, %v1660
      %v1662 = vpop.f32.mrf.mxu0
      %1663 = vmatprep.mubr.bf16.mxu0 0
      %1664 = vmatmul.mubr.bf16.gmra.mxu0 %v723
      %v1665 = vpop.f32.mrf.mxu0
      %v1666 = vadd.f32 %v1097, %v1665
      %v1667 = vpop.f32.mrf.mxu0
      %v1668 = vpop.f32.mrf.mxu0
      %v1669 = vadd.f32 %v1100, %v1668
      %v1670 = vpop.f32.mrf.mxu0
      %1671 = vmatprep.mubr.bf16.mxu0 0
      %1672 = vmatmul.mubr.bf16.gmra.mxu0 %v726
      %v1673 = vpop.f32.mrf.mxu0
      %v1674 = vadd.f32 %v1105, %v1673
      %v1675 = vpop.f32.mrf.mxu0
      %v1676 = vpop.f32.mrf.mxu0
      %v1677 = vadd.f32 %v1108, %v1676
      %v1678 = vpop.f32.mrf.mxu0
      %1679 = vmatprep.mubr.bf16.mxu0 0
      %1680 = vmatmul.mubr.bf16.gmra.mxu0 %v729
      %v1681 = vpop.f32.mrf.mxu0
      %v1682 = vadd.f32 %v1113, %v1681
      %v1683 = vpop.f32.mrf.mxu0
      %v1684 = vpop.f32.mrf.mxu0
      %v1685 = vadd.f32 %v1116, %v1684
      %v1686 = vpop.f32.mrf.mxu0
      %1687 = vmatprep.mubr.bf16.mxu0 0
      %1688 = vmatmul.mubr.bf16.gmra.mxu0 %v732
      %v1689 = vpop.f32.mrf.mxu0
      %v1690 = vadd.f32 %v1121, %v1689
      %v1691 = vpop.f32.mrf.mxu0
      %v1692 = vpop.f32.mrf.mxu0
      %v1693 = vadd.f32 %v1124, %v1692
      %v1694 = vpop.f32.mrf.mxu0
      %1695 = vmatprep.mubr.bf16.mxu0 0
      %1696 = vmatmul.mubr.bf16.gmra.mxu0 %v735
      %v1697 = vpop.f32.mrf.mxu0
      %v1698 = vadd.f32 %v1129, %v1697
      %v1699 = vpop.f32.mrf.mxu0
      %v1700 = vpop.f32.mrf.mxu0
      %v1701 = vadd.f32 %v1132, %v1700
      %v1702 = vpop.f32.mrf.mxu0
      %1703 = vmatprep.mubr.bf16.mxu0 0
      %1704 = vmatmul.mubr.bf16.gmra.mxu0 %v738
      %v1705 = vpop.f32.mrf.mxu0
      %v1706 = vadd.f32 %v1137, %v1705
      %v1707 = vpop.f32.mrf.mxu0
      %v1708 = vpop.f32.mrf.mxu0
      %v1709 = vadd.f32 %v1140, %v1708
      %v1710 = vpop.f32.mrf.mxu0
      %1711 = vmatprep.mubr.bf16.mxu0 0
      %1712 = vmatmul.mubr.bf16.gmra.mxu0 %v741
      %v1713 = vpop.f32.mrf.mxu0
      %v1714 = vadd.f32 %v1145, %v1713
      %v1715 = vpop.f32.mrf.mxu0
      %v1716 = vpop.f32.mrf.mxu0
      %v1717 = vadd.f32 %v1148, %v1716
      %v1718 = vpop.f32.mrf.mxu0
      %1719 = vmatprep.mubr.bf16.mxu0 0
      %1720 = vmatmul.mubr.bf16.gmra.mxu0 %v744
      %v1721 = vpop.f32.mrf.mxu0
      %v1722 = vadd.f32 %v1153, %v1721
      %v1723 = vpop.f32.mrf.mxu0
      %v1724 = vpop.f32.mrf.mxu0
      %v1725 = vadd.f32 %v1156, %v1724
      %v1726 = vpop.f32.mrf.mxu0
      %1727 = vmatprep.mubr.bf16.mxu0 0
      %1728 = vmatmul.mubr.bf16.gmra.mxu0 %v747
      %v1729 = vpop.f32.mrf.mxu0
      %v1730 = vadd.f32 %v1161, %v1729
      %v1731 = vpop.f32.mrf.mxu0
      %v1732 = vpop.f32.mrf.mxu0
      %v1733 = vadd.f32 %v1164, %v1732
      %v1734 = vpop.f32.mrf.mxu0
      %1735 = vmatprep.mubr.bf16.mxu0 0
      %1736 = vmatmul.mubr.bf16.gmra.mxu0 %v750
      %v1737 = vpop.f32.mrf.mxu0
      %v1738 = vadd.f32 %v1169, %v1737
      %v1739 = vpop.f32.mrf.mxu0
      %v1740 = vpop.f32.mrf.mxu0
      %v1741 = vadd.f32 %v1172, %v1740
      %v1742 = vpop.f32.mrf.mxu0
      %1743 = vmatprep.mubr.bf16.mxu0 0
      %1744 = vmatmul.mubr.bf16.gmra.mxu0 %v753
      %v1745 = vpop.f32.mrf.mxu0
      %v1746 = vadd.f32 %v1177, %v1745
      %v1747 = vpop.f32.mrf.mxu0
      %v1748 = vpop.f32.mrf.mxu0
      %v1749 = vadd.f32 %v1180, %v1748
      %v1750 = vpop.f32.mrf.mxu0
      %1751 = vmatprep.mubr.bf16.mxu0 0
      %1752 = vmatmul.mubr.bf16.gmra.mxu0 %v756
      %v1753 = vpop.f32.mrf.mxu0
      %v1754 = vadd.f32 %v1185, %v1753
      %v1755 = vpop.f32.mrf.mxu0
      %v1756 = vpop.f32.mrf.mxu0
      %v1757 = vadd.f32 %v1188, %v1756
      %v1758 = vpop.f32.mrf.mxu0
      %1759 = vmatprep.mubr.bf16.mxu0 0
      %1760 = vmatmul.mubr.bf16.gmra.mxu0 %v759
      %v1761 = vpop.f32.mrf.mxu0
      %v1762 = vadd.f32 %v1193, %v1761
      %v1763 = vpop.f32.mrf.mxu0
      %v1764 = vpop.f32.mrf.mxu0
      %v1765 = vadd.f32 %v1196, %v1764
      %v1766 = vpop.f32.mrf.mxu0
      %1767 = vmatprep.mubr.bf16.mxu0 0
      %1768 = vmatmul.mubr.bf16.gmra.mxu0 %v762
      %v1769 = vpop.f32.mrf.mxu0
      %v1770 = vadd.f32 %v1201, %v1769
      %v1771 = vpop.f32.mrf.mxu0
      %v1772 = vpop.f32.mrf.mxu0
      %v1773 = vadd.f32 %v1204, %v1772
      %v1774 = vpop.f32.mrf.mxu0
      %1775 = vmatprep.mubr.bf16.mxu0 0
      %1776 = vmatmul.mubr.bf16.gmra.mxu0 %v765
      %v1777 = vpop.f32.mrf.mxu0
      %v1778 = vadd.f32 %v1209, %v1777
      %v1779 = vpop.f32.mrf.mxu0
      %v1780 = vpop.f32.mrf.mxu0
      %v1781 = vadd.f32 %v1212, %v1780
      %v1782 = vpop.f32.mrf.mxu0
      %1783 = vmatprep.mubr.bf16.mxu0 0
      %1784 = vmatmul.mubr.bf16.gmra.mxu0 %v768
      %v1785 = vpop.f32.mrf.mxu0
      %v1786 = vadd.f32 %v1217, %v1785
      %v1787 = vpop.f32.mrf.mxu0
      %v1788 = vpop.f32.mrf.mxu0
      %v1789 = vadd.f32 %v1220, %v1788
      %v1790 = vpop.f32.mrf.mxu0
      %1791 = vmatprep.mubr.bf16.mxu0 0
      %1792 = vmatmul.mubr.bf16.gmra.mxu0 %v771
      %v1793 = vpop.f32.mrf.mxu0
      %v1794 = vadd.f32 %v1225, %v1793
      %v1795 = vpop.f32.mrf.mxu0
      %v1796 = vpop.f32.mrf.mxu0
      %v1797 = vadd.f32 %v1228, %v1796
      %v1798 = vpop.f32.mrf.mxu0
      %1799 = vmatprep.mubr.bf16.mxu0 0
      %1800 = vmatmul.mubr.bf16.gmra.mxu0 %v774
      %v1801 = vpop.f32.mrf.mxu0
      %v1802 = vadd.f32 %v1233, %v1801
      %v1803 = vpop.f32.mrf.mxu0
      %v1804 = vpop.f32.mrf.mxu0
      %v1805 = vadd.f32 %v1236, %v1804
      %v1806 = vpop.f32.mrf.mxu0
      %1807 = vmatprep.mubr.bf16.mxu0 0
      %1808 = vmatmul.mubr.bf16.gmra.mxu0 %v777
      %v1809 = vpop.f32.mrf.mxu0
      %v1810 = vadd.f32 %v1241, %v1809
      %v1811 = vpop.f32.mrf.mxu0
      %v1812 = vpop.f32.mrf.mxu0
      %v1813 = vadd.f32 %v1244, %v1812
      %v1814 = vpop.f32.mrf.mxu0
      %1815 = vmatprep.mubr.bf16.mxu0 0
      %1816 = vmatmul.mubr.bf16.gmra.mxu0 %v780
      %v1817 = vpop.f32.mrf.mxu0
      %v1818 = vadd.f32 %v1249, %v1817
      %v1819 = vpop.f32.mrf.mxu0
      %v1820 = vpop.f32.mrf.mxu0
      %v1821 = vadd.f32 %v1252, %v1820
      %v1822 = vpop.f32.mrf.mxu0
      %1823 = vmatprep.mubr.bf16.mxu0 0
      %1824 = vmatmul.mubr.bf16.gmra.mxu0 %v783
      %v1825 = vpop.f32.mrf.mxu0
      %v1826 = vadd.f32 %v1257, %v1825
      %v1827 = vpop.f32.mrf.mxu0
      %v1828 = vpop.f32.mrf.mxu0
      %v1829 = vadd.f32 %v1260, %v1828
      %v1830 = vpop.f32.mrf.mxu0
      %1831 = vmatprep.mubr.bf16.mxu0 0
      %1832 = vmatmul.mubr.bf16.gmra.mxu0 %v786
      %v1833 = vpop.f32.mrf.mxu0
      %v1834 = vadd.f32 %v1265, %v1833
      %v1835 = vpop.f32.mrf.mxu0
      %v1836 = vpop.f32.mrf.mxu0
      %v1837 = vadd.f32 %v1268, %v1836
      %v1838 = vpop.f32.mrf.mxu0
      %1839 = vmatprep.mubr.bf16.mxu0 0
      %1840 = vmatmul.mubr.bf16.gmra.mxu0 %v789
      %v1841 = vpop.f32.mrf.mxu0
      %v1842 = vadd.f32 %v1273, %v1841
      %v1843 = vpop.f32.mrf.mxu0
      %v1844 = vpop.f32.mrf.mxu0
      %v1845 = vadd.f32 %v1276, %v1844
      %v1846 = vpop.f32.mrf.mxu0
      %1847 = vmatprep.mubr.bf16.mxu0 0
      %1848 = vmatmul.mubr.bf16.gmra.mxu0 %v792
      %v1849 = vpop.f32.mrf.mxu0
      %v1850 = vadd.f32 %v1281, %v1849
      %v1851 = vpop.f32.mrf.mxu0
      %v1852 = vpop.f32.mrf.mxu0
      %v1853 = vadd.f32 %v1284, %v1852
      %v1854 = vpop.f32.mrf.mxu0
      %1855 = vmatprep.mubr.bf16.mxu0 0
      %1856 = vmatmul.mubr.bf16.gmra.mxu0 %v795
      %v1857 = vpop.f32.mrf.mxu0
      %v1858 = vadd.f32 %v1289, %v1857
      %v1859 = vpop.f32.mrf.mxu0
      %v1860 = vpop.f32.mrf.mxu0
      %v1861 = vadd.f32 %v1292, %v1860
      %v1862 = vpop.f32.mrf.mxu0
      %1863 = vmatprep.mubr.bf16.mxu0 0
      %1864 = vmatmul.mubr.bf16.gmra.mxu0 %v798
      %v1865 = vpop.f32.mrf.mxu0
      %v1866 = vadd.f32 %v1297, %v1865
      %v1867 = vpop.f32.mrf.mxu0
      %v1868 = vpop.f32.mrf.mxu0
      %v1869 = vadd.f32 %v1300, %v1868
      %v1870 = vpop.f32.mrf.mxu0
      %1871 = vmatprep.mubr.bf16.mxu0 0
      %1872 = vmatmul.mubr.bf16.gmra.mxu0 %v801
      %v1873 = vpop.f32.mrf.mxu0
      %v1874 = vadd.f32 %v1305, %v1873
      %v1875 = vpop.f32.mrf.mxu0
      %v1876 = vpop.f32.mrf.mxu0
      %v1877 = vadd.f32 %v1308, %v1876
      %v1878 = vpop.f32.mrf.mxu0
      %1879 = vmatprep.mubr.bf16.mxu0 0
      %1880 = vmatmul.mubr.bf16.gmra.mxu0 %v804
      %v1881 = vpop.f32.mrf.mxu0
      %v1882 = vadd.f32 %v1313, %v1881
      %v1883 = vpop.f32.mrf.mxu0
      %v1884 = vpop.f32.mrf.mxu0
      %v1885 = vadd.f32 %v1316, %v1884
      %v1886 = vpop.f32.mrf.mxu0
      %1887 = vmatprep.mubr.bf16.mxu0 0
      %1888 = vmatmul.mubr.bf16.gmra.mxu0 %v807
      %v1889 = vpop.f32.mrf.mxu0
      %v1890 = vadd.f32 %v1321, %v1889
      %v1891 = vpop.f32.mrf.mxu0
      %v1892 = vpop.f32.mrf.mxu0
      %v1893 = vadd.f32 %v1324, %v1892
      %v1894 = vpop.f32.mrf.mxu0
      %1895 = vmatprep.mubr.bf16.mxu0 0
      %1896 = vmatmul.mubr.bf16.gmra.mxu0 %v810
      %v1897 = vpop.f32.mrf.mxu0
      %v1898 = vadd.f32 %v1329, %v1897
      %v1899 = vpop.f32.mrf.mxu0
      %v1900 = vpop.f32.mrf.mxu0
      %v1901 = vadd.f32 %v1332, %v1900
      %v1902 = vpop.f32.mrf.mxu0
      %1903 = vmatprep.mubr.bf16.mxu0 0
      %1904 = vmatmul.mubr.bf16.gmra.mxu0 %v813
      %v1905 = vpop.f32.mrf.mxu0
      %v1906 = vadd.f32 %v1337, %v1905
      %v1907 = vpop.f32.mrf.mxu0
      %v1908 = vpop.f32.mrf.mxu0
      %v1909 = vadd.f32 %v1340, %v1908
      %v1910 = vpop.f32.mrf.mxu0
      %1911 = vmatprep.mubr.bf16.mxu0 0
      %1912 = vmatmul.mubr.bf16.gmra.mxu0 %v816
      %v1913 = vpop.f32.mrf.mxu0
      %v1914 = vadd.f32 %v1345, %v1913
      %v1915 = vpop.f32.mrf.mxu0
      %v1916 = vpop.f32.mrf.mxu0
      %v1917 = vadd.f32 %v1348, %v1916
      %v1918 = vpop.f32.mrf.mxu0
      %1919 = vmatprep.mubr.bf16.mxu0 0
      %1920 = vmatmul.mubr.bf16.gmra.mxu0 %v819
      %v1921 = vpop.f32.mrf.mxu0
      %v1922 = vadd.f32 %v1353, %v1921
      %v1923 = vpop.f32.mrf.mxu0
      %v1924 = vpop.f32.mrf.mxu0
      %v1925 = vadd.f32 %v1356, %v1924
      %v1926 = vpop.f32.mrf.mxu0
      %1927 = vmatprep.mubr.bf16.mxu0 0
      %1928 = vmatmul.mubr.bf16.gmra.mxu0 %v822
      %v1929 = vpop.f32.mrf.mxu0
      %v1930 = vadd.f32 %v1361, %v1929
      %v1931 = vpop.f32.mrf.mxu0
      %v1932 = vpop.f32.mrf.mxu0
      %v1933 = vadd.f32 %v1364, %v1932
      %v1934 = vpop.f32.mrf.mxu0
      %1935 = vmatprep.mubr.bf16.mxu0 0
      %1936 = vmatmul.mubr.bf16.gmra.mxu0 %v825
      %v1937 = vpop.f32.mrf.mxu0
      %v1938 = vadd.f32 %v1369, %v1937
      %v1939 = vpop.f32.mrf.mxu0
      %v1940 = vpop.f32.mrf.mxu0
      %v1941 = vadd.f32 %v1372, %v1940
      %v1942 = vpop.f32.mrf.mxu0
      %1943 = vmatprep.mubr.bf16.mxu0 0
      %1944 = vmatmul.mubr.bf16.gmra.mxu0 %v828
      %v1945 = vpop.f32.mrf.mxu0
      %v1946 = vadd.f32 %v1377, %v1945
      %v1947 = vpop.f32.mrf.mxu0
      %v1948 = vpop.f32.mrf.mxu0
      %v1949 = vadd.f32 %v1380, %v1948
      %v1950 = vpop.f32.mrf.mxu0
      %1951 = vmatprep.mubr.bf16.mxu0 0
      %1952 = vmatmul.mubr.bf16.gmra.mxu0 %v831
      %v1953 = vpop.f32.mrf.mxu0
      %v1954 = vadd.f32 %v1385, %v1953
      %v1955 = vpop.f32.mrf.mxu0
      %v1956 = vpop.f32.mrf.mxu0
      %v1957 = vadd.f32 %v1388, %v1956
      %v1958 = vpop.f32.mrf.mxu0
      %1959 = vdwg.mxu0
      %s1960 = scalar_lea.vmem %s1, 16
      %v1961 = vld [vmem:[%s1960] sm:$0xf]
      %v1962 = vld [vmem:[%s1960 + $0x4] sm:$0xf]
      %v1967 = vunpack.c.l.b16 %v304
      %v1968 = vunpack.c.l.b16 %v305
      %v1969 = vunpack.c.l.b16 %v306
      %v1970 = vunpack.c.l.b16 %v307
      %v1971 = vpack.c.b16 %v1968, %v1967
      %v1972 = vpack.c.b16 %v1970, %v1969
      %v1975 = vunpack.c.l.b16 %v1961
      %v1976 = vunpack.c.l.b16 %v1962
      %v1977 = vpack.c.b16 %v1976, %v1975
      %v1979 = vsel %vm646, %v1971, 0
      %v1982 = vsel %vm646, %v1972, 0
      %v1985 = vand.u32 %v1977, %v842
      %1987 = vmatprep.subr.bf16.mxu0 0
      %1988 = vmatpush1.bf16.msra.mxu0 0
      %1989 = vmatprep.subr.bf16.mxu0 0
      %1990 = vmatpush1.bf16.msra.mxu0 0
      %1991 = vmatprep.subr.bf16.mxu0 0
      %1992 = vmatpush1.bf16.msra.mxu0 0
      %1993 = vmatprep.subr.bf16.mxu0 0
      %1994 = vmatpush1.bf16.msra.mxu0 0
      %1995 = vmatprep.subr.bf16.mxu0 0
      %1996 = vmatpush1.bf16.msra.mxu0 0
      %1997 = vmatprep.subr.bf16.mxu0 0
      %1998 = vmatpush1.bf16.msra.mxu0 0
      %1999 = vmatprep.subr.bf16.mxu0 0
      %2000 = vmatpush1.bf16.msra.mxu0 0
      %2001 = vmatprep.subr.bf16.mxu0 0
      %2002 = vmatpush1.bf16.msra.mxu0 %v1985
      %2003 = vmatprep.subr.bf16.mxu0 0
      %2004 = vmatpush2.bf16.msra.mxu0 0
      %2005 = vmatprep.subr.bf16.mxu0 0
      %2006 = vmatpush2.bf16.msra.mxu0 0
      %2007 = vmatprep.subr.bf16.mxu0 0
      %2008 = vmatpush2.bf16.msra.mxu0 0
      %2009 = vmatprep.subr.bf16.mxu0 0
      %2010 = vmatpush2.bf16.msra.mxu0 0
      %2011 = vmatprep.subr.bf16.mxu0 0
      %2012 = vmatpush2.bf16.msra.mxu0 0
      %2013 = vmatprep.subr.bf16.mxu0 0
      %2014 = vmatpush2.bf16.msra.mxu0 0
      %2015 = vmatprep.subr.bf16.mxu0 0
      %2016 = vmatpush2.bf16.msra.mxu0 0
      %2017 = vmatprep.subr.bf16.mxu0 0
      %2018 = vmatpush2.bf16.msra.mxu0 0
      %2019 = vmatprep.mubr.bf16.mxu0 0
      %2020 = vmatmul.mubr.bf16.gmra.mxu0 %v654
      %v2021 = vpop.f32.mrf.mxu0
      %v2022 = vadd.f32 0.0, %v2021
      %v2023 = vpop.f32.mrf.mxu0
      %v2024 = vpop.f32.mrf.mxu0
      %v2025 = vadd.f32 0.0, %v2024
      %v2026 = vpop.f32.mrf.mxu0
      %2027 = vmatprep.mubr.bf16.mxu0 0
      %2028 = vmatmul.mubr.bf16.gmra.mxu0 %v657
      %v2029 = vpop.f32.mrf.mxu0
      %v2030 = vadd.f32 0.0, %v2029
      %v2031 = vpop.f32.mrf.mxu0
      %v2032 = vpop.f32.mrf.mxu0
      %v2033 = vadd.f32 0.0, %v2032
      %v2034 = vpop.f32.mrf.mxu0
      %2035 = vmatprep.mubr.bf16.mxu0 0
      %2036 = vmatmul.mubr.bf16.gmra.mxu0 %v660
      %v2037 = vpop.f32.mrf.mxu0
      %v2038 = vadd.f32 0.0, %v2037
      %v2039 = vpop.f32.mrf.mxu0
      %v2040 = vpop.f32.mrf.mxu0
      %v2041 = vadd.f32 0.0, %v2040
      %v2042 = vpop.f32.mrf.mxu0
      %2043 = vmatprep.mubr.bf16.mxu0 0
      %2044 = vmatmul.mubr.bf16.gmra.mxu0 %v663
      %v2045 = vpop.f32.mrf.mxu0
      %v2046 = vadd.f32 0.0, %v2045
      %v2047 = vpop.f32.mrf.mxu0
      %v2048 = vpop.f32.mrf.mxu0
      %v2049 = vadd.f32 0.0, %v2048
      %v2050 = vpop.f32.mrf.mxu0
      %2051 = vmatprep.mubr.bf16.mxu0 0
      %2052 = vmatmul.mubr.bf16.gmra.mxu0 %v666
      %v2053 = vpop.f32.mrf.mxu0
      %v2054 = vadd.f32 0.0, %v2053
      %v2055 = vpop.f32.mrf.mxu0
      %v2056 = vpop.f32.mrf.mxu0
      %v2057 = vadd.f32 0.0, %v2056
      %v2058 = vpop.f32.mrf.mxu0
      %2059 = vmatprep.mubr.bf16.mxu0 0
      %2060 = vmatmul.mubr.bf16.gmra.mxu0 %v669
      %v2061 = vpop.f32.mrf.mxu0
      %v2062 = vadd.f32 0.0, %v2061
      %v2063 = vpop.f32.mrf.mxu0
      %v2064 = vpop.f32.mrf.mxu0
      %v2065 = vadd.f32 0.0, %v2064
      %v2066 = vpop.f32.mrf.mxu0
      %2067 = vmatprep.mubr.bf16.mxu0 0
      %2068 = vmatmul.mubr.bf16.gmra.mxu0 %v672
      %v2069 = vpop.f32.mrf.mxu0
      %v2070 = vadd.f32 0.0, %v2069
      %v2071 = vpop.f32.mrf.mxu0
      %v2072 = vpop.f32.mrf.mxu0
      %v2073 = vadd.f32 0.0, %v2072
      %v2074 = vpop.f32.mrf.mxu0
      %2075 = vmatprep.mubr.bf16.mxu0 0
      %2076 = vmatmul.mubr.bf16.gmra.mxu0 %v675
      %v2077 = vpop.f32.mrf.mxu0
      %v2078 = vadd.f32 0.0, %v2077
      %v2079 = vpop.f32.mrf.mxu0
      %v2080 = vpop.f32.mrf.mxu0
      %v2081 = vadd.f32 0.0, %v2080
      %v2082 = vpop.f32.mrf.mxu0
      %2083 = vmatprep.mubr.bf16.mxu0 0
      %2084 = vmatmul.mubr.bf16.gmra.mxu0 %v678
      %v2085 = vpop.f32.mrf.mxu0
      %v2086 = vadd.f32 0.0, %v2085
      %v2087 = vpop.f32.mrf.mxu0
      %v2088 = vpop.f32.mrf.mxu0
      %v2089 = vadd.f32 0.0, %v2088
      %v2090 = vpop.f32.mrf.mxu0
      %2091 = vmatprep.mubr.bf16.mxu0 0
      %2092 = vmatmul.mubr.bf16.gmra.mxu0 %v681
      %v2093 = vpop.f32.mrf.mxu0
      %v2094 = vadd.f32 0.0, %v2093
      %v2095 = vpop.f32.mrf.mxu0
      %v2096 = vpop.f32.mrf.mxu0
      %v2097 = vadd.f32 0.0, %v2096
      %v2098 = vpop.f32.mrf.mxu0
      %2099 = vmatprep.mubr.bf16.mxu0 0
      %2100 = vmatmul.mubr.bf16.gmra.mxu0 %v684
      %v2101 = vpop.f32.mrf.mxu0
      %v2102 = vadd.f32 0.0, %v2101
      %v2103 = vpop.f32.mrf.mxu0
      %v2104 = vpop.f32.mrf.mxu0
      %v2105 = vadd.f32 0.0, %v2104
      %v2106 = vpop.f32.mrf.mxu0
      %2107 = vmatprep.mubr.bf16.mxu0 0
      %2108 = vmatmul.mubr.bf16.gmra.mxu0 %v687
      %v2109 = vpop.f32.mrf.mxu0
      %v2110 = vadd.f32 0.0, %v2109
      %v2111 = vpop.f32.mrf.mxu0
      %v2112 = vpop.f32.mrf.mxu0
      %v2113 = vadd.f32 0.0, %v2112
      %v2114 = vpop.f32.mrf.mxu0
      %2115 = vmatprep.mubr.bf16.mxu0 0
      %2116 = vmatmul.mubr.bf16.gmra.mxu0 %v690
      %v2117 = vpop.f32.mrf.mxu0
      %v2118 = vadd.f32 0.0, %v2117
      %v2119 = vpop.f32.mrf.mxu0
      %v2120 = vpop.f32.mrf.mxu0
      %v2121 = vadd.f32 0.0, %v2120
      %v2122 = vpop.f32.mrf.mxu0
      %2123 = vmatprep.mubr.bf16.mxu0 0
      %2124 = vmatmul.mubr.bf16.gmra.mxu0 %v693
      %v2125 = vpop.f32.mrf.mxu0
      %v2126 = vadd.f32 0.0, %v2125
      %v2127 = vpop.f32.mrf.mxu0
      %v2128 = vpop.f32.mrf.mxu0
      %v2129 = vadd.f32 0.0, %v2128
      %v2130 = vpop.f32.mrf.mxu0
      %2131 = vmatprep.mubr.bf16.mxu0 0
      %2132 = vmatmul.mubr.bf16.gmra.mxu0 %v696
      %v2133 = vpop.f32.mrf.mxu0
      %v2134 = vadd.f32 0.0, %v2133
      %v2135 = vpop.f32.mrf.mxu0
      %v2136 = vpop.f32.mrf.mxu0
      %v2137 = vadd.f32 0.0, %v2136
      %v2138 = vpop.f32.mrf.mxu0
      %2139 = vmatprep.mubr.bf16.mxu0 0
      %2140 = vmatmul.mubr.bf16.gmra.mxu0 %v699
      %v2141 = vpop.f32.mrf.mxu0
      %v2142 = vadd.f32 0.0, %v2141
      %v2143 = vpop.f32.mrf.mxu0
      %v2144 = vpop.f32.mrf.mxu0
      %v2145 = vadd.f32 0.0, %v2144
      %v2146 = vpop.f32.mrf.mxu0
      %2147 = vmatprep.mubr.bf16.mxu0 0
      %2148 = vmatmul.mubr.bf16.gmra.mxu0 %v702
      %v2149 = vpop.f32.mrf.mxu0
      %v2150 = vadd.f32 0.0, %v2149
      %v2151 = vpop.f32.mrf.mxu0
      %v2152 = vpop.f32.mrf.mxu0
      %v2153 = vadd.f32 0.0, %v2152
      %v2154 = vpop.f32.mrf.mxu0
      %2155 = vmatprep.mubr.bf16.mxu0 0
      %2156 = vmatmul.mubr.bf16.gmra.mxu0 %v705
      %v2157 = vpop.f32.mrf.mxu0
      %v2158 = vadd.f32 0.0, %v2157
      %v2159 = vpop.f32.mrf.mxu0
      %v2160 = vpop.f32.mrf.mxu0
      %v2161 = vadd.f32 0.0, %v2160
      %v2162 = vpop.f32.mrf.mxu0
      %2163 = vmatprep.mubr.bf16.mxu0 0
      %2164 = vmatmul.mubr.bf16.gmra.mxu0 %v708
      %v2165 = vpop.f32.mrf.mxu0
      %v2166 = vadd.f32 0.0, %v2165
      %v2167 = vpop.f32.mrf.mxu0
      %v2168 = vpop.f32.mrf.mxu0
      %v2169 = vadd.f32 0.0, %v2168
      %v2170 = vpop.f32.mrf.mxu0
      %2171 = vmatprep.mubr.bf16.mxu0 0
      %2172 = vmatmul.mubr.bf16.gmra.mxu0 %v711
      %v2173 = vpop.f32.mrf.mxu0
      %v2174 = vadd.f32 0.0, %v2173
      %v2175 = vpop.f32.mrf.mxu0
      %v2176 = vpop.f32.mrf.mxu0
      %v2177 = vadd.f32 0.0, %v2176
      %v2178 = vpop.f32.mrf.mxu0
      %2179 = vmatprep.mubr.bf16.mxu0 0
      %2180 = vmatmul.mubr.bf16.gmra.mxu0 %v714
      %v2181 = vpop.f32.mrf.mxu0
      %v2182 = vadd.f32 0.0, %v2181
      %v2183 = vpop.f32.mrf.mxu0
      %v2184 = vpop.f32.mrf.mxu0
      %v2185 = vadd.f32 0.0, %v2184
      %v2186 = vpop.f32.mrf.mxu0
      %2187 = vmatprep.mubr.bf16.mxu0 0
      %2188 = vmatmul.mubr.bf16.gmra.mxu0 %v717
      %v2189 = vpop.f32.mrf.mxu0
      %v2190 = vadd.f32 0.0, %v2189
      %v2191 = vpop.f32.mrf.mxu0
      %v2192 = vpop.f32.mrf.mxu0
      %v2193 = vadd.f32 0.0, %v2192
      %v2194 = vpop.f32.mrf.mxu0
      %2195 = vmatprep.mubr.bf16.mxu0 0
      %2196 = vmatmul.mubr.bf16.gmra.mxu0 %v720
      %v2197 = vpop.f32.mrf.mxu0
      %v2198 = vadd.f32 0.0, %v2197
      %v2199 = vpop.f32.mrf.mxu0
      %v2200 = vpop.f32.mrf.mxu0
      %v2201 = vadd.f32 0.0, %v2200
      %v2202 = vpop.f32.mrf.mxu0
      %2203 = vmatprep.mubr.bf16.mxu0 0
      %2204 = vmatmul.mubr.bf16.gmra.mxu0 %v723
      %v2205 = vpop.f32.mrf.mxu0
      %v2206 = vadd.f32 0.0, %v2205
      %v2207 = vpop.f32.mrf.mxu0
      %v2208 = vpop.f32.mrf.mxu0
      %v2209 = vadd.f32 0.0, %v2208
      %v2210 = vpop.f32.mrf.mxu0
      %2211 = vmatprep.mubr.bf16.mxu0 0
      %2212 = vmatmul.mubr.bf16.gmra.mxu0 %v726
      %v2213 = vpop.f32.mrf.mxu0
      %v2214 = vadd.f32 0.0, %v2213
      %v2215 = vpop.f32.mrf.mxu0
      %v2216 = vpop.f32.mrf.mxu0
      %v2217 = vadd.f32 0.0, %v2216
      %v2218 = vpop.f32.mrf.mxu0
      %2219 = vmatprep.mubr.bf16.mxu0 0
      %2220 = vmatmul.mubr.bf16.gmra.mxu0 %v729
      %v2221 = vpop.f32.mrf.mxu0
      %v2222 = vadd.f32 0.0, %v2221
      %v2223 = vpop.f32.mrf.mxu0
      %v2224 = vpop.f32.mrf.mxu0
      %v2225 = vadd.f32 0.0, %v2224
      %v2226 = vpop.f32.mrf.mxu0
      %2227 = vmatprep.mubr.bf16.mxu0 0
      %2228 = vmatmul.mubr.bf16.gmra.mxu0 %v732
      %v2229 = vpop.f32.mrf.mxu0
      %v2230 = vadd.f32 0.0, %v2229
      %v2231 = vpop.f32.mrf.mxu0
      %v2232 = vpop.f32.mrf.mxu0
      %v2233 = vadd.f32 0.0, %v2232
      %v2234 = vpop.f32.mrf.mxu0
      %2235 = vmatprep.mubr.bf16.mxu0 0
      %2236 = vmatmul.mubr.bf16.gmra.mxu0 %v735
      %v2237 = vpop.f32.mrf.mxu0
      %v2238 = vadd.f32 0.0, %v2237
      %v2239 = vpop.f32.mrf.mxu0
      %v2240 = vpop.f32.mrf.mxu0
      %v2241 = vadd.f32 0.0, %v2240
      %v2242 = vpop.f32.mrf.mxu0
      %2243 = vmatprep.mubr.bf16.mxu0 0
      %2244 = vmatmul.mubr.bf16.gmra.mxu0 %v738
      %v2245 = vpop.f32.mrf.mxu0
      %v2246 = vadd.f32 0.0, %v2245
      %v2247 = vpop.f32.mrf.mxu0
      %v2248 = vpop.f32.mrf.mxu0
      %v2249 = vadd.f32 0.0, %v2248
      %v2250 = vpop.f32.mrf.mxu0
      %2251 = vmatprep.mubr.bf16.mxu0 0
      %2252 = vmatmul.mubr.bf16.gmra.mxu0 %v741
      %v2253 = vpop.f32.mrf.mxu0
      %v2254 = vadd.f32 0.0, %v2253
      %v2255 = vpop.f32.mrf.mxu0
      %v2256 = vpop.f32.mrf.mxu0
      %v2257 = vadd.f32 0.0, %v2256
      %v2258 = vpop.f32.mrf.mxu0
      %2259 = vmatprep.mubr.bf16.mxu0 0
      %2260 = vmatmul.mubr.bf16.gmra.mxu0 %v744
      %v2261 = vpop.f32.mrf.mxu0
      %v2262 = vadd.f32 0.0, %v2261
      %v2263 = vpop.f32.mrf.mxu0
      %v2264 = vpop.f32.mrf.mxu0
      %v2265 = vadd.f32 0.0, %v2264
      %v2266 = vpop.f32.mrf.mxu0
      %2267 = vmatprep.mubr.bf16.mxu0 0
      %2268 = vmatmul.mubr.bf16.gmra.mxu0 %v747
      %v2269 = vpop.f32.mrf.mxu0
      %v2270 = vadd.f32 0.0, %v2269
      %v2271 = vpop.f32.mrf.mxu0
      %v2272 = vpop.f32.mrf.mxu0
      %v2273 = vadd.f32 0.0, %v2272
      %v2274 = vpop.f32.mrf.mxu0
      %2275 = vmatprep.mubr.bf16.mxu0 0
      %2276 = vmatmul.mubr.bf16.gmra.mxu0 %v750
      %v2277 = vpop.f32.mrf.mxu0
      %v2278 = vadd.f32 0.0, %v2277
      %v2279 = vpop.f32.mrf.mxu0
      %v2280 = vpop.f32.mrf.mxu0
      %v2281 = vadd.f32 0.0, %v2280
      %v2282 = vpop.f32.mrf.mxu0
      %2283 = vmatprep.mubr.bf16.mxu0 0
      %2284 = vmatmul.mubr.bf16.gmra.mxu0 %v753
      %v2285 = vpop.f32.mrf.mxu0
      %v2286 = vadd.f32 0.0, %v2285
      %v2287 = vpop.f32.mrf.mxu0
      %v2288 = vpop.f32.mrf.mxu0
      %v2289 = vadd.f32 0.0, %v2288
      %v2290 = vpop.f32.mrf.mxu0
      %2291 = vmatprep.mubr.bf16.mxu0 0
      %2292 = vmatmul.mubr.bf16.gmra.mxu0 %v756
      %v2293 = vpop.f32.mrf.mxu0
      %v2294 = vadd.f32 0.0, %v2293
      %v2295 = vpop.f32.mrf.mxu0
      %v2296 = vpop.f32.mrf.mxu0
      %v2297 = vadd.f32 0.0, %v2296
      %v2298 = vpop.f32.mrf.mxu0
      %2299 = vmatprep.mubr.bf16.mxu0 0
      %2300 = vmatmul.mubr.bf16.gmra.mxu0 %v759
      %v2301 = vpop.f32.mrf.mxu0
      %v2302 = vadd.f32 0.0, %v2301
      %v2303 = vpop.f32.mrf.mxu0
      %v2304 = vpop.f32.mrf.mxu0
      %v2305 = vadd.f32 0.0, %v2304
      %v2306 = vpop.f32.mrf.mxu0
      %2307 = vmatprep.mubr.bf16.mxu0 0
      %2308 = vmatmul.mubr.bf16.gmra.mxu0 %v762
      %v2309 = vpop.f32.mrf.mxu0
      %v2310 = vadd.f32 0.0, %v2309
      %v2311 = vpop.f32.mrf.mxu0
      %v2312 = vpop.f32.mrf.mxu0
      %v2313 = vadd.f32 0.0, %v2312
      %v2314 = vpop.f32.mrf.mxu0
      %2315 = vmatprep.mubr.bf16.mxu0 0
      %2316 = vmatmul.mubr.bf16.gmra.mxu0 %v765
      %v2317 = vpop.f32.mrf.mxu0
      %v2318 = vadd.f32 0.0, %v2317
      %v2319 = vpop.f32.mrf.mxu0
      %v2320 = vpop.f32.mrf.mxu0
      %v2321 = vadd.f32 0.0, %v2320
      %v2322 = vpop.f32.mrf.mxu0
      %2323 = vmatprep.mubr.bf16.mxu0 0
      %2324 = vmatmul.mubr.bf16.gmra.mxu0 %v768
      %v2325 = vpop.f32.mrf.mxu0
      %v2326 = vadd.f32 0.0, %v2325
      %v2327 = vpop.f32.mrf.mxu0
      %v2328 = vpop.f32.mrf.mxu0
      %v2329 = vadd.f32 0.0, %v2328
      %v2330 = vpop.f32.mrf.mxu0
      %2331 = vmatprep.mubr.bf16.mxu0 0
      %2332 = vmatmul.mubr.bf16.gmra.mxu0 %v771
      %v2333 = vpop.f32.mrf.mxu0
      %v2334 = vadd.f32 0.0, %v2333
      %v2335 = vpop.f32.mrf.mxu0
      %v2336 = vpop.f32.mrf.mxu0
      %v2337 = vadd.f32 0.0, %v2336
      %v2338 = vpop.f32.mrf.mxu0
      %2339 = vmatprep.mubr.bf16.mxu0 0
      %2340 = vmatmul.mubr.bf16.gmra.mxu0 %v774
      %v2341 = vpop.f32.mrf.mxu0
      %v2342 = vadd.f32 0.0, %v2341
      %v2343 = vpop.f32.mrf.mxu0
      %v2344 = vpop.f32.mrf.mxu0
      %v2345 = vadd.f32 0.0, %v2344
      %v2346 = vpop.f32.mrf.mxu0
      %2347 = vmatprep.mubr.bf16.mxu0 0
      %2348 = vmatmul.mubr.bf16.gmra.mxu0 %v777
      %v2349 = vpop.f32.mrf.mxu0
      %v2350 = vadd.f32 0.0, %v2349
      %v2351 = vpop.f32.mrf.mxu0
      %v2352 = vpop.f32.mrf.mxu0
      %v2353 = vadd.f32 0.0, %v2352
      %v2354 = vpop.f32.mrf.mxu0
      %2355 = vmatprep.mubr.bf16.mxu0 0
      %2356 = vmatmul.mubr.bf16.gmra.mxu0 %v780
      %v2357 = vpop.f32.mrf.mxu0
      %v2358 = vadd.f32 0.0, %v2357
      %v2359 = vpop.f32.mrf.mxu0
      %v2360 = vpop.f32.mrf.mxu0
      %v2361 = vadd.f32 0.0, %v2360
      %v2362 = vpop.f32.mrf.mxu0
      %2363 = vmatprep.mubr.bf16.mxu0 0
      %2364 = vmatmul.mubr.bf16.gmra.mxu0 %v783
      %v2365 = vpop.f32.mrf.mxu0
      %v2366 = vadd.f32 0.0, %v2365
      %v2367 = vpop.f32.mrf.mxu0
      %v2368 = vpop.f32.mrf.mxu0
      %v2369 = vadd.f32 0.0, %v2368
      %v2370 = vpop.f32.mrf.mxu0
      %2371 = vmatprep.mubr.bf16.mxu0 0
      %2372 = vmatmul.mubr.bf16.gmra.mxu0 %v786
      %v2373 = vpop.f32.mrf.mxu0
      %v2374 = vadd.f32 0.0, %v2373
      %v2375 = vpop.f32.mrf.mxu0
      %v2376 = vpop.f32.mrf.mxu0
      %v2377 = vadd.f32 0.0, %v2376
      %v2378 = vpop.f32.mrf.mxu0
      %2379 = vmatprep.mubr.bf16.mxu0 0
      %2380 = vmatmul.mubr.bf16.gmra.mxu0 %v789
      %v2381 = vpop.f32.mrf.mxu0
      %v2382 = vadd.f32 0.0, %v2381
      %v2383 = vpop.f32.mrf.mxu0
      %v2384 = vpop.f32.mrf.mxu0
      %v2385 = vadd.f32 0.0, %v2384
      %v2386 = vpop.f32.mrf.mxu0
      %2387 = vmatprep.mubr.bf16.mxu0 0
      %2388 = vmatmul.mubr.bf16.gmra.mxu0 %v792
      %v2389 = vpop.f32.mrf.mxu0
      %v2390 = vadd.f32 0.0, %v2389
      %v2391 = vpop.f32.mrf.mxu0
      %v2392 = vpop.f32.mrf.mxu0
      %v2393 = vadd.f32 0.0, %v2392
      %v2394 = vpop.f32.mrf.mxu0
      %2395 = vmatprep.mubr.bf16.mxu0 0
      %2396 = vmatmul.mubr.bf16.gmra.mxu0 %v795
      %v2397 = vpop.f32.mrf.mxu0
      %v2398 = vadd.f32 0.0, %v2397
      %v2399 = vpop.f32.mrf.mxu0
      %v2400 = vpop.f32.mrf.mxu0
      %v2401 = vadd.f32 0.0, %v2400
      %v2402 = vpop.f32.mrf.mxu0
      %2403 = vmatprep.mubr.bf16.mxu0 0
      %2404 = vmatmul.mubr.bf16.gmra.mxu0 %v798
      %v2405 = vpop.f32.mrf.mxu0
      %v2406 = vadd.f32 0.0, %v2405
      %v2407 = vpop.f32.mrf.mxu0
      %v2408 = vpop.f32.mrf.mxu0
      %v2409 = vadd.f32 0.0, %v2408
      %v2410 = vpop.f32.mrf.mxu0
      %2411 = vmatprep.mubr.bf16.mxu0 0
      %2412 = vmatmul.mubr.bf16.gmra.mxu0 %v801
      %v2413 = vpop.f32.mrf.mxu0
      %v2414 = vadd.f32 0.0, %v2413
      %v2415 = vpop.f32.mrf.mxu0
      %v2416 = vpop.f32.mrf.mxu0
      %v2417 = vadd.f32 0.0, %v2416
      %v2418 = vpop.f32.mrf.mxu0
      %2419 = vmatprep.mubr.bf16.mxu0 0
      %2420 = vmatmul.mubr.bf16.gmra.mxu0 %v804
      %v2421 = vpop.f32.mrf.mxu0
      %v2422 = vadd.f32 0.0, %v2421
      %v2423 = vpop.f32.mrf.mxu0
      %v2424 = vpop.f32.mrf.mxu0
      %v2425 = vadd.f32 0.0, %v2424
      %v2426 = vpop.f32.mrf.mxu0
      %2427 = vmatprep.mubr.bf16.mxu0 0
      %2428 = vmatmul.mubr.bf16.gmra.mxu0 %v807
      %v2429 = vpop.f32.mrf.mxu0
      %v2430 = vadd.f32 0.0, %v2429
      %v2431 = vpop.f32.mrf.mxu0
      %v2432 = vpop.f32.mrf.mxu0
      %v2433 = vadd.f32 0.0, %v2432
      %v2434 = vpop.f32.mrf.mxu0
      %2435 = vmatprep.mubr.bf16.mxu0 0
      %2436 = vmatmul.mubr.bf16.gmra.mxu0 %v810
      %v2437 = vpop.f32.mrf.mxu0
      %v2438 = vadd.f32 0.0, %v2437
      %v2439 = vpop.f32.mrf.mxu0
      %v2440 = vpop.f32.mrf.mxu0
      %v2441 = vadd.f32 0.0, %v2440
      %v2442 = vpop.f32.mrf.mxu0
      %2443 = vmatprep.mubr.bf16.mxu0 0
      %2444 = vmatmul.mubr.bf16.gmra.mxu0 %v813
      %v2445 = vpop.f32.mrf.mxu0
      %v2446 = vadd.f32 0.0, %v2445
      %v2447 = vpop.f32.mrf.mxu0
      %v2448 = vpop.f32.mrf.mxu0
      %v2449 = vadd.f32 0.0, %v2448
      %v2450 = vpop.f32.mrf.mxu0
      %2451 = vmatprep.mubr.bf16.mxu0 0
      %2452 = vmatmul.mubr.bf16.gmra.mxu0 %v816
      %v2453 = vpop.f32.mrf.mxu0
      %v2454 = vadd.f32 0.0, %v2453
      %v2455 = vpop.f32.mrf.mxu0
      %v2456 = vpop.f32.mrf.mxu0
      %v2457 = vadd.f32 0.0, %v2456
      %v2458 = vpop.f32.mrf.mxu0
      %2459 = vmatprep.mubr.bf16.mxu0 0
      %2460 = vmatmul.mubr.bf16.gmra.mxu0 %v819
      %v2461 = vpop.f32.mrf.mxu0
      %v2462 = vadd.f32 0.0, %v2461
      %v2463 = vpop.f32.mrf.mxu0
      %v2464 = vpop.f32.mrf.mxu0
      %v2465 = vadd.f32 0.0, %v2464
      %v2466 = vpop.f32.mrf.mxu0
      %2467 = vmatprep.mubr.bf16.mxu0 0
      %2468 = vmatmul.mubr.bf16.gmra.mxu0 %v822
      %v2469 = vpop.f32.mrf.mxu0
      %v2470 = vadd.f32 0.0, %v2469
      %v2471 = vpop.f32.mrf.mxu0
      %v2472 = vpop.f32.mrf.mxu0
      %v2473 = vadd.f32 0.0, %v2472
      %v2474 = vpop.f32.mrf.mxu0
      %2475 = vmatprep.mubr.bf16.mxu0 0
      %2476 = vmatmul.mubr.bf16.gmra.mxu0 %v825
      %v2477 = vpop.f32.mrf.mxu0
      %v2478 = vadd.f32 0.0, %v2477
      %v2479 = vpop.f32.mrf.mxu0
      %v2480 = vpop.f32.mrf.mxu0
      %v2481 = vadd.f32 0.0, %v2480
      %v2482 = vpop.f32.mrf.mxu0
      %2483 = vmatprep.mubr.bf16.mxu0 0
      %2484 = vmatmul.mubr.bf16.gmra.mxu0 %v828
      %v2485 = vpop.f32.mrf.mxu0
      %v2486 = vadd.f32 0.0, %v2485
      %v2487 = vpop.f32.mrf.mxu0
      %v2488 = vpop.f32.mrf.mxu0
      %v2489 = vadd.f32 0.0, %v2488
      %v2490 = vpop.f32.mrf.mxu0
      %2491 = vmatprep.mubr.bf16.mxu0 0
      %2492 = vmatmul.mubr.bf16.gmra.mxu0 %v831
      %v2493 = vpop.f32.mrf.mxu0
      %v2494 = vadd.f32 0.0, %v2493
      %v2495 = vpop.f32.mrf.mxu0
      %v2496 = vpop.f32.mrf.mxu0
      %v2497 = vadd.f32 0.0, %v2496
      %v2498 = vpop.f32.mrf.mxu0
      %2499 = vmatprep.mubr.bf16.mxu0 0
      %2500 = vmatmul.mubr.bf16.gmra.mxu0 %v834
      %v2501 = vpop.f32.mrf.mxu0
      %v2502 = vadd.f32 0.0, %v2501
      %v2503 = vpop.f32.mrf.mxu0
      %v2504 = vpop.f32.mrf.mxu0
      %v2505 = vadd.f32 0.0, %v2504
      %v2506 = vpop.f32.mrf.mxu0
      %2507 = vmatprep.mubr.bf16.mxu0 0
      %2508 = vmatmul.mubr.bf16.gmra.mxu0 %v837
      %v2509 = vpop.f32.mrf.mxu0
      %v2510 = vadd.f32 0.0, %v2509
      %v2511 = vpop.f32.mrf.mxu0
      %v2512 = vpop.f32.mrf.mxu0
      %v2513 = vadd.f32 0.0, %v2512
      %v2514 = vpop.f32.mrf.mxu0
      %2515 = vmatprep.mubr.bf16.mxu0 0
      %2516 = vmatmul.mubr.bf16.gmra.mxu0 %v1979
      %v2517 = vpop.f32.mrf.mxu0
      %v2518 = vadd.f32 0.0, %v2517
      %v2519 = vpop.f32.mrf.mxu0
      %v2520 = vpop.f32.mrf.mxu0
      %v2521 = vadd.f32 0.0, %v2520
      %v2522 = vpop.f32.mrf.mxu0
      %2523 = vmatprep.mubr.bf16.mxu0 0
      %2524 = vmatmul.mubr.bf16.gmra.mxu0 %v1982
      %v2525 = vpop.f32.mrf.mxu0
      %v2526 = vadd.f32 0.0, %v2525
      %v2527 = vpop.f32.mrf.mxu0
      %v2528 = vpop.f32.mrf.mxu0
      %v2529 = vadd.f32 0.0, %v2528
      %v2530 = vpop.f32.mrf.mxu0
      %2531 = vdwg.mxu0
      %v2532 = vadd.f32 %v1450, %v2022
      %v2533 = vadd.f32 %v1453, %v2025
      %v2534 = vadd.f32 %v1458, %v2030
      %v2535 = vadd.f32 %v1461, %v2033
      %v2536 = vadd.f32 %v1466, %v2038
      %v2537 = vadd.f32 %v1469, %v2041
      %v2538 = vadd.f32 %v1474, %v2046
      %v2539 = vadd.f32 %v1477, %v2049
      %v2540 = vadd.f32 %v1482, %v2054
      %v2541 = vadd.f32 %v1485, %v2057
      %v2542 = vadd.f32 %v1490, %v2062
      %v2543 = vadd.f32 %v1493, %v2065
      %v2544 = vadd.f32 %v1498, %v2070
      %v2545 = vadd.f32 %v1501, %v2073
      %v2546 = vadd.f32 %v1506, %v2078
      %v2547 = vadd.f32 %v1509, %v2081
      %v2548 = vadd.f32 %v1514, %v2086
      %v2549 = vadd.f32 %v1517, %v2089
      %v2550 = vadd.f32 %v1522, %v2094
      %v2551 = vadd.f32 %v1525, %v2097
      %v2552 = vadd.f32 %v1530, %v2102
      %v2553 = vadd.f32 %v1533, %v2105
      %v2554 = vadd.f32 %v1538, %v2110
      %v2555 = vadd.f32 %v1541, %v2113
      %v2556 = vadd.f32 %v1546, %v2118
      %v2557 = vadd.f32 %v1549, %v2121
      %v2558 = vadd.f32 %v1554, %v2126
      %v2559 = vadd.f32 %v1557, %v2129
      %v2560 = vadd.f32 %v1562, %v2134
      %v2561 = vadd.f32 %v1565, %v2137
      %v2562 = vadd.f32 %v1570, %v2142
      %v2563 = vadd.f32 %v1573, %v2145
      %v2564 = vadd.f32 %v1578, %v2150
      %v2565 = vadd.f32 %v1581, %v2153
      %v2566 = vadd.f32 %v1586, %v2158
      %v2567 = vadd.f32 %v1589, %v2161
      %v2568 = vadd.f32 %v1594, %v2166
      %v2569 = vadd.f32 %v1597, %v2169
      %v2570 = vadd.f32 %v1602, %v2174
      %v2571 = vadd.f32 %v1605, %v2177
      %v2572 = vadd.f32 %v1610, %v2182
      %v2573 = vadd.f32 %v1613, %v2185
      %v2574 = vadd.f32 %v1618, %v2190
      %v2575 = vadd.f32 %v1621, %v2193
      %v2576 = vadd.f32 %v1626, %v2198
      %v2577 = vadd.f32 %v1629, %v2201
      %v2578 = vadd.f32 %v1634, %v2206
      %v2579 = vadd.f32 %v1637, %v2209
      %v2580 = vadd.f32 %v1642, %v2214
      %v2581 = vadd.f32 %v1645, %v2217
      %v2582 = vadd.f32 %v1650, %v2222
      %v2583 = vadd.f32 %v1653, %v2225
      %v2584 = vadd.f32 %v1658, %v2230
      %v2585 = vadd.f32 %v1661, %v2233
      %v2586 = vadd.f32 %v1666, %v2238
      %v2587 = vadd.f32 %v1669, %v2241
      %v2588 = vadd.f32 %v1674, %v2246
      %v2589 = vadd.f32 %v1677, %v2249
      %v2590 = vadd.f32 %v1682, %v2254
      %v2591 = vadd.f32 %v1685, %v2257
      %v2592 = vadd.f32 %v1690, %v2262
      %v2593 = vadd.f32 %v1693, %v2265
      %v2594 = vadd.f32 %v1698, %v2270
      %v2595 = vadd.f32 %v1701, %v2273
      %v2596 = vadd.f32 %v1706, %v2278
      %v2597 = vadd.f32 %v1709, %v2281
      %v2598 = vadd.f32 %v1714, %v2286
      %v2599 = vadd.f32 %v1717, %v2289
      %v2600 = vadd.f32 %v1722, %v2294
      %v2601 = vadd.f32 %v1725, %v2297
      %v2602 = vadd.f32 %v1730, %v2302
      %v2603 = vadd.f32 %v1733, %v2305
      %v2604 = vadd.f32 %v1738, %v2310
      %v2605 = vadd.f32 %v1741, %v2313
      %v2606 = vadd.f32 %v1746, %v2318
      %v2607 = vadd.f32 %v1749, %v2321
      %v2608 = vadd.f32 %v1754, %v2326
      %v2609 = vadd.f32 %v1757, %v2329
      %v2610 = vadd.f32 %v1762, %v2334
      %v2611 = vadd.f32 %v1765, %v2337
      %v2612 = vadd.f32 %v1770, %v2342
      %v2613 = vadd.f32 %v1773, %v2345
      %v2614 = vadd.f32 %v1778, %v2350
      %v2615 = vadd.f32 %v1781, %v2353
      %v2616 = vadd.f32 %v1786, %v2358
      %v2617 = vadd.f32 %v1789, %v2361
      %v2618 = vadd.f32 %v1794, %v2366
      %v2619 = vadd.f32 %v1797, %v2369
      %v2620 = vadd.f32 %v1802, %v2374
      %v2621 = vadd.f32 %v1805, %v2377
      %v2622 = vadd.f32 %v1810, %v2382
      %v2623 = vadd.f32 %v1813, %v2385
      %v2624 = vadd.f32 %v1818, %v2390
      %v2625 = vadd.f32 %v1821, %v2393
      %v2626 = vadd.f32 %v1826, %v2398
      %v2627 = vadd.f32 %v1829, %v2401
      %v2628 = vadd.f32 %v1834, %v2406
      %v2629 = vadd.f32 %v1837, %v2409
      %v2630 = vadd.f32 %v1842, %v2414
      %v2631 = vadd.f32 %v1845, %v2417
      %v2632 = vadd.f32 %v1850, %v2422
      %v2633 = vadd.f32 %v1853, %v2425
      %v2634 = vadd.f32 %v1858, %v2430
      %v2635 = vadd.f32 %v1861, %v2433
      %v2636 = vadd.f32 %v1866, %v2438
      %v2637 = vadd.f32 %v1869, %v2441
      %v2638 = vadd.f32 %v1874, %v2446
      %v2639 = vadd.f32 %v1877, %v2449
      %v2640 = vadd.f32 %v1882, %v2454
      %v2641 = vadd.f32 %v1885, %v2457
      %v2642 = vadd.f32 %v1890, %v2462
      %v2643 = vadd.f32 %v1893, %v2465
      %v2644 = vadd.f32 %v1898, %v2470
      %v2645 = vadd.f32 %v1901, %v2473
      %v2646 = vadd.f32 %v1906, %v2478
      %v2647 = vadd.f32 %v1909, %v2481
      %v2648 = vadd.f32 %v1914, %v2486
      %v2649 = vadd.f32 %v1917, %v2489
      %v2650 = vadd.f32 %v1922, %v2494
      %v2651 = vadd.f32 %v1925, %v2497
      %v2652 = vadd.f32 %v1930, %v2502
      %v2653 = vadd.f32 %v1933, %v2505
      %v2654 = vadd.f32 %v1938, %v2510
      %v2655 = vadd.f32 %v1941, %v2513
      %v2656 = vadd.f32 %v1946, %v2518
      %v2657 = vadd.f32 %v1949, %v2521
      %v2658 = vadd.f32 %v1954, %v2526
      %v2659 = vadd.f32 %v1957, %v2529
      %s2660 = scalar_lea.vmem %s1, 24
      %v2661 = vld [vmem:[%s2660] sm:$0xf]
      %v2662 = vld [vmem:[%s2660 + $0x4] sm:$0xf]
      %v2667 = vunpack.c.l.b16 %v308
      %v2668 = vunpack.c.l.b16 %v309
      %v2669 = vunpack.c.l.b16 %v310
      %v2670 = vunpack.c.l.b16 %v311
      %v2671 = vpack.c.b16 %v2668, %v2667
      %v2672 = vpack.c.b16 %v2670, %v2669
      %v2675 = vunpack.c.l.b16 %v2661
      %v2676 = vunpack.c.l.b16 %v2662
      %v2677 = vpack.c.b16 %v2676, %v2675
      %v2679 = vsel %vm646, %v2671, 0
      %v2682 = vsel %vm646, %v2672, 0
      %v2685 = vand.u32 %v2677, %v842
      %2687 = vmatprep.subr.bf16.mxu0 0
      %2688 = vmatpush1.bf16.msra.mxu0 0
      %2689 = vmatprep.subr.bf16.mxu0 0
      %2690 = vmatpush1.bf16.msra.mxu0 0
      %2691 = vmatprep.subr.bf16.mxu0 0
      %2692 = vmatpush1.bf16.msra.mxu0 0
      %2693 = vmatprep.subr.bf16.mxu0 0
      %2694 = vmatpush1.bf16.msra.mxu0 0
      %2695 = vmatprep.subr.bf16.mxu0 0
      %2696 = vmatpush1.bf16.msra.mxu0 0
      %2697 = vmatprep.subr.bf16.mxu0 0
      %2698 = vmatpush1.bf16.msra.mxu0 0
      %2699 = vmatprep.subr.bf16.mxu0 0
      %2700 = vmatpush1.bf16.msra.mxu0 0
      %2701 = vmatprep.subr.bf16.mxu0 0
      %2702 = vmatpush1.bf16.msra.mxu0 %v2685
      %2703 = vmatprep.subr.bf16.mxu0 0
      %2704 = vmatpush2.bf16.msra.mxu0 0
      %2705 = vmatprep.subr.bf16.mxu0 0
      %2706 = vmatpush2.bf16.msra.mxu0 0
      %2707 = vmatprep.subr.bf16.mxu0 0
      %2708 = vmatpush2.bf16.msra.mxu0 0
      %2709 = vmatprep.subr.bf16.mxu0 0
      %2710 = vmatpush2.bf16.msra.mxu0 0
      %2711 = vmatprep.subr.bf16.mxu0 0
      %2712 = vmatpush2.bf16.msra.mxu0 0
      %2713 = vmatprep.subr.bf16.mxu0 0
      %2714 = vmatpush2.bf16.msra.mxu0 0
      %2715 = vmatprep.subr.bf16.mxu0 0
      %2716 = vmatpush2.bf16.msra.mxu0 0
      %2717 = vmatprep.subr.bf16.mxu0 0
      %2718 = vmatpush2.bf16.msra.mxu0 0
      %2719 = vmatprep.mubr.bf16.mxu0 0
      %2720 = vmatmul.mubr.bf16.gmra.mxu0 %v660
      %v2721 = vpop.f32.mrf.mxu0
      %v2722 = vadd.f32 0.0, %v2721
      %v2723 = vpop.f32.mrf.mxu0
      %v2724 = vpop.f32.mrf.mxu0
      %v2725 = vadd.f32 0.0, %v2724
      %v2726 = vpop.f32.mrf.mxu0
      %2727 = vmatprep.mubr.bf16.mxu0 0
      %2728 = vmatmul.mubr.bf16.gmra.mxu0 %v663
      %v2729 = vpop.f32.mrf.mxu0
      %v2730 = vadd.f32 0.0, %v2729
      %v2731 = vpop.f32.mrf.mxu0
      %v2732 = vpop.f32.mrf.mxu0
      %v2733 = vadd.f32 0.0, %v2732
      %v2734 = vpop.f32.mrf.mxu0
      %2735 = vmatprep.mubr.bf16.mxu0 0
      %2736 = vmatmul.mubr.bf16.gmra.mxu0 %v666
      %v2737 = vpop.f32.mrf.mxu0
      %v2738 = vadd.f32 0.0, %v2737
      %v2739 = vpop.f32.mrf.mxu0
      %v2740 = vpop.f32.mrf.mxu0
      %v2741 = vadd.f32 0.0, %v2740
      %v2742 = vpop.f32.mrf.mxu0
      %2743 = vmatprep.mubr.bf16.mxu0 0
      %2744 = vmatmul.mubr.bf16.gmra.mxu0 %v669
      %v2745 = vpop.f32.mrf.mxu0
      %v2746 = vadd.f32 0.0, %v2745
      %v2747 = vpop.f32.mrf.mxu0
      %v2748 = vpop.f32.mrf.mxu0
      %v2749 = vadd.f32 0.0, %v2748
      %v2750 = vpop.f32.mrf.mxu0
      %2751 = vmatprep.mubr.bf16.mxu0 0
      %2752 = vmatmul.mubr.bf16.gmra.mxu0 %v672
      %v2753 = vpop.f32.mrf.mxu0
      %v2754 = vadd.f32 0.0, %v2753
      %v2755 = vpop.f32.mrf.mxu0
      %v2756 = vpop.f32.mrf.mxu0
      %v2757 = vadd.f32 0.0, %v2756
      %v2758 = vpop.f32.mrf.mxu0
      %2759 = vmatprep.mubr.bf16.mxu0 0
      %2760 = vmatmul.mubr.bf16.gmra.mxu0 %v675
      %v2761 = vpop.f32.mrf.mxu0
      %v2762 = vadd.f32 0.0, %v2761
      %v2763 = vpop.f32.mrf.mxu0
      %v2764 = vpop.f32.mrf.mxu0
      %v2765 = vadd.f32 0.0, %v2764
      %v2766 = vpop.f32.mrf.mxu0
      %2767 = vmatprep.mubr.bf16.mxu0 0
      %2768 = vmatmul.mubr.bf16.gmra.mxu0 %v678
      %v2769 = vpop.f32.mrf.mxu0
      %v2770 = vadd.f32 0.0, %v2769
      %v2771 = vpop.f32.mrf.mxu0
      %v2772 = vpop.f32.mrf.mxu0
      %v2773 = vadd.f32 0.0, %v2772
      %v2774 = vpop.f32.mrf.mxu0
      %2775 = vmatprep.mubr.bf16.mxu0 0
      %2776 = vmatmul.mubr.bf16.gmra.mxu0 %v681
      %v2777 = vpop.f32.mrf.mxu0
      %v2778 = vadd.f32 0.0, %v2777
      %v2779 = vpop.f32.mrf.mxu0
      %v2780 = vpop.f32.mrf.mxu0
      %v2781 = vadd.f32 0.0, %v2780
      %v2782 = vpop.f32.mrf.mxu0
      %2783 = vmatprep.mubr.bf16.mxu0 0
      %2784 = vmatmul.mubr.bf16.gmra.mxu0 %v684
      %v2785 = vpop.f32.mrf.mxu0
      %v2786 = vadd.f32 0.0, %v2785
      %v2787 = vpop.f32.mrf.mxu0
      %v2788 = vpop.f32.mrf.mxu0
      %v2789 = vadd.f32 0.0, %v2788
      %v2790 = vpop.f32.mrf.mxu0
      %2791 = vmatprep.mubr.bf16.mxu0 0
      %2792 = vmatmul.mubr.bf16.gmra.mxu0 %v687
      %v2793 = vpop.f32.mrf.mxu0
      %v2794 = vadd.f32 0.0, %v2793
      %v2795 = vpop.f32.mrf.mxu0
      %v2796 = vpop.f32.mrf.mxu0
      %v2797 = vadd.f32 0.0, %v2796
      %v2798 = vpop.f32.mrf.mxu0
      %2799 = vmatprep.mubr.bf16.mxu0 0
      %2800 = vmatmul.mubr.bf16.gmra.mxu0 %v690
      %v2801 = vpop.f32.mrf.mxu0
      %v2802 = vadd.f32 0.0, %v2801
      %v2803 = vpop.f32.mrf.mxu0
      %v2804 = vpop.f32.mrf.mxu0
      %v2805 = vadd.f32 0.0, %v2804
      %v2806 = vpop.f32.mrf.mxu0
      %2807 = vmatprep.mubr.bf16.mxu0 0
      %2808 = vmatmul.mubr.bf16.gmra.mxu0 %v693
      %v2809 = vpop.f32.mrf.mxu0
      %v2810 = vadd.f32 0.0, %v2809
      %v2811 = vpop.f32.mrf.mxu0
      %v2812 = vpop.f32.mrf.mxu0
      %v2813 = vadd.f32 0.0, %v2812
      %v2814 = vpop.f32.mrf.mxu0
      %2815 = vmatprep.mubr.bf16.mxu0 0
      %2816 = vmatmul.mubr.bf16.gmra.mxu0 %v696
      %v2817 = vpop.f32.mrf.mxu0
      %v2818 = vadd.f32 0.0, %v2817
      %v2819 = vpop.f32.mrf.mxu0
      %v2820 = vpop.f32.mrf.mxu0
      %v2821 = vadd.f32 0.0, %v2820
      %v2822 = vpop.f32.mrf.mxu0
      %2823 = vmatprep.mubr.bf16.mxu0 0
      %2824 = vmatmul.mubr.bf16.gmra.mxu0 %v699
      %v2825 = vpop.f32.mrf.mxu0
      %v2826 = vadd.f32 0.0, %v2825
      %v2827 = vpop.f32.mrf.mxu0
      %v2828 = vpop.f32.mrf.mxu0
      %v2829 = vadd.f32 0.0, %v2828
      %v2830 = vpop.f32.mrf.mxu0
      %2831 = vmatprep.mubr.bf16.mxu0 0
      %2832 = vmatmul.mubr.bf16.gmra.mxu0 %v702
      %v2833 = vpop.f32.mrf.mxu0
      %v2834 = vadd.f32 0.0, %v2833
      %v2835 = vpop.f32.mrf.mxu0
      %v2836 = vpop.f32.mrf.mxu0
      %v2837 = vadd.f32 0.0, %v2836
      %v2838 = vpop.f32.mrf.mxu0
      %2839 = vmatprep.mubr.bf16.mxu0 0
      %2840 = vmatmul.mubr.bf16.gmra.mxu0 %v705
      %v2841 = vpop.f32.mrf.mxu0
      %v2842 = vadd.f32 0.0, %v2841
      %v2843 = vpop.f32.mrf.mxu0
      %v2844 = vpop.f32.mrf.mxu0
      %v2845 = vadd.f32 0.0, %v2844
      %v2846 = vpop.f32.mrf.mxu0
      %2847 = vmatprep.mubr.bf16.mxu0 0
      %2848 = vmatmul.mubr.bf16.gmra.mxu0 %v708
      %v2849 = vpop.f32.mrf.mxu0
      %v2850 = vadd.f32 0.0, %v2849
      %v2851 = vpop.f32.mrf.mxu0
      %v2852 = vpop.f32.mrf.mxu0
      %v2853 = vadd.f32 0.0, %v2852
      %v2854 = vpop.f32.mrf.mxu0
      %2855 = vmatprep.mubr.bf16.mxu0 0
      %2856 = vmatmul.mubr.bf16.gmra.mxu0 %v711
      %v2857 = vpop.f32.mrf.mxu0
      %v2858 = vadd.f32 0.0, %v2857
      %v2859 = vpop.f32.mrf.mxu0
      %v2860 = vpop.f32.mrf.mxu0
      %v2861 = vadd.f32 0.0, %v2860
      %v2862 = vpop.f32.mrf.mxu0
      %2863 = vmatprep.mubr.bf16.mxu0 0
      %2864 = vmatmul.mubr.bf16.gmra.mxu0 %v714
      %v2865 = vpop.f32.mrf.mxu0
      %v2866 = vadd.f32 0.0, %v2865
      %v2867 = vpop.f32.mrf.mxu0
      %v2868 = vpop.f32.mrf.mxu0
      %v2869 = vadd.f32 0.0, %v2868
      %v2870 = vpop.f32.mrf.mxu0
      %2871 = vmatprep.mubr.bf16.mxu0 0
      %2872 = vmatmul.mubr.bf16.gmra.mxu0 %v717
      %v2873 = vpop.f32.mrf.mxu0
      %v2874 = vadd.f32 0.0, %v2873
      %v2875 = vpop.f32.mrf.mxu0
      %v2876 = vpop.f32.mrf.mxu0
      %v2877 = vadd.f32 0.0, %v2876
      %v2878 = vpop.f32.mrf.mxu0
      %2879 = vmatprep.mubr.bf16.mxu0 0
      %2880 = vmatmul.mubr.bf16.gmra.mxu0 %v720
      %v2881 = vpop.f32.mrf.mxu0
      %v2882 = vadd.f32 0.0, %v2881
      %v2883 = vpop.f32.mrf.mxu0
      %v2884 = vpop.f32.mrf.mxu0
      %v2885 = vadd.f32 0.0, %v2884
      %v2886 = vpop.f32.mrf.mxu0
      %2887 = vmatprep.mubr.bf16.mxu0 0
      %2888 = vmatmul.mubr.bf16.gmra.mxu0 %v723
      %v2889 = vpop.f32.mrf.mxu0
      %v2890 = vadd.f32 0.0, %v2889
      %v2891 = vpop.f32.mrf.mxu0
      %v2892 = vpop.f32.mrf.mxu0
      %v2893 = vadd.f32 0.0, %v2892
      %v2894 = vpop.f32.mrf.mxu0
      %2895 = vmatprep.mubr.bf16.mxu0 0
      %2896 = vmatmul.mubr.bf16.gmra.mxu0 %v726
      %v2897 = vpop.f32.mrf.mxu0
      %v2898 = vadd.f32 0.0, %v2897
      %v2899 = vpop.f32.mrf.mxu0
      %v2900 = vpop.f32.mrf.mxu0
      %v2901 = vadd.f32 0.0, %v2900
      %v2902 = vpop.f32.mrf.mxu0
      %2903 = vmatprep.mubr.bf16.mxu0 0
      %2904 = vmatmul.mubr.bf16.gmra.mxu0 %v729
      %v2905 = vpop.f32.mrf.mxu0
      %v2906 = vadd.f32 0.0, %v2905
      %v2907 = vpop.f32.mrf.mxu0
      %v2908 = vpop.f32.mrf.mxu0
      %v2909 = vadd.f32 0.0, %v2908
      %v2910 = vpop.f32.mrf.mxu0
      %2911 = vmatprep.mubr.bf16.mxu0 0
      %2912 = vmatmul.mubr.bf16.gmra.mxu0 %v732
      %v2913 = vpop.f32.mrf.mxu0
      %v2914 = vadd.f32 0.0, %v2913
      %v2915 = vpop.f32.mrf.mxu0
      %v2916 = vpop.f32.mrf.mxu0
      %v2917 = vadd.f32 0.0, %v2916
      %v2918 = vpop.f32.mrf.mxu0
      %2919 = vmatprep.mubr.bf16.mxu0 0
      %2920 = vmatmul.mubr.bf16.gmra.mxu0 %v735
      %v2921 = vpop.f32.mrf.mxu0
      %v2922 = vadd.f32 0.0, %v2921
      %v2923 = vpop.f32.mrf.mxu0
      %v2924 = vpop.f32.mrf.mxu0
      %v2925 = vadd.f32 0.0, %v2924
      %v2926 = vpop.f32.mrf.mxu0
      %2927 = vmatprep.mubr.bf16.mxu0 0
      %2928 = vmatmul.mubr.bf16.gmra.mxu0 %v738
      %v2929 = vpop.f32.mrf.mxu0
      %v2930 = vadd.f32 0.0, %v2929
      %v2931 = vpop.f32.mrf.mxu0
      %v2932 = vpop.f32.mrf.mxu0
      %v2933 = vadd.f32 0.0, %v2932
      %v2934 = vpop.f32.mrf.mxu0
      %2935 = vmatprep.mubr.bf16.mxu0 0
      %2936 = vmatmul.mubr.bf16.gmra.mxu0 %v741
      %v2937 = vpop.f32.mrf.mxu0
      %v2938 = vadd.f32 0.0, %v2937
      %v2939 = vpop.f32.mrf.mxu0
      %v2940 = vpop.f32.mrf.mxu0
      %v2941 = vadd.f32 0.0, %v2940
      %v2942 = vpop.f32.mrf.mxu0
      %2943 = vmatprep.mubr.bf16.mxu0 0
      %2944 = vmatmul.mubr.bf16.gmra.mxu0 %v744
      %v2945 = vpop.f32.mrf.mxu0
      %v2946 = vadd.f32 0.0, %v2945
      %v2947 = vpop.f32.mrf.mxu0
      %v2948 = vpop.f32.mrf.mxu0
      %v2949 = vadd.f32 0.0, %v2948
      %v2950 = vpop.f32.mrf.mxu0
      %2951 = vmatprep.mubr.bf16.mxu0 0
      %2952 = vmatmul.mubr.bf16.gmra.mxu0 %v747
      %v2953 = vpop.f32.mrf.mxu0
      %v2954 = vadd.f32 0.0, %v2953
      %v2955 = vpop.f32.mrf.mxu0
      %v2956 = vpop.f32.mrf.mxu0
      %v2957 = vadd.f32 0.0, %v2956
      %v2958 = vpop.f32.mrf.mxu0
      %2959 = vmatprep.mubr.bf16.mxu0 0
      %2960 = vmatmul.mubr.bf16.gmra.mxu0 %v750
      %v2961 = vpop.f32.mrf.mxu0
      %v2962 = vadd.f32 0.0, %v2961
      %v2963 = vpop.f32.mrf.mxu0
      %v2964 = vpop.f32.mrf.mxu0
      %v2965 = vadd.f32 0.0, %v2964
      %v2966 = vpop.f32.mrf.mxu0
      %2967 = vmatprep.mubr.bf16.mxu0 0
      %2968 = vmatmul.mubr.bf16.gmra.mxu0 %v753
      %v2969 = vpop.f32.mrf.mxu0
      %v2970 = vadd.f32 0.0, %v2969
      %v2971 = vpop.f32.mrf.mxu0
      %v2972 = vpop.f32.mrf.mxu0
      %v2973 = vadd.f32 0.0, %v2972
      %v2974 = vpop.f32.mrf.mxu0
      %2975 = vmatprep.mubr.bf16.mxu0 0
      %2976 = vmatmul.mubr.bf16.gmra.mxu0 %v756
      %v2977 = vpop.f32.mrf.mxu0
      %v2978 = vadd.f32 0.0, %v2977
      %v2979 = vpop.f32.mrf.mxu0
      %v2980 = vpop.f32.mrf.mxu0
      %v2981 = vadd.f32 0.0, %v2980
      %v2982 = vpop.f32.mrf.mxu0
      %2983 = vmatprep.mubr.bf16.mxu0 0
      %2984 = vmatmul.mubr.bf16.gmra.mxu0 %v759
      %v2985 = vpop.f32.mrf.mxu0
      %v2986 = vadd.f32 0.0, %v2985
      %v2987 = vpop.f32.mrf.mxu0
      %v2988 = vpop.f32.mrf.mxu0
      %v2989 = vadd.f32 0.0, %v2988
      %v2990 = vpop.f32.mrf.mxu0
      %2991 = vmatprep.mubr.bf16.mxu0 0
      %2992 = vmatmul.mubr.bf16.gmra.mxu0 %v762
      %v2993 = vpop.f32.mrf.mxu0
      %v2994 = vadd.f32 0.0, %v2993
      %v2995 = vpop.f32.mrf.mxu0
      %v2996 = vpop.f32.mrf.mxu0
      %v2997 = vadd.f32 0.0, %v2996
      %v2998 = vpop.f32.mrf.mxu0
      %2999 = vmatprep.mubr.bf16.mxu0 0
      %3000 = vmatmul.mubr.bf16.gmra.mxu0 %v765
      %v3001 = vpop.f32.mrf.mxu0
      %v3002 = vadd.f32 0.0, %v3001
      %v3003 = vpop.f32.mrf.mxu0
      %v3004 = vpop.f32.mrf.mxu0
      %v3005 = vadd.f32 0.0, %v3004
      %v3006 = vpop.f32.mrf.mxu0
      %3007 = vmatprep.mubr.bf16.mxu0 0
      %3008 = vmatmul.mubr.bf16.gmra.mxu0 %v768
      %v3009 = vpop.f32.mrf.mxu0
      %v3010 = vadd.f32 0.0, %v3009
      %v3011 = vpop.f32.mrf.mxu0
      %v3012 = vpop.f32.mrf.mxu0
      %v3013 = vadd.f32 0.0, %v3012
      %v3014 = vpop.f32.mrf.mxu0
      %3015 = vmatprep.mubr.bf16.mxu0 0
      %3016 = vmatmul.mubr.bf16.gmra.mxu0 %v771
      %v3017 = vpop.f32.mrf.mxu0
      %v3018 = vadd.f32 0.0, %v3017
      %v3019 = vpop.f32.mrf.mxu0
      %v3020 = vpop.f32.mrf.mxu0
      %v3021 = vadd.f32 0.0, %v3020
      %v3022 = vpop.f32.mrf.mxu0
      %3023 = vmatprep.mubr.bf16.mxu0 0
      %3024 = vmatmul.mubr.bf16.gmra.mxu0 %v774
      %v3025 = vpop.f32.mrf.mxu0
      %v3026 = vadd.f32 0.0, %v3025
      %v3027 = vpop.f32.mrf.mxu0
      %v3028 = vpop.f32.mrf.mxu0
      %v3029 = vadd.f32 0.0, %v3028
      %v3030 = vpop.f32.mrf.mxu0
      %3031 = vmatprep.mubr.bf16.mxu0 0
      %3032 = vmatmul.mubr.bf16.gmra.mxu0 %v777
      %v3033 = vpop.f32.mrf.mxu0
      %v3034 = vadd.f32 0.0, %v3033
      %v3035 = vpop.f32.mrf.mxu0
      %v3036 = vpop.f32.mrf.mxu0
      %v3037 = vadd.f32 0.0, %v3036
      %v3038 = vpop.f32.mrf.mxu0
      %3039 = vmatprep.mubr.bf16.mxu0 0
      %3040 = vmatmul.mubr.bf16.gmra.mxu0 %v780
      %v3041 = vpop.f32.mrf.mxu0
      %v3042 = vadd.f32 0.0, %v3041
      %v3043 = vpop.f32.mrf.mxu0
      %v3044 = vpop.f32.mrf.mxu0
      %v3045 = vadd.f32 0.0, %v3044
      %v3046 = vpop.f32.mrf.mxu0
      %3047 = vmatprep.mubr.bf16.mxu0 0
      %3048 = vmatmul.mubr.bf16.gmra.mxu0 %v783
      %v3049 = vpop.f32.mrf.mxu0
      %v3050 = vadd.f32 0.0, %v3049
      %v3051 = vpop.f32.mrf.mxu0
      %v3052 = vpop.f32.mrf.mxu0
      %v3053 = vadd.f32 0.0, %v3052
      %v3054 = vpop.f32.mrf.mxu0
      %3055 = vmatprep.mubr.bf16.mxu0 0
      %3056 = vmatmul.mubr.bf16.gmra.mxu0 %v786
      %v3057 = vpop.f32.mrf.mxu0
      %v3058 = vadd.f32 0.0, %v3057
      %v3059 = vpop.f32.mrf.mxu0
      %v3060 = vpop.f32.mrf.mxu0
      %v3061 = vadd.f32 0.0, %v3060
      %v3062 = vpop.f32.mrf.mxu0
      %3063 = vmatprep.mubr.bf16.mxu0 0
      %3064 = vmatmul.mubr.bf16.gmra.mxu0 %v789
      %v3065 = vpop.f32.mrf.mxu0
      %v3066 = vadd.f32 0.0, %v3065
      %v3067 = vpop.f32.mrf.mxu0
      %v3068 = vpop.f32.mrf.mxu0
      %v3069 = vadd.f32 0.0, %v3068
      %v3070 = vpop.f32.mrf.mxu0
      %3071 = vmatprep.mubr.bf16.mxu0 0
      %3072 = vmatmul.mubr.bf16.gmra.mxu0 %v792
      %v3073 = vpop.f32.mrf.mxu0
      %v3074 = vadd.f32 0.0, %v3073
      %v3075 = vpop.f32.mrf.mxu0
      %v3076 = vpop.f32.mrf.mxu0
      %v3077 = vadd.f32 0.0, %v3076
      %v3078 = vpop.f32.mrf.mxu0
      %3079 = vmatprep.mubr.bf16.mxu0 0
      %3080 = vmatmul.mubr.bf16.gmra.mxu0 %v795
      %v3081 = vpop.f32.mrf.mxu0
      %v3082 = vadd.f32 0.0, %v3081
      %v3083 = vpop.f32.mrf.mxu0
      %v3084 = vpop.f32.mrf.mxu0
      %v3085 = vadd.f32 0.0, %v3084
      %v3086 = vpop.f32.mrf.mxu0
      %3087 = vmatprep.mubr.bf16.mxu0 0
      %3088 = vmatmul.mubr.bf16.gmra.mxu0 %v798
      %v3089 = vpop.f32.mrf.mxu0
      %v3090 = vadd.f32 0.0, %v3089
      %v3091 = vpop.f32.mrf.mxu0
      %v3092 = vpop.f32.mrf.mxu0
      %v3093 = vadd.f32 0.0, %v3092
      %v3094 = vpop.f32.mrf.mxu0
      %3095 = vmatprep.mubr.bf16.mxu0 0
      %3096 = vmatmul.mubr.bf16.gmra.mxu0 %v801
      %v3097 = vpop.f32.mrf.mxu0
      %v3098 = vadd.f32 0.0, %v3097
      %v3099 = vpop.f32.mrf.mxu0
      %v3100 = vpop.f32.mrf.mxu0
      %v3101 = vadd.f32 0.0, %v3100
      %v3102 = vpop.f32.mrf.mxu0
      %3103 = vmatprep.mubr.bf16.mxu0 0
      %3104 = vmatmul.mubr.bf16.gmra.mxu0 %v804
      %v3105 = vpop.f32.mrf.mxu0
      %v3106 = vadd.f32 0.0, %v3105
      %v3107 = vpop.f32.mrf.mxu0
      %v3108 = vpop.f32.mrf.mxu0
      %v3109 = vadd.f32 0.0, %v3108
      %v3110 = vpop.f32.mrf.mxu0
      %3111 = vmatprep.mubr.bf16.mxu0 0
      %3112 = vmatmul.mubr.bf16.gmra.mxu0 %v807
      %v3113 = vpop.f32.mrf.mxu0
      %v3114 = vadd.f32 0.0, %v3113
      %v3115 = vpop.f32.mrf.mxu0
      %v3116 = vpop.f32.mrf.mxu0
      %v3117 = vadd.f32 0.0, %v3116
      %v3118 = vpop.f32.mrf.mxu0
      %3119 = vmatprep.mubr.bf16.mxu0 0
      %3120 = vmatmul.mubr.bf16.gmra.mxu0 %v810
      %v3121 = vpop.f32.mrf.mxu0
      %v3122 = vadd.f32 0.0, %v3121
      %v3123 = vpop.f32.mrf.mxu0
      %v3124 = vpop.f32.mrf.mxu0
      %v3125 = vadd.f32 0.0, %v3124
      %v3126 = vpop.f32.mrf.mxu0
      %3127 = vmatprep.mubr.bf16.mxu0 0
      %3128 = vmatmul.mubr.bf16.gmra.mxu0 %v813
      %v3129 = vpop.f32.mrf.mxu0
      %v3130 = vadd.f32 0.0, %v3129
      %v3131 = vpop.f32.mrf.mxu0
      %v3132 = vpop.f32.mrf.mxu0
      %v3133 = vadd.f32 0.0, %v3132
      %v3134 = vpop.f32.mrf.mxu0
      %3135 = vmatprep.mubr.bf16.mxu0 0
      %3136 = vmatmul.mubr.bf16.gmra.mxu0 %v816
      %v3137 = vpop.f32.mrf.mxu0
      %v3138 = vadd.f32 0.0, %v3137
      %v3139 = vpop.f32.mrf.mxu0
      %v3140 = vpop.f32.mrf.mxu0
      %v3141 = vadd.f32 0.0, %v3140
      %v3142 = vpop.f32.mrf.mxu0
      %3143 = vmatprep.mubr.bf16.mxu0 0
      %3144 = vmatmul.mubr.bf16.gmra.mxu0 %v819
      %v3145 = vpop.f32.mrf.mxu0
      %v3146 = vadd.f32 0.0, %v3145
      %v3147 = vpop.f32.mrf.mxu0
      %v3148 = vpop.f32.mrf.mxu0
      %v3149 = vadd.f32 0.0, %v3148
      %v3150 = vpop.f32.mrf.mxu0
      %3151 = vmatprep.mubr.bf16.mxu0 0
      %3152 = vmatmul.mubr.bf16.gmra.mxu0 %v822
      %v3153 = vpop.f32.mrf.mxu0
      %v3154 = vadd.f32 0.0, %v3153
      %v3155 = vpop.f32.mrf.mxu0
      %v3156 = vpop.f32.mrf.mxu0
      %v3157 = vadd.f32 0.0, %v3156
      %v3158 = vpop.f32.mrf.mxu0
      %3159 = vmatprep.mubr.bf16.mxu0 0
      %3160 = vmatmul.mubr.bf16.gmra.mxu0 %v825
      %v3161 = vpop.f32.mrf.mxu0
      %v3162 = vadd.f32 0.0, %v3161
      %v3163 = vpop.f32.mrf.mxu0
      %v3164 = vpop.f32.mrf.mxu0
      %v3165 = vadd.f32 0.0, %v3164
      %v3166 = vpop.f32.mrf.mxu0
      %3167 = vmatprep.mubr.bf16.mxu0 0
      %3168 = vmatmul.mubr.bf16.gmra.mxu0 %v828
      %v3169 = vpop.f32.mrf.mxu0
      %v3170 = vadd.f32 0.0, %v3169
      %v3171 = vpop.f32.mrf.mxu0
      %v3172 = vpop.f32.mrf.mxu0
      %v3173 = vadd.f32 0.0, %v3172
      %v3174 = vpop.f32.mrf.mxu0
      %3175 = vmatprep.mubr.bf16.mxu0 0
      %3176 = vmatmul.mubr.bf16.gmra.mxu0 %v831
      %v3177 = vpop.f32.mrf.mxu0
      %v3178 = vadd.f32 0.0, %v3177
      %v3179 = vpop.f32.mrf.mxu0
      %v3180 = vpop.f32.mrf.mxu0
      %v3181 = vadd.f32 0.0, %v3180
      %v3182 = vpop.f32.mrf.mxu0
      %3183 = vmatprep.mubr.bf16.mxu0 0
      %3184 = vmatmul.mubr.bf16.gmra.mxu0 %v834
      %v3185 = vpop.f32.mrf.mxu0
      %v3186 = vadd.f32 0.0, %v3185
      %v3187 = vpop.f32.mrf.mxu0
      %v3188 = vpop.f32.mrf.mxu0
      %v3189 = vadd.f32 0.0, %v3188
      %v3190 = vpop.f32.mrf.mxu0
      %3191 = vmatprep.mubr.bf16.mxu0 0
      %3192 = vmatmul.mubr.bf16.gmra.mxu0 %v837
      %v3193 = vpop.f32.mrf.mxu0
      %v3194 = vadd.f32 0.0, %v3193
      %v3195 = vpop.f32.mrf.mxu0
      %v3196 = vpop.f32.mrf.mxu0
      %v3197 = vadd.f32 0.0, %v3196
      %v3198 = vpop.f32.mrf.mxu0
      %3199 = vmatprep.mubr.bf16.mxu0 0
      %3200 = vmatmul.mubr.bf16.gmra.mxu0 %v1979
      %v3201 = vpop.f32.mrf.mxu0
      %v3202 = vadd.f32 0.0, %v3201
      %v3203 = vpop.f32.mrf.mxu0
      %v3204 = vpop.f32.mrf.mxu0
      %v3205 = vadd.f32 0.0, %v3204
      %v3206 = vpop.f32.mrf.mxu0
      %3207 = vmatprep.mubr.bf16.mxu0 0
      %3208 = vmatmul.mubr.bf16.gmra.mxu0 %v1982
      %v3209 = vpop.f32.mrf.mxu0
      %v3210 = vadd.f32 0.0, %v3209
      %v3211 = vpop.f32.mrf.mxu0
      %v3212 = vpop.f32.mrf.mxu0
      %v3213 = vadd.f32 0.0, %v3212
      %v3214 = vpop.f32.mrf.mxu0
      %3215 = vmatprep.mubr.bf16.mxu0 0
      %3216 = vmatmul.mubr.bf16.gmra.mxu0 %v2679
      %v3217 = vpop.f32.mrf.mxu0
      %v3218 = vadd.f32 0.0, %v3217
      %v3219 = vpop.f32.mrf.mxu0
      %v3220 = vpop.f32.mrf.mxu0
      %v3221 = vadd.f32 0.0, %v3220
      %v3222 = vpop.f32.mrf.mxu0
      %3223 = vmatprep.mubr.bf16.mxu0 0
      %3224 = vmatmul.mubr.bf16.gmra.mxu0 %v2682
      %v3225 = vpop.f32.mrf.mxu0
      %v3226 = vadd.f32 0.0, %v3225
      %v3227 = vpop.f32.mrf.mxu0
      %v3228 = vpop.f32.mrf.mxu0
      %v3229 = vadd.f32 0.0, %v3228
      %v3230 = vpop.f32.mrf.mxu0
      %3231 = vdwg.mxu0
      %v3232 = vadd.f32 %v2532, %v2722
      %v3233 = vadd.f32 %v2533, %v2725
      %v3234 = vadd.f32 %v2534, %v2730
      %v3235 = vadd.f32 %v2535, %v2733
      %v3236 = vadd.f32 %v2536, %v2738
      %v3237 = vadd.f32 %v2537, %v2741
      %v3238 = vadd.f32 %v2538, %v2746
      %v3239 = vadd.f32 %v2539, %v2749
      %v3240 = vadd.f32 %v2540, %v2754
      %v3241 = vadd.f32 %v2541, %v2757
      %v3242 = vadd.f32 %v2542, %v2762
      %v3243 = vadd.f32 %v2543, %v2765
      %v3244 = vadd.f32 %v2544, %v2770
      %v3245 = vadd.f32 %v2545, %v2773
      %v3246 = vadd.f32 %v2546, %v2778
      %v3247 = vadd.f32 %v2547, %v2781
      %v3248 = vadd.f32 %v2548, %v2786
      %v3249 = vadd.f32 %v2549, %v2789
      %v3250 = vadd.f32 %v2550, %v2794
      %v3251 = vadd.f32 %v2551, %v2797
      %v3252 = vadd.f32 %v2552, %v2802
      %v3253 = vadd.f32 %v2553, %v2805
      %v3254 = vadd.f32 %v2554, %v2810
      %v3255 = vadd.f32 %v2555, %v2813
      %v3256 = vadd.f32 %v2556, %v2818
      %v3257 = vadd.f32 %v2557, %v2821
      %v3258 = vadd.f32 %v2558, %v2826
      %v3259 = vadd.f32 %v2559, %v2829
      %v3260 = vadd.f32 %v2560, %v2834
      %v3261 = vadd.f32 %v2561, %v2837
      %v3262 = vadd.f32 %v2562, %v2842
      %v3263 = vadd.f32 %v2563, %v2845
      %v3264 = vadd.f32 %v2564, %v2850
      %v3265 = vadd.f32 %v2565, %v2853
      %v3266 = vadd.f32 %v2566, %v2858
      %v3267 = vadd.f32 %v2567, %v2861
      %v3268 = vadd.f32 %v2568, %v2866
      %v3269 = vadd.f32 %v2569, %v2869
      %v3270 = vadd.f32 %v2570, %v2874
      %v3271 = vadd.f32 %v2571, %v2877
      %v3272 = vadd.f32 %v2572, %v2882
      %v3273 = vadd.f32 %v2573, %v2885
      %v3274 = vadd.f32 %v2574, %v2890
      %v3275 = vadd.f32 %v2575, %v2893
      %v3276 = vadd.f32 %v2576, %v2898
      %v3277 = vadd.f32 %v2577, %v2901
      %v3278 = vadd.f32 %v2578, %v2906
      %v3279 = vadd.f32 %v2579, %v2909
      %v3280 = vadd.f32 %v2580, %v2914
      %v3281 = vadd.f32 %v2581, %v2917
      %v3282 = vadd.f32 %v2582, %v2922
      %v3283 = vadd.f32 %v2583, %v2925
      %v3284 = vadd.f32 %v2584, %v2930
      %v3285 = vadd.f32 %v2585, %v2933
      %v3286 = vadd.f32 %v2586, %v2938
      %v3287 = vadd.f32 %v2587, %v2941
      %v3288 = vadd.f32 %v2588, %v2946
      %v3289 = vadd.f32 %v2589, %v2949
      %v3290 = vadd.f32 %v2590, %v2954
      %v3291 = vadd.f32 %v2591, %v2957
      %v3292 = vadd.f32 %v2592, %v2962
      %v3293 = vadd.f32 %v2593, %v2965
      %v3294 = vadd.f32 %v2594, %v2970
      %v3295 = vadd.f32 %v2595, %v2973
      %v3296 = vadd.f32 %v2596, %v2978
      %v3297 = vadd.f32 %v2597, %v2981
      %v3298 = vadd.f32 %v2598, %v2986
      %v3299 = vadd.f32 %v2599, %v2989
      %v3300 = vadd.f32 %v2600, %v2994
      %v3301 = vadd.f32 %v2601, %v2997
      %v3302 = vadd.f32 %v2602, %v3002
      %v3303 = vadd.f32 %v2603, %v3005
      %v3304 = vadd.f32 %v2604, %v3010
      %v3305 = vadd.f32 %v2605, %v3013
      %v3306 = vadd.f32 %v2606, %v3018
      %v3307 = vadd.f32 %v2607, %v3021
      %v3308 = vadd.f32 %v2608, %v3026
      %v3309 = vadd.f32 %v2609, %v3029
      %v3310 = vadd.f32 %v2610, %v3034
      %v3311 = vadd.f32 %v2611, %v3037
      %v3312 = vadd.f32 %v2612, %v3042
      %v3313 = vadd.f32 %v2613, %v3045
      %v3314 = vadd.f32 %v2614, %v3050
      %v3315 = vadd.f32 %v2615, %v3053
      %v3316 = vadd.f32 %v2616, %v3058
      %v3317 = vadd.f32 %v2617, %v3061
      %v3318 = vadd.f32 %v2618, %v3066
      %v3319 = vadd.f32 %v2619, %v3069
      %v3320 = vadd.f32 %v2620, %v3074
      %v3321 = vadd.f32 %v2621, %v3077
      %v3322 = vadd.f32 %v2622, %v3082
      %v3323 = vadd.f32 %v2623, %v3085
      %v3324 = vadd.f32 %v2624, %v3090
      %v3325 = vadd.f32 %v2625, %v3093
      %v3326 = vadd.f32 %v2626, %v3098
      %v3327 = vadd.f32 %v2627, %v3101
      %v3328 = vadd.f32 %v2628, %v3106
      %v3329 = vadd.f32 %v2629, %v3109
      %v3330 = vadd.f32 %v2630, %v3114
      %v3331 = vadd.f32 %v2631, %v3117
      %v3332 = vadd.f32 %v2632, %v3122
      %v3333 = vadd.f32 %v2633, %v3125
      %v3334 = vadd.f32 %v2634, %v3130
      %v3335 = vadd.f32 %v2635, %v3133
      %v3336 = vadd.f32 %v2636, %v3138
      %v3337 = vadd.f32 %v2637, %v3141
      %v3338 = vadd.f32 %v2638, %v3146
      %v3339 = vadd.f32 %v2639, %v3149
      %v3340 = vadd.f32 %v2640, %v3154
      %v3341 = vadd.f32 %v2641, %v3157
      %v3342 = vadd.f32 %v2642, %v3162
      %v3343 = vadd.f32 %v2643, %v3165
      %v3344 = vadd.f32 %v2644, %v3170
      %v3345 = vadd.f32 %v2645, %v3173
      %v3346 = vadd.f32 %v2646, %v3178
      %v3347 = vadd.f32 %v2647, %v3181
      %v3348 = vadd.f32 %v2648, %v3186
      %v3349 = vadd.f32 %v2649, %v3189
      %v3350 = vadd.f32 %v2650, %v3194
      %v3351 = vadd.f32 %v2651, %v3197
      %v3352 = vadd.f32 %v2652, %v3202
      %v3353 = vadd.f32 %v2653, %v3205
      %v3354 = vadd.f32 %v2654, %v3210
      %v3355 = vadd.f32 %v2655, %v3213
      %v3356 = vadd.f32 %v2656, %v3218
      %v3357 = vadd.f32 %v2657, %v3221
      %v3358 = vadd.f32 %v2658, %v3226
      %v3359 = vadd.f32 %v2659, %v3229
      %s3360 = scalar_lea.vmem %s1, 32
      %v3361 = vld [vmem:[%s3360] sm:$0xf]
      %v3362 = vld [vmem:[%s3360 + $0x4] sm:$0xf]
      %v3367 = vunpack.c.l.b16 %v312
      %v3368 = vunpack.c.l.b16 %v313
      %v3369 = vunpack.c.l.b16 %v314
      %v3370 = vunpack.c.l.b16 %v315
      %v3371 = vpack.c.b16 %v3368, %v3367
      %v3372 = vpack.c.b16 %v3370, %v3369
      %v3375 = vunpack.c.l.b16 %v3361
      %v3376 = vunpack.c.l.b16 %v3362
      %v3377 = vpack.c.b16 %v3376, %v3375
      %v3379 = vsel %vm646, %v3371, 0
      %v3382 = vsel %vm646, %v3372, 0
      %v3385 = vand.u32 %v3377, %v842
      %3387 = vmatprep.subr.bf16.mxu0 0
      %3388 = vmatpush1.bf16.msra.mxu0 0
      %3389 = vmatprep.subr.bf16.mxu0 0
      %3390 = vmatpush1.bf16.msra.mxu0 0
      %3391 = vmatprep.subr.bf16.mxu0 0
      %3392 = vmatpush1.bf16.msra.mxu0 0
      %3393 = vmatprep.subr.bf16.mxu0 0
      %3394 = vmatpush1.bf16.msra.mxu0 0
      %3395 = vmatprep.subr.bf16.mxu0 0
      %3396 = vmatpush1.bf16.msra.mxu0 0
      %3397 = vmatprep.subr.bf16.mxu0 0
      %3398 = vmatpush1.bf16.msra.mxu0 0
      %3399 = vmatprep.subr.bf16.mxu0 0
      %3400 = vmatpush1.bf16.msra.mxu0 0
      %3401 = vmatprep.subr.bf16.mxu0 0
      %3402 = vmatpush1.bf16.msra.mxu0 %v3385
      %3403 = vmatprep.subr.bf16.mxu0 0
      %3404 = vmatpush2.bf16.msra.mxu0 0
      %3405 = vmatprep.subr.bf16.mxu0 0
      %3406 = vmatpush2.bf16.msra.mxu0 0
      %3407 = vmatprep.subr.bf16.mxu0 0
      %3408 = vmatpush2.bf16.msra.mxu0 0
      %3409 = vmatprep.subr.bf16.mxu0 0
      %3410 = vmatpush2.bf16.msra.mxu0 0
      %3411 = vmatprep.subr.bf16.mxu0 0
      %3412 = vmatpush2.bf16.msra.mxu0 0
      %3413 = vmatprep.subr.bf16.mxu0 0
      %3414 = vmatpush2.bf16.msra.mxu0 0
      %3415 = vmatprep.subr.bf16.mxu0 0
      %3416 = vmatpush2.bf16.msra.mxu0 0
      %3417 = vmatprep.subr.bf16.mxu0 0
      %3418 = vmatpush2.bf16.msra.mxu0 0
      %3419 = vmatprep.mubr.bf16.mxu0 0
      %3420 = vmatmul.mubr.bf16.gmra.mxu0 %v666
      %v3421 = vpop.f32.mrf.mxu0
      %v3422 = vadd.f32 0.0, %v3421
      %v3423 = vpop.f32.mrf.mxu0
      %v3424 = vpop.f32.mrf.mxu0
      %v3425 = vadd.f32 0.0, %v3424
      %v3426 = vpop.f32.mrf.mxu0
      %3427 = vmatprep.mubr.bf16.mxu0 0
      %3428 = vmatmul.mubr.bf16.gmra.mxu0 %v669
      %v3429 = vpop.f32.mrf.mxu0
      %v3430 = vadd.f32 0.0, %v3429
      %v3431 = vpop.f32.mrf.mxu0
      %v3432 = vpop.f32.mrf.mxu0
      %v3433 = vadd.f32 0.0, %v3432
      %v3434 = vpop.f32.mrf.mxu0
      %3435 = vmatprep.mubr.bf16.mxu0 0
      %3436 = vmatmul.mubr.bf16.gmra.mxu0 %v672
      %v3437 = vpop.f32.mrf.mxu0
      %v3438 = vadd.f32 0.0, %v3437
      %v3439 = vpop.f32.mrf.mxu0
      %v3440 = vpop.f32.mrf.mxu0
      %v3441 = vadd.f32 0.0, %v3440
      %v3442 = vpop.f32.mrf.mxu0
      %3443 = vmatprep.mubr.bf16.mxu0 0
      %3444 = vmatmul.mubr.bf16.gmra.mxu0 %v675
      %v3445 = vpop.f32.mrf.mxu0
      %v3446 = vadd.f32 0.0, %v3445
      %v3447 = vpop.f32.mrf.mxu0
      %v3448 = vpop.f32.mrf.mxu0
      %v3449 = vadd.f32 0.0, %v3448
      %v3450 = vpop.f32.mrf.mxu0
      %3451 = vmatprep.mubr.bf16.mxu0 0
      %3452 = vmatmul.mubr.bf16.gmra.mxu0 %v678
      %v3453 = vpop.f32.mrf.mxu0
      %v3454 = vadd.f32 0.0, %v3453
      %v3455 = vpop.f32.mrf.mxu0
      %v3456 = vpop.f32.mrf.mxu0
      %v3457 = vadd.f32 0.0, %v3456
      %v3458 = vpop.f32.mrf.mxu0
      %3459 = vmatprep.mubr.bf16.mxu0 0
      %3460 = vmatmul.mubr.bf16.gmra.mxu0 %v681
      %v3461 = vpop.f32.mrf.mxu0
      %v3462 = vadd.f32 0.0, %v3461
      %v3463 = vpop.f32.mrf.mxu0
      %v3464 = vpop.f32.mrf.mxu0
      %v3465 = vadd.f32 0.0, %v3464
      %v3466 = vpop.f32.mrf.mxu0
      %3467 = vmatprep.mubr.bf16.mxu0 0
      %3468 = vmatmul.mubr.bf16.gmra.mxu0 %v684
      %v3469 = vpop.f32.mrf.mxu0
      %v3470 = vadd.f32 0.0, %v3469
      %v3471 = vpop.f32.mrf.mxu0
      %v3472 = vpop.f32.mrf.mxu0
      %v3473 = vadd.f32 0.0, %v3472
      %v3474 = vpop.f32.mrf.mxu0
      %3475 = vmatprep.mubr.bf16.mxu0 0
      %3476 = vmatmul.mubr.bf16.gmra.mxu0 %v687
      %v3477 = vpop.f32.mrf.mxu0
      %v3478 = vadd.f32 0.0, %v3477
      %v3479 = vpop.f32.mrf.mxu0
      %v3480 = vpop.f32.mrf.mxu0
      %v3481 = vadd.f32 0.0, %v3480
      %v3482 = vpop.f32.mrf.mxu0
      %3483 = vmatprep.mubr.bf16.mxu0 0
      %3484 = vmatmul.mubr.bf16.gmra.mxu0 %v690
      %v3485 = vpop.f32.mrf.mxu0
      %v3486 = vadd.f32 0.0, %v3485
      %v3487 = vpop.f32.mrf.mxu0
      %v3488 = vpop.f32.mrf.mxu0
      %v3489 = vadd.f32 0.0, %v3488
      %v3490 = vpop.f32.mrf.mxu0
      %3491 = vmatprep.mubr.bf16.mxu0 0
      %3492 = vmatmul.mubr.bf16.gmra.mxu0 %v693
      %v3493 = vpop.f32.mrf.mxu0
      %v3494 = vadd.f32 0.0, %v3493
      %v3495 = vpop.f32.mrf.mxu0
      %v3496 = vpop.f32.mrf.mxu0
      %v3497 = vadd.f32 0.0, %v3496
      %v3498 = vpop.f32.mrf.mxu0
      %3499 = vmatprep.mubr.bf16.mxu0 0
      %3500 = vmatmul.mubr.bf16.gmra.mxu0 %v696
      %v3501 = vpop.f32.mrf.mxu0
      %v3502 = vadd.f32 0.0, %v3501
      %v3503 = vpop.f32.mrf.mxu0
      %v3504 = vpop.f32.mrf.mxu0
      %v3505 = vadd.f32 0.0, %v3504
      %v3506 = vpop.f32.mrf.mxu0
      %3507 = vmatprep.mubr.bf16.mxu0 0
      %3508 = vmatmul.mubr.bf16.gmra.mxu0 %v699
      %v3509 = vpop.f32.mrf.mxu0
      %v3510 = vadd.f32 0.0, %v3509
      %v3511 = vpop.f32.mrf.mxu0
      %v3512 = vpop.f32.mrf.mxu0
      %v3513 = vadd.f32 0.0, %v3512
      %v3514 = vpop.f32.mrf.mxu0
      %3515 = vmatprep.mubr.bf16.mxu0 0
      %3516 = vmatmul.mubr.bf16.gmra.mxu0 %v702
      %v3517 = vpop.f32.mrf.mxu0
      %v3518 = vadd.f32 0.0, %v3517
      %v3519 = vpop.f32.mrf.mxu0
      %v3520 = vpop.f32.mrf.mxu0
      %v3521 = vadd.f32 0.0, %v3520
      %v3522 = vpop.f32.mrf.mxu0
      %3523 = vmatprep.mubr.bf16.mxu0 0
      %3524 = vmatmul.mubr.bf16.gmra.mxu0 %v705
      %v3525 = vpop.f32.mrf.mxu0
      %v3526 = vadd.f32 0.0, %v3525
      %v3527 = vpop.f32.mrf.mxu0
      %v3528 = vpop.f32.mrf.mxu0
      %v3529 = vadd.f32 0.0, %v3528
      %v3530 = vpop.f32.mrf.mxu0
      %3531 = vmatprep.mubr.bf16.mxu0 0
      %3532 = vmatmul.mubr.bf16.gmra.mxu0 %v708
      %v3533 = vpop.f32.mrf.mxu0
      %v3534 = vadd.f32 0.0, %v3533
      %v3535 = vpop.f32.mrf.mxu0
      %v3536 = vpop.f32.mrf.mxu0
      %v3537 = vadd.f32 0.0, %v3536
      %v3538 = vpop.f32.mrf.mxu0
      %3539 = vmatprep.mubr.bf16.mxu0 0
      %3540 = vmatmul.mubr.bf16.gmra.mxu0 %v711
      %v3541 = vpop.f32.mrf.mxu0
      %v3542 = vadd.f32 0.0, %v3541
      %v3543 = vpop.f32.mrf.mxu0
      %v3544 = vpop.f32.mrf.mxu0
      %v3545 = vadd.f32 0.0, %v3544
      %v3546 = vpop.f32.mrf.mxu0
      %3547 = vmatprep.mubr.bf16.mxu0 0
      %3548 = vmatmul.mubr.bf16.gmra.mxu0 %v714
      %v3549 = vpop.f32.mrf.mxu0
      %v3550 = vadd.f32 0.0, %v3549
      %v3551 = vpop.f32.mrf.mxu0
      %v3552 = vpop.f32.mrf.mxu0
      %v3553 = vadd.f32 0.0, %v3552
      %v3554 = vpop.f32.mrf.mxu0
      %3555 = vmatprep.mubr.bf16.mxu0 0
      %3556 = vmatmul.mubr.bf16.gmra.mxu0 %v717
      %v3557 = vpop.f32.mrf.mxu0
      %v3558 = vadd.f32 0.0, %v3557
      %v3559 = vpop.f32.mrf.mxu0
      %v3560 = vpop.f32.mrf.mxu0
      %v3561 = vadd.f32 0.0, %v3560
      %v3562 = vpop.f32.mrf.mxu0
      %3563 = vmatprep.mubr.bf16.mxu0 0
      %3564 = vmatmul.mubr.bf16.gmra.mxu0 %v720
      %v3565 = vpop.f32.mrf.mxu0
      %v3566 = vadd.f32 0.0, %v3565
      %v3567 = vpop.f32.mrf.mxu0
      %v3568 = vpop.f32.mrf.mxu0
      %v3569 = vadd.f32 0.0, %v3568
      %v3570 = vpop.f32.mrf.mxu0
      %3571 = vmatprep.mubr.bf16.mxu0 0
      %3572 = vmatmul.mubr.bf16.gmra.mxu0 %v723
      %v3573 = vpop.f32.mrf.mxu0
      %v3574 = vadd.f32 0.0, %v3573
      %v3575 = vpop.f32.mrf.mxu0
      %v3576 = vpop.f32.mrf.mxu0
      %v3577 = vadd.f32 0.0, %v3576
      %v3578 = vpop.f32.mrf.mxu0
      %3579 = vmatprep.mubr.bf16.mxu0 0
      %3580 = vmatmul.mubr.bf16.gmra.mxu0 %v726
      %v3581 = vpop.f32.mrf.mxu0
      %v3582 = vadd.f32 0.0, %v3581
      %v3583 = vpop.f32.mrf.mxu0
      %v3584 = vpop.f32.mrf.mxu0
      %v3585 = vadd.f32 0.0, %v3584
      %v3586 = vpop.f32.mrf.mxu0
      %3587 = vmatprep.mubr.bf16.mxu0 0
      %3588 = vmatmul.mubr.bf16.gmra.mxu0 %v729
      %v3589 = vpop.f32.mrf.mxu0
      %v3590 = vadd.f32 0.0, %v3589
      %v3591 = vpop.f32.mrf.mxu0
      %v3592 = vpop.f32.mrf.mxu0
      %v3593 = vadd.f32 0.0, %v3592
      %v3594 = vpop.f32.mrf.mxu0
      %3595 = vmatprep.mubr.bf16.mxu0 0
      %3596 = vmatmul.mubr.bf16.gmra.mxu0 %v732
      %v3597 = vpop.f32.mrf.mxu0
      %v3598 = vadd.f32 0.0, %v3597
      %v3599 = vpop.f32.mrf.mxu0
      %v3600 = vpop.f32.mrf.mxu0
      %v3601 = vadd.f32 0.0, %v3600
      %v3602 = vpop.f32.mrf.mxu0
      %3603 = vmatprep.mubr.bf16.mxu0 0
      %3604 = vmatmul.mubr.bf16.gmra.mxu0 %v735
      %v3605 = vpop.f32.mrf.mxu0
      %v3606 = vadd.f32 0.0, %v3605
      %v3607 = vpop.f32.mrf.mxu0
      %v3608 = vpop.f32.mrf.mxu0
      %v3609 = vadd.f32 0.0, %v3608
      %v3610 = vpop.f32.mrf.mxu0
      %3611 = vmatprep.mubr.bf16.mxu0 0
      %3612 = vmatmul.mubr.bf16.gmra.mxu0 %v738
      %v3613 = vpop.f32.mrf.mxu0
      %v3614 = vadd.f32 0.0, %v3613
      %v3615 = vpop.f32.mrf.mxu0
      %v3616 = vpop.f32.mrf.mxu0
      %v3617 = vadd.f32 0.0, %v3616
      %v3618 = vpop.f32.mrf.mxu0
      %3619 = vmatprep.mubr.bf16.mxu0 0
      %3620 = vmatmul.mubr.bf16.gmra.mxu0 %v741
      %v3621 = vpop.f32.mrf.mxu0
      %v3622 = vadd.f32 0.0, %v3621
      %v3623 = vpop.f32.mrf.mxu0
      %v3624 = vpop.f32.mrf.mxu0
      %v3625 = vadd.f32 0.0, %v3624
      %v3626 = vpop.f32.mrf.mxu0
      %3627 = vmatprep.mubr.bf16.mxu0 0
      %3628 = vmatmul.mubr.bf16.gmra.mxu0 %v744
      %v3629 = vpop.f32.mrf.mxu0
      %v3630 = vadd.f32 0.0, %v3629
      %v3631 = vpop.f32.mrf.mxu0
      %v3632 = vpop.f32.mrf.mxu0
      %v3633 = vadd.f32 0.0, %v3632
      %v3634 = vpop.f32.mrf.mxu0
      %3635 = vmatprep.mubr.bf16.mxu0 0
      %3636 = vmatmul.mubr.bf16.gmra.mxu0 %v747
      %v3637 = vpop.f32.mrf.mxu0
      %v3638 = vadd.f32 0.0, %v3637
      %v3639 = vpop.f32.mrf.mxu0
      %v3640 = vpop.f32.mrf.mxu0
      %v3641 = vadd.f32 0.0, %v3640
      %v3642 = vpop.f32.mrf.mxu0
      %3643 = vmatprep.mubr.bf16.mxu0 0
      %3644 = vmatmul.mubr.bf16.gmra.mxu0 %v750
      %v3645 = vpop.f32.mrf.mxu0
      %v3646 = vadd.f32 0.0, %v3645
      %v3647 = vpop.f32.mrf.mxu0
      %v3648 = vpop.f32.mrf.mxu0
      %v3649 = vadd.f32 0.0, %v3648
      %v3650 = vpop.f32.mrf.mxu0
      %3651 = vmatprep.mubr.bf16.mxu0 0
      %3652 = vmatmul.mubr.bf16.gmra.mxu0 %v753
      %v3653 = vpop.f32.mrf.mxu0
      %v3654 = vadd.f32 0.0, %v3653
      %v3655 = vpop.f32.mrf.mxu0
      %v3656 = vpop.f32.mrf.mxu0
      %v3657 = vadd.f32 0.0, %v3656
      %v3658 = vpop.f32.mrf.mxu0
      %3659 = vmatprep.mubr.bf16.mxu0 0
      %3660 = vmatmul.mubr.bf16.gmra.mxu0 %v756
      %v3661 = vpop.f32.mrf.mxu0
      %v3662 = vadd.f32 0.0, %v3661
      %v3663 = vpop.f32.mrf.mxu0
      %v3664 = vpop.f32.mrf.mxu0
      %v3665 = vadd.f32 0.0, %v3664
      %v3666 = vpop.f32.mrf.mxu0
      %3667 = vmatprep.mubr.bf16.mxu0 0
      %3668 = vmatmul.mubr.bf16.gmra.mxu0 %v759
      %v3669 = vpop.f32.mrf.mxu0
      %v3670 = vadd.f32 0.0, %v3669
      %v3671 = vpop.f32.mrf.mxu0
      %v3672 = vpop.f32.mrf.mxu0
      %v3673 = vadd.f32 0.0, %v3672
      %v3674 = vpop.f32.mrf.mxu0
      %3675 = vmatprep.mubr.bf16.mxu0 0
      %3676 = vmatmul.mubr.bf16.gmra.mxu0 %v762
      %v3677 = vpop.f32.mrf.mxu0
      %v3678 = vadd.f32 0.0, %v3677
      %v3679 = vpop.f32.mrf.mxu0
      %v3680 = vpop.f32.mrf.mxu0
      %v3681 = vadd.f32 0.0, %v3680
      %v3682 = vpop.f32.mrf.mxu0
      %3683 = vmatprep.mubr.bf16.mxu0 0
      %3684 = vmatmul.mubr.bf16.gmra.mxu0 %v765
      %v3685 = vpop.f32.mrf.mxu0
      %v3686 = vadd.f32 0.0, %v3685
      %v3687 = vpop.f32.mrf.mxu0
      %v3688 = vpop.f32.mrf.mxu0
      %v3689 = vadd.f32 0.0, %v3688
      %v3690 = vpop.f32.mrf.mxu0
      %3691 = vmatprep.mubr.bf16.mxu0 0
      %3692 = vmatmul.mubr.bf16.gmra.mxu0 %v768
      %v3693 = vpop.f32.mrf.mxu0
      %v3694 = vadd.f32 0.0, %v3693
      %v3695 = vpop.f32.mrf.mxu0
      %v3696 = vpop.f32.mrf.mxu0
      %v3697 = vadd.f32 0.0, %v3696
      %v3698 = vpop.f32.mrf.mxu0
      %3699 = vmatprep.mubr.bf16.mxu0 0
      %3700 = vmatmul.mubr.bf16.gmra.mxu0 %v771
      %v3701 = vpop.f32.mrf.mxu0
      %v3702 = vadd.f32 0.0, %v3701
      %v3703 = vpop.f32.mrf.mxu0
      %v3704 = vpop.f32.mrf.mxu0
      %v3705 = vadd.f32 0.0, %v3704
      %v3706 = vpop.f32.mrf.mxu0
      %3707 = vmatprep.mubr.bf16.mxu0 0
      %3708 = vmatmul.mubr.bf16.gmra.mxu0 %v774
      %v3709 = vpop.f32.mrf.mxu0
      %v3710 = vadd.f32 0.0, %v3709
      %v3711 = vpop.f32.mrf.mxu0
      %v3712 = vpop.f32.mrf.mxu0
      %v3713 = vadd.f32 0.0, %v3712
      %v3714 = vpop.f32.mrf.mxu0
      %3715 = vmatprep.mubr.bf16.mxu0 0
      %3716 = vmatmul.mubr.bf16.gmra.mxu0 %v777
      %v3717 = vpop.f32.mrf.mxu0
      %v3718 = vadd.f32 0.0, %v3717
      %v3719 = vpop.f32.mrf.mxu0
      %v3720 = vpop.f32.mrf.mxu0
      %v3721 = vadd.f32 0.0, %v3720
      %v3722 = vpop.f32.mrf.mxu0
      %3723 = vmatprep.mubr.bf16.mxu0 0
      %3724 = vmatmul.mubr.bf16.gmra.mxu0 %v780
      %v3725 = vpop.f32.mrf.mxu0
      %v3726 = vadd.f32 0.0, %v3725
      %v3727 = vpop.f32.mrf.mxu0
      %v3728 = vpop.f32.mrf.mxu0
      %v3729 = vadd.f32 0.0, %v3728
      %v3730 = vpop.f32.mrf.mxu0
      %3731 = vmatprep.mubr.bf16.mxu0 0
      %3732 = vmatmul.mubr.bf16.gmra.mxu0 %v783
      %v3733 = vpop.f32.mrf.mxu0
      %v3734 = vadd.f32 0.0, %v3733
      %v3735 = vpop.f32.mrf.mxu0
      %v3736 = vpop.f32.mrf.mxu0
      %v3737 = vadd.f32 0.0, %v3736
      %v3738 = vpop.f32.mrf.mxu0
      %3739 = vmatprep.mubr.bf16.mxu0 0
      %3740 = vmatmul.mubr.bf16.gmra.mxu0 %v786
      %v3741 = vpop.f32.mrf.mxu0
      %v3742 = vadd.f32 0.0, %v3741
      %v3743 = vpop.f32.mrf.mxu0
      %v3744 = vpop.f32.mrf.mxu0
      %v3745 = vadd.f32 0.0, %v3744
      %v3746 = vpop.f32.mrf.mxu0
      %3747 = vmatprep.mubr.bf16.mxu0 0
      %3748 = vmatmul.mubr.bf16.gmra.mxu0 %v789
      %v3749 = vpop.f32.mrf.mxu0
      %v3750 = vadd.f32 0.0, %v3749
      %v3751 = vpop.f32.mrf.mxu0
      %v3752 = vpop.f32.mrf.mxu0
      %v3753 = vadd.f32 0.0, %v3752
      %v3754 = vpop.f32.mrf.mxu0
      %3755 = vmatprep.mubr.bf16.mxu0 0
      %3756 = vmatmul.mubr.bf16.gmra.mxu0 %v792
      %v3757 = vpop.f32.mrf.mxu0
      %v3758 = vadd.f32 0.0, %v3757
      %v3759 = vpop.f32.mrf.mxu0
      %v3760 = vpop.f32.mrf.mxu0
      %v3761 = vadd.f32 0.0, %v3760
      %v3762 = vpop.f32.mrf.mxu0
      %3763 = vmatprep.mubr.bf16.mxu0 0
      %3764 = vmatmul.mubr.bf16.gmra.mxu0 %v795
      %v3765 = vpop.f32.mrf.mxu0
      %v3766 = vadd.f32 0.0, %v3765
      %v3767 = vpop.f32.mrf.mxu0
      %v3768 = vpop.f32.mrf.mxu0
      %v3769 = vadd.f32 0.0, %v3768
      %v3770 = vpop.f32.mrf.mxu0
      %3771 = vmatprep.mubr.bf16.mxu0 0
      %3772 = vmatmul.mubr.bf16.gmra.mxu0 %v798
      %v3773 = vpop.f32.mrf.mxu0
      %v3774 = vadd.f32 0.0, %v3773
      %v3775 = vpop.f32.mrf.mxu0
      %v3776 = vpop.f32.mrf.mxu0
      %v3777 = vadd.f32 0.0, %v3776
      %v3778 = vpop.f32.mrf.mxu0
      %3779 = vmatprep.mubr.bf16.mxu0 0
      %3780 = vmatmul.mubr.bf16.gmra.mxu0 %v801
      %v3781 = vpop.f32.mrf.mxu0
      %v3782 = vadd.f32 0.0, %v3781
      %v3783 = vpop.f32.mrf.mxu0
      %v3784 = vpop.f32.mrf.mxu0
      %v3785 = vadd.f32 0.0, %v3784
      %v3786 = vpop.f32.mrf.mxu0
      %3787 = vmatprep.mubr.bf16.mxu0 0
      %3788 = vmatmul.mubr.bf16.gmra.mxu0 %v804
      %v3789 = vpop.f32.mrf.mxu0
      %v3790 = vadd.f32 0.0, %v3789
      %v3791 = vpop.f32.mrf.mxu0
      %v3792 = vpop.f32.mrf.mxu0
      %v3793 = vadd.f32 0.0, %v3792
      %v3794 = vpop.f32.mrf.mxu0
      %3795 = vmatprep.mubr.bf16.mxu0 0
      %3796 = vmatmul.mubr.bf16.gmra.mxu0 %v807
      %v3797 = vpop.f32.mrf.mxu0
      %v3798 = vadd.f32 0.0, %v3797
      %v3799 = vpop.f32.mrf.mxu0
      %v3800 = vpop.f32.mrf.mxu0
      %v3801 = vadd.f32 0.0, %v3800
      %v3802 = vpop.f32.mrf.mxu0
      %3803 = vmatprep.mubr.bf16.mxu0 0
      %3804 = vmatmul.mubr.bf16.gmra.mxu0 %v810
      %v3805 = vpop.f32.mrf.mxu0
      %v3806 = vadd.f32 0.0, %v3805
      %v3807 = vpop.f32.mrf.mxu0
      %v3808 = vpop.f32.mrf.mxu0
      %v3809 = vadd.f32 0.0, %v3808
      %v3810 = vpop.f32.mrf.mxu0
      %3811 = vmatprep.mubr.bf16.mxu0 0
      %3812 = vmatmul.mubr.bf16.gmra.mxu0 %v813
      %v3813 = vpop.f32.mrf.mxu0
      %v3814 = vadd.f32 0.0, %v3813
      %v3815 = vpop.f32.mrf.mxu0
      %v3816 = vpop.f32.mrf.mxu0
      %v3817 = vadd.f32 0.0, %v3816
      %v3818 = vpop.f32.mrf.mxu0
      %3819 = vmatprep.mubr.bf16.mxu0 0
      %3820 = vmatmul.mubr.bf16.gmra.mxu0 %v816
      %v3821 = vpop.f32.mrf.mxu0
      %v3822 = vadd.f32 0.0, %v3821
      %v3823 = vpop.f32.mrf.mxu0
      %v3824 = vpop.f32.mrf.mxu0
      %v3825 = vadd.f32 0.0, %v3824
      %v3826 = vpop.f32.mrf.mxu0
      %3827 = vmatprep.mubr.bf16.mxu0 0
      %3828 = vmatmul.mubr.bf16.gmra.mxu0 %v819
      %v3829 = vpop.f32.mrf.mxu0
      %v3830 = vadd.f32 0.0, %v3829
      %v3831 = vpop.f32.mrf.mxu0
      %v3832 = vpop.f32.mrf.mxu0
      %v3833 = vadd.f32 0.0, %v3832
      %v3834 = vpop.f32.mrf.mxu0
      %3835 = vmatprep.mubr.bf16.mxu0 0
      %3836 = vmatmul.mubr.bf16.gmra.mxu0 %v822
      %v3837 = vpop.f32.mrf.mxu0
      %v3838 = vadd.f32 0.0, %v3837
      %v3839 = vpop.f32.mrf.mxu0
      %v3840 = vpop.f32.mrf.mxu0
      %v3841 = vadd.f32 0.0, %v3840
      %v3842 = vpop.f32.mrf.mxu0
      %3843 = vmatprep.mubr.bf16.mxu0 0
      %3844 = vmatmul.mubr.bf16.gmra.mxu0 %v825
      %v3845 = vpop.f32.mrf.mxu0
      %v3846 = vadd.f32 0.0, %v3845
      %v3847 = vpop.f32.mrf.mxu0
      %v3848 = vpop.f32.mrf.mxu0
      %v3849 = vadd.f32 0.0, %v3848
      %v3850 = vpop.f32.mrf.mxu0
      %3851 = vmatprep.mubr.bf16.mxu0 0
      %3852 = vmatmul.mubr.bf16.gmra.mxu0 %v828
      %v3853 = vpop.f32.mrf.mxu0
      %v3854 = vadd.f32 0.0, %v3853
      %v3855 = vpop.f32.mrf.mxu0
      %v3856 = vpop.f32.mrf.mxu0
      %v3857 = vadd.f32 0.0, %v3856
      %v3858 = vpop.f32.mrf.mxu0
      %3859 = vmatprep.mubr.bf16.mxu0 0
      %3860 = vmatmul.mubr.bf16.gmra.mxu0 %v831
      %v3861 = vpop.f32.mrf.mxu0
      %v3862 = vadd.f32 0.0, %v3861
      %v3863 = vpop.f32.mrf.mxu0
      %v3864 = vpop.f32.mrf.mxu0
      %v3865 = vadd.f32 0.0, %v3864
      %v3866 = vpop.f32.mrf.mxu0
      %3867 = vmatprep.mubr.bf16.mxu0 0
      %3868 = vmatmul.mubr.bf16.gmra.mxu0 %v834
      %v3869 = vpop.f32.mrf.mxu0
      %v3870 = vadd.f32 0.0, %v3869
      %v3871 = vpop.f32.mrf.mxu0
      %v3872 = vpop.f32.mrf.mxu0
      %v3873 = vadd.f32 0.0, %v3872
      %v3874 = vpop.f32.mrf.mxu0
      %3875 = vmatprep.mubr.bf16.mxu0 0
      %3876 = vmatmul.mubr.bf16.gmra.mxu0 %v837
      %v3877 = vpop.f32.mrf.mxu0
      %v3878 = vadd.f32 0.0, %v3877
      %v3879 = vpop.f32.mrf.mxu0
      %v3880 = vpop.f32.mrf.mxu0
      %v3881 = vadd.f32 0.0, %v3880
      %v3882 = vpop.f32.mrf.mxu0
      %3883 = vmatprep.mubr.bf16.mxu0 0
      %3884 = vmatmul.mubr.bf16.gmra.mxu0 %v1979
      %v3885 = vpop.f32.mrf.mxu0
      %v3886 = vadd.f32 0.0, %v3885
      %v3887 = vpop.f32.mrf.mxu0
      %v3888 = vpop.f32.mrf.mxu0
      %v3889 = vadd.f32 0.0, %v3888
      %v3890 = vpop.f32.mrf.mxu0
      %3891 = vmatprep.mubr.bf16.mxu0 0
      %3892 = vmatmul.mubr.bf16.gmra.mxu0 %v1982
      %v3893 = vpop.f32.mrf.mxu0
      %v3894 = vadd.f32 0.0, %v3893
      %v3895 = vpop.f32.mrf.mxu0
      %v3896 = vpop.f32.mrf.mxu0
      %v3897 = vadd.f32 0.0, %v3896
      %v3898 = vpop.f32.mrf.mxu0
      %3899 = vmatprep.mubr.bf16.mxu0 0
      %3900 = vmatmul.mubr.bf16.gmra.mxu0 %v2679
      %v3901 = vpop.f32.mrf.mxu0
      %v3902 = vadd.f32 0.0, %v3901
      %v3903 = vpop.f32.mrf.mxu0
      %v3904 = vpop.f32.mrf.mxu0
      %v3905 = vadd.f32 0.0, %v3904
      %v3906 = vpop.f32.mrf.mxu0
      %3907 = vmatprep.mubr.bf16.mxu0 0
      %3908 = vmatmul.mubr.bf16.gmra.mxu0 %v2682
      %v3909 = vpop.f32.mrf.mxu0
      %v3910 = vadd.f32 0.0, %v3909
      %v3911 = vpop.f32.mrf.mxu0
      %v3912 = vpop.f32.mrf.mxu0
      %v3913 = vadd.f32 0.0, %v3912
      %v3914 = vpop.f32.mrf.mxu0
      %3915 = vmatprep.mubr.bf16.mxu0 0
      %3916 = vmatmul.mubr.bf16.gmra.mxu0 %v3379
      %v3917 = vpop.f32.mrf.mxu0
      %v3918 = vadd.f32 0.0, %v3917
      %v3919 = vpop.f32.mrf.mxu0
      %v3920 = vpop.f32.mrf.mxu0
      %v3921 = vadd.f32 0.0, %v3920
      %v3922 = vpop.f32.mrf.mxu0
      %3923 = vmatprep.mubr.bf16.mxu0 0
      %3924 = vmatmul.mubr.bf16.gmra.mxu0 %v3382
      %v3925 = vpop.f32.mrf.mxu0
      %v3926 = vadd.f32 0.0, %v3925
      %v3927 = vpop.f32.mrf.mxu0
      %v3928 = vpop.f32.mrf.mxu0
      %v3929 = vadd.f32 0.0, %v3928
      %v3930 = vpop.f32.mrf.mxu0
      %3931 = vdwg.mxu0
      %v3932 = vadd.f32 %v3232, %v3422
      %v3933 = vadd.f32 %v3233, %v3425
      %v3934 = vadd.f32 %v3234, %v3430
      %v3935 = vadd.f32 %v3235, %v3433
      %v3936 = vadd.f32 %v3236, %v3438
      %v3937 = vadd.f32 %v3237, %v3441
      %v3938 = vadd.f32 %v3238, %v3446
      %v3939 = vadd.f32 %v3239, %v3449
      %v3940 = vadd.f32 %v3240, %v3454
      %v3941 = vadd.f32 %v3241, %v3457
      %v3942 = vadd.f32 %v3242, %v3462
      %v3943 = vadd.f32 %v3243, %v3465
      %v3944 = vadd.f32 %v3244, %v3470
      %v3945 = vadd.f32 %v3245, %v3473
      %v3946 = vadd.f32 %v3246, %v3478
      %v3947 = vadd.f32 %v3247, %v3481
      %v3948 = vadd.f32 %v3248, %v3486
      %v3949 = vadd.f32 %v3249, %v3489
      %v3950 = vadd.f32 %v3250, %v3494
      %v3951 = vadd.f32 %v3251, %v3497
      %v3952 = vadd.f32 %v3252, %v3502
      %v3953 = vadd.f32 %v3253, %v3505
      %v3954 = vadd.f32 %v3254, %v3510
      %v3955 = vadd.f32 %v3255, %v3513
      %v3956 = vadd.f32 %v3256, %v3518
      %v3957 = vadd.f32 %v3257, %v3521
      %v3958 = vadd.f32 %v3258, %v3526
      %v3959 = vadd.f32 %v3259, %v3529
      %v3960 = vadd.f32 %v3260, %v3534
      %v3961 = vadd.f32 %v3261, %v3537
      %v3962 = vadd.f32 %v3262, %v3542
      %v3963 = vadd.f32 %v3263, %v3545
      %v3964 = vadd.f32 %v3264, %v3550
      %v3965 = vadd.f32 %v3265, %v3553
      %v3966 = vadd.f32 %v3266, %v3558
      %v3967 = vadd.f32 %v3267, %v3561
      %v3968 = vadd.f32 %v3268, %v3566
      %v3969 = vadd.f32 %v3269, %v3569
      %v3970 = vadd.f32 %v3270, %v3574
      %v3971 = vadd.f32 %v3271, %v3577
      %v3972 = vadd.f32 %v3272, %v3582
      %v3973 = vadd.f32 %v3273, %v3585
      %v3974 = vadd.f32 %v3274, %v3590
      %v3975 = vadd.f32 %v3275, %v3593
      %v3976 = vadd.f32 %v3276, %v3598
      %v3977 = vadd.f32 %v3277, %v3601
      %v3978 = vadd.f32 %v3278, %v3606
      %v3979 = vadd.f32 %v3279, %v3609
      %v3980 = vadd.f32 %v3280, %v3614
      %v3981 = vadd.f32 %v3281, %v3617
      %v3982 = vadd.f32 %v3282, %v3622
      %v3983 = vadd.f32 %v3283, %v3625
      %v3984 = vadd.f32 %v3284, %v3630
      %v3985 = vadd.f32 %v3285, %v3633
      %v3986 = vadd.f32 %v3286, %v3638
      %v3987 = vadd.f32 %v3287, %v3641
      %v3988 = vadd.f32 %v3288, %v3646
      %v3989 = vadd.f32 %v3289, %v3649
      %v3990 = vadd.f32 %v3290, %v3654
      %v3991 = vadd.f32 %v3291, %v3657
      %v3992 = vadd.f32 %v3292, %v3662
      %v3993 = vadd.f32 %v3293, %v3665
      %v3994 = vadd.f32 %v3294, %v3670
      %v3995 = vadd.f32 %v3295, %v3673
      %v3996 = vadd.f32 %v3296, %v3678
      %v3997 = vadd.f32 %v3297, %v3681
      %v3998 = vadd.f32 %v3298, %v3686
      %v3999 = vadd.f32 %v3299, %v3689
      %v4000 = vadd.f32 %v3300, %v3694
      %v4001 = vadd.f32 %v3301, %v3697
      %v4002 = vadd.f32 %v3302, %v3702
      %v4003 = vadd.f32 %v3303, %v3705
      %v4004 = vadd.f32 %v3304, %v3710
      %v4005 = vadd.f32 %v3305, %v3713
      %v4006 = vadd.f32 %v3306, %v3718
      %v4007 = vadd.f32 %v3307, %v3721
      %v4008 = vadd.f32 %v3308, %v3726
      %v4009 = vadd.f32 %v3309, %v3729
      %v4010 = vadd.f32 %v3310, %v3734
      %v4011 = vadd.f32 %v3311, %v3737
      %v4012 = vadd.f32 %v3312, %v3742
      %v4013 = vadd.f32 %v3313, %v3745
      %v4014 = vadd.f32 %v3314, %v3750
      %v4015 = vadd.f32 %v3315, %v3753
      %v4016 = vadd.f32 %v3316, %v3758
      %v4017 = vadd.f32 %v3317, %v3761
      %v4018 = vadd.f32 %v3318, %v3766
      %v4019 = vadd.f32 %v3319, %v3769
      %v4020 = vadd.f32 %v3320, %v3774
      %v4021 = vadd.f32 %v3321, %v3777
      %v4022 = vadd.f32 %v3322, %v3782
      %v4023 = vadd.f32 %v3323, %v3785
      %v4024 = vadd.f32 %v3324, %v3790
      %v4025 = vadd.f32 %v3325, %v3793
      %v4026 = vadd.f32 %v3326, %v3798
      %v4027 = vadd.f32 %v3327, %v3801
      %v4028 = vadd.f32 %v3328, %v3806
      %v4029 = vadd.f32 %v3329, %v3809
      %v4030 = vadd.f32 %v3330, %v3814
      %v4031 = vadd.f32 %v3331, %v3817
      %v4032 = vadd.f32 %v3332, %v3822
      %v4033 = vadd.f32 %v3333, %v3825
      %v4034 = vadd.f32 %v3334, %v3830
      %v4035 = vadd.f32 %v3335, %v3833
      %v4036 = vadd.f32 %v3336, %v3838
      %v4037 = vadd.f32 %v3337, %v3841
      %v4038 = vadd.f32 %v3338, %v3846
      %v4039 = vadd.f32 %v3339, %v3849
      %v4040 = vadd.f32 %v3340, %v3854
      %v4041 = vadd.f32 %v3341, %v3857
      %v4042 = vadd.f32 %v3342, %v3862
      %v4043 = vadd.f32 %v3343, %v3865
      %v4044 = vadd.f32 %v3344, %v3870
      %v4045 = vadd.f32 %v3345, %v3873
      %v4046 = vadd.f32 %v3346, %v3878
      %v4047 = vadd.f32 %v3347, %v3881
      %v4048 = vadd.f32 %v3348, %v3886
      %v4049 = vadd.f32 %v3349, %v3889
      %v4050 = vadd.f32 %v3350, %v3894
      %v4051 = vadd.f32 %v3351, %v3897
      %v4052 = vadd.f32 %v3352, %v3902
      %v4053 = vadd.f32 %v3353, %v3905
      %v4054 = vadd.f32 %v3354, %v3910
      %v4055 = vadd.f32 %v3355, %v3913
      %v4056 = vadd.f32 %v3356, %v3918
      %v4057 = vadd.f32 %v3357, %v3921
      %v4058 = vadd.f32 %v3358, %v3926
      %v4059 = vadd.f32 %v3359, %v3929
      %v4060 = vmax.f32 %v3932, %v3934
      %v4061 = vmax.f32 %v3933, %v3935
      %v4062 = vmax.f32 %v3936, %v3938
      %v4063 = vmax.f32 %v3937, %v3939
      %v4064 = vmax.f32 %v3940, %v3942
      %v4065 = vmax.f32 %v3941, %v3943
      %v4066 = vmax.f32 %v3944, %v3946
      %v4067 = vmax.f32 %v3945, %v3947
      %v4068 = vmax.f32 %v3948, %v3950
      %v4069 = vmax.f32 %v3949, %v3951
      %v4070 = vmax.f32 %v3952, %v3954
      %v4071 = vmax.f32 %v3953, %v3955
      %v4072 = vmax.f32 %v3956, %v3958
      %v4073 = vmax.f32 %v3957, %v3959
      %v4074 = vmax.f32 %v3960, %v3962
      %v4075 = vmax.f32 %v3961, %v3963
      %v4076 = vmax.f32 %v3964, %v3966
      %v4077 = vmax.f32 %v3965, %v3967
      %v4078 = vmax.f32 %v3968, %v3970
      %v4079 = vmax.f32 %v3969, %v3971
      %v4080 = vmax.f32 %v3972, %v3974
      %v4081 = vmax.f32 %v3973, %v3975
      %v4082 = vmax.f32 %v3976, %v3978
      %v4083 = vmax.f32 %v3977, %v3979
      %v4084 = vmax.f32 %v3980, %v3982
      %v4085 = vmax.f32 %v3981, %v3983
      %v4086 = vmax.f32 %v3984, %v3986
      %v4087 = vmax.f32 %v3985, %v3987
      %v4088 = vmax.f32 %v3988, %v3990
      %v4089 = vmax.f32 %v3989, %v3991
      %v4090 = vmax.f32 %v3992, %v3994
      %v4091 = vmax.f32 %v3993, %v3995
      %v4092 = vmax.f32 %v3996, %v3998
      %v4093 = vmax.f32 %v3997, %v3999
      %v4094 = vmax.f32 %v4000, %v4002
      %v4095 = vmax.f32 %v4001, %v4003
      %v4096 = vmax.f32 %v4004, %v4006
      %v4097 = vmax.f32 %v4005, %v4007
      %v4098 = vmax.f32 %v4008, %v4010
      %v4099 = vmax.f32 %v4009, %v4011
      %v4100 = vmax.f32 %v4012, %v4014
      %v4101 = vmax.f32 %v4013, %v4015
      %v4102 = vmax.f32 %v4016, %v4018
      %v4103 = vmax.f32 %v4017, %v4019
      %v4104 = vmax.f32 %v4020, %v4022
      %v4105 = vmax.f32 %v4021, %v4023
      %v4106 = vmax.f32 %v4024, %v4026
      %v4107 = vmax.f32 %v4025, %v4027
      %v4108 = vmax.f32 %v4028, %v4030
      %v4109 = vmax.f32 %v4029, %v4031
      %v4110 = vmax.f32 %v4032, %v4034
      %v4111 = vmax.f32 %v4033, %v4035
      %v4112 = vmax.f32 %v4036, %v4038
      %v4113 = vmax.f32 %v4037, %v4039
      %v4114 = vmax.f32 %v4040, %v4042
      %v4115 = vmax.f32 %v4041, %v4043
      %v4116 = vmax.f32 %v4044, %v4046
      %v4117 = vmax.f32 %v4045, %v4047
      %v4118 = vmax.f32 %v4048, %v4050
      %v4119 = vmax.f32 %v4049, %v4051
      %v4120 = vmax.f32 %v4052, %v4054
      %v4121 = vmax.f32 %v4053, %v4055
      %v4122 = vmax.f32 %v4056, %v4058
      %v4123 = vmax.f32 %v4057, %v4059
      %v4124 = vmax.f32 %v4060, %v4062
      %v4125 = vmax.f32 %v4061, %v4063
      %v4126 = vmax.f32 %v4064, %v4066
      %v4127 = vmax.f32 %v4065, %v4067
      %v4128 = vmax.f32 %v4068, %v4070
      %v4129 = vmax.f32 %v4069, %v4071
      %v4130 = vmax.f32 %v4072, %v4074
      %v4131 = vmax.f32 %v4073, %v4075
      %v4132 = vmax.f32 %v4076, %v4078
      %v4133 = vmax.f32 %v4077, %v4079
      %v4134 = vmax.f32 %v4080, %v4082
      %v4135 = vmax.f32 %v4081, %v4083
      %v4136 = vmax.f32 %v4084, %v4086
      %v4137 = vmax.f32 %v4085, %v4087
      %v4138 = vmax.f32 %v4088, %v4090
      %v4139 = vmax.f32 %v4089, %v4091
      %v4140 = vmax.f32 %v4092, %v4094
      %v4141 = vmax.f32 %v4093, %v4095
      %v4142 = vmax.f32 %v4096, %v4098
      %v4143 = vmax.f32 %v4097, %v4099
      %v4144 = vmax.f32 %v4100, %v4102
      %v4145 = vmax.f32 %v4101, %v4103
      %v4146 = vmax.f32 %v4104, %v4106
      %v4147 = vmax.f32 %v4105, %v4107
      %v4148 = vmax.f32 %v4108, %v4110
      %v4149 = vmax.f32 %v4109, %v4111
      %v4150 = vmax.f32 %v4112, %v4114
      %v4151 = vmax.f32 %v4113, %v4115
      %v4152 = vmax.f32 %v4116, %v4118
      %v4153 = vmax.f32 %v4117, %v4119
      %v4154 = vmax.f32 %v4120, %v4122
      %v4155 = vmax.f32 %v4121, %v4123
      %v4156 = vld [vmem:[%s2] sm:$0x1]
      %v4158 = vlaneseq
      %v4159 = vshrl.u32 %v4158, 7
      %v4160 = vsub.s32 0, %v4159
      %v4161 = vrot.slane %v4156, %v4160
      %v4163 = vadd.f32 %v4124, %v4161
      %v4164 = vadd.f32 %v4125, %v4161
      %v4165 = vadd.f32 %v4126, %v4161
      %v4166 = vadd.f32 %v4127, %v4161
      %v4167 = vadd.f32 %v4128, %v4161
      %v4168 = vadd.f32 %v4129, %v4161
      %v4169 = vadd.f32 %v4130, %v4161
      %v4170 = vadd.f32 %v4131, %v4161
      %v4171 = vadd.f32 %v4132, %v4161
      %v4172 = vadd.f32 %v4133, %v4161
      %v4173 = vadd.f32 %v4134, %v4161
      %v4174 = vadd.f32 %v4135, %v4161
      %v4175 = vadd.f32 %v4136, %v4161
      %v4176 = vadd.f32 %v4137, %v4161
      %v4177 = vadd.f32 %v4138, %v4161
      %v4178 = vadd.f32 %v4139, %v4161
      %v4179 = vadd.f32 %v4140, %v4161
      %v4180 = vadd.f32 %v4141, %v4161
      %v4181 = vadd.f32 %v4142, %v4161
      %v4182 = vadd.f32 %v4143, %v4161
      %v4183 = vadd.f32 %v4144, %v4161
      %v4184 = vadd.f32 %v4145, %v4161
      %v4185 = vadd.f32 %v4146, %v4161
      %v4186 = vadd.f32 %v4147, %v4161
      %v4187 = vadd.f32 %v4148, %v4161
      %v4188 = vadd.f32 %v4149, %v4161
      %v4189 = vadd.f32 %v4150, %v4161
      %v4190 = vadd.f32 %v4151, %v4161
      %v4191 = vadd.f32 %v4152, %v4161
      %v4192 = vadd.f32 %v4153, %v4161
      %v4193 = vadd.f32 %v4154, %v4161
      %v4194 = vadd.f32 %v4155, %v4161
      %v4195 = vpack.c.bf16 %v4164, %v4163
      %v4196 = vpack.c.bf16 %v4166, %v4165
      %v4197 = vpack.c.bf16 %v4168, %v4167
      %v4198 = vpack.c.bf16 %v4170, %v4169
      %v4199 = vpack.c.bf16 %v4172, %v4171
      %v4200 = vpack.c.bf16 %v4174, %v4173
      %v4201 = vpack.c.bf16 %v4176, %v4175
      %v4202 = vpack.c.bf16 %v4178, %v4177
      %v4203 = vpack.c.bf16 %v4180, %v4179
      %v4204 = vpack.c.bf16 %v4182, %v4181
      %v4205 = vpack.c.bf16 %v4184, %v4183
      %v4206 = vpack.c.bf16 %v4186, %v4185
      %v4207 = vpack.c.bf16 %v4188, %v4187
      %v4208 = vpack.c.bf16 %v4190, %v4189
      %v4209 = vpack.c.bf16 %v4192, %v4191
      %v4210 = vpack.c.bf16 %v4194, %v4193
      %v4227 = vunpack.c.l.b16 %v4195
      %v4228 = vunpack.c.h.b16 %v4195
      %v4229 = vunpack.c.l.b16 %v4196
      %v4230 = vunpack.c.h.b16 %v4196
      %v4231 = vunpack.c.l.b16 %v4197
      %v4232 = vunpack.c.h.b16 %v4197
      %v4233 = vunpack.c.l.b16 %v4198
      %v4234 = vunpack.c.h.b16 %v4198
      %v4235 = vunpack.c.l.b16 %v4199
      %v4236 = vunpack.c.h.b16 %v4199
      %v4237 = vunpack.c.l.b16 %v4200
      %v4238 = vunpack.c.h.b16 %v4200
      %v4239 = vunpack.c.l.b16 %v4201
      %v4240 = vunpack.c.h.b16 %v4201
      %v4241 = vunpack.c.l.b16 %v4202
      %v4242 = vunpack.c.h.b16 %v4202
      %v4243 = vunpack.c.l.b16 %v4203
      %v4244 = vunpack.c.h.b16 %v4203
      %v4245 = vunpack.c.l.b16 %v4204
      %v4246 = vunpack.c.h.b16 %v4204
      %v4247 = vunpack.c.l.b16 %v4205
      %v4248 = vunpack.c.h.b16 %v4205
      %v4249 = vunpack.c.l.b16 %v4206
      %v4250 = vunpack.c.h.b16 %v4206
      %v4251 = vunpack.c.l.b16 %v4207
      %v4252 = vunpack.c.h.b16 %v4207
      %v4253 = vunpack.c.l.b16 %v4208
      %v4254 = vunpack.c.h.b16 %v4208
      %v4255 = vunpack.c.l.b16 %v4209
      %v4256 = vunpack.c.h.b16 %v4209
      %v4257 = vunpack.c.l.b16 %v4210
      %v4258 = vunpack.c.h.b16 %v4210
      %v4259 = vpack.c.b16 %v4227, %v4227
      %v4260 = vpack.c.b16 %v4228, %v4228
      %v4261 = vpack.c.b16 %v4229, %v4229
      %v4262 = vpack.c.b16 %v4230, %v4230
      %v4263 = vpack.c.b16 %v4231, %v4231
      %v4264 = vpack.c.b16 %v4232, %v4232
      %v4265 = vpack.c.b16 %v4233, %v4233
      %v4266 = vpack.c.b16 %v4234, %v4234
      %v4267 = vpack.c.b16 %v4235, %v4235
      %v4268 = vpack.c.b16 %v4236, %v4236
      %v4269 = vpack.c.b16 %v4237, %v4237
      %v4270 = vpack.c.b16 %v4238, %v4238
      %v4271 = vpack.c.b16 %v4239, %v4239
      %v4272 = vpack.c.b16 %v4240, %v4240
      %v4273 = vpack.c.b16 %v4241, %v4241
      %v4274 = vpack.c.b16 %v4242, %v4242
      %v4275 = vpack.c.b16 %v4243, %v4243
      %v4276 = vpack.c.b16 %v4244, %v4244
      %v4277 = vpack.c.b16 %v4245, %v4245
      %v4278 = vpack.c.b16 %v4246, %v4246
      %v4279 = vpack.c.b16 %v4247, %v4247
      %v4280 = vpack.c.b16 %v4248, %v4248
      %v4281 = vpack.c.b16 %v4249, %v4249
      %v4282 = vpack.c.b16 %v4250, %v4250
      %v4283 = vpack.c.b16 %v4251, %v4251
      %v4284 = vpack.c.b16 %v4252, %v4252
      %v4285 = vpack.c.b16 %v4253, %v4253
      %v4286 = vpack.c.b16 %v4254, %v4254
      %v4287 = vpack.c.b16 %v4255, %v4255
      %v4288 = vpack.c.b16 %v4256, %v4256
      %v4289 = vpack.c.b16 %v4257, %v4257
      %v4290 = vpack.c.b16 %v4258, %v4258
      %4323 = vst [vmem:[%s170] sm:$0xf] %v4259
      %4324 = vst [vmem:[%s170 + $0x4] sm:$0xf] %v4260
      %4325 = vst [vmem:[%s170 + $0x8] sm:$0xf] %v4261
      %4326 = vst [vmem:[%s170 + $0xc] sm:$0xf] %v4262
      %4327 = vst [vmem:[%s170 + $0x10] sm:$0xf] %v4263
      %4328 = vst [vmem:[%s170 + $0x14] sm:$0xf] %v4264
      %4329 = vst [vmem:[%s170 + $0x18] sm:$0xf] %v4265
      %4330 = vst [vmem:[%s170 + $0x1c] sm:$0xf] %v4266
      %4331 = vst [vmem:[%s170 + $0x20] sm:$0xf] %v4267
      %4332 = vst [vmem:[%s170 + $0x24] sm:$0xf] %v4268
      %4333 = vst [vmem:[%s170 + $0x28] sm:$0xf] %v4269
      %4334 = vst [vmem:[%s170 + $0x2c] sm:$0xf] %v4270
      %4335 = vst [vmem:[%s170 + $0x30] sm:$0xf] %v4271
      %4336 = vst [vmem:[%s170 + $0x34] sm:$0xf] %v4272
      %4337 = vst [vmem:[%s170 + $0x38] sm:$0xf] %v4273
      %4338 = vst [vmem:[%s170 + $0x3c] sm:$0xf] %v4274
      %4339 = vst [vmem:[%s170 + $0x40] sm:$0xf] %v4275
      %4340 = vst [vmem:[%s170 + $0x44] sm:$0xf] %v4276
      %4341 = vst [vmem:[%s170 + $0x48] sm:$0xf] %v4277
      %4342 = vst [vmem:[%s170 + $0x4c] sm:$0xf] %v4278
      %4343 = vst [vmem:[%s170 + $0x50] sm:$0xf] %v4279
      %4344 = vst [vmem:[%s170 + $0x54] sm:$0xf] %v4280
      %4345 = vst [vmem:[%s170 + $0x58] sm:$0xf] %v4281
      %4346 = vst [vmem:[%s170 + $0x5c] sm:$0xf] %v4282
      %4347 = vst [vmem:[%s170 + $0x60] sm:$0xf] %v4283
      %4348 = vst [vmem:[%s170 + $0x64] sm:$0xf] %v4284
      %4349 = vst [vmem:[%s170 + $0x68] sm:$0xf] %v4285
      %4350 = vst [vmem:[%s170 + $0x6c] sm:$0xf] %v4286
      %4351 = vst [vmem:[%s170 + $0x70] sm:$0xf] %v4287
      %4352 = vst [vmem:[%s170 + $0x74] sm:$0xf] %v4288
      %4353 = vst [vmem:[%s170 + $0x78] sm:$0xf] %v4289
      %4354 = vst [vmem:[%s170 + $0x7c] sm:$0xf] %v4290
      %p4355 = scmp.lt.s32.totalorder %s14, 1
      %s4356 = scalar_select %p4355, %s14, 1
      %s4357 = smul.addr %s4356, 32
      %s4358 = smul.addr %s4357, 4
      %s4359 = scalar_lea.vmem %s3, %s4358
      // Predicated region
      $region33: #{test_forward.4} parent=31 // pred_check
        %p4360 = pneg %p100
      $region34: #{test_forward.4} parent=31 // pred_check_branch
        %4362 = sbr.rel (%p4360) target = $region36
      $region35: #{test_forward.4} parent=31 // pred_region
        _
      $region36: #{test_forward.4} parent=31 // pred_fallthru
        _
    $region32: #{test_forward.4} parent=5 // pred_fallthru
      _
    %p4363 = scmp.le.s32.totalorder 2, %s9
    // Predicated region
    $region37: #{test_forward.4} parent=5 // pred_check
      %p4364 = pneg %p4363
    $region38: #{test_forward.4} parent=5 // pred_check_branch
      %4366 = sbr.rel (%p4364) target = $region40
    $region39: #{test_forward.4} parent=5 // pred_region
      %s4367 = ssub.s32 %s9, 2
      // Predicated region
      $region41: #{test_forward.4} parent=39 // pred_check
        %p4368 = pneg %p106
      $region42: #{test_forward.4} parent=39 // pred_check_branch
        %4370 = sbr.rel (%p4368) target = $region44
      $region43: #{test_forward.4} parent=39 // pred_region
        %p4371 = scmp.lt.s32.totalorder %s15, 1
        %s4372 = scalar_select %p4371, %s15, 1
        %s4373 = smul.addr %s4372, 32
        %s4374 = smul.addr %s4373, 4
        %s4375 = scalar_lea.vmem %s3, %s4374
      $region44: #{test_forward.4} parent=39 // pred_fallthru
        _
    $region40: #{test_forward.4} parent=5 // pred_fallthru
      _
  $region6: #{test_forward.4} parent=0 // loop_footer
    %s13 = sadd.s32 1, %s9
  $region7: #{test_forward.4} parent=0 // loop_footer_branch
    %8 = sbr.rel target = $region3
  $region8: #{test_forward.4} parent=0 // loop_exit
    _

// kernel: test_forward.5
$region0: #{test_forward.5}
  #allocation0 [shape = 'u32[]', space=smem, size = 0x4, offset = 0x4, fixed_abs, tag = 'smem constant byte address 0x4 - core index']
  #allocation1 [shape = 'u32[144,128]{1,0:T(1,128)}', space=vmem, size = 0x12000, scoped, tag = 'internal scratch']
  %s0 = inlined_call_operand.vmem [shape: bf16[2,20,16,160], index: 0, kind: input, shape index: {}]
  %s1 = inlined_call_operand.vmem [shape: bf16[5,160,128], index: 1, kind: input, shape index: {}]
  %s2 = inlined_call_operand.vmem [shape: f32[1,128], index: 2, kind: input, shape index: {}]
  %s3 = inlined_call_operand.vmem [shape: bf16[2,8,8,128], index: 3, kind: output, shape index: {}]
  %s4 = sld [smem:[#allocation0]]
  $region45: #{test_forward.5} parent=0
    _
  %s6 = ssub.s32 1, %s4
  %s7 = scalar_select 0, %s6, %s4
  loop: start=0, step=1, limit=4
  $region2: #{test_forward.5} parent=0 // loop_pre_header
    _
  $region3: #{test_forward.5} parent=0 // loop_header
    %s9 = sphi 0, %s13
    %p10 = scmp.ge.s32.totalorder %s9, 4
    %s19 = sphi 0, %s21
    %s22 = sphi 0, %s19
    %s23 = sphi 0, %s22
    %s39 = sphi 0, %s23
    %s43 = sphi 0, %s43
    %s45 = sphi 0, %s43
    %s46 = sphi 0, %s45
    %s60 = sphi 0, %s46
    %s64 = sphi 0, %s64
    %s66 = sphi 0, %s64
    %s67 = sphi 0, %s66
    %s81 = sphi 0, %s67
    %s87 = sphi 0, %s89
    %s90 = sphi 0, %s87
    %s91 = sphi 0, %s90
    %s107 = sphi 0, %s91
  $region4: #{test_forward.5} parent=0 // loop_header_branch
    %12 = sbr.rel (%p10) target = $region8
  $region5: #{test_forward.5} parent=0 // loop_body
    %s14 = ssub.s32 %s9, 1
    %s15 = ssub.s32 %s9, 2
    %s16 = sadd.s32 %s9, 1
    %s17 = ssub.s32 %s9, %s16
    %p18 = scmp.eq.s32.totalorder %s17, 0
    %s20 = sadd.s32 %s19, 1
    %s21 = scalar_select %p18, %s19, %s20
    %p24 = pneg %p18
    %p25 = scmp.eq.s32.totalorder %s9, 1
    %p26 = por %p24, %p25
    %p27 = scmp.ne.s32.totalorder %s19, %s22
    %p28 = scmp.eq.s32.totalorder %s9, 0
    %p29 = por %p27, %p28
    %p30 = scmp.ne.s32.totalorder %s19, %s22
    %p31 = scmp.eq.s32.totalorder %s14, 1
    %p32 = por %p30, %p31
    %p33 = scmp.ne.s32.totalorder %s22, %s23
    %p34 = scmp.eq.s32.totalorder %s14, 0
    %p35 = por %p33, %p34
    %p36 = scmp.ne.s32.totalorder %s22, %s23
    %p37 = scmp.eq.s32.totalorder %s15, 1
    %p38 = por %p36, %p37
    %p40 = scmp.ne.s32.totalorder %s23, %s39
    %p41 = scmp.eq.s32.totalorder %s15, 0
    %p42 = por %p40, %p41
    %s44 = sadd.s32 %s43, 1
    %p47 = scmp.eq.s32.totalorder %s9, 1
    %p48 = scmp.ne.s32.totalorder %s43, %s45
    %p49 = scmp.eq.s32.totalorder %s9, 0
    %p50 = por %p48, %p49
    %p51 = scmp.ne.s32.totalorder %s43, %s45
    %p52 = scmp.eq.s32.totalorder %s14, 1
    %p53 = por %p51, %p52
    %p54 = scmp.ne.s32.totalorder %s45, %s46
    %p55 = scmp.eq.s32.totalorder %s14, 0
    %p56 = por %p54, %p55
    %p57 = scmp.ne.s32.totalorder %s45, %s46
    %p58 = scmp.eq.s32.totalorder %s15, 1
    %p59 = por %p57, %p58
    %p61 = scmp.ne.s32.totalorder %s46, %s60
    %p62 = scmp.eq.s32.totalorder %s15, 0
    %p63 = por %p61, %p62
    %s65 = sadd.s32 %s64, 1
    %p68 = scmp.eq.s32.totalorder %s9, 1
    %p69 = scmp.ne.s32.totalorder %s64, %s66
    %p70 = scmp.eq.s32.totalorder %s9, 0
    %p71 = por %p69, %p70
    %p72 = scmp.ne.s32.totalorder %s64, %s66
    %p73 = scmp.eq.s32.totalorder %s14, 1
    %p74 = por %p72, %p73
    %p75 = scmp.ne.s32.totalorder %s66, %s67
    %p76 = scmp.eq.s32.totalorder %s14, 0
    %p77 = por %p75, %p76
    %p78 = scmp.ne.s32.totalorder %s66, %s67
    %p79 = scmp.eq.s32.totalorder %s15, 1
    %p80 = por %p78, %p79
    %p82 = scmp.ne.s32.totalorder %s67, %s81
    %p83 = scmp.eq.s32.totalorder %s15, 0
    %p84 = por %p82, %p83
    %s85 = ssub.s32 %s9, %s16
    %p86 = scmp.eq.s32.totalorder %s85, 0
    %s88 = sadd.s32 %s87, 1
    %s89 = scalar_select %p86, %s87, %s88
    %p92 = pneg %p86
    %p93 = scmp.eq.s32.totalorder %s9, 1
    %p94 = por %p92, %p93
    %p95 = scmp.ne.s32.totalorder %s87, %s90
    %p96 = scmp.eq.s32.totalorder %s9, 0
    %p97 = por %p95, %p96
    %p98 = scmp.ne.s32.totalorder %s87, %s90
    %p99 = scmp.eq.s32.totalorder %s14, 1
    %p100 = por %p98, %p99
    %p101 = scmp.ne.s32.totalorder %s90, %s91
    %p102 = scmp.eq.s32.totalorder %s14, 0
    %p103 = por %p101, %p102
    %p104 = scmp.ne.s32.totalorder %s90, %s91
    %p105 = scmp.eq.s32.totalorder %s15, 1
    %p106 = por %p104, %p105
    %p108 = scmp.ne.s32.totalorder %s91, %s107
    %p109 = scmp.eq.s32.totalorder %s15, 0
    %p110 = por %p108, %p109
    %p111 = scmp.le.s32.totalorder 1, %s9
    %p112 = scmp.lt.s32.totalorder %s9, 3
    %p113 = pnand %p111, %p112
    %p114 = pneg %p113
    // Predicated region
    $region9: #{test_forward.5} parent=5 // pred_check
      _
    $region10: #{test_forward.5} parent=5 // pred_check_branch
      %116 = sbr.rel (%p113) target = $region12
    $region11: #{test_forward.5} parent=5 // pred_region
      %s117 = ssub.s32 %s9, 1
      // Predicated region
      $region13: #{test_forward.5} parent=11 // pred_check
        %p118 = pneg %p56
      $region14: #{test_forward.5} parent=11 // pred_check_branch
        %120 = sbr.rel (%p118) target = $region16
      $region15: #{test_forward.5} parent=11 // pred_region
        _
      $region16: #{test_forward.5} parent=11 // pred_fallthru
        _
      // Predicated region
      $region17: #{test_forward.5} parent=11 // pred_check
        %p121 = pneg %p77
      $region18: #{test_forward.5} parent=11 // pred_check_branch
        %123 = sbr.rel (%p121) target = $region20
      $region19: #{test_forward.5} parent=11 // pred_region
        _
      $region20: #{test_forward.5} parent=11 // pred_fallthru
        _
    $region12: #{test_forward.5} parent=5 // pred_fallthru
      _
    %p124 = scmp.lt.s32.totalorder %s9, 2
    // Predicated region
    $region21: #{test_forward.5} parent=5 // pred_check
      %p125 = pneg %p124
    $region22: #{test_forward.5} parent=5 // pred_check_branch
      %127 = sbr.rel (%p125) target = $region24
    $region23: #{test_forward.5} parent=5 // pred_region
      // Predicated region
      $region25: #{test_forward.5} parent=23 // pred_check
        %p128 = pneg %p29
      $region26: #{test_forward.5} parent=23 // pred_check_branch
        %130 = sbr.rel (%p128) target = $region28
      $region27: #{test_forward.5} parent=23 // pred_region
        %p131 = scmp.lt.s32.totalorder %s9, 1
        %s132 = scalar_select %p131, %s9, 1
        %s133 = smul.addr %s132, 80
        %s134 = smul.addr %s133, 4
        %s135 = scalar_lea.vmem %s0, %s134
      $region28: #{test_forward.5} parent=23 // pred_fallthru
        _
    $region24: #{test_forward.5} parent=5 // pred_fallthru
      _
    %p136 = scmp.le.s32.totalorder 1, %s9
    %p137 = scmp.lt.s32.totalorder %s9, 3
    %p138 = pnand %p136, %p137
    %p139 = pneg %p138
    // Predicated region
    $region29: #{test_forward.5} parent=5 // pred_check
      _
    $region30: #{test_forward.5} parent=5 // pred_check_branch
      %141 = sbr.rel (%p138) target = $region32
    $region31: #{test_forward.5} parent=5 // pred_region
      %s142 = ssub.s32 %s9, 1
      %p143 = scmp.lt.s32.totalorder %s14, 1
      %s144 = scalar_select %p143, %s14, 1
      %s145 = smul.addr %s144, 80
      %s146 = smul.addr %s145, 4
      %s147 = scalar_lea.vmem %s0, %s146
      %p148 = pneg %p35
      %p149 = pneg %p32
      %p150 = pneg %p56
      %p151 = pneg %p53
      %p152 = pneg %p77
      %p153 = pneg %p74
      %p154 = pneg %p103
      %p155 = pneg %p100
      %p156 = scmp.lt.s32.totalorder %s14, 1
      %s157 = scalar_select %p156, %s14, 1
      %s158 = smul.addr %s157, 8
      %s159 = smul.addr %s158, 4
      %s160 = scalar_lea.vmem %s3, %s159
      %p161 = scmp.lt.s32.totalorder %s14, 1
      %s162 = scalar_select %p161, %s14, 1
      %s163 = smul.addr %s162, 80
      %s164 = smul.addr %s163, 4
      %s165 = scalar_lea.vmem %s0, %s164
      %p166 = scmp.lt.s32.totalorder %s14, 1
      %s167 = scalar_select %p166, %s14, 1
      %s168 = smul.addr %s167, 8
      %s169 = smul.addr %s168, 4
      %s170 = scalar_lea.vmem %s3, %s169
      %v172 = vld [vmem:[%s165] sm:$0xff]
      %v173 = vld [vmem:[%s165 + $0x8] sm:$0xff]
      %v174 = vld [vmem:[%s165 + $0x10] sm:$0xff]
      %v175 = vld [vmem:[%s165 + $0x18] sm:$0xff]
      %v176 = vld [vmem:[%s165 + $0x20] sm:$0xff]
      %v177 = vld [vmem:[%s165 + $0x28] sm:$0xff]
      %v178 = vld [vmem:[%s165 + $0x30] sm:$0xff]
      %v179 = vld [vmem:[%s165 + $0x38] sm:$0xff]
      %v180 = vld [vmem:[%s165 + $0x40] sm:$0xff]
      %v181 = vld [vmem:[%s165 + $0x48] sm:$0xff]
      %v182 = vld [vmem:[%s165 + $0x50] sm:$0xff]
      %v183 = vld [vmem:[%s165 + $0x58] sm:$0xff]
      %v184 = vld [vmem:[%s165 + $0x60] sm:$0xff]
      %v185 = vld [vmem:[%s165 + $0x68] sm:$0xff]
      %v186 = vld [vmem:[%s165 + $0x70] sm:$0xff]
      %v187 = vld [vmem:[%s165 + $0x78] sm:$0xff]
      %v188 = vld [vmem:[%s165 + $0x80] sm:$0xff]
      %v189 = vld [vmem:[%s165 + $0x88] sm:$0xff]
      %v190 = vld [vmem:[%s165 + $0x90] sm:$0xff]
      %v191 = vld [vmem:[%s165 + $0x98] sm:$0xff]
      %v192 = vld [vmem:[%s165 + $0xa0] sm:$0xff]
      %v193 = vld [vmem:[%s165 + $0xa8] sm:$0xff]
      %v194 = vld [vmem:[%s165 + $0xb0] sm:$0xff]
      %v195 = vld [vmem:[%s165 + $0xb8] sm:$0xff]
      %v196 = vld [vmem:[%s165 + $0xc0] sm:$0xff]
      %v197 = vld [vmem:[%s165 + $0xc8] sm:$0xff]
      %v198 = vld [vmem:[%s165 + $0xd0] sm:$0xff]
      %v199 = vld [vmem:[%s165 + $0xd8] sm:$0xff]
      %v200 = vld [vmem:[%s165 + $0xe0] sm:$0xff]
      %v201 = vld [vmem:[%s165 + $0xe8] sm:$0xff]
      %v202 = vld [vmem:[%s165 + $0xf0] sm:$0xff]
      %v203 = vld [vmem:[%s165 + $0xf8] sm:$0xff]
      %v204 = vld [vmem:[%s165 + $0x100] sm:$0xff]
      %v205 = vld [vmem:[%s165 + $0x108] sm:$0xff]
      %v206 = vld [vmem:[%s165 + $0x110] sm:$0xff]
      %v207 = vld [vmem:[%s165 + $0x118] sm:$0xff]
      %v208 = vld [vmem:[%s165 + $0x120] sm:$0xff]
      %v209 = vld [vmem:[%s165 + $0x128] sm:$0xff]
      %v210 = vld [vmem:[%s165 + $0x130] sm:$0xff]
      %v211 = vld [vmem:[%s165 + $0x138] sm:$0xff]
      %v212 = vld [vmem:[%s1] sm:$0xf]
      %v213 = vld [vmem:[%s1 + $0x4] sm:$0xf]
      %v214 = vld [vmem:[%s1 + $0x8] sm:$0xf]
      %v215 = vld [vmem:[%s1 + $0xc] sm:$0xf]
      %v216 = vld [vmem:[%s1 + $0x10] sm:$0xf]
      %v217 = vld [vmem:[%s1 + $0x14] sm:$0xf]
      %v218 = vld [vmem:[%s1 + $0x18] sm:$0xf]
      %v219 = vld [vmem:[%s1 + $0x1c] sm:$0xf]
      %v220 = vld [vmem:[%s1 + $0x20] sm:$0xf]
      %v221 = vld [vmem:[%s1 + $0x24] sm:$0xf]
      %v222 = vld [vmem:[%s1 + $0x28] sm:$0xf]
      %v223 = vld [vmem:[%s1 + $0x2c] sm:$0xf]
      %v224 = vld [vmem:[%s1 + $0x30] sm:$0xf]
      %v225 = vld [vmem:[%s1 + $0x34] sm:$0xf]
      %v226 = vld [vmem:[%s1 + $0x38] sm:$0xf]
      %v227 = vld [vmem:[%s1 + $0x3c] sm:$0xf]
      %v228 = vld [vmem:[%s1 + $0x40] sm:$0xf]
      %v229 = vld [vmem:[%s1 + $0x44] sm:$0xf]
      %v230 = vld [vmem:[%s1 + $0x48] sm:$0xf]
      %v231 = vld [vmem:[%s1 + $0x4c] sm:$0xf]
      %s232 = scalar_lea.vmem %s1, 80
      %v233 = vld [vmem:[%s232] sm:$0xf]
      %v234 = vld [vmem:[%s232 + $0x4] sm:$0xf]
      %v235 = vld [vmem:[%s232 + $0x8] sm:$0xf]
      %v236 = vld [vmem:[%s232 + $0xc] sm:$0xf]
      %v237 = vld [vmem:[%s232 + $0x10] sm:$0xf]
      %v238 = vld [vmem:[%s232 + $0x14] sm:$0xf]
      %v239 = vld [vmem:[%s232 + $0x18] sm:$0xf]
      %v240 = vld [vmem:[%s232 + $0x1c] sm:$0xf]
      %v241 = vld [vmem:[%s232 + $0x20] sm:$0xf]
      %v242 = vld [vmem:[%s232 + $0x24] sm:$0xf]
      %v243 = vld [vmem:[%s232 + $0x28] sm:$0xf]
      %v244 = vld [vmem:[%s232 + $0x2c] sm:$0xf]
      %v245 = vld [vmem:[%s232 + $0x30] sm:$0xf]
      %v246 = vld [vmem:[%s232 + $0x34] sm:$0xf]
      %v247 = vld [vmem:[%s232 + $0x38] sm:$0xf]
      %v248 = vld [vmem:[%s232 + $0x3c] sm:$0xf]
      %v249 = vld [vmem:[%s232 + $0x40] sm:$0xf]
      %v250 = vld [vmem:[%s232 + $0x44] sm:$0xf]
      %v251 = vld [vmem:[%s232 + $0x48] sm:$0xf]
      %v252 = vld [vmem:[%s232 + $0x4c] sm:$0xf]
      %v285 = vunpack.c.l.b16 %v174
      %v286 = vunpack.c.h.b16 %v174
      %v287 = vunpack.c.l.b16 %v175
      %v288 = vunpack.c.h.b16 %v175
      %v289 = vunpack.c.l.b16 %v176
      %v290 = vunpack.c.h.b16 %v176
      %v291 = vunpack.c.l.b16 %v177
      %v292 = vunpack.c.h.b16 %v177
      %v293 = vunpack.c.l.b16 %v178
      %v294 = vunpack.c.h.b16 %v178
      %v295 = vunpack.c.l.b16 %v179
      %v296 = vunpack.c.h.b16 %v179
      %v297 = vunpack.c.l.b16 %v180
      %v298 = vunpack.c.h.b16 %v180
      %v299 = vunpack.c.l.b16 %v181
      %v300 = vunpack.c.h.b16 %v181
      %v301 = vunpack.c.l.b16 %v182
      %v302 = vunpack.c.h.b16 %v182
      %v303 = vunpack.c.l.b16 %v183
      %v304 = vunpack.c.h.b16 %v183
      %v305 = vunpack.c.l.b16 %v184
      %v306 = vunpack.c.h.b16 %v184
      %v307 = vunpack.c.l.b16 %v185
      %v308 = vunpack.c.h.b16 %v185
      %v309 = vunpack.c.l.b16 %v186
      %v310 = vunpack.c.h.b16 %v186
      %v311 = vunpack.c.l.b16 %v187
      %v312 = vunpack.c.h.b16 %v187
      %v313 = vunpack.c.l.b16 %v188
      %v314 = vunpack.c.h.b16 %v188
      %v315 = vunpack.c.l.b16 %v189
      %v316 = vunpack.c.h.b16 %v189
      %v317 = vunpack.c.l.b16 %v190
      %v318 = vunpack.c.h.b16 %v190
      %v319 = vunpack.c.l.b16 %v191
      %v320 = vunpack.c.h.b16 %v191
      %v321 = vunpack.c.l.b16 %v192
      %v322 = vunpack.c.h.b16 %v192
      %v323 = vunpack.c.l.b16 %v193
      %v324 = vunpack.c.h.b16 %v193
      %v325 = vunpack.c.l.b16 %v194
      %v326 = vunpack.c.h.b16 %v194
      %v327 = vunpack.c.l.b16 %v195
      %v328 = vunpack.c.h.b16 %v195
      %v329 = vunpack.c.l.b16 %v196
      %v330 = vunpack.c.h.b16 %v196
      %v331 = vunpack.c.l.b16 %v197
      %v332 = vunpack.c.h.b16 %v197
      %v333 = vunpack.c.l.b16 %v198
      %v334 = vunpack.c.h.b16 %v198
      %v335 = vunpack.c.l.b16 %v199
      %v336 = vunpack.c.h.b16 %v199
      %v337 = vunpack.c.l.b16 %v200
      %v338 = vunpack.c.h.b16 %v200
      %v339 = vunpack.c.l.b16 %v201
      %v340 = vunpack.c.h.b16 %v201
      %v341 = vunpack.c.l.b16 %v202
      %v342 = vunpack.c.h.b16 %v202
      %v343 = vunpack.c.l.b16 %v203
      %v344 = vunpack.c.h.b16 %v203
      %v345 = vunpack.c.l.b16 %v204
      %v346 = vunpack.c.h.b16 %v204
      %v347 = vunpack.c.l.b16 %v205
      %v348 = vunpack.c.h.b16 %v205
      %v349 = vpack.c.b16 %v287, %v285
      %v350 = vpack.c.b16 %v288, %v286
      %v351 = vpack.c.b16 %v291, %v289
      %v352 = vpack.c.b16 %v292, %v290
      %v353 = vpack.c.b16 %v295, %v293
      %v354 = vpack.c.b16 %v296, %v294
      %v355 = vpack.c.b16 %v299, %v297
      %v356 = vpack.c.b16 %v300, %v298
      %v357 = vpack.c.b16 %v303, %v301
      %v358 = vpack.c.b16 %v304, %v302
      %v359 = vpack.c.b16 %v307, %v305
      %v360 = vpack.c.b16 %v308, %v306
      %v361 = vpack.c.b16 %v311, %v309
      %v362 = vpack.c.b16 %v312, %v310
      %v363 = vpack.c.b16 %v315, %v313
      %v364 = vpack.c.b16 %v316, %v314
      %v365 = vpack.c.b16 %v319, %v317
      %v366 = vpack.c.b16 %v320, %v318
      %v367 = vpack.c.b16 %v323, %v321
      %v368 = vpack.c.b16 %v324, %v322
      %v369 = vpack.c.b16 %v327, %v325
      %v370 = vpack.c.b16 %v328, %v326
      %v371 = vpack.c.b16 %v331, %v329
      %v372 = vpack.c.b16 %v332, %v330
      %v373 = vpack.c.b16 %v335, %v333
      %v374 = vpack.c.b16 %v336, %v334
      %v375 = vpack.c.b16 %v339, %v337
      %v376 = vpack.c.b16 %v340, %v338
      %v377 = vpack.c.b16 %v343, %v341
      %v378 = vpack.c.b16 %v344, %v342
      %v379 = vpack.c.b16 %v347, %v345
      %v380 = vpack.c.b16 %v348, %v346
      %v417 = vunpack.c.l.b16 %v233
      %v418 = vunpack.c.l.b16 %v234
      %v419 = vunpack.c.l.b16 %v235
      %v420 = vunpack.c.l.b16 %v236
      %v421 = vunpack.c.l.b16 %v237
      %v422 = vunpack.c.l.b16 %v238
      %v423 = vunpack.c.l.b16 %v239
      %v424 = vunpack.c.l.b16 %v240
      %v425 = vunpack.c.l.b16 %v241
      %v426 = vunpack.c.l.b16 %v242
      %v427 = vunpack.c.l.b16 %v243
      %v428 = vunpack.c.l.b16 %v244
      %v429 = vunpack.c.l.b16 %v245
      %v430 = vunpack.c.l.b16 %v246
      %v431 = vunpack.c.l.b16 %v247
      %v432 = vunpack.c.l.b16 %v248
      %v433 = vunpack.c.l.b16 %v249
      %v434 = vunpack.c.l.b16 %v250
      %v435 = vunpack.c.l.b16 %v251
      %v436 = vunpack.c.l.b16 %v252
      %v437 = vpack.c.b16 %v418, %v417
      %v438 = vpack.c.b16 %v420, %v419
      %v439 = vpack.c.b16 %v422, %v421
      %v440 = vpack.c.b16 %v424, %v423
      %v441 = vpack.c.b16 %v426, %v425
      %v442 = vpack.c.b16 %v428, %v427
      %v443 = vpack.c.b16 %v430, %v429
      %v444 = vpack.c.b16 %v432, %v431
      %v445 = vpack.c.b16 %v434, %v433
      %v446 = vpack.c.b16 %v436, %v435
      %vm457 = vcmask 261120
      %v459 = vsel %vm457, %v350, 0
      %v462 = vsel %vm457, %v352, 0
      %v465 = vsel %vm457, %v354, 0
      %v468 = vsel %vm457, %v356, 0
      %v471 = vsel %vm457, %v358, 0
      %v474 = vsel %vm457, %v360, 0
      %v477 = vsel %vm457, %v362, 0
      %v480 = vsel %vm457, %v364, 0
      %v483 = vsel %vm457, %v366, 0
      %v486 = vsel %vm457, %v368, 0
      %v489 = vsel %vm457, %v370, 0
      %v492 = vsel %vm457, %v372, 0
      %v495 = vsel %vm457, %v374, 0
      %v498 = vsel %vm457, %v376, 0
      %v501 = vsel %vm457, %v378, 0
      %v504 = vsel %vm457, %v380, 0
      %506 = vmatprep.subr.bf16.mxu0 0
      %507 = vmatpush1.bf16.msra.mxu0 %v444
      %508 = vmatprep.subr.bf16.mxu0 0
      %509 = vmatpush1.bf16.msra.mxu0 %v443
      %510 = vmatprep.subr.bf16.mxu0 0
      %511 = vmatpush1.bf16.msra.mxu0 %v442
      %512 = vmatprep.subr.bf16.mxu0 0
      %513 = vmatpush1.bf16.msra.mxu0 %v441
      %514 = vmatprep.subr.bf16.mxu0 0
      %515 = vmatpush1.bf16.msra.mxu0 %v440
      %516 = vmatprep.subr.bf16.mxu0 0
      %517 = vmatpush1.bf16.msra.mxu0 %v439
      %518 = vmatprep.subr.bf16.mxu0 0
      %519 = vmatpush1.bf16.msra.mxu0 %v438
      %520 = vmatprep.subr.bf16.mxu0 0
      %521 = vmatpush1.bf16.msra.mxu0 %v437
      %522 = vmatprep.subr.bf16.mxu0 0
      %523 = vmatpush2.bf16.msra.mxu0 0
      %524 = vmatprep.subr.bf16.mxu0 0
      %525 = vmatpush2.bf16.msra.mxu0 0
      %526 = vmatprep.subr.bf16.mxu0 0
      %527 = vmatpush2.bf16.msra.mxu0 0
      %528 = vmatprep.subr.bf16.mxu0 0
      %529 = vmatpush2.bf16.msra.mxu0 0
      %530 = vmatprep.subr.bf16.mxu0 0
      %531 = vmatpush2.bf16.msra.mxu0 0
      %532 = vmatprep.subr.bf16.mxu0 0
      %533 = vmatpush2.bf16.msra.mxu0 0
      %534 = vmatprep.subr.bf16.mxu0 0
      %535 = vmatpush2.bf16.msra.mxu0 %v446
      %536 = vmatprep.subr.bf16.mxu0 0
      %537 = vmatpush2.bf16.msra.mxu0 %v445
      %538 = vmatprep.mubr.bf16.mxu0 %v459
      %539 = vmatmul.mubr.bf16.gmra.mxu0 %v349
      %v540 = vpop.f32.mrf.mxu0
      %v541 = vadd.f32 0.0, %v540
      %v542 = vpop.f32.mrf.mxu0
      %v543 = vpop.f32.mrf.mxu0
      %v544 = vadd.f32 0.0, %v543
      %v545 = vpop.f32.mrf.mxu0
      %546 = vmatprep.mubr.bf16.mxu0 %v462
      %547 = vmatmul.mubr.bf16.gmra.mxu0 %v351
      %v548 = vpop.f32.mrf.mxu0
      %v549 = vadd.f32 0.0, %v548
      %v550 = vpop.f32.mrf.mxu0
      %v551 = vpop.f32.mrf.mxu0
      %v552 = vadd.f32 0.0, %v551
      %v553 = vpop.f32.mrf.mxu0
      %554 = vmatprep.mubr.bf16.mxu0 %v465
      %555 = vmatmul.mubr.bf16.gmra.mxu0 %v353
      %v556 = vpop.f32.mrf.mxu0
      %v557 = vadd.f32 0.0, %v556
      %v558 = vpop.f32.mrf.mxu0
      %v559 = vpop.f32.mrf.mxu0
      %v560 = vadd.f32 0.0, %v559
      %v561 = vpop.f32.mrf.mxu0
      %562 = vmatprep.mubr.bf16.mxu0 %v468
      %563 = vmatmul.mubr.bf16.gmra.mxu0 %v355
      %v564 = vpop.f32.mrf.mxu0
      %v565 = vadd.f32 0.0, %v564
      %v566 = vpop.f32.mrf.mxu0
      %v567 = vpop.f32.mrf.mxu0
      %v568 = vadd.f32 0.0, %v567
      %v569 = vpop.f32.mrf.mxu0
      %570 = vmatprep.mubr.bf16.mxu0 %v471
      %571 = vmatmul.mubr.bf16.gmra.mxu0 %v357
      %v572 = vpop.f32.mrf.mxu0
      %v573 = vadd.f32 0.0, %v572
      %v574 = vpop.f32.mrf.mxu0
      %v575 = vpop.f32.mrf.mxu0
      %v576 = vadd.f32 0.0, %v575
      %v577 = vpop.f32.mrf.mxu0
      %578 = vmatprep.mubr.bf16.mxu0 %v474
      %579 = vmatmul.mubr.bf16.gmra.mxu0 %v359
      %v580 = vpop.f32.mrf.mxu0
      %v581 = vadd.f32 0.0, %v580
      %v582 = vpop.f32.mrf.mxu0
      %v583 = vpop.f32.mrf.mxu0
      %v584 = vadd.f32 0.0, %v583
      %v585 = vpop.f32.mrf.mxu0
      %586 = vmatprep.mubr.bf16.mxu0 %v477
      %587 = vmatmul.mubr.bf16.gmra.mxu0 %v361
      %v588 = vpop.f32.mrf.mxu0
      %v589 = vadd.f32 0.0, %v588
      %v590 = vpop.f32.mrf.mxu0
      %v591 = vpop.f32.mrf.mxu0
      %v592 = vadd.f32 0.0, %v591
      %v593 = vpop.f32.mrf.mxu0
      %594 = vmatprep.mubr.bf16.mxu0 %v480
      %595 = vmatmul.mubr.bf16.gmra.mxu0 %v363
      %v596 = vpop.f32.mrf.mxu0
      %v597 = vadd.f32 0.0, %v596
      %v598 = vpop.f32.mrf.mxu0
      %v599 = vpop.f32.mrf.mxu0
      %v600 = vadd.f32 0.0, %v599
      %v601 = vpop.f32.mrf.mxu0
      %602 = vmatprep.mubr.bf16.mxu0 %v483
      %603 = vmatmul.mubr.bf16.gmra.mxu0 %v365
      %v604 = vpop.f32.mrf.mxu0
      %v605 = vadd.f32 0.0, %v604
      %v606 = vpop.f32.mrf.mxu0
      %v607 = vpop.f32.mrf.mxu0
      %v608 = vadd.f32 0.0, %v607
      %v609 = vpop.f32.mrf.mxu0
      %610 = vmatprep.mubr.bf16.mxu0 %v486
      %611 = vmatmul.mubr.bf16.gmra.mxu0 %v367
      %v612 = vpop.f32.mrf.mxu0
      %v613 = vadd.f32 0.0, %v612
      %v614 = vpop.f32.mrf.mxu0
      %v615 = vpop.f32.mrf.mxu0
      %v616 = vadd.f32 0.0, %v615
      %v617 = vpop.f32.mrf.mxu0
      %618 = vmatprep.mubr.bf16.mxu0 %v489
      %619 = vmatmul.mubr.bf16.gmra.mxu0 %v369
      %v620 = vpop.f32.mrf.mxu0
      %v621 = vadd.f32 0.0, %v620
      %v622 = vpop.f32.mrf.mxu0
      %v623 = vpop.f32.mrf.mxu0
      %v624 = vadd.f32 0.0, %v623
      %v625 = vpop.f32.mrf.mxu0
      %626 = vmatprep.mubr.bf16.mxu0 %v492
      %627 = vmatmul.mubr.bf16.gmra.mxu0 %v371
      %v628 = vpop.f32.mrf.mxu0
      %v629 = vadd.f32 0.0, %v628
      %v630 = vpop.f32.mrf.mxu0
      %v631 = vpop.f32.mrf.mxu0
      %v632 = vadd.f32 0.0, %v631
      %v633 = vpop.f32.mrf.mxu0
      %634 = vmatprep.mubr.bf16.mxu0 %v495
      %635 = vmatmul.mubr.bf16.gmra.mxu0 %v373
      %v636 = vpop.f32.mrf.mxu0
      %v637 = vadd.f32 0.0, %v636
      %v638 = vpop.f32.mrf.mxu0
      %v639 = vpop.f32.mrf.mxu0
      %v640 = vadd.f32 0.0, %v639
      %v641 = vpop.f32.mrf.mxu0
      %642 = vmatprep.mubr.bf16.mxu0 %v498
      %643 = vmatmul.mubr.bf16.gmra.mxu0 %v375
      %v644 = vpop.f32.mrf.mxu0
      %v645 = vadd.f32 0.0, %v644
      %v646 = vpop.f32.mrf.mxu0
      %v647 = vpop.f32.mrf.mxu0
      %v648 = vadd.f32 0.0, %v647
      %v649 = vpop.f32.mrf.mxu0
      %650 = vmatprep.mubr.bf16.mxu0 %v501
      %651 = vmatmul.mubr.bf16.gmra.mxu0 %v377
      %v652 = vpop.f32.mrf.mxu0
      %v653 = vadd.f32 0.0, %v652
      %v654 = vpop.f32.mrf.mxu0
      %v655 = vpop.f32.mrf.mxu0
      %v656 = vadd.f32 0.0, %v655
      %v657 = vpop.f32.mrf.mxu0
      %658 = vmatprep.mubr.bf16.mxu0 %v504
      %659 = vmatmul.mubr.bf16.gmra.mxu0 %v379
      %v660 = vpop.f32.mrf.mxu0
      %v661 = vadd.f32 0.0, %v660
      %v662 = vpop.f32.mrf.mxu0
      %v663 = vpop.f32.mrf.mxu0
      %v664 = vadd.f32 0.0, %v663
      %v665 = vpop.f32.mrf.mxu0
      %666 = vdwg.mxu0
      %v669 = vunpack.c.l.b16 %v172
      %v670 = vunpack.c.h.b16 %v172
      %v671 = vunpack.c.l.b16 %v173
      %v672 = vunpack.c.h.b16 %v173
      %v673 = vpack.c.b16 %v671, %v669
      %v674 = vpack.c.b16 %v672, %v670
      %v696 = vunpack.c.l.b16 %v212
      %v697 = vunpack.c.l.b16 %v213
      %v698 = vunpack.c.l.b16 %v214
      %v699 = vunpack.c.l.b16 %v215
      %v700 = vunpack.c.l.b16 %v216
      %v701 = vunpack.c.l.b16 %v217
      %v702 = vunpack.c.l.b16 %v218
      %v703 = vunpack.c.l.b16 %v219
      %v704 = vunpack.c.l.b16 %v220
      %v705 = vunpack.c.l.b16 %v221
      %v706 = vunpack.c.l.b16 %v222
      %v707 = vunpack.c.l.b16 %v223
      %v708 = vunpack.c.l.b16 %v224
      %v709 = vunpack.c.l.b16 %v225
      %v710 = vunpack.c.l.b16 %v226
      %v711 = vunpack.c.l.b16 %v227
      %v712 = vunpack.c.l.b16 %v228
      %v713 = vunpack.c.l.b16 %v229
      %v714 = vunpack.c.l.b16 %v230
      %v715 = vunpack.c.l.b16 %v231
      %v716 = vpack.c.b16 %v697, %v696
      %v717 = vpack.c.b16 %v699, %v698
      %v718 = vpack.c.b16 %v701, %v700
      %v719 = vpack.c.b16 %v703, %v702
      %v720 = vpack.c.b16 %v705, %v704
      %v721 = vpack.c.b16 %v707, %v706
      %v722 = vpack.c.b16 %v709, %v708
      %v723 = vpack.c.b16 %v711, %v710
      %v724 = vpack.c.b16 %v713, %v712
      %v725 = vpack.c.b16 %v715, %v714
      %v737 = vsel %vm457, %v674, 0
      %739 = vmatprep.subr.bf16.mxu0 0
      %740 = vmatpush1.bf16.msra.mxu0 %v723
      %741 = vmatprep.subr.bf16.mxu0 0
      %742 = vmatpush1.bf16.msra.mxu0 %v722
      %743 = vmatprep.subr.bf16.mxu0 0
      %744 = vmatpush1.bf16.msra.mxu0 %v721
      %745 = vmatprep.subr.bf16.mxu0 0
      %746 = vmatpush1.bf16.msra.mxu0 %v720
      %747 = vmatprep.subr.bf16.mxu0 0
      %748 = vmatpush1.bf16.msra.mxu0 %v719
      %749 = vmatprep.subr.bf16.mxu0 0
      %750 = vmatpush1.bf16.msra.mxu0 %v718
      %751 = vmatprep.subr.bf16.mxu0 0
      %752 = vmatpush1.bf16.msra.mxu0 %v717
      %753 = vmatprep.subr.bf16.mxu0 0
      %754 = vmatpush1.bf16.msra.mxu0 %v716
      %755 = vmatprep.subr.bf16.mxu0 0
      %756 = vmatpush2.bf16.msra.mxu0 0
      %757 = vmatprep.subr.bf16.mxu0 0
      %758 = vmatpush2.bf16.msra.mxu0 0
      %759 = vmatprep.subr.bf16.mxu0 0
      %760 = vmatpush2.bf16.msra.mxu0 0
      %761 = vmatprep.subr.bf16.mxu0 0
      %762 = vmatpush2.bf16.msra.mxu0 0
      %763 = vmatprep.subr.bf16.mxu0 0
      %764 = vmatpush2.bf16.msra.mxu0 0
      %765 = vmatprep.subr.bf16.mxu0 0
      %766 = vmatpush2.bf16.msra.mxu0 0
      %767 = vmatprep.subr.bf16.mxu0 0
      %768 = vmatpush2.bf16.msra.mxu0 %v725
      %769 = vmatprep.subr.bf16.mxu0 0
      %770 = vmatpush2.bf16.msra.mxu0 %v724
      %771 = vmatprep.mubr.bf16.mxu0 %v737
      %772 = vmatmul.mubr.bf16.gmra.mxu0 %v673
      %v773 = vpop.f32.mrf.mxu0
      %v774 = vadd.f32 %v541, %v773
      %v775 = vpop.f32.mrf.mxu0
      %v776 = vpop.f32.mrf.mxu0
      %v777 = vadd.f32 %v544, %v776
      %v778 = vpop.f32.mrf.mxu0
      %779 = vmatprep.mubr.bf16.mxu0 %v459
      %780 = vmatmul.mubr.bf16.gmra.mxu0 %v349
      %v781 = vpop.f32.mrf.mxu0
      %v782 = vadd.f32 %v549, %v781
      %v783 = vpop.f32.mrf.mxu0
      %v784 = vpop.f32.mrf.mxu0
      %v785 = vadd.f32 %v552, %v784
      %v786 = vpop.f32.mrf.mxu0
      %787 = vmatprep.mubr.bf16.mxu0 %v462
      %788 = vmatmul.mubr.bf16.gmra.mxu0 %v351
      %v789 = vpop.f32.mrf.mxu0
      %v790 = vadd.f32 %v557, %v789
      %v791 = vpop.f32.mrf.mxu0
      %v792 = vpop.f32.mrf.mxu0
      %v793 = vadd.f32 %v560, %v792
      %v794 = vpop.f32.mrf.mxu0
      %795 = vmatprep.mubr.bf16.mxu0 %v465
      %796 = vmatmul.mubr.bf16.gmra.mxu0 %v353
      %v797 = vpop.f32.mrf.mxu0
      %v798 = vadd.f32 %v565, %v797
      %v799 = vpop.f32.mrf.mxu0
      %v800 = vpop.f32.mrf.mxu0
      %v801 = vadd.f32 %v568, %v800
      %v802 = vpop.f32.mrf.mxu0
      %803 = vmatprep.mubr.bf16.mxu0 %v468
      %804 = vmatmul.mubr.bf16.gmra.mxu0 %v355
      %v805 = vpop.f32.mrf.mxu0
      %v806 = vadd.f32 %v573, %v805
      %v807 = vpop.f32.mrf.mxu0
      %v808 = vpop.f32.mrf.mxu0
      %v809 = vadd.f32 %v576, %v808
      %v810 = vpop.f32.mrf.mxu0
      %811 = vmatprep.mubr.bf16.mxu0 %v471
      %812 = vmatmul.mubr.bf16.gmra.mxu0 %v357
      %v813 = vpop.f32.mrf.mxu0
      %v814 = vadd.f32 %v581, %v813
      %v815 = vpop.f32.mrf.mxu0
      %v816 = vpop.f32.mrf.mxu0
      %v817 = vadd.f32 %v584, %v816
      %v818 = vpop.f32.mrf.mxu0
      %819 = vmatprep.mubr.bf16.mxu0 %v474
      %820 = vmatmul.mubr.bf16.gmra.mxu0 %v359
      %v821 = vpop.f32.mrf.mxu0
      %v822 = vadd.f32 %v589, %v821
      %v823 = vpop.f32.mrf.mxu0
      %v824 = vpop.f32.mrf.mxu0
      %v825 = vadd.f32 %v592, %v824
      %v826 = vpop.f32.mrf.mxu0
      %827 = vmatprep.mubr.bf16.mxu0 %v477
      %828 = vmatmul.mubr.bf16.gmra.mxu0 %v361
      %v829 = vpop.f32.mrf.mxu0
      %v830 = vadd.f32 %v597, %v829
      %v831 = vpop.f32.mrf.mxu0
      %v832 = vpop.f32.mrf.mxu0
      %v833 = vadd.f32 %v600, %v832
      %v834 = vpop.f32.mrf.mxu0
      %835 = vmatprep.mubr.bf16.mxu0 %v480
      %836 = vmatmul.mubr.bf16.gmra.mxu0 %v363
      %v837 = vpop.f32.mrf.mxu0
      %v838 = vadd.f32 %v605, %v837
      %v839 = vpop.f32.mrf.mxu0
      %v840 = vpop.f32.mrf.mxu0
      %v841 = vadd.f32 %v608, %v840
      %v842 = vpop.f32.mrf.mxu0
      %843 = vmatprep.mubr.bf16.mxu0 %v483
      %844 = vmatmul.mubr.bf16.gmra.mxu0 %v365
      %v845 = vpop.f32.mrf.mxu0
      %v846 = vadd.f32 %v613, %v845
      %v847 = vpop.f32.mrf.mxu0
      %v848 = vpop.f32.mrf.mxu0
      %v849 = vadd.f32 %v616, %v848
      %v850 = vpop.f32.mrf.mxu0
      %851 = vmatprep.mubr.bf16.mxu0 %v486
      %852 = vmatmul.mubr.bf16.gmra.mxu0 %v367
      %v853 = vpop.f32.mrf.mxu0
      %v854 = vadd.f32 %v621, %v853
      %v855 = vpop.f32.mrf.mxu0
      %v856 = vpop.f32.mrf.mxu0
      %v857 = vadd.f32 %v624, %v856
      %v858 = vpop.f32.mrf.mxu0
      %859 = vmatprep.mubr.bf16.mxu0 %v489
      %860 = vmatmul.mubr.bf16.gmra.mxu0 %v369
      %v861 = vpop.f32.mrf.mxu0
      %v862 = vadd.f32 %v629, %v861
      %v863 = vpop.f32.mrf.mxu0
      %v864 = vpop.f32.mrf.mxu0
      %v865 = vadd.f32 %v632, %v864
      %v866 = vpop.f32.mrf.mxu0
      %867 = vmatprep.mubr.bf16.mxu0 %v492
      %868 = vmatmul.mubr.bf16.gmra.mxu0 %v371
      %v869 = vpop.f32.mrf.mxu0
      %v870 = vadd.f32 %v637, %v869
      %v871 = vpop.f32.mrf.mxu0
      %v872 = vpop.f32.mrf.mxu0
      %v873 = vadd.f32 %v640, %v872
      %v874 = vpop.f32.mrf.mxu0
      %875 = vmatprep.mubr.bf16.mxu0 %v495
      %876 = vmatmul.mubr.bf16.gmra.mxu0 %v373
      %v877 = vpop.f32.mrf.mxu0
      %v878 = vadd.f32 %v645, %v877
      %v879 = vpop.f32.mrf.mxu0
      %v880 = vpop.f32.mrf.mxu0
      %v881 = vadd.f32 %v648, %v880
      %v882 = vpop.f32.mrf.mxu0
      %883 = vmatprep.mubr.bf16.mxu0 %v498
      %884 = vmatmul.mubr.bf16.gmra.mxu0 %v375
      %v885 = vpop.f32.mrf.mxu0
      %v886 = vadd.f32 %v653, %v885
      %v887 = vpop.f32.mrf.mxu0
      %v888 = vpop.f32.mrf.mxu0
      %v889 = vadd.f32 %v656, %v888
      %v890 = vpop.f32.mrf.mxu0
      %891 = vmatprep.mubr.bf16.mxu0 %v501
      %892 = vmatmul.mubr.bf16.gmra.mxu0 %v377
      %v893 = vpop.f32.mrf.mxu0
      %v894 = vadd.f32 %v661, %v893
      %v895 = vpop.f32.mrf.mxu0
      %v896 = vpop.f32.mrf.mxu0
      %v897 = vadd.f32 %v664, %v896
      %v898 = vpop.f32.mrf.mxu0
      %899 = vdwg.mxu0
      %s900 = scalar_lea.vmem %s1, 160
      %v901 = vld [vmem:[%s900] sm:$0xf]
      %v902 = vld [vmem:[%s900 + $0x4] sm:$0xf]
      %v903 = vld [vmem:[%s900 + $0x8] sm:$0xf]
      %v904 = vld [vmem:[%s900 + $0xc] sm:$0xf]
      %v905 = vld [vmem:[%s900 + $0x10] sm:$0xf]
      %v906 = vld [vmem:[%s900 + $0x14] sm:$0xf]
      %v907 = vld [vmem:[%s900 + $0x18] sm:$0xf]
      %v908 = vld [vmem:[%s900 + $0x1c] sm:$0xf]
      %v909 = vld [vmem:[%s900 + $0x20] sm:$0xf]
      %v910 = vld [vmem:[%s900 + $0x24] sm:$0xf]
      %v911 = vld [vmem:[%s900 + $0x28] sm:$0xf]
      %v912 = vld [vmem:[%s900 + $0x2c] sm:$0xf]
      %v913 = vld [vmem:[%s900 + $0x30] sm:$0xf]
      %v914 = vld [vmem:[%s900 + $0x34] sm:$0xf]
      %v915 = vld [vmem:[%s900 + $0x38] sm:$0xf]
      %v916 = vld [vmem:[%s900 + $0x3c] sm:$0xf]
      %v917 = vld [vmem:[%s900 + $0x40] sm:$0xf]
      %v918 = vld [vmem:[%s900 + $0x44] sm:$0xf]
      %v919 = vld [vmem:[%s900 + $0x48] sm:$0xf]
      %v920 = vld [vmem:[%s900 + $0x4c] sm:$0xf]
      %v923 = vunpack.c.l.b16 %v206
      %v924 = vunpack.c.h.b16 %v206
      %v925 = vunpack.c.l.b16 %v207
      %v926 = vunpack.c.h.b16 %v207
      %v927 = vpack.c.b16 %v925, %v923
      %v928 = vpack.c.b16 %v926, %v924
      %v950 = vunpack.c.l.b16 %v901
      %v951 = vunpack.c.l.b16 %v902
      %v952 = vunpack.c.l.b16 %v903
      %v953 = vunpack.c.l.b16 %v904
      %v954 = vunpack.c.l.b16 %v905
      %v955 = vunpack.c.l.b16 %v906
      %v956 = vunpack.c.l.b16 %v907
      %v957 = vunpack.c.l.b16 %v908
      %v958 = vunpack.c.l.b16 %v909
      %v959 = vunpack.c.l.b16 %v910
      %v960 = vunpack.c.l.b16 %v911
      %v961 = vunpack.c.l.b16 %v912
      %v962 = vunpack.c.l.b16 %v913
      %v963 = vunpack.c.l.b16 %v914
      %v964 = vunpack.c.l.b16 %v915
      %v965 = vunpack.c.l.b16 %v916
      %v966 = vunpack.c.l.b16 %v917
      %v967 = vunpack.c.l.b16 %v918
      %v968 = vunpack.c.l.b16 %v919
      %v969 = vunpack.c.l.b16 %v920
      %v970 = vpack.c.b16 %v951, %v950
      %v971 = vpack.c.b16 %v953, %v952
      %v972 = vpack.c.b16 %v955, %v954
      %v973 = vpack.c.b16 %v957, %v956
      %v974 = vpack.c.b16 %v959, %v958
      %v975 = vpack.c.b16 %v961, %v960
      %v976 = vpack.c.b16 %v963, %v962
      %v977 = vpack.c.b16 %v965, %v964
      %v978 = vpack.c.b16 %v967, %v966
      %v979 = vpack.c.b16 %v969, %v968
      %v991 = vsel %vm457, %v928, 0
      %993 = vmatprep.subr.bf16.mxu0 0
      %994 = vmatpush1.bf16.msra.mxu0 %v977
      %995 = vmatprep.subr.bf16.mxu0 0
      %996 = vmatpush1.bf16.msra.mxu0 %v976
      %997 = vmatprep.subr.bf16.mxu0 0
      %998 = vmatpush1.bf16.msra.mxu0 %v975
      %999 = vmatprep.subr.bf16.mxu0 0
      %1000 = vmatpush1.bf16.msra.mxu0 %v974
      %1001 = vmatprep.subr.bf16.mxu0 0
      %1002 = vmatpush1.bf16.msra.mxu0 %v973
      %1003 = vmatprep.subr.bf16.mxu0 0
      %1004 = vmatpush1.bf16.msra.mxu0 %v972
      %1005 = vmatprep.subr.bf16.mxu0 0
      %1006 = vmatpush1.bf16.msra.mxu0 %v971
      %1007 = vmatprep.subr.bf16.mxu0 0
      %1008 = vmatpush1.bf16.msra.mxu0 %v970
      %1009 = vmatprep.subr.bf16.mxu0 0
      %1010 = vmatpush2.bf16.msra.mxu0 0
      %1011 = vmatprep.subr.bf16.mxu0 0
      %1012 = vmatpush2.bf16.msra.mxu0 0
      %1013 = vmatprep.subr.bf16.mxu0 0
      %1014 = vmatpush2.bf16.msra.mxu0 0
      %1015 = vmatprep.subr.bf16.mxu0 0
      %1016 = vmatpush2.bf16.msra.mxu0 0
      %1017 = vmatprep.subr.bf16.mxu0 0
      %1018 = vmatpush2.bf16.msra.mxu0 0
      %1019 = vmatprep.subr.bf16.mxu0 0
      %1020 = vmatpush2.bf16.msra.mxu0 0
      %1021 = vmatprep.subr.bf16.mxu0 0
      %1022 = vmatpush2.bf16.msra.mxu0 %v979
      %1023 = vmatprep.subr.bf16.mxu0 0
      %1024 = vmatpush2.bf16.msra.mxu0 %v978
      %1025 = vmatprep.mubr.bf16.mxu0 %v462
      %1026 = vmatmul.mubr.bf16.gmra.mxu0 %v351
      %v1027 = vpop.f32.mrf.mxu0
      %v1028 = vadd.f32 0.0, %v1027
      %v1029 = vpop.f32.mrf.mxu0
      %v1030 = vpop.f32.mrf.mxu0
      %v1031 = vadd.f32 0.0, %v1030
      %v1032 = vpop.f32.mrf.mxu0
      %1033 = vmatprep.mubr.bf16.mxu0 %v465
      %1034 = vmatmul.mubr.bf16.gmra.mxu0 %v353
      %v1035 = vpop.f32.mrf.mxu0
      %v1036 = vadd.f32 0.0, %v1035
      %v1037 = vpop.f32.mrf.mxu0
      %v1038 = vpop.f32.mrf.mxu0
      %v1039 = vadd.f32 0.0, %v1038
      %v1040 = vpop.f32.mrf.mxu0
      %1041 = vmatprep.mubr.bf16.mxu0 %v468
      %1042 = vmatmul.mubr.bf16.gmra.mxu0 %v355
      %v1043 = vpop.f32.mrf.mxu0
      %v1044 = vadd.f32 0.0, %v1043
      %v1045 = vpop.f32.mrf.mxu0
      %v1046 = vpop.f32.mrf.mxu0
      %v1047 = vadd.f32 0.0, %v1046
      %v1048 = vpop.f32.mrf.mxu0
      %1049 = vmatprep.mubr.bf16.mxu0 %v471
      %1050 = vmatmul.mubr.bf16.gmra.mxu0 %v357
      %v1051 = vpop.f32.mrf.mxu0
      %v1052 = vadd.f32 0.0, %v1051
      %v1053 = vpop.f32.mrf.mxu0
      %v1054 = vpop.f32.mrf.mxu0
      %v1055 = vadd.f32 0.0, %v1054
      %v1056 = vpop.f32.mrf.mxu0
      %1057 = vmatprep.mubr.bf16.mxu0 %v474
      %1058 = vmatmul.mubr.bf16.gmra.mxu0 %v359
      %v1059 = vpop.f32.mrf.mxu0
      %v1060 = vadd.f32 0.0, %v1059
      %v1061 = vpop.f32.mrf.mxu0
      %v1062 = vpop.f32.mrf.mxu0
      %v1063 = vadd.f32 0.0, %v1062
      %v1064 = vpop.f32.mrf.mxu0
      %1065 = vmatprep.mubr.bf16.mxu0 %v477
      %1066 = vmatmul.mubr.bf16.gmra.mxu0 %v361
      %v1067 = vpop.f32.mrf.mxu0
      %v1068 = vadd.f32 0.0, %v1067
      %v1069 = vpop.f32.mrf.mxu0
      %v1070 = vpop.f32.mrf.mxu0
      %v1071 = vadd.f32 0.0, %v1070
      %v1072 = vpop.f32.mrf.mxu0
      %1073 = vmatprep.mubr.bf16.mxu0 %v480
      %1074 = vmatmul.mubr.bf16.gmra.mxu0 %v363
      %v1075 = vpop.f32.mrf.mxu0
      %v1076 = vadd.f32 0.0, %v1075
      %v1077 = vpop.f32.mrf.mxu0
      %v1078 = vpop.f32.mrf.mxu0
      %v1079 = vadd.f32 0.0, %v1078
      %v1080 = vpop.f32.mrf.mxu0
      %1081 = vmatprep.mubr.bf16.mxu0 %v483
      %1082 = vmatmul.mubr.bf16.gmra.mxu0 %v365
      %v1083 = vpop.f32.mrf.mxu0
      %v1084 = vadd.f32 0.0, %v1083
      %v1085 = vpop.f32.mrf.mxu0
      %v1086 = vpop.f32.mrf.mxu0
      %v1087 = vadd.f32 0.0, %v1086
      %v1088 = vpop.f32.mrf.mxu0
      %1089 = vmatprep.mubr.bf16.mxu0 %v486
      %1090 = vmatmul.mubr.bf16.gmra.mxu0 %v367
      %v1091 = vpop.f32.mrf.mxu0
      %v1092 = vadd.f32 0.0, %v1091
      %v1093 = vpop.f32.mrf.mxu0
      %v1094 = vpop.f32.mrf.mxu0
      %v1095 = vadd.f32 0.0, %v1094
      %v1096 = vpop.f32.mrf.mxu0
      %1097 = vmatprep.mubr.bf16.mxu0 %v489
      %1098 = vmatmul.mubr.bf16.gmra.mxu0 %v369
      %v1099 = vpop.f32.mrf.mxu0
      %v1100 = vadd.f32 0.0, %v1099
      %v1101 = vpop.f32.mrf.mxu0
      %v1102 = vpop.f32.mrf.mxu0
      %v1103 = vadd.f32 0.0, %v1102
      %v1104 = vpop.f32.mrf.mxu0
      %1105 = vmatprep.mubr.bf16.mxu0 %v492
      %1106 = vmatmul.mubr.bf16.gmra.mxu0 %v371
      %v1107 = vpop.f32.mrf.mxu0
      %v1108 = vadd.f32 0.0, %v1107
      %v1109 = vpop.f32.mrf.mxu0
      %v1110 = vpop.f32.mrf.mxu0
      %v1111 = vadd.f32 0.0, %v1110
      %v1112 = vpop.f32.mrf.mxu0
      %1113 = vmatprep.mubr.bf16.mxu0 %v495
      %1114 = vmatmul.mubr.bf16.gmra.mxu0 %v373
      %v1115 = vpop.f32.mrf.mxu0
      %v1116 = vadd.f32 0.0, %v1115
      %v1117 = vpop.f32.mrf.mxu0
      %v1118 = vpop.f32.mrf.mxu0
      %v1119 = vadd.f32 0.0, %v1118
      %v1120 = vpop.f32.mrf.mxu0
      %1121 = vmatprep.mubr.bf16.mxu0 %v498
      %1122 = vmatmul.mubr.bf16.gmra.mxu0 %v375
      %v1123 = vpop.f32.mrf.mxu0
      %v1124 = vadd.f32 0.0, %v1123
      %v1125 = vpop.f32.mrf.mxu0
      %v1126 = vpop.f32.mrf.mxu0
      %v1127 = vadd.f32 0.0, %v1126
      %v1128 = vpop.f32.mrf.mxu0
      %1129 = vmatprep.mubr.bf16.mxu0 %v501
      %1130 = vmatmul.mubr.bf16.gmra.mxu0 %v377
      %v1131 = vpop.f32.mrf.mxu0
      %v1132 = vadd.f32 0.0, %v1131
      %v1133 = vpop.f32.mrf.mxu0
      %v1134 = vpop.f32.mrf.mxu0
      %v1135 = vadd.f32 0.0, %v1134
      %v1136 = vpop.f32.mrf.mxu0
      %1137 = vmatprep.mubr.bf16.mxu0 %v504
      %1138 = vmatmul.mubr.bf16.gmra.mxu0 %v379
      %v1139 = vpop.f32.mrf.mxu0
      %v1140 = vadd.f32 0.0, %v1139
      %v1141 = vpop.f32.mrf.mxu0
      %v1142 = vpop.f32.mrf.mxu0
      %v1143 = vadd.f32 0.0, %v1142
      %v1144 = vpop.f32.mrf.mxu0
      %1145 = vmatprep.mubr.bf16.mxu0 %v991
      %1146 = vmatmul.mubr.bf16.gmra.mxu0 %v927
      %v1147 = vpop.f32.mrf.mxu0
      %v1148 = vadd.f32 0.0, %v1147
      %v1149 = vpop.f32.mrf.mxu0
      %v1150 = vpop.f32.mrf.mxu0
      %v1151 = vadd.f32 0.0, %v1150
      %v1152 = vpop.f32.mrf.mxu0
      %1153 = vdwg.mxu0
      %v1154 = vadd.f32 %v774, %v1028
      %v1155 = vadd.f32 %v777, %v1031
      %v1156 = vadd.f32 %v782, %v1036
      %v1157 = vadd.f32 %v785, %v1039
      %v1158 = vadd.f32 %v790, %v1044
      %v1159 = vadd.f32 %v793, %v1047
      %v1160 = vadd.f32 %v798, %v1052
      %v1161 = vadd.f32 %v801, %v1055
      %v1162 = vadd.f32 %v806, %v1060
      %v1163 = vadd.f32 %v809, %v1063
      %v1164 = vadd.f32 %v814, %v1068
      %v1165 = vadd.f32 %v817, %v1071
      %v1166 = vadd.f32 %v822, %v1076
      %v1167 = vadd.f32 %v825, %v1079
      %v1168 = vadd.f32 %v830, %v1084
      %v1169 = vadd.f32 %v833, %v1087
      %v1170 = vadd.f32 %v838, %v1092
      %v1171 = vadd.f32 %v841, %v1095
      %v1172 = vadd.f32 %v846, %v1100
      %v1173 = vadd.f32 %v849, %v1103
      %v1174 = vadd.f32 %v854, %v1108
      %v1175 = vadd.f32 %v857, %v1111
      %v1176 = vadd.f32 %v862, %v1116
      %v1177 = vadd.f32 %v865, %v1119
      %v1178 = vadd.f32 %v870, %v1124
      %v1179 = vadd.f32 %v873, %v1127
      %v1180 = vadd.f32 %v878, %v1132
      %v1181 = vadd.f32 %v881, %v1135
      %v1182 = vadd.f32 %v886, %v1140
      %v1183 = vadd.f32 %v889, %v1143
      %v1184 = vadd.f32 %v894, %v1148
      %v1185 = vadd.f32 %v897, %v1151
      %s1186 = scalar_lea.vmem %s1, 240
      %v1187 = vld [vmem:[%s1186] sm:$0xf]
      %v1188 = vld [vmem:[%s1186 + $0x4] sm:$0xf]
      %v1189 = vld [vmem:[%s1186 + $0x8] sm:$0xf]
      %v1190 = vld [vmem:[%s1186 + $0xc] sm:$0xf]
      %v1191 = vld [vmem:[%s1186 + $0x10] sm:$0xf]
      %v1192 = vld [vmem:[%s1186 + $0x14] sm:$0xf]
      %v1193 = vld [vmem:[%s1186 + $0x18] sm:$0xf]
      %v1194 = vld [vmem:[%s1186 + $0x1c] sm:$0xf]
      %v1195 = vld [vmem:[%s1186 + $0x20] sm:$0xf]
      %v1196 = vld [vmem:[%s1186 + $0x24] sm:$0xf]
      %v1197 = vld [vmem:[%s1186 + $0x28] sm:$0xf]
      %v1198 = vld [vmem:[%s1186 + $0x2c] sm:$0xf]
      %v1199 = vld [vmem:[%s1186 + $0x30] sm:$0xf]
      %v1200 = vld [vmem:[%s1186 + $0x34] sm:$0xf]
      %v1201 = vld [vmem:[%s1186 + $0x38] sm:$0xf]
      %v1202 = vld [vmem:[%s1186 + $0x3c] sm:$0xf]
      %v1203 = vld [vmem:[%s1186 + $0x40] sm:$0xf]
      %v1204 = vld [vmem:[%s1186 + $0x44] sm:$0xf]
      %v1205 = vld [vmem:[%s1186 + $0x48] sm:$0xf]
      %v1206 = vld [vmem:[%s1186 + $0x4c] sm:$0xf]
      %v1209 = vunpack.c.l.b16 %v208
      %v1210 = vunpack.c.h.b16 %v208
      %v1211 = vunpack.c.l.b16 %v209
      %v1212 = vunpack.c.h.b16 %v209
      %v1213 = vpack.c.b16 %v1211, %v1209
      %v1214 = vpack.c.b16 %v1212, %v1210
      %v1236 = vunpack.c.l.b16 %v1187
      %v1237 = vunpack.c.l.b16 %v1188
      %v1238 = vunpack.c.l.b16 %v1189
      %v1239 = vunpack.c.l.b16 %v1190
      %v1240 = vunpack.c.l.b16 %v1191
      %v1241 = vunpack.c.l.b16 %v1192
      %v1242 = vunpack.c.l.b16 %v1193
      %v1243 = vunpack.c.l.b16 %v1194
      %v1244 = vunpack.c.l.b16 %v1195
      %v1245 = vunpack.c.l.b16 %v1196
      %v1246 = vunpack.c.l.b16 %v1197
      %v1247 = vunpack.c.l.b16 %v1198
      %v1248 = vunpack.c.l.b16 %v1199
      %v1249 = vunpack.c.l.b16 %v1200
      %v1250 = vunpack.c.l.b16 %v1201
      %v1251 = vunpack.c.l.b16 %v1202
      %v1252 = vunpack.c.l.b16 %v1203
      %v1253 = vunpack.c.l.b16 %v1204
      %v1254 = vunpack.c.l.b16 %v1205
      %v1255 = vunpack.c.l.b16 %v1206
      %v1256 = vpack.c.b16 %v1237, %v1236
      %v1257 = vpack.c.b16 %v1239, %v1238
      %v1258 = vpack.c.b16 %v1241, %v1240
      %v1259 = vpack.c.b16 %v1243, %v1242
      %v1260 = vpack.c.b16 %v1245, %v1244
      %v1261 = vpack.c.b16 %v1247, %v1246
      %v1262 = vpack.c.b16 %v1249, %v1248
      %v1263 = vpack.c.b16 %v1251, %v1250
      %v1264 = vpack.c.b16 %v1253, %v1252
      %v1265 = vpack.c.b16 %v1255, %v1254
      %v1277 = vsel %vm457, %v1214, 0
      %1279 = vmatprep.subr.bf16.mxu0 0
      %1280 = vmatpush1.bf16.msra.mxu0 %v1263
      %1281 = vmatprep.subr.bf16.mxu0 0
      %1282 = vmatpush1.bf16.msra.mxu0 %v1262
      %1283 = vmatprep.subr.bf16.mxu0 0
      %1284 = vmatpush1.bf16.msra.mxu0 %v1261
      %1285 = vmatprep.subr.bf16.mxu0 0
      %1286 = vmatpush1.bf16.msra.mxu0 %v1260
      %1287 = vmatprep.subr.bf16.mxu0 0
      %1288 = vmatpush1.bf16.msra.mxu0 %v1259
      %1289 = vmatprep.subr.bf16.mxu0 0
      %1290 = vmatpush1.bf16.msra.mxu0 %v1258
      %1291 = vmatprep.subr.bf16.mxu0 0
      %1292 = vmatpush1.bf16.msra.mxu0 %v1257
      %1293 = vmatprep.subr.bf16.mxu0 0
      %1294 = vmatpush1.bf16.msra.mxu0 %v1256
      %1295 = vmatprep.subr.bf16.mxu0 0
      %1296 = vmatpush2.bf16.msra.mxu0 0
      %1297 = vmatprep.subr.bf16.mxu0 0
      %1298 = vmatpush2.bf16.msra.mxu0 0
      %1299 = vmatprep.subr.bf16.mxu0 0
      %1300 = vmatpush2.bf16.msra.mxu0 0
      %1301 = vmatprep.subr.bf16.mxu0 0
      %1302 = vmatpush2.bf16.msra.mxu0 0
      %1303 = vmatprep.subr.bf16.mxu0 0
      %1304 = vmatpush2.bf16.msra.mxu0 0
      %1305 = vmatprep.subr.bf16.mxu0 0
      %1306 = vmatpush2.bf16.msra.mxu0 0
      %1307 = vmatprep.subr.bf16.mxu0 0
      %1308 = vmatpush2.bf16.msra.mxu0 %v1265
      %1309 = vmatprep.subr.bf16.mxu0 0
      %1310 = vmatpush2.bf16.msra.mxu0 %v1264
      %1311 = vmatprep.mubr.bf16.mxu0 %v465
      %1312 = vmatmul.mubr.bf16.gmra.mxu0 %v353
      %v1313 = vpop.f32.mrf.mxu0
      %v1314 = vadd.f32 0.0, %v1313
      %v1315 = vpop.f32.mrf.mxu0
      %v1316 = vpop.f32.mrf.mxu0
      %v1317 = vadd.f32 0.0, %v1316
      %v1318 = vpop.f32.mrf.mxu0
      %1319 = vmatprep.mubr.bf16.mxu0 %v468
      %1320 = vmatmul.mubr.bf16.gmra.mxu0 %v355
      %v1321 = vpop.f32.mrf.mxu0
      %v1322 = vadd.f32 0.0, %v1321
      %v1323 = vpop.f32.mrf.mxu0
      %v1324 = vpop.f32.mrf.mxu0
      %v1325 = vadd.f32 0.0, %v1324
      %v1326 = vpop.f32.mrf.mxu0
      %1327 = vmatprep.mubr.bf16.mxu0 %v471
      %1328 = vmatmul.mubr.bf16.gmra.mxu0 %v357
      %v1329 = vpop.f32.mrf.mxu0
      %v1330 = vadd.f32 0.0, %v1329
      %v1331 = vpop.f32.mrf.mxu0
      %v1332 = vpop.f32.mrf.mxu0
      %v1333 = vadd.f32 0.0, %v1332
      %v1334 = vpop.f32.mrf.mxu0
      %1335 = vmatprep.mubr.bf16.mxu0 %v474
      %1336 = vmatmul.mubr.bf16.gmra.mxu0 %v359
      %v1337 = vpop.f32.mrf.mxu0
      %v1338 = vadd.f32 0.0, %v1337
      %v1339 = vpop.f32.mrf.mxu0
      %v1340 = vpop.f32.mrf.mxu0
      %v1341 = vadd.f32 0.0, %v1340
      %v1342 = vpop.f32.mrf.mxu0
      %1343 = vmatprep.mubr.bf16.mxu0 %v477
      %1344 = vmatmul.mubr.bf16.gmra.mxu0 %v361
      %v1345 = vpop.f32.mrf.mxu0
      %v1346 = vadd.f32 0.0, %v1345
      %v1347 = vpop.f32.mrf.mxu0
      %v1348 = vpop.f32.mrf.mxu0
      %v1349 = vadd.f32 0.0, %v1348
      %v1350 = vpop.f32.mrf.mxu0
      %1351 = vmatprep.mubr.bf16.mxu0 %v480
      %1352 = vmatmul.mubr.bf16.gmra.mxu0 %v363
      %v1353 = vpop.f32.mrf.mxu0
      %v1354 = vadd.f32 0.0, %v1353
      %v1355 = vpop.f32.mrf.mxu0
      %v1356 = vpop.f32.mrf.mxu0
      %v1357 = vadd.f32 0.0, %v1356
      %v1358 = vpop.f32.mrf.mxu0
      %1359 = vmatprep.mubr.bf16.mxu0 %v483
      %1360 = vmatmul.mubr.bf16.gmra.mxu0 %v365
      %v1361 = vpop.f32.mrf.mxu0
      %v1362 = vadd.f32 0.0, %v1361
      %v1363 = vpop.f32.mrf.mxu0
      %v1364 = vpop.f32.mrf.mxu0
      %v1365 = vadd.f32 0.0, %v1364
      %v1366 = vpop.f32.mrf.mxu0
      %1367 = vmatprep.mubr.bf16.mxu0 %v486
      %1368 = vmatmul.mubr.bf16.gmra.mxu0 %v367
      %v1369 = vpop.f32.mrf.mxu0
      %v1370 = vadd.f32 0.0, %v1369
      %v1371 = vpop.f32.mrf.mxu0
      %v1372 = vpop.f32.mrf.mxu0
      %v1373 = vadd.f32 0.0, %v1372
      %v1374 = vpop.f32.mrf.mxu0
      %1375 = vmatprep.mubr.bf16.mxu0 %v489
      %1376 = vmatmul.mubr.bf16.gmra.mxu0 %v369
      %v1377 = vpop.f32.mrf.mxu0
      %v1378 = vadd.f32 0.0, %v1377
      %v1379 = vpop.f32.mrf.mxu0
      %v1380 = vpop.f32.mrf.mxu0
      %v1381 = vadd.f32 0.0, %v1380
      %v1382 = vpop.f32.mrf.mxu0
      %1383 = vmatprep.mubr.bf16.mxu0 %v492
      %1384 = vmatmul.mubr.bf16.gmra.mxu0 %v371
      %v1385 = vpop.f32.mrf.mxu0
      %v1386 = vadd.f32 0.0, %v1385
      %v1387 = vpop.f32.mrf.mxu0
      %v1388 = vpop.f32.mrf.mxu0
      %v1389 = vadd.f32 0.0, %v1388
      %v1390 = vpop.f32.mrf.mxu0
      %1391 = vmatprep.mubr.bf16.mxu0 %v495
      %1392 = vmatmul.mubr.bf16.gmra.mxu0 %v373
      %v1393 = vpop.f32.mrf.mxu0
      %v1394 = vadd.f32 0.0, %v1393
      %v1395 = vpop.f32.mrf.mxu0
      %v1396 = vpop.f32.mrf.mxu0
      %v1397 = vadd.f32 0.0, %v1396
      %v1398 = vpop.f32.mrf.mxu0
      %1399 = vmatprep.mubr.bf16.mxu0 %v498
      %1400 = vmatmul.mubr.bf16.gmra.mxu0 %v375
      %v1401 = vpop.f32.mrf.mxu0
      %v1402 = vadd.f32 0.0, %v1401
      %v1403 = vpop.f32.mrf.mxu0
      %v1404 = vpop.f32.mrf.mxu0
      %v1405 = vadd.f32 0.0, %v1404
      %v1406 = vpop.f32.mrf.mxu0
      %1407 = vmatprep.mubr.bf16.mxu0 %v501
      %1408 = vmatmul.mubr.bf16.gmra.mxu0 %v377
      %v1409 = vpop.f32.mrf.mxu0
      %v1410 = vadd.f32 0.0, %v1409
      %v1411 = vpop.f32.mrf.mxu0
      %v1412 = vpop.f32.mrf.mxu0
      %v1413 = vadd.f32 0.0, %v1412
      %v1414 = vpop.f32.mrf.mxu0
      %1415 = vmatprep.mubr.bf16.mxu0 %v504
      %1416 = vmatmul.mubr.bf16.gmra.mxu0 %v379
      %v1417 = vpop.f32.mrf.mxu0
      %v1418 = vadd.f32 0.0, %v1417
      %v1419 = vpop.f32.mrf.mxu0
      %v1420 = vpop.f32.mrf.mxu0
      %v1421 = vadd.f32 0.0, %v1420
      %v1422 = vpop.f32.mrf.mxu0
      %1423 = vmatprep.mubr.bf16.mxu0 %v991
      %1424 = vmatmul.mubr.bf16.gmra.mxu0 %v927
      %v1425 = vpop.f32.mrf.mxu0
      %v1426 = vadd.f32 0.0, %v1425
      %v1427 = vpop.f32.mrf.mxu0
      %v1428 = vpop.f32.mrf.mxu0
      %v1429 = vadd.f32 0.0, %v1428
      %v1430 = vpop.f32.mrf.mxu0
      %1431 = vmatprep.mubr.bf16.mxu0 %v1277
      %1432 = vmatmul.mubr.bf16.gmra.mxu0 %v1213
      %v1433 = vpop.f32.mrf.mxu0
      %v1434 = vadd.f32 0.0, %v1433
      %v1435 = vpop.f32.mrf.mxu0
      %v1436 = vpop.f32.mrf.mxu0
      %v1437 = vadd.f32 0.0, %v1436
      %v1438 = vpop.f32.mrf.mxu0
      %1439 = vdwg.mxu0
      %v1440 = vadd.f32 %v1154, %v1314
      %v1441 = vadd.f32 %v1155, %v1317
      %v1442 = vadd.f32 %v1156, %v1322
      %v1443 = vadd.f32 %v1157, %v1325
      %v1444 = vadd.f32 %v1158, %v1330
      %v1445 = vadd.f32 %v1159, %v1333
      %v1446 = vadd.f32 %v1160, %v1338
      %v1447 = vadd.f32 %v1161, %v1341
      %v1448 = vadd.f32 %v1162, %v1346
      %v1449 = vadd.f32 %v1163, %v1349
      %v1450 = vadd.f32 %v1164, %v1354
      %v1451 = vadd.f32 %v1165, %v1357
      %v1452 = vadd.f32 %v1166, %v1362
      %v1453 = vadd.f32 %v1167, %v1365
      %v1454 = vadd.f32 %v1168, %v1370
      %v1455 = vadd.f32 %v1169, %v1373
      %v1456 = vadd.f32 %v1170, %v1378
      %v1457 = vadd.f32 %v1171, %v1381
      %v1458 = vadd.f32 %v1172, %v1386
      %v1459 = vadd.f32 %v1173, %v1389
      %v1460 = vadd.f32 %v1174, %v1394
      %v1461 = vadd.f32 %v1175, %v1397
      %v1462 = vadd.f32 %v1176, %v1402
      %v1463 = vadd.f32 %v1177, %v1405
      %v1464 = vadd.f32 %v1178, %v1410
      %v1465 = vadd.f32 %v1179, %v1413
      %v1466 = vadd.f32 %v1180, %v1418
      %v1467 = vadd.f32 %v1181, %v1421
      %v1468 = vadd.f32 %v1182, %v1426
      %v1469 = vadd.f32 %v1183, %v1429
      %v1470 = vadd.f32 %v1184, %v1434
      %v1471 = vadd.f32 %v1185, %v1437
      %s1472 = scalar_lea.vmem %s1, 320
      %v1473 = vld [vmem:[%s1472] sm:$0xf]
      %v1474 = vld [vmem:[%s1472 + $0x4] sm:$0xf]
      %v1475 = vld [vmem:[%s1472 + $0x8] sm:$0xf]
      %v1476 = vld [vmem:[%s1472 + $0xc] sm:$0xf]
      %v1477 = vld [vmem:[%s1472 + $0x10] sm:$0xf]
      %v1478 = vld [vmem:[%s1472 + $0x14] sm:$0xf]
      %v1479 = vld [vmem:[%s1472 + $0x18] sm:$0xf]
      %v1480 = vld [vmem:[%s1472 + $0x1c] sm:$0xf]
      %v1481 = vld [vmem:[%s1472 + $0x20] sm:$0xf]
      %v1482 = vld [vmem:[%s1472 + $0x24] sm:$0xf]
      %v1483 = vld [vmem:[%s1472 + $0x28] sm:$0xf]
      %v1484 = vld [vmem:[%s1472 + $0x2c] sm:$0xf]
      %v1485 = vld [vmem:[%s1472 + $0x30] sm:$0xf]
      %v1486 = vld [vmem:[%s1472 + $0x34] sm:$0xf]
      %v1487 = vld [vmem:[%s1472 + $0x38] sm:$0xf]
      %v1488 = vld [vmem:[%s1472 + $0x3c] sm:$0xf]
      %v1489 = vld [vmem:[%s1472 + $0x40] sm:$0xf]
      %v1490 = vld [vmem:[%s1472 + $0x44] sm:$0xf]
      %v1491 = vld [vmem:[%s1472 + $0x48] sm:$0xf]
      %v1492 = vld [vmem:[%s1472 + $0x4c] sm:$0xf]
      %v1495 = vunpack.c.l.b16 %v210
      %v1496 = vunpack.c.h.b16 %v210
      %v1497 = vunpack.c.l.b16 %v211
      %v1498 = vunpack.c.h.b16 %v211
      %v1499 = vpack.c.b16 %v1497, %v1495
      %v1500 = vpack.c.b16 %v1498, %v1496
      %v1522 = vunpack.c.l.b16 %v1473
      %v1523 = vunpack.c.l.b16 %v1474
      %v1524 = vunpack.c.l.b16 %v1475
      %v1525 = vunpack.c.l.b16 %v1476
      %v1526 = vunpack.c.l.b16 %v1477
      %v1527 = vunpack.c.l.b16 %v1478
      %v1528 = vunpack.c.l.b16 %v1479
      %v1529 = vunpack.c.l.b16 %v1480
      %v1530 = vunpack.c.l.b16 %v1481
      %v1531 = vunpack.c.l.b16 %v1482
      %v1532 = vunpack.c.l.b16 %v1483
      %v1533 = vunpack.c.l.b16 %v1484
      %v1534 = vunpack.c.l.b16 %v1485
      %v1535 = vunpack.c.l.b16 %v1486
      %v1536 = vunpack.c.l.b16 %v1487
      %v1537 = vunpack.c.l.b16 %v1488
      %v1538 = vunpack.c.l.b16 %v1489
      %v1539 = vunpack.c.l.b16 %v1490
      %v1540 = vunpack.c.l.b16 %v1491
      %v1541 = vunpack.c.l.b16 %v1492
      %v1542 = vpack.c.b16 %v1523, %v1522
      %v1543 = vpack.c.b16 %v1525, %v1524
      %v1544 = vpack.c.b16 %v1527, %v1526
      %v1545 = vpack.c.b16 %v1529, %v1528
      %v1546 = vpack.c.b16 %v1531, %v1530
      %v1547 = vpack.c.b16 %v1533, %v1532
      %v1548 = vpack.c.b16 %v1535, %v1534
      %v1549 = vpack.c.b16 %v1537, %v1536
      %v1550 = vpack.c.b16 %v1539, %v1538
      %v1551 = vpack.c.b16 %v1541, %v1540
      %v1563 = vsel %vm457, %v1500, 0
      %1565 = vmatprep.subr.bf16.mxu0 0
      %1566 = vmatpush1.bf16.msra.mxu0 %v1549
      %1567 = vmatprep.subr.bf16.mxu0 0
      %1568 = vmatpush1.bf16.msra.mxu0 %v1548
      %1569 = vmatprep.subr.bf16.mxu0 0
      %1570 = vmatpush1.bf16.msra.mxu0 %v1547
      %1571 = vmatprep.subr.bf16.mxu0 0
      %1572 = vmatpush1.bf16.msra.mxu0 %v1546
      %1573 = vmatprep.subr.bf16.mxu0 0
      %1574 = vmatpush1.bf16.msra.mxu0 %v1545
      %1575 = vmatprep.subr.bf16.mxu0 0
      %1576 = vmatpush1.bf16.msra.mxu0 %v1544
      %1577 = vmatprep.subr.bf16.mxu0 0
      %1578 = vmatpush1.bf16.msra.mxu0 %v1543
      %1579 = vmatprep.subr.bf16.mxu0 0
      %1580 = vmatpush1.bf16.msra.mxu0 %v1542
      %1581 = vmatprep.subr.bf16.mxu0 0
      %1582 = vmatpush2.bf16.msra.mxu0 0
      %1583 = vmatprep.subr.bf16.mxu0 0
      %1584 = vmatpush2.bf16.msra.mxu0 0
      %1585 = vmatprep.subr.bf16.mxu0 0
      %1586 = vmatpush2.bf16.msra.mxu0 0
      %1587 = vmatprep.subr.bf16.mxu0 0
      %1588 = vmatpush2.bf16.msra.mxu0 0
      %1589 = vmatprep.subr.bf16.mxu0 0
      %1590 = vmatpush2.bf16.msra.mxu0 0
      %1591 = vmatprep.subr.bf16.mxu0 0
      %1592 = vmatpush2.bf16.msra.mxu0 0
      %1593 = vmatprep.subr.bf16.mxu0 0
      %1594 = vmatpush2.bf16.msra.mxu0 %v1551
      %1595 = vmatprep.subr.bf16.mxu0 0
      %1596 = vmatpush2.bf16.msra.mxu0 %v1550
      %1597 = vmatprep.mubr.bf16.mxu0 %v468
      %1598 = vmatmul.mubr.bf16.gmra.mxu0 %v355
      %v1599 = vpop.f32.mrf.mxu0
      %v1600 = vadd.f32 0.0, %v1599
      %v1601 = vpop.f32.mrf.mxu0
      %v1602 = vpop.f32.mrf.mxu0
      %v1603 = vadd.f32 0.0, %v1602
      %v1604 = vpop.f32.mrf.mxu0
      %1605 = vmatprep.mubr.bf16.mxu0 %v471
      %1606 = vmatmul.mubr.bf16.gmra.mxu0 %v357
      %v1607 = vpop.f32.mrf.mxu0
      %v1608 = vadd.f32 0.0, %v1607
      %v1609 = vpop.f32.mrf.mxu0
      %v1610 = vpop.f32.mrf.mxu0
      %v1611 = vadd.f32 0.0, %v1610
      %v1612 = vpop.f32.mrf.mxu0
      %1613 = vmatprep.mubr.bf16.mxu0 %v474
      %1614 = vmatmul.mubr.bf16.gmra.mxu0 %v359
      %v1615 = vpop.f32.mrf.mxu0
      %v1616 = vadd.f32 0.0, %v1615
      %v1617 = vpop.f32.mrf.mxu0
      %v1618 = vpop.f32.mrf.mxu0
      %v1619 = vadd.f32 0.0, %v1618
      %v1620 = vpop.f32.mrf.mxu0
      %1621 = vmatprep.mubr.bf16.mxu0 %v477
      %1622 = vmatmul.mubr.bf16.gmra.mxu0 %v361
      %v1623 = vpop.f32.mrf.mxu0
      %v1624 = vadd.f32 0.0, %v1623
      %v1625 = vpop.f32.mrf.mxu0
      %v1626 = vpop.f32.mrf.mxu0
      %v1627 = vadd.f32 0.0, %v1626
      %v1628 = vpop.f32.mrf.mxu0
      %1629 = vmatprep.mubr.bf16.mxu0 %v480
      %1630 = vmatmul.mubr.bf16.gmra.mxu0 %v363
      %v1631 = vpop.f32.mrf.mxu0
      %v1632 = vadd.f32 0.0, %v1631
      %v1633 = vpop.f32.mrf.mxu0
      %v1634 = vpop.f32.mrf.mxu0
      %v1635 = vadd.f32 0.0, %v1634
      %v1636 = vpop.f32.mrf.mxu0
      %1637 = vmatprep.mubr.bf16.mxu0 %v483
      %1638 = vmatmul.mubr.bf16.gmra.mxu0 %v365
      %v1639 = vpop.f32.mrf.mxu0
      %v1640 = vadd.f32 0.0, %v1639
      %v1641 = vpop.f32.mrf.mxu0
      %v1642 = vpop.f32.mrf.mxu0
      %v1643 = vadd.f32 0.0, %v1642
      %v1644 = vpop.f32.mrf.mxu0
      %1645 = vmatprep.mubr.bf16.mxu0 %v486
      %1646 = vmatmul.mubr.bf16.gmra.mxu0 %v367
      %v1647 = vpop.f32.mrf.mxu0
      %v1648 = vadd.f32 0.0, %v1647
      %v1649 = vpop.f32.mrf.mxu0
      %v1650 = vpop.f32.mrf.mxu0
      %v1651 = vadd.f32 0.0, %v1650
      %v1652 = vpop.f32.mrf.mxu0
      %1653 = vmatprep.mubr.bf16.mxu0 %v489
      %1654 = vmatmul.mubr.bf16.gmra.mxu0 %v369
      %v1655 = vpop.f32.mrf.mxu0
      %v1656 = vadd.f32 0.0, %v1655
      %v1657 = vpop.f32.mrf.mxu0
      %v1658 = vpop.f32.mrf.mxu0
      %v1659 = vadd.f32 0.0, %v1658
      %v1660 = vpop.f32.mrf.mxu0
      %1661 = vmatprep.mubr.bf16.mxu0 %v492
      %1662 = vmatmul.mubr.bf16.gmra.mxu0 %v371
      %v1663 = vpop.f32.mrf.mxu0
      %v1664 = vadd.f32 0.0, %v1663
      %v1665 = vpop.f32.mrf.mxu0
      %v1666 = vpop.f32.mrf.mxu0
      %v1667 = vadd.f32 0.0, %v1666
      %v1668 = vpop.f32.mrf.mxu0
      %1669 = vmatprep.mubr.bf16.mxu0 %v495
      %1670 = vmatmul.mubr.bf16.gmra.mxu0 %v373
      %v1671 = vpop.f32.mrf.mxu0
      %v1672 = vadd.f32 0.0, %v1671
      %v1673 = vpop.f32.mrf.mxu0
      %v1674 = vpop.f32.mrf.mxu0
      %v1675 = vadd.f32 0.0, %v1674
      %v1676 = vpop.f32.mrf.mxu0
      %1677 = vmatprep.mubr.bf16.mxu0 %v498
      %1678 = vmatmul.mubr.bf16.gmra.mxu0 %v375
      %v1679 = vpop.f32.mrf.mxu0
      %v1680 = vadd.f32 0.0, %v1679
      %v1681 = vpop.f32.mrf.mxu0
      %v1682 = vpop.f32.mrf.mxu0
      %v1683 = vadd.f32 0.0, %v1682
      %v1684 = vpop.f32.mrf.mxu0
      %1685 = vmatprep.mubr.bf16.mxu0 %v501
      %1686 = vmatmul.mubr.bf16.gmra.mxu0 %v377
      %v1687 = vpop.f32.mrf.mxu0
      %v1688 = vadd.f32 0.0, %v1687
      %v1689 = vpop.f32.mrf.mxu0
      %v1690 = vpop.f32.mrf.mxu0
      %v1691 = vadd.f32 0.0, %v1690
      %v1692 = vpop.f32.mrf.mxu0
      %1693 = vmatprep.mubr.bf16.mxu0 %v504
      %1694 = vmatmul.mubr.bf16.gmra.mxu0 %v379
      %v1695 = vpop.f32.mrf.mxu0
      %v1696 = vadd.f32 0.0, %v1695
      %v1697 = vpop.f32.mrf.mxu0
      %v1698 = vpop.f32.mrf.mxu0
      %v1699 = vadd.f32 0.0, %v1698
      %v1700 = vpop.f32.mrf.mxu0
      %1701 = vmatprep.mubr.bf16.mxu0 %v991
      %1702 = vmatmul.mubr.bf16.gmra.mxu0 %v927
      %v1703 = vpop.f32.mrf.mxu0
      %v1704 = vadd.f32 0.0, %v1703
      %v1705 = vpop.f32.mrf.mxu0
      %v1706 = vpop.f32.mrf.mxu0
      %v1707 = vadd.f32 0.0, %v1706
      %v1708 = vpop.f32.mrf.mxu0
      %1709 = vmatprep.mubr.bf16.mxu0 %v1277
      %1710 = vmatmul.mubr.bf16.gmra.mxu0 %v1213
      %v1711 = vpop.f32.mrf.mxu0
      %v1712 = vadd.f32 0.0, %v1711
      %v1713 = vpop.f32.mrf.mxu0
      %v1714 = vpop.f32.mrf.mxu0
      %v1715 = vadd.f32 0.0, %v1714
      %v1716 = vpop.f32.mrf.mxu0
      %1717 = vmatprep.mubr.bf16.mxu0 %v1563
      %1718 = vmatmul.mubr.bf16.gmra.mxu0 %v1499
      %v1719 = vpop.f32.mrf.mxu0
      %v1720 = vadd.f32 0.0, %v1719
      %v1721 = vpop.f32.mrf.mxu0
      %v1722 = vpop.f32.mrf.mxu0
      %v1723 = vadd.f32 0.0, %v1722
      %v1724 = vpop.f32.mrf.mxu0
      %1725 = vdwg.mxu0
      %v1726 = vadd.f32 %v1440, %v1600
      %v1727 = vadd.f32 %v1441, %v1603
      %v1728 = vadd.f32 %v1442, %v1608
      %v1729 = vadd.f32 %v1443, %v1611
      %v1730 = vadd.f32 %v1444, %v1616
      %v1731 = vadd.f32 %v1445, %v1619
      %v1732 = vadd.f32 %v1446, %v1624
      %v1733 = vadd.f32 %v1447, %v1627
      %v1734 = vadd.f32 %v1448, %v1632
      %v1735 = vadd.f32 %v1449, %v1635
      %v1736 = vadd.f32 %v1450, %v1640
      %v1737 = vadd.f32 %v1451, %v1643
      %v1738 = vadd.f32 %v1452, %v1648
      %v1739 = vadd.f32 %v1453, %v1651
      %v1740 = vadd.f32 %v1454, %v1656
      %v1741 = vadd.f32 %v1455, %v1659
      %v1742 = vadd.f32 %v1456, %v1664
      %v1743 = vadd.f32 %v1457, %v1667
      %v1744 = vadd.f32 %v1458, %v1672
      %v1745 = vadd.f32 %v1459, %v1675
      %v1746 = vadd.f32 %v1460, %v1680
      %v1747 = vadd.f32 %v1461, %v1683
      %v1748 = vadd.f32 %v1462, %v1688
      %v1749 = vadd.f32 %v1463, %v1691
      %v1750 = vadd.f32 %v1464, %v1696
      %v1751 = vadd.f32 %v1465, %v1699
      %v1752 = vadd.f32 %v1466, %v1704
      %v1753 = vadd.f32 %v1467, %v1707
      %v1754 = vadd.f32 %v1468, %v1712
      %v1755 = vadd.f32 %v1469, %v1715
      %v1756 = vadd.f32 %v1470, %v1720
      %v1757 = vadd.f32 %v1471, %v1723
      %v1758 = vmax.f32 %v1726, %v1727
      %v1759 = vmax.f32 %v1728, %v1729
      %v1760 = vmax.f32 %v1730, %v1731
      %v1761 = vmax.f32 %v1732, %v1733
      %v1762 = vmax.f32 %v1734, %v1735
      %v1763 = vmax.f32 %v1736, %v1737
      %v1764 = vmax.f32 %v1738, %v1739
      %v1765 = vmax.f32 %v1740, %v1741
      %v1766 = vmax.f32 %v1742, %v1743
      %v1767 = vmax.f32 %v1744, %v1745
      %v1768 = vmax.f32 %v1746, %v1747
      %v1769 = vmax.f32 %v1748, %v1749
      %v1770 = vmax.f32 %v1750, %v1751
      %v1771 = vmax.f32 %v1752, %v1753
      %v1772 = vmax.f32 %v1754, %v1755
      %v1773 = vmax.f32 %v1756, %v1757
      %v1774 = vmax.f32 %v1758, %v1759
      %v1775 = vmax.f32 %v1760, %v1761
      %v1776 = vmax.f32 %v1762, %v1763
      %v1777 = vmax.f32 %v1764, %v1765
      %v1778 = vmax.f32 %v1766, %v1767
      %v1779 = vmax.f32 %v1768, %v1769
      %v1780 = vmax.f32 %v1770, %v1771
      %v1781 = vmax.f32 %v1772, %v1773
      %v1782 = vld [vmem:[%s2] sm:$0x1]
      %v1784 = vlaneseq
      %v1785 = vshrl.u32 %v1784, 7
      %v1786 = vsub.s32 0, %v1785
      %v1787 = vrot.slane %v1782, %v1786
      %v1789 = vadd.f32 %v1774, %v1787
      %v1790 = vadd.f32 %v1775, %v1787
      %v1791 = vadd.f32 %v1776, %v1787
      %v1792 = vadd.f32 %v1777, %v1787
      %v1793 = vadd.f32 %v1778, %v1787
      %v1794 = vadd.f32 %v1779, %v1787
      %v1795 = vadd.f32 %v1780, %v1787
      %v1796 = vadd.f32 %v1781, %v1787
      %v1797 = vpack.c.bf16 %v1789, %v1789
      %v1798 = vpack.c.bf16 %v1790, %v1790
      %v1799 = vpack.c.bf16 %v1791, %v1791
      %v1800 = vpack.c.bf16 %v1792, %v1792
      %v1801 = vpack.c.bf16 %v1793, %v1793
      %v1802 = vpack.c.bf16 %v1794, %v1794
      %v1803 = vpack.c.bf16 %v1795, %v1795
      %v1804 = vpack.c.bf16 %v1796, %v1796
      %1805 = vst [vmem:[%s170] sm:$0xf] %v1797
      %1806 = vst [vmem:[%s170 + $0x4] sm:$0xf] %v1798
      %1807 = vst [vmem:[%s170 + $0x8] sm:$0xf] %v1799
      %1808 = vst [vmem:[%s170 + $0xc] sm:$0xf] %v1800
      %1809 = vst [vmem:[%s170 + $0x10] sm:$0xf] %v1801
      %1810 = vst [vmem:[%s170 + $0x14] sm:$0xf] %v1802
      %1811 = vst [vmem:[%s170 + $0x18] sm:$0xf] %v1803
      %1812 = vst [vmem:[%s170 + $0x1c] sm:$0xf] %v1804
      %p1813 = scmp.lt.s32.totalorder %s14, 1
      %s1814 = scalar_select %p1813, %s14, 1
      %s1815 = smul.addr %s1814, 8
      %s1816 = smul.addr %s1815, 4
      %s1817 = scalar_lea.vmem %s3, %s1816
      // Predicated region
      $region33: #{test_forward.5} parent=31 // pred_check
        %p1818 = pneg %p100
      $region34: #{test_forward.5} parent=31 // pred_check_branch
        %1820 = sbr.rel (%p1818) target = $region36
      $region35: #{test_forward.5} parent=31 // pred_region
        _
      $region36: #{test_forward.5} parent=31 // pred_fallthru
        _
    $region32: #{test_forward.5} parent=5 // pred_fallthru
      _
    %p1821 = scmp.le.s32.totalorder 2, %s9
    // Predicated region
    $region37: #{test_forward.5} parent=5 // pred_check
      %p1822 = pneg %p1821
    $region38: #{test_forward.5} parent=5 // pred_check_branch
      %1824 = sbr.rel (%p1822) target = $region40
    $region39: #{test_forward.5} parent=5 // pred_region
      %s1825 = ssub.s32 %s9, 2
      // Predicated region
      $region41: #{test_forward.5} parent=39 // pred_check
        %p1826 = pneg %p106
      $region42: #{test_forward.5} parent=39 // pred_check_branch
        %1828 = sbr.rel (%p1826) target = $region44
      $region43: #{test_forward.5} parent=39 // pred_region
        %p1829 = scmp.lt.s32.totalorder %s15, 1
        %s1830 = scalar_select %p1829, %s15, 1
        %s1831 = smul.addr %s1830, 8
        %s1832 = smul.addr %s1831, 4
        %s1833 = scalar_lea.vmem %s3, %s1832
      $region44: #{test_forward.5} parent=39 // pred_fallthru
        _
    $region40: #{test_forward.5} parent=5 // pred_fallthru
      _
  $region6: #{test_forward.5} parent=0 // loop_footer
    %s13 = sadd.s32 1, %s9
  $region7: #{test_forward.5} parent=0 // loop_footer_branch
    %8 = sbr.rel target = $region3
  $region8: #{test_forward.5} parent=0 // loop_exit
    _

// kernel: test_forward.6
$region0: #{test_forward.6}
  #allocation0 [shape = 'u32[]', space=smem, size = 0x4, offset = 0x4, fixed_abs, tag = 'smem constant byte address 0x4 - core index']
  #allocation1 [shape = 'u32[144,128]{1,0:T(1,128)}', space=vmem, size = 0x12000, scoped, tag = 'internal scratch']
  %s0 = inlined_call_operand.vmem [shape: bf16[2,12,8,160], index: 0, kind: input, shape index: {}]
  %s1 = inlined_call_operand.vmem [shape: bf16[5,160,128], index: 1, kind: input, shape index: {}]
  %s2 = inlined_call_operand.vmem [shape: f32[1,128], index: 2, kind: input, shape index: {}]
  %s3 = inlined_call_operand.vmem [shape: bf16[2,4,4,128], index: 3, kind: output, shape index: {}]
  %s4 = sld [smem:[#allocation0]]
  $region45: #{test_forward.6} parent=0
    _
  %s6 = ssub.s32 1, %s4
  %s7 = scalar_select 0, %s6, %s4
  loop: start=0, step=1, limit=4
  $region2: #{test_forward.6} parent=0 // loop_pre_header
    _
  $region3: #{test_forward.6} parent=0 // loop_header
    %s9 = sphi 0, %s13
    %p10 = scmp.ge.s32.totalorder %s9, 4
    %s19 = sphi 0, %s21
    %s22 = sphi 0, %s19
    %s23 = sphi 0, %s22
    %s39 = sphi 0, %s23
    %s43 = sphi 0, %s43
    %s45 = sphi 0, %s43
    %s46 = sphi 0, %s45
    %s60 = sphi 0, %s46
    %s64 = sphi 0, %s64
    %s66 = sphi 0, %s64
    %s67 = sphi 0, %s66
    %s81 = sphi 0, %s67
    %s87 = sphi 0, %s89
    %s90 = sphi 0, %s87
    %s91 = sphi 0, %s90
    %s107 = sphi 0, %s91
  $region4: #{test_forward.6} parent=0 // loop_header_branch
    %12 = sbr.rel (%p10) target = $region8
  $region5: #{test_forward.6} parent=0 // loop_body
    %s14 = ssub.s32 %s9, 1
    %s15 = ssub.s32 %s9, 2
    %s16 = sadd.s32 %s9, 1
    %s17 = ssub.s32 %s9, %s16
    %p18 = scmp.eq.s32.totalorder %s17, 0
    %s20 = sadd.s32 %s19, 1
    %s21 = scalar_select %p18, %s19, %s20
    %p24 = pneg %p18
    %p25 = scmp.eq.s32.totalorder %s9, 1
    %p26 = por %p24, %p25
    %p27 = scmp.ne.s32.totalorder %s19, %s22
    %p28 = scmp.eq.s32.totalorder %s9, 0
    %p29 = por %p27, %p28
    %p30 = scmp.ne.s32.totalorder %s19, %s22
    %p31 = scmp.eq.s32.totalorder %s14, 1
    %p32 = por %p30, %p31
    %p33 = scmp.ne.s32.totalorder %s22, %s23
    %p34 = scmp.eq.s32.totalorder %s14, 0
    %p35 = por %p33, %p34
    %p36 = scmp.ne.s32.totalorder %s22, %s23
    %p37 = scmp.eq.s32.totalorder %s15, 1
    %p38 = por %p36, %p37
    %p40 = scmp.ne.s32.totalorder %s23, %s39
    %p41 = scmp.eq.s32.totalorder %s15, 0
    %p42 = por %p40, %p41
    %s44 = sadd.s32 %s43, 1
    %p47 = scmp.eq.s32.totalorder %s9, 1
    %p48 = scmp.ne.s32.totalorder %s43, %s45
    %p49 = scmp.eq.s32.totalorder %s9, 0
    %p50 = por %p48, %p49
    %p51 = scmp.ne.s32.totalorder %s43, %s45
    %p52 = scmp.eq.s32.totalorder %s14, 1
    %p53 = por %p51, %p52
    %p54 = scmp.ne.s32.totalorder %s45, %s46
    %p55 = scmp.eq.s32.totalorder %s14, 0
    %p56 = por %p54, %p55
    %p57 = scmp.ne.s32.totalorder %s45, %s46
    %p58 = scmp.eq.s32.totalorder %s15, 1
    %p59 = por %p57, %p58
    %p61 = scmp.ne.s32.totalorder %s46, %s60
    %p62 = scmp.eq.s32.totalorder %s15, 0
    %p63 = por %p61, %p62
    %s65 = sadd.s32 %s64, 1
    %p68 = scmp.eq.s32.totalorder %s9, 1
    %p69 = scmp.ne.s32.totalorder %s64, %s66
    %p70 = scmp.eq.s32.totalorder %s9, 0
    %p71 = por %p69, %p70
    %p72 = scmp.ne.s32.totalorder %s64, %s66
    %p73 = scmp.eq.s32.totalorder %s14, 1
    %p74 = por %p72, %p73
    %p75 = scmp.ne.s32.totalorder %s66, %s67
    %p76 = scmp.eq.s32.totalorder %s14, 0
    %p77 = por %p75, %p76
    %p78 = scmp.ne.s32.totalorder %s66, %s67
    %p79 = scmp.eq.s32.totalorder %s15, 1
    %p80 = por %p78, %p79
    %p82 = scmp.ne.s32.totalorder %s67, %s81
    %p83 = scmp.eq.s32.totalorder %s15, 0
    %p84 = por %p82, %p83
    %s85 = ssub.s32 %s9, %s16
    %p86 = scmp.eq.s32.totalorder %s85, 0
    %s88 = sadd.s32 %s87, 1
    %s89 = scalar_select %p86, %s87, %s88
    %p92 = pneg %p86
    %p93 = scmp.eq.s32.totalorder %s9, 1
    %p94 = por %p92, %p93
    %p95 = scmp.ne.s32.totalorder %s87, %s90
    %p96 = scmp.eq.s32.totalorder %s9, 0
    %p97 = por %p95, %p96
    %p98 = scmp.ne.s32.totalorder %s87, %s90
    %p99 = scmp.eq.s32.totalorder %s14, 1
    %p100 = por %p98, %p99
    %p101 = scmp.ne.s32.totalorder %s90, %s91
    %p102 = scmp.eq.s32.totalorder %s14, 0
    %p103 = por %p101, %p102
    %p104 = scmp.ne.s32.totalorder %s90, %s91
    %p105 = scmp.eq.s32.totalorder %s15, 1
    %p106 = por %p104, %p105
    %p108 = scmp.ne.s32.totalorder %s91, %s107
    %p109 = scmp.eq.s32.totalorder %s15, 0
    %p110 = por %p108, %p109
    %p111 = scmp.le.s32.totalorder 1, %s9
    %p112 = scmp.lt.s32.totalorder %s9, 3
    %p113 = pnand %p111, %p112
    %p114 = pneg %p113
    // Predicated region
    $region9: #{test_forward.6} parent=5 // pred_check
      _
    $region10: #{test_forward.6} parent=5 // pred_check_branch
      %116 = sbr.rel (%p113) target = $region12
    $region11: #{test_forward.6} parent=5 // pred_region
      %s117 = ssub.s32 %s9, 1
      // Predicated region
      $region13: #{test_forward.6} parent=11 // pred_check
        %p118 = pneg %p56
      $region14: #{test_forward.6} parent=11 // pred_check_branch
        %120 = sbr.rel (%p118) target = $region16
      $region15: #{test_forward.6} parent=11 // pred_region
        _
      $region16: #{test_forward.6} parent=11 // pred_fallthru
        _
      // Predicated region
      $region17: #{test_forward.6} parent=11 // pred_check
        %p121 = pneg %p77
      $region18: #{test_forward.6} parent=11 // pred_check_branch
        %123 = sbr.rel (%p121) target = $region20
      $region19: #{test_forward.6} parent=11 // pred_region
        _
      $region20: #{test_forward.6} parent=11 // pred_fallthru
        _
    $region12: #{test_forward.6} parent=5 // pred_fallthru
      _
    %p124 = scmp.lt.s32.totalorder %s9, 2
    // Predicated region
    $region21: #{test_forward.6} parent=5 // pred_check
      %p125 = pneg %p124
    $region22: #{test_forward.6} parent=5 // pred_check_branch
      %127 = sbr.rel (%p125) target = $region24
    $region23: #{test_forward.6} parent=5 // pred_region
      // Predicated region
      $region25: #{test_forward.6} parent=23 // pred_check
        %p128 = pneg %p29
      $region26: #{test_forward.6} parent=23 // pred_check_branch
        %130 = sbr.rel (%p128) target = $region28
      $region27: #{test_forward.6} parent=23 // pred_region
        %p131 = scmp.lt.s32.totalorder %s9, 1
        %s132 = scalar_select %p131, %s9, 1
        %s133 = smul.addr %s132, 24
        %s134 = smul.addr %s133, 4
        %s135 = scalar_lea.vmem %s0, %s134
      $region28: #{test_forward.6} parent=23 // pred_fallthru
        _
    $region24: #{test_forward.6} parent=5 // pred_fallthru
      _
    %p136 = scmp.le.s32.totalorder 1, %s9
    %p137 = scmp.lt.s32.totalorder %s9, 3
    %p138 = pnand %p136, %p137
    %p139 = pneg %p138
    // Predicated region
    $region29: #{test_forward.6} parent=5 // pred_check
      _
    $region30: #{test_forward.6} parent=5 // pred_check_branch
      %141 = sbr.rel (%p138) target = $region32
    $region31: #{test_forward.6} parent=5 // pred_region
      %s142 = ssub.s32 %s9, 1
      %p143 = scmp.lt.s32.totalorder %s14, 1
      %s144 = scalar_select %p143, %s14, 1
      %s145 = smul.addr %s144, 24
      %s146 = smul.addr %s145, 4
      %s147 = scalar_lea.vmem %s0, %s146
      %p148 = pneg %p35
      %p149 = pneg %p32
      %p150 = pneg %p56
      %p151 = pneg %p53
      %p152 = pneg %p77
      %p153 = pneg %p74
      %p154 = pneg %p103
      %p155 = pneg %p100
      %p156 = scmp.lt.s32.totalorder %s14, 1
      %s157 = scalar_select %p156, %s14, 1
      %s158 = smul.addr %s157, 4
      %s159 = smul.addr %s158, 2
      %s160 = scalar_lea.vmem %s3, %s159
      %p161 = scmp.lt.s32.totalorder %s14, 1
      %s162 = scalar_select %p161, %s14, 1
      %s163 = smul.addr %s162, 24
      %s164 = smul.addr %s163, 4
      %s165 = scalar_lea.vmem %s0, %s164
      %p166 = scmp.lt.s32.totalorder %s14, 1
      %s167 = scalar_select %p166, %s14, 1
      %s168 = smul.addr %s167, 4
      %s169 = smul.addr %s168, 2
      %s170 = scalar_lea.vmem %s3, %s169
      %v172 = vld [vmem:[%s165] sm:$0xff]
      %v173 = vld [vmem:[%s165 + $0x8] sm:$0xff]
      %v174 = vld [vmem:[%s165 + $0x10] sm:$0xff]
      %v175 = vld [vmem:[%s165 + $0x18] sm:$0xff]
      %v176 = vld [vmem:[%s165 + $0x20] sm:$0xff]
      %v177 = vld [vmem:[%s165 + $0x28] sm:$0xff]
      %v178 = vld [vmem:[%s165 + $0x30] sm:$0xff]
      %v179 = vld [vmem:[%s165 + $0x38] sm:$0xff]
      %v180 = vld [vmem:[%s165 + $0x40] sm:$0xff]
      %v181 = vld [vmem:[%s165 + $0x48] sm:$0xff]
      %v182 = vld [vmem:[%s165 + $0x50] sm:$0xff]
      %v183 = vld [vmem:[%s165 + $0x58] sm:$0xff]
      %v184 = vld [vmem:[%s1] sm:$0xf]
      %v185 = vld [vmem:[%s1 + $0x4] sm:$0xf]
      %v186 = vld [vmem:[%s1 + $0x8] sm:$0xf]
      %v187 = vld [vmem:[%s1 + $0xc] sm:$0xf]
      %v188 = vld [vmem:[%s1 + $0x10] sm:$0xf]
      %v189 = vld [vmem:[%s1 + $0x14] sm:$0xf]
      %v190 = vld [vmem:[%s1 + $0x18] sm:$0xf]
      %v191 = vld [vmem:[%s1 + $0x1c] sm:$0xf]
      %v192 = vld [vmem:[%s1 + $0x20] sm:$0xf]
      %v193 = vld [vmem:[%s1 + $0x24] sm:$0xf]
      %v194 = vld [vmem:[%s1 + $0x28] sm:$0xf]
      %v195 = vld [vmem:[%s1 + $0x2c] sm:$0xf]
      %v196 = vld [vmem:[%s1 + $0x30] sm:$0xf]
      %v197 = vld [vmem:[%s1 + $0x34] sm:$0xf]
      %v198 = vld [vmem:[%s1 + $0x38] sm:$0xf]
      %v199 = vld [vmem:[%s1 + $0x3c] sm:$0xf]
      %v200 = vld [vmem:[%s1 + $0x40] sm:$0xf]
      %v201 = vld [vmem:[%s1 + $0x44] sm:$0xf]
      %v202 = vld [vmem:[%s1 + $0x48] sm:$0xf]
      %v203 = vld [vmem:[%s1 + $0x4c] sm:$0xf]
      %s204 = scalar_lea.vmem %s1, 80
      %v205 = vld [vmem:[%s204] sm:$0xf]
      %v206 = vld [vmem:[%s204 + $0x4] sm:$0xf]
      %v207 = vld [vmem:[%s204 + $0x8] sm:$0xf]
      %v208 = vld [vmem:[%s204 + $0xc] sm:$0xf]
      %v209 = vld [vmem:[%s204 + $0x10] sm:$0xf]
      %v210 = vld [vmem:[%s204 + $0x14] sm:$0xf]
      %v211 = vld [vmem:[%s204 + $0x18] sm:$0xf]
      %v212 = vld [vmem:[%s204 + $0x1c] sm:$0xf]
      %v213 = vld [vmem:[%s204 + $0x20] sm:$0xf]
      %v214 = vld [vmem:[%s204 + $0x24] sm:$0xf]
      %v215 = vld [vmem:[%s204 + $0x28] sm:$0xf]
      %v216 = vld [vmem:[%s204 + $0x2c] sm:$0xf]
      %v217 = vld [vmem:[%s204 + $0x30] sm:$0xf]
      %v218 = vld [vmem:[%s204 + $0x34] sm:$0xf]
      %v219 = vld [vmem:[%s204 + $0x38] sm:$0xf]
      %v220 = vld [vmem:[%s204 + $0x3c] sm:$0xf]
      %v221 = vld [vmem:[%s204 + $0x40] sm:$0xf]
      %v222 = vld [vmem:[%s204 + $0x44] sm:$0xf]
      %v223 = vld [vmem:[%s204 + $0x48] sm:$0xf]
      %v224 = vld [vmem:[%s204 + $0x4c] sm:$0xf]
      %v233 = vunpack.c.l.b16 %v173
      %v234 = vunpack.c.h.b16 %v173
      %v235 = vunpack.c.l.b16 %v174
      %v236 = vunpack.c.h.b16 %v174
      %v237 = vunpack.c.l.b16 %v175
      %v238 = vunpack.c.h.b16 %v175
      %v239 = vunpack.c.l.b16 %v176
      %v240 = vunpack.c.h.b16 %v176
      %v241 = vunpack.c.l.b16 %v177
      %v242 = vunpack.c.h.b16 %v177
      %v243 = vunpack.c.l.b16 %v178
      %v244 = vunpack.c.h.b16 %v178
      %v245 = vunpack.c.l.b16 %v179
      %v246 = vunpack.c.h.b16 %v179
      %v247 = vunpack.c.l.b16 %v180
      %v248 = vunpack.c.h.b16 %v180
      %v249 = vpack.c.b16 %v235, %v233
      %v250 = vpack.c.b16 %v236, %v234
      %v251 = vpack.c.b16 %v239, %v237
      %v252 = vpack.c.b16 %v240, %v238
      %v253 = vpack.c.b16 %v243, %v241
      %v254 = vpack.c.b16 %v244, %v242
      %v255 = vpack.c.b16 %v247, %v245
      %v256 = vpack.c.b16 %v248, %v246
      %v281 = vunpack.c.l.b16 %v205
      %v282 = vunpack.c.l.b16 %v206
      %v283 = vunpack.c.l.b16 %v207
      %v284 = vunpack.c.l.b16 %v208
      %v285 = vunpack.c.l.b16 %v209
      %v286 = vunpack.c.l.b16 %v210
      %v287 = vunpack.c.l.b16 %v211
      %v288 = vunpack.c.l.b16 %v212
      %v289 = vunpack.c.l.b16 %v213
      %v290 = vunpack.c.l.b16 %v214
      %v291 = vunpack.c.l.b16 %v215
      %v292 = vunpack.c.l.b16 %v216
      %v293 = vunpack.c.l.b16 %v217
      %v294 = vunpack.c.l.b16 %v218
      %v295 = vunpack.c.l.b16 %v219
      %v296 = vunpack.c.l.b16 %v220
      %v297 = vunpack.c.l.b16 %v221
      %v298 = vunpack.c.l.b16 %v222
      %v299 = vunpack.c.l.b16 %v223
      %v300 = vunpack.c.l.b16 %v224
      %v301 = vpack.c.b16 %v282, %v281
      %v302 = vpack.c.b16 %v284, %v283
      %v303 = vpack.c.b16 %v286, %v285
      %v304 = vpack.c.b16 %v288, %v287
      %v305 = vpack.c.b16 %v290, %v289
      %v306 = vpack.c.b16 %v292, %v291
      %v307 = vpack.c.b16 %v294, %v293
      %v308 = vpack.c.b16 %v296, %v295
      %v309 = vpack.c.b16 %v298, %v297
      %v310 = vpack.c.b16 %v300, %v299
      %vm321 = vcmask 261120
      %v323 = vsel %vm321, %v250, 0
      %v326 = vsel %vm321, %v252, 0
      %v329 = vsel %vm321, %v254, 0
      %v332 = vsel %vm321, %v256, 0
      %334 = vmatprep.subr.bf16.mxu0 0
      %335 = vmatpush1.bf16.msra.mxu0 %v308
      %336 = vmatprep.subr.bf16.mxu0 0
      %337 = vmatpush1.bf16.msra.mxu0 %v307
      %338 = vmatprep.subr.bf16.mxu0 0
      %339 = vmatpush1.bf16.msra.mxu0 %v306
      %340 = vmatprep.subr.bf16.mxu0 0
      %341 = vmatpush1.bf16.msra.mxu0 %v305
      %342 = vmatprep.subr.bf16.mxu0 0
      %343 = vmatpush1.bf16.msra.mxu0 %v304
      %344 = vmatprep.subr.bf16.mxu0 0
      %345 = vmatpush1.bf16.msra.mxu0 %v303
      %346 = vmatprep.subr.bf16.mxu0 0
      %347 = vmatpush1.bf16.msra.mxu0 %v302
      %348 = vmatprep.subr.bf16.mxu0 0
      %349 = vmatpush1.bf16.msra.mxu0 %v301
      %350 = vmatprep.subr.bf16.mxu0 0
      %351 = vmatpush2.bf16.msra.mxu0 0
      %352 = vmatprep.subr.bf16.mxu0 0
      %353 = vmatpush2.bf16.msra.mxu0 0
      %354 = vmatprep.subr.bf16.mxu0 0
      %355 = vmatpush2.bf16.msra.mxu0 0
      %356 = vmatprep.subr.bf16.mxu0 0
      %357 = vmatpush2.bf16.msra.mxu0 0
      %358 = vmatprep.subr.bf16.mxu0 0
      %359 = vmatpush2.bf16.msra.mxu0 0
      %360 = vmatprep.subr.bf16.mxu0 0
      %361 = vmatpush2.bf16.msra.mxu0 0
      %362 = vmatprep.subr.bf16.mxu0 0
      %363 = vmatpush2.bf16.msra.mxu0 %v310
      %364 = vmatprep.subr.bf16.mxu0 0
      %365 = vmatpush2.bf16.msra.mxu0 %v309
      %366 = vmatprep.mubr.bf16.mxu0 %v323
      %367 = vmatmul.mubr.bf16.gmra.mxu0 %v249
      %v368 = vpop.f32.mrf.mxu0
      %v369 = vadd.f32 0.0, %v368
      %v370 = vpop.f32.mrf.mxu0
      %v371 = vpop.f32.mrf.mxu0
      %v372 = vadd.f32 0.0, %v371
      %v373 = vpop.f32.mrf.mxu0
      %374 = vmatprep.mubr.bf16.mxu0 %v326
      %375 = vmatmul.mubr.bf16.gmra.mxu0 %v251
      %v376 = vpop.f32.mrf.mxu0
      %v377 = vadd.f32 0.0, %v376
      %v378 = vpop.f32.mrf.mxu0
      %v379 = vpop.f32.mrf.mxu0
      %v380 = vadd.f32 0.0, %v379
      %v381 = vpop.f32.mrf.mxu0
      %382 = vmatprep.mubr.bf16.mxu0 %v329
      %383 = vmatmul.mubr.bf16.gmra.mxu0 %v253
      %v384 = vpop.f32.mrf.mxu0
      %v385 = vadd.f32 0.0, %v384
      %v386 = vpop.f32.mrf.mxu0
      %v387 = vpop.f32.mrf.mxu0
      %v388 = vadd.f32 0.0, %v387
      %v389 = vpop.f32.mrf.mxu0
      %390 = vmatprep.mubr.bf16.mxu0 %v332
      %391 = vmatmul.mubr.bf16.gmra.mxu0 %v255
      %v392 = vpop.f32.mrf.mxu0
      %v393 = vadd.f32 0.0, %v392
      %v394 = vpop.f32.mrf.mxu0
      %v395 = vpop.f32.mrf.mxu0
      %v396 = vadd.f32 0.0, %v395
      %v397 = vpop.f32.mrf.mxu0
      %398 = vdwg.mxu0
      %v400 = vunpack.c.l.b16 %v172
      %v401 = vunpack.c.h.b16 %v172
      %v402 = vpack.c.b16 %v233, %v400
      %v403 = vpack.c.b16 %v234, %v401
      %v404 = vpack.c.b16 %v237, %v235
      %v405 = vpack.c.b16 %v238, %v236
      %v406 = vpack.c.b16 %v241, %v239
      %v407 = vpack.c.b16 %v242, %v240
      %v408 = vpack.c.b16 %v245, %v243
      %v409 = vpack.c.b16 %v246, %v244
      %v434 = vunpack.c.l.b16 %v184
      %v435 = vunpack.c.l.b16 %v185
      %v436 = vunpack.c.l.b16 %v186
      %v437 = vunpack.c.l.b16 %v187
      %v438 = vunpack.c.l.b16 %v188
      %v439 = vunpack.c.l.b16 %v189
      %v440 = vunpack.c.l.b16 %v190
      %v441 = vunpack.c.l.b16 %v191
      %v442 = vunpack.c.l.b16 %v192
      %v443 = vunpack.c.l.b16 %v193
      %v444 = vunpack.c.l.b16 %v194
      %v445 = vunpack.c.l.b16 %v195
      %v446 = vunpack.c.l.b16 %v196
      %v447 = vunpack.c.l.b16 %v197
      %v448 = vunpack.c.l.b16 %v198
      %v449 = vunpack.c.l.b16 %v199
      %v450 = vunpack.c.l.b16 %v200
      %v451 = vunpack.c.l.b16 %v201
      %v452 = vunpack.c.l.b16 %v202
      %v453 = vunpack.c.l.b16 %v203
      %v454 = vpack.c.b16 %v435, %v434
      %v455 = vpack.c.b16 %v437, %v436
      %v456 = vpack.c.b16 %v439, %v438
      %v457 = vpack.c.b16 %v441, %v440
      %v458 = vpack.c.b16 %v443, %v442
      %v459 = vpack.c.b16 %v445, %v444
      %v460 = vpack.c.b16 %v447, %v446
      %v461 = vpack.c.b16 %v449, %v448
      %v462 = vpack.c.b16 %v451, %v450
      %v463 = vpack.c.b16 %v453, %v452
      %v475 = vsel %vm321, %v403, 0
      %v478 = vsel %vm321, %v405, 0
      %v481 = vsel %vm321, %v407, 0
      %v484 = vsel %vm321, %v409, 0
      %486 = vmatprep.subr.bf16.mxu0 0
      %487 = vmatpush1.bf16.msra.mxu0 %v461
      %488 = vmatprep.subr.bf16.mxu0 0
      %489 = vmatpush1.bf16.msra.mxu0 %v460
      %490 = vmatprep.subr.bf16.mxu0 0
      %491 = vmatpush1.bf16.msra.mxu0 %v459
      %492 = vmatprep.subr.bf16.mxu0 0
      %493 = vmatpush1.bf16.msra.mxu0 %v458
      %494 = vmatprep.subr.bf16.mxu0 0
      %495 = vmatpush1.bf16.msra.mxu0 %v457
      %496 = vmatprep.subr.bf16.mxu0 0
      %497 = vmatpush1.bf16.msra.mxu0 %v456
      %498 = vmatprep.subr.bf16.mxu0 0
      %499 = vmatpush1.bf16.msra.mxu0 %v455
      %500 = vmatprep.subr.bf16.mxu0 0
      %501 = vmatpush1.bf16.msra.mxu0 %v454
      %502 = vmatprep.subr.bf16.mxu0 0
      %503 = vmatpush2.bf16.msra.mxu0 0
      %504 = vmatprep.subr.bf16.mxu0 0
      %505 = vmatpush2.bf16.msra.mxu0 0
      %506 = vmatprep.subr.bf16.mxu0 0
      %507 = vmatpush2.bf16.msra.mxu0 0
      %508 = vmatprep.subr.bf16.mxu0 0
      %509 = vmatpush2.bf16.msra.mxu0 0
      %510 = vmatprep.subr.bf16.mxu0 0
      %511 = vmatpush2.bf16.msra.mxu0 0
      %512 = vmatprep.subr.bf16.mxu0 0
      %513 = vmatpush2.bf16.msra.mxu0 0
      %514 = vmatprep.subr.bf16.mxu0 0
      %515 = vmatpush2.bf16.msra.mxu0 %v463
      %516 = vmatprep.subr.bf16.mxu0 0
      %517 = vmatpush2.bf16.msra.mxu0 %v462
      %518 = vmatprep.mubr.bf16.mxu0 %v475
      %519 = vmatmul.mubr.bf16.gmra.mxu0 %v402
      %v520 = vpop.f32.mrf.mxu0
      %v521 = vadd.f32 %v369, %v520
      %v522 = vpop.f32.mrf.mxu0
      %v523 = vpop.f32.mrf.mxu0
      %v524 = vadd.f32 %v372, %v523
      %v525 = vpop.f32.mrf.mxu0
      %526 = vmatprep.mubr.bf16.mxu0 %v478
      %527 = vmatmul.mubr.bf16.gmra.mxu0 %v404
      %v528 = vpop.f32.mrf.mxu0
      %v529 = vadd.f32 %v377, %v528
      %v530 = vpop.f32.mrf.mxu0
      %v531 = vpop.f32.mrf.mxu0
      %v532 = vadd.f32 %v380, %v531
      %v533 = vpop.f32.mrf.mxu0
      %534 = vmatprep.mubr.bf16.mxu0 %v481
      %535 = vmatmul.mubr.bf16.gmra.mxu0 %v406
      %v536 = vpop.f32.mrf.mxu0
      %v537 = vadd.f32 %v385, %v536
      %v538 = vpop.f32.mrf.mxu0
      %v539 = vpop.f32.mrf.mxu0
      %v540 = vadd.f32 %v388, %v539
      %v541 = vpop.f32.mrf.mxu0
      %542 = vmatprep.mubr.bf16.mxu0 %v484
      %543 = vmatmul.mubr.bf16.gmra.mxu0 %v408
      %v544 = vpop.f32.mrf.mxu0
      %v545 = vadd.f32 %v393, %v544
      %v546 = vpop.f32.mrf.mxu0
      %v547 = vpop.f32.mrf.mxu0
      %v548 = vadd.f32 %v396, %v547
      %v549 = vpop.f32.mrf.mxu0
      %550 = vdwg.mxu0
      %s551 = scalar_lea.vmem %s1, 160
      %v552 = vld [vmem:[%s551] sm:$0xf]
      %v553 = vld [vmem:[%s551 + $0x4] sm:$0xf]
      %v554 = vld [vmem:[%s551 + $0x8] sm:$0xf]
      %v555 = vld [vmem:[%s551 + $0xc] sm:$0xf]
      %v556 = vld [vmem:[%s551 + $0x10] sm:$0xf]
      %v557 = vld [vmem:[%s551 + $0x14] sm:$0xf]
      %v558 = vld [vmem:[%s551 + $0x18] sm:$0xf]
      %v559 = vld [vmem:[%s551 + $0x1c] sm:$0xf]
      %v560 = vld [vmem:[%s551 + $0x20] sm:$0xf]
      %v561 = vld [vmem:[%s551 + $0x24] sm:$0xf]
      %v562 = vld [vmem:[%s551 + $0x28] sm:$0xf]
      %v563 = vld [vmem:[%s551 + $0x2c] sm:$0xf]
      %v564 = vld [vmem:[%s551 + $0x30] sm:$0xf]
      %v565 = vld [vmem:[%s551 + $0x34] sm:$0xf]
      %v566 = vld [vmem:[%s551 + $0x38] sm:$0xf]
      %v567 = vld [vmem:[%s551 + $0x3c] sm:$0xf]
      %v568 = vld [vmem:[%s551 + $0x40] sm:$0xf]
      %v569 = vld [vmem:[%s551 + $0x44] sm:$0xf]
      %v570 = vld [vmem:[%s551 + $0x48] sm:$0xf]
      %v571 = vld [vmem:[%s551 + $0x4c] sm:$0xf]
      %v573 = vunpack.c.l.b16 %v181
      %v574 = vunpack.c.h.b16 %v181
      %v575 = vpack.c.b16 %v573, %v247
      %v576 = vpack.c.b16 %v574, %v248
      %v598 = vunpack.c.l.b16 %v552
      %v599 = vunpack.c.l.b16 %v553
      %v600 = vunpack.c.l.b16 %v554
      %v601 = vunpack.c.l.b16 %v555
      %v602 = vunpack.c.l.b16 %v556
      %v603 = vunpack.c.l.b16 %v557
      %v604 = vunpack.c.l.b16 %v558
      %v605 = vunpack.c.l.b16 %v559
      %v606 = vunpack.c.l.b16 %v560
      %v607 = vunpack.c.l.b16 %v561
      %v608 = vunpack.c.l.b16 %v562
      %v609 = vunpack.c.l.b16 %v563
      %v610 = vunpack.c.l.b16 %v564
      %v611 = vunpack.c.l.b16 %v565
      %v612 = vunpack.c.l.b16 %v566
      %v613 = vunpack.c.l.b16 %v567
      %v614 = vunpack.c.l.b16 %v568
      %v615 = vunpack.c.l.b16 %v569
      %v616 = vunpack.c.l.b16 %v570
      %v617 = vunpack.c.l.b16 %v571
      %v618 = vpack.c.b16 %v599, %v598
      %v619 = vpack.c.b16 %v601, %v600
      %v620 = vpack.c.b16 %v603, %v602
      %v621 = vpack.c.b16 %v605, %v604
      %v622 = vpack.c.b16 %v607, %v606
      %v623 = vpack.c.b16 %v609, %v608
      %v624 = vpack.c.b16 %v611, %v610
      %v625 = vpack.c.b16 %v613, %v612
      %v626 = vpack.c.b16 %v615, %v614
      %v627 = vpack.c.b16 %v617, %v616
      %v639 = vsel %vm321, %v576, 0
      %641 = vmatprep.subr.bf16.mxu0 0
      %642 = vmatpush1.bf16.msra.mxu0 %v625
      %643 = vmatprep.subr.bf16.mxu0 0
      %644 = vmatpush1.bf16.msra.mxu0 %v624
      %645 = vmatprep.subr.bf16.mxu0 0
      %646 = vmatpush1.bf16.msra.mxu0 %v623
      %647 = vmatprep.subr.bf16.mxu0 0
      %648 = vmatpush1.bf16.msra.mxu0 %v622
      %649 = vmatprep.subr.bf16.mxu0 0
      %650 = vmatpush1.bf16.msra.mxu0 %v621
      %651 = vmatprep.subr.bf16.mxu0 0
      %652 = vmatpush1.bf16.msra.mxu0 %v620
      %653 = vmatprep.subr.bf16.mxu0 0
      %654 = vmatpush1.bf16.msra.mxu0 %v619
      %655 = vmatprep.subr.bf16.mxu0 0
      %656 = vmatpush1.bf16.msra.mxu0 %v618
      %657 = vmatprep.subr.bf16.mxu0 0
      %658 = vmatpush2.bf16.msra.mxu0 0
      %659 = vmatprep.subr.bf16.mxu0 0
      %660 = vmatpush2.bf16.msra.mxu0 0
      %661 = vmatprep.subr.bf16.mxu0 0
      %662 = vmatpush2.bf16.msra.mxu0 0
      %663 = vmatprep.subr.bf16.mxu0 0
      %664 = vmatpush2.bf16.msra.mxu0 0
      %665 = vmatprep.subr.bf16.mxu0 0
      %666 = vmatpush2.bf16.msra.mxu0 0
      %667 = vmatprep.subr.bf16.mxu0 0
      %668 = vmatpush2.bf16.msra.mxu0 0
      %669 = vmatprep.subr.bf16.mxu0 0
      %670 = vmatpush2.bf16.msra.mxu0 %v627
      %671 = vmatprep.subr.bf16.mxu0 0
      %672 = vmatpush2.bf16.msra.mxu0 %v626
      %673 = vmatprep.mubr.bf16.mxu0 %v478
      %674 = vmatmul.mubr.bf16.gmra.mxu0 %v404
      %v675 = vpop.f32.mrf.mxu0
      %v676 = vadd.f32 0.0, %v675
      %v677 = vpop.f32.mrf.mxu0
      %v678 = vpop.f32.mrf.mxu0
      %v679 = vadd.f32 0.0, %v678
      %v680 = vpop.f32.mrf.mxu0
      %681 = vmatprep.mubr.bf16.mxu0 %v481
      %682 = vmatmul.mubr.bf16.gmra.mxu0 %v406
      %v683 = vpop.f32.mrf.mxu0
      %v684 = vadd.f32 0.0, %v683
      %v685 = vpop.f32.mrf.mxu0
      %v686 = vpop.f32.mrf.mxu0
      %v687 = vadd.f32 0.0, %v686
      %v688 = vpop.f32.mrf.mxu0
      %689 = vmatprep.mubr.bf16.mxu0 %v484
      %690 = vmatmul.mubr.bf16.gmra.mxu0 %v408
      %v691 = vpop.f32.mrf.mxu0
      %v692 = vadd.f32 0.0, %v691
      %v693 = vpop.f32.mrf.mxu0
      %v694 = vpop.f32.mrf.mxu0
      %v695 = vadd.f32 0.0, %v694
      %v696 = vpop.f32.mrf.mxu0
      %697 = vmatprep.mubr.bf16.mxu0 %v639
      %698 = vmatmul.mubr.bf16.gmra.mxu0 %v575
      %v699 = vpop.f32.mrf.mxu0
      %v700 = vadd.f32 0.0, %v699
      %v701 = vpop.f32.mrf.mxu0
      %v702 = vpop.f32.mrf.mxu0
      %v703 = vadd.f32 0.0, %v702
      %v704 = vpop.f32.mrf.mxu0
      %705 = vdwg.mxu0
      %v706 = vadd.f32 %v521, %v676
      %v707 = vadd.f32 %v524, %v679
      %v708 = vadd.f32 %v529, %v684
      %v709 = vadd.f32 %v532, %v687
      %v710 = vadd.f32 %v537, %v692
      %v711 = vadd.f32 %v540, %v695
      %v712 = vadd.f32 %v545, %v700
      %v713 = vadd.f32 %v548, %v703
      %s714 = scalar_lea.vmem %s1, 240
      %v715 = vld [vmem:[%s714] sm:$0xf]
      %v716 = vld [vmem:[%s714 + $0x4] sm:$0xf]
      %v717 = vld [vmem:[%s714 + $0x8] sm:$0xf]
      %v718 = vld [vmem:[%s714 + $0xc] sm:$0xf]
      %v719 = vld [vmem:[%s714 + $0x10] sm:$0xf]
      %v720 = vld [vmem:[%s714 + $0x14] sm:$0xf]
      %v721 = vld [vmem:[%s714 + $0x18] sm:$0xf]
      %v722 = vld [vmem:[%s714 + $0x1c] sm:$0xf]
      %v723 = vld [vmem:[%s714 + $0x20] sm:$0xf]
      %v724 = vld [vmem:[%s714 + $0x24] sm:$0xf]
      %v725 = vld [vmem:[%s714 + $0x28] sm:$0xf]
      %v726 = vld [vmem:[%s714 + $0x2c] sm:$0xf]
      %v727 = vld [vmem:[%s714 + $0x30] sm:$0xf]
      %v728 = vld [vmem:[%s714 + $0x34] sm:$0xf]
      %v729 = vld [vmem:[%s714 + $0x38] sm:$0xf]
      %v730 = vld [vmem:[%s714 + $0x3c] sm:$0xf]
      %v731 = vld [vmem:[%s714 + $0x40] sm:$0xf]
      %v732 = vld [vmem:[%s714 + $0x44] sm:$0xf]
      %v733 = vld [vmem:[%s714 + $0x48] sm:$0xf]
      %v734 = vld [vmem:[%s714 + $0x4c] sm:$0xf]
      %v736 = vunpack.c.l.b16 %v182
      %v737 = vunpack.c.h.b16 %v182
      %v738 = vpack.c.b16 %v736, %v573
      %v739 = vpack.c.b16 %v737, %v574
      %v761 = vunpack.c.l.b16 %v715
      %v762 = vunpack.c.l.b16 %v716
      %v763 = vunpack.c.l.b16 %v717
      %v764 = vunpack.c.l.b16 %v718
      %v765 = vunpack.c.l.b16 %v719
      %v766 = vunpack.c.l.b16 %v720
      %v767 = vunpack.c.l.b16 %v721
      %v768 = vunpack.c.l.b16 %v722
      %v769 = vunpack.c.l.b16 %v723
      %v770 = vunpack.c.l.b16 %v724
      %v771 = vunpack.c.l.b16 %v725
      %v772 = vunpack.c.l.b16 %v726
      %v773 = vunpack.c.l.b16 %v727
      %v774 = vunpack.c.l.b16 %v728
      %v775 = vunpack.c.l.b16 %v729
      %v776 = vunpack.c.l.b16 %v730
      %v777 = vunpack.c.l.b16 %v731
      %v778 = vunpack.c.l.b16 %v732
      %v779 = vunpack.c.l.b16 %v733
      %v780 = vunpack.c.l.b16 %v734
      %v781 = vpack.c.b16 %v762, %v761
      %v782 = vpack.c.b16 %v764, %v763
      %v783 = vpack.c.b16 %v766, %v765
      %v784 = vpack.c.b16 %v768, %v767
      %v785 = vpack.c.b16 %v770, %v769
      %v786 = vpack.c.b16 %v772, %v771
      %v787 = vpack.c.b16 %v774, %v773
      %v788 = vpack.c.b16 %v776, %v775
      %v789 = vpack.c.b16 %v778, %v777
      %v790 = vpack.c.b16 %v780, %v779
      %v802 = vsel %vm321, %v739, 0
      %804 = vmatprep.subr.bf16.mxu0 0
      %805 = vmatpush1.bf16.msra.mxu0 %v788
      %806 = vmatprep.subr.bf16.mxu0 0
      %807 = vmatpush1.bf16.msra.mxu0 %v787
      %808 = vmatprep.subr.bf16.mxu0 0
      %809 = vmatpush1.bf16.msra.mxu0 %v786
      %810 = vmatprep.subr.bf16.mxu0 0
      %811 = vmatpush1.bf16.msra.mxu0 %v785
      %812 = vmatprep.subr.bf16.mxu0 0
      %813 = vmatpush1.bf16.msra.mxu0 %v784
      %814 = vmatprep.subr.bf16.mxu0 0
      %815 = vmatpush1.bf16.msra.mxu0 %v783
      %816 = vmatprep.subr.bf16.mxu0 0
      %817 = vmatpush1.bf16.msra.mxu0 %v782
      %818 = vmatprep.subr.bf16.mxu0 0
      %819 = vmatpush1.bf16.msra.mxu0 %v781
      %820 = vmatprep.subr.bf16.mxu0 0
      %821 = vmatpush2.bf16.msra.mxu0 0
      %822 = vmatprep.subr.bf16.mxu0 0
      %823 = vmatpush2.bf16.msra.mxu0 0
      %824 = vmatprep.subr.bf16.mxu0 0
      %825 = vmatpush2.bf16.msra.mxu0 0
      %826 = vmatprep.subr.bf16.mxu0 0
      %827 = vmatpush2.bf16.msra.mxu0 0
      %828 = vmatprep.subr.bf16.mxu0 0
      %829 = vmatpush2.bf16.msra.mxu0 0
      %830 = vmatprep.subr.bf16.mxu0 0
      %831 = vmatpush2.bf16.msra.mxu0 0
      %832 = vmatprep.subr.bf16.mxu0 0
      %833 = vmatpush2.bf16.msra.mxu0 %v790
      %834 = vmatprep.subr.bf16.mxu0 0
      %835 = vmatpush2.bf16.msra.mxu0 %v789
      %836 = vmatprep.mubr.bf16.mxu0 %v326
      %837 = vmatmul.mubr.bf16.gmra.mxu0 %v251
      %v838 = vpop.f32.mrf.mxu0
      %v839 = vadd.f32 0.0, %v838
      %v840 = vpop.f32.mrf.mxu0
      %v841 = vpop.f32.mrf.mxu0
      %v842 = vadd.f32 0.0, %v841
      %v843 = vpop.f32.mrf.mxu0
      %844 = vmatprep.mubr.bf16.mxu0 %v329
      %845 = vmatmul.mubr.bf16.gmra.mxu0 %v253
      %v846 = vpop.f32.mrf.mxu0
      %v847 = vadd.f32 0.0, %v846
      %v848 = vpop.f32.mrf.mxu0
      %v849 = vpop.f32.mrf.mxu0
      %v850 = vadd.f32 0.0, %v849
      %v851 = vpop.f32.mrf.mxu0
      %852 = vmatprep.mubr.bf16.mxu0 %v332
      %853 = vmatmul.mubr.bf16.gmra.mxu0 %v255
      %v854 = vpop.f32.mrf.mxu0
      %v855 = vadd.f32 0.0, %v854
      %v856 = vpop.f32.mrf.mxu0
      %v857 = vpop.f32.mrf.mxu0
      %v858 = vadd.f32 0.0, %v857
      %v859 = vpop.f32.mrf.mxu0
      %860 = vmatprep.mubr.bf16.mxu0 %v802
      %861 = vmatmul.mubr.bf16.gmra.mxu0 %v738
      %v862 = vpop.f32.mrf.mxu0
      %v863 = vadd.f32 0.0, %v862
      %v864 = vpop.f32.mrf.mxu0
      %v865 = vpop.f32.mrf.mxu0
      %v866 = vadd.f32 0.0, %v865
      %v867 = vpop.f32.mrf.mxu0
      %868 = vdwg.mxu0
      %v869 = vadd.f32 %v706, %v839
      %v870 = vadd.f32 %v707, %v842
      %v871 = vadd.f32 %v708, %v847
      %v872 = vadd.f32 %v709, %v850
      %v873 = vadd.f32 %v710, %v855
      %v874 = vadd.f32 %v711, %v858
      %v875 = vadd.f32 %v712, %v863
      %v876 = vadd.f32 %v713, %v866
      %s877 = scalar_lea.vmem %s1, 320
      %v878 = vld [vmem:[%s877] sm:$0xf]
      %v879 = vld [vmem:[%s877 + $0x4] sm:$0xf]
      %v880 = vld [vmem:[%s877 + $0x8] sm:$0xf]
      %v881 = vld [vmem:[%s877 + $0xc] sm:$0xf]
      %v882 = vld [vmem:[%s877 + $0x10] sm:$0xf]
      %v883 = vld [vmem:[%s877 + $0x14] sm:$0xf]
      %v884 = vld [vmem:[%s877 + $0x18] sm:$0xf]
      %v885 = vld [vmem:[%s877 + $0x1c] sm:$0xf]
      %v886 = vld [vmem:[%s877 + $0x20] sm:$0xf]
      %v887 = vld [vmem:[%s877 + $0x24] sm:$0xf]
      %v888 = vld [vmem:[%s877 + $0x28] sm:$0xf]
      %v889 = vld [vmem:[%s877 + $0x2c] sm:$0xf]
      %v890 = vld [vmem:[%s877 + $0x30] sm:$0xf]
      %v891 = vld [vmem:[%s877 + $0x34] sm:$0xf]
      %v892 = vld [vmem:[%s877 + $0x38] sm:$0xf]
      %v893 = vld [vmem:[%s877 + $0x3c] sm:$0xf]
      %v894 = vld [vmem:[%s877 + $0x40] sm:$0xf]
      %v895 = vld [vmem:[%s877 + $0x44] sm:$0xf]
      %v896 = vld [vmem:[%s877 + $0x48] sm:$0xf]
      %v897 = vld [vmem:[%s877 + $0x4c] sm:$0xf]
      %v899 = vunpack.c.l.b16 %v183
      %v900 = vunpack.c.h.b16 %v183
      %v901 = vpack.c.b16 %v899, %v736
      %v902 = vpack.c.b16 %v900, %v737
      %v924 = vunpack.c.l.b16 %v878
      %v925 = vunpack.c.l.b16 %v879
      %v926 = vunpack.c.l.b16 %v880
      %v927 = vunpack.c.l.b16 %v881
      %v928 = vunpack.c.l.b16 %v882
      %v929 = vunpack.c.l.b16 %v883
      %v930 = vunpack.c.l.b16 %v884
      %v931 = vunpack.c.l.b16 %v885
      %v932 = vunpack.c.l.b16 %v886
      %v933 = vunpack.c.l.b16 %v887
      %v934 = vunpack.c.l.b16 %v888
      %v935 = vunpack.c.l.b16 %v889
      %v936 = vunpack.c.l.b16 %v890
      %v937 = vunpack.c.l.b16 %v891
      %v938 = vunpack.c.l.b16 %v892
      %v939 = vunpack.c.l.b16 %v893
      %v940 = vunpack.c.l.b16 %v894
      %v941 = vunpack.c.l.b16 %v895
      %v942 = vunpack.c.l.b16 %v896
      %v943 = vunpack.c.l.b16 %v897
      %v944 = vpack.c.b16 %v925, %v924
      %v945 = vpack.c.b16 %v927, %v926
      %v946 = vpack.c.b16 %v929, %v928
      %v947 = vpack.c.b16 %v931, %v930
      %v948 = vpack.c.b16 %v933, %v932
      %v949 = vpack.c.b16 %v935, %v934
      %v950 = vpack.c.b16 %v937, %v936
      %v951 = vpack.c.b16 %v939, %v938
      %v952 = vpack.c.b16 %v941, %v940
      %v953 = vpack.c.b16 %v943, %v942
      %v965 = vsel %vm321, %v902, 0
      %967 = vmatprep.subr.bf16.mxu0 0
      %968 = vmatpush1.bf16.msra.mxu0 %v951
      %969 = vmatprep.subr.bf16.mxu0 0
      %970 = vmatpush1.bf16.msra.mxu0 %v950
      %971 = vmatprep.subr.bf16.mxu0 0
      %972 = vmatpush1.bf16.msra.mxu0 %v949
      %973 = vmatprep.subr.bf16.mxu0 0
      %974 = vmatpush1.bf16.msra.mxu0 %v948
      %975 = vmatprep.subr.bf16.mxu0 0
      %976 = vmatpush1.bf16.msra.mxu0 %v947
      %977 = vmatprep.subr.bf16.mxu0 0
      %978 = vmatpush1.bf16.msra.mxu0 %v946
      %979 = vmatprep.subr.bf16.mxu0 0
      %980 = vmatpush1.bf16.msra.mxu0 %v945
      %981 = vmatprep.subr.bf16.mxu0 0
      %982 = vmatpush1.bf16.msra.mxu0 %v944
      %983 = vmatprep.subr.bf16.mxu0 0
      %984 = vmatpush2.bf16.msra.mxu0 0
      %985 = vmatprep.subr.bf16.mxu0 0
      %986 = vmatpush2.bf16.msra.mxu0 0
      %987 = vmatprep.subr.bf16.mxu0 0
      %988 = vmatpush2.bf16.msra.mxu0 0
      %989 = vmatprep.subr.bf16.mxu0 0
      %990 = vmatpush2.bf16.msra.mxu0 0
      %991 = vmatprep.subr.bf16.mxu0 0
      %992 = vmatpush2.bf16.msra.mxu0 0
      %993 = vmatprep.subr.bf16.mxu0 0
      %994 = vmatpush2.bf16.msra.mxu0 0
      %995 = vmatprep.subr.bf16.mxu0 0
      %996 = vmatpush2.bf16.msra.mxu0 %v953
      %997 = vmatprep.subr.bf16.mxu0 0
      %998 = vmatpush2.bf16.msra.mxu0 %v952
      %999 = vmatprep.mubr.bf16.mxu0 %v481
      %1000 = vmatmul.mubr.bf16.gmra.mxu0 %v406
      %v1001 = vpop.f32.mrf.mxu0
      %v1002 = vadd.f32 0.0, %v1001
      %v1003 = vpop.f32.mrf.mxu0
      %v1004 = vpop.f32.mrf.mxu0
      %v1005 = vadd.f32 0.0, %v1004
      %v1006 = vpop.f32.mrf.mxu0
      %1007 = vmatprep.mubr.bf16.mxu0 %v484
      %1008 = vmatmul.mubr.bf16.gmra.mxu0 %v408
      %v1009 = vpop.f32.mrf.mxu0
      %v1010 = vadd.f32 0.0, %v1009
      %v1011 = vpop.f32.mrf.mxu0
      %v1012 = vpop.f32.mrf.mxu0
      %v1013 = vadd.f32 0.0, %v1012
      %v1014 = vpop.f32.mrf.mxu0
      %1015 = vmatprep.mubr.bf16.mxu0 %v639
      %1016 = vmatmul.mubr.bf16.gmra.mxu0 %v575
      %v1017 = vpop.f32.mrf.mxu0
      %v1018 = vadd.f32 0.0, %v1017
      %v1019 = vpop.f32.mrf.mxu0
      %v1020 = vpop.f32.mrf.mxu0
      %v1021 = vadd.f32 0.0, %v1020
      %v1022 = vpop.f32.mrf.mxu0
      %1023 = vmatprep.mubr.bf16.mxu0 %v965
      %1024 = vmatmul.mubr.bf16.gmra.mxu0 %v901
      %v1025 = vpop.f32.mrf.mxu0
      %v1026 = vadd.f32 0.0, %v1025
      %v1027 = vpop.f32.mrf.mxu0
      %v1028 = vpop.f32.mrf.mxu0
      %v1029 = vadd.f32 0.0, %v1028
      %v1030 = vpop.f32.mrf.mxu0
      %1031 = vdwg.mxu0
      %v1032 = vadd.f32 %v869, %v1002
      %v1033 = vadd.f32 %v870, %v1005
      %v1034 = vadd.f32 %v871, %v1010
      %v1035 = vadd.f32 %v872, %v1013
      %v1036 = vadd.f32 %v873, %v1018
      %v1037 = vadd.f32 %v874, %v1021
      %v1038 = vadd.f32 %v875, %v1026
      %v1039 = vadd.f32 %v876, %v1029
      %v1048 = vrot.slane %v1032, 4
      %v1049 = vrot.slane %v1033, 4
      %v1050 = vrot.slane %v1034, 4
      %v1051 = vrot.slane %v1035, 4
      %v1052 = vrot.slane %v1036, 4
      %v1053 = vrot.slane %v1037, 4
      %v1054 = vrot.slane %v1038, 4
      %v1055 = vrot.slane %v1039, 4
      %v1064 = vmax.f32 %v1032, %v1048
      %v1065 = vmax.f32 %v1033, %v1049
      %v1066 = vmax.f32 %v1034, %v1050
      %v1067 = vmax.f32 %v1035, %v1051
      %v1068 = vmax.f32 %v1036, %v1052
      %v1069 = vmax.f32 %v1037, %v1053
      %v1070 = vmax.f32 %v1038, %v1054
      %v1071 = vmax.f32 %v1039, %v1055
      %v1072 = vmax.f32 %v1064, %v1065
      %v1073 = vmax.f32 %v1066, %v1067
      %v1074 = vmax.f32 %v1068, %v1069
      %v1075 = vmax.f32 %v1070, %v1071
      %v1076 = vld [vmem:[%s2] sm:$0x1]
      %v1078 = vlaneseq
      %v1079 = vshrl.u32 %v1078, 7
      %v1080 = vsub.s32 0, %v1079
      %v1081 = vrot.slane %v1076, %v1080
      %v1083 = vadd.f32 %v1072, %v1081
      %v1084 = vadd.f32 %v1073, %v1081
      %v1085 = vadd.f32 %v1074, %v1081
      %v1086 = vadd.f32 %v1075, %v1081
      %v1087 = vpack.c.bf16 %v1083, %v1083
      %v1088 = vpack.c.bf16 %v1084, %v1084
      %v1089 = vpack.c.bf16 %v1085, %v1085
      %v1090 = vpack.c.bf16 %v1086, %v1086
      %1091 = vst [vmem:[%s170] sm:$0x3] %v1087
      %1092 = vst [vmem:[%s170 + $0x2] sm:$0x3] %v1088
      %1093 = vst [vmem:[%s170 + $0x4] sm:$0x3] %v1089
      %1094 = vst [vmem:[%s170 + $0x6] sm:$0x3] %v1090
      %p1095 = scmp.lt.s32.totalorder %s14, 1
      %s1096 = scalar_select %p1095, %s14, 1
      %s1097 = smul.addr %s1096, 4
      %s1098 = smul.addr %s1097, 2
      %s1099 = scalar_lea.vmem %s3, %s1098
      // Predicated region
      $region33: #{test_forward.6} parent=31 // pred_check
        %p1100 = pneg %p100
      $region34: #{test_forward.6} parent=31 // pred_check_branch
        %1102 = sbr.rel (%p1100) target = $region36
      $region35: #{test_forward.6} parent=31 // pred_region
        _
      $region36: #{test_forward.6} parent=31 // pred_fallthru
        _
    $region32: #{test_forward.6} parent=5 // pred_fallthru
      _
    %p1103 = scmp.le.s32.totalorder 2, %s9
    // Predicated region
    $region37: #{test_forward.6} parent=5 // pred_check
      %p1104 = pneg %p1103
    $region38: #{test_forward.6} parent=5 // pred_check_branch
      %1106 = sbr.rel (%p1104) target = $region40
    $region39: #{test_forward.6} parent=5 // pred_region
      %s1107 = ssub.s32 %s9, 2
      // Predicated region
      $region41: #{test_forward.6} parent=39 // pred_check
        %p1108 = pneg %p106
      $region42: #{test_forward.6} parent=39 // pred_check_branch
        %1110 = sbr.rel (%p1108) target = $region44
      $region43: #{test_forward.6} parent=39 // pred_region
        %p1111 = scmp.lt.s32.totalorder %s15, 1
        %s1112 = scalar_select %p1111, %s15, 1
        %s1113 = smul.addr %s1112, 4
        %s1114 = smul.addr %s1113, 2
        %s1115 = scalar_lea.vmem %s3, %s1114
      $region44: #{test_forward.6} parent=39 // pred_fallthru
        _
    $region40: #{test_forward.6} parent=5 // pred_fallthru
      _
  $region6: #{test_forward.6} parent=0 // loop_footer
    %s13 = sadd.s32 1, %s9
  $region7: #{test_forward.6} parent=0 // loop_footer_branch
    %8 = sbr.rel target = $region3
  $region8: #{test_forward.6} parent=0 // loop_exit
    _

// kernel: test_forward.7
$region0: #{test_forward.7}
  #allocation0 [shape = 'u32[]', space=smem, size = 0x4, offset = 0x4, fixed_abs, tag = 'smem constant byte address 0x4 - core index']
  #allocation1 [shape = 'u32[144,128]{1,0:T(1,128)}', space=vmem, size = 0x12000, scoped, tag = 'internal scratch']
  %s0 = inlined_call_operand.vmem [shape: bf16[2,2048], index: 0, kind: input, shape index: {}]
  %s1 = inlined_call_operand.vmem [shape: bf16[2048,128], index: 1, kind: input, shape index: {}]
  %s2 = inlined_call_operand.vmem [shape: f32[1,128], index: 2, kind: input, shape index: {}]
  %s3 = inlined_call_operand.hbm [shape: f32[2,128], index: 3, kind: output, shape index: {}]
  %s4 = sld [smem:[#allocation0]]
  $region22: #{test_forward.7} parent=0
    _
  %s6 = ssub.s32 1, %s4
  %s7 = scalar_select 0, %s6, %s4
  $region1: #{test_forward.7} parent=0
    #allocation2 [shape = 'u8[1024]{0}', space=vmem, size = 0x400, scoped, tag = 'output window, operand 0, single buffered']
    #allocation3 [shape = 's32[1]{0}', space=sflag, size = 0x4, scoped, tag = 'scoped memory for test_forward.7']
    %8 = vsyncpa [#allocation3], 0
    // Predicated region
    $region2: #{test_forward.7} parent=1 // pred_check
      _
    $region3: #{test_forward.7} parent=1 // pred_check_branch
      %10 = sbr.rel (0) target = $region5
    $region4: #{test_forward.7} parent=1 // pred_region
      _
    $region5: #{test_forward.7} parent=1 // pred_fallthru
      _
    // Predicated region
    $region6: #{test_forward.7} parent=1 // pred_check
      _
    $region7: #{test_forward.7} parent=1 // pred_check_branch
      %12 = sbr.rel (0) target = $region9
    $region8: #{test_forward.7} parent=1 // pred_region
      _
    $region9: #{test_forward.7} parent=1 // pred_fallthru
      _
    // Predicated region
    $region10: #{test_forward.7} parent=1 // pred_check
      _
    $region11: #{test_forward.7} parent=1 // pred_check_branch
      %14 = sbr.rel (0) target = $region13
    $region12: #{test_forward.7} parent=1 // pred_region
      _
    $region13: #{test_forward.7} parent=1 // pred_fallthru
      _
    %v16 = vld [vmem:[%s0] sm:$0xff]
    %v17 = vld [vmem:[%s0 + $0x8] sm:$0xff]
    %v18 = vld [vmem:[%s1] sm:$0xf]
    %v19 = vld [vmem:[%s1 + $0x4] sm:$0xf]
    %v20 = vld [vmem:[%s1 + $0x8] sm:$0xf]
    %v21 = vld [vmem:[%s1 + $0xc] sm:$0xf]
    %v22 = vld [vmem:[%s1 + $0x10] sm:$0xf]
    %v23 = vld [vmem:[%s1 + $0x14] sm:$0xf]
    %v24 = vld [vmem:[%s1 + $0x18] sm:$0xf]
    %v25 = vld [vmem:[%s1 + $0x1c] sm:$0xf]
    %v26 = vld [vmem:[%s1 + $0x20] sm:$0xf]
    %v27 = vld [vmem:[%s1 + $0x24] sm:$0xf]
    %v28 = vld [vmem:[%s1 + $0x28] sm:$0xf]
    %v29 = vld [vmem:[%s1 + $0x2c] sm:$0xf]
    %v30 = vld [vmem:[%s1 + $0x30] sm:$0xf]
    %v31 = vld [vmem:[%s1 + $0x34] sm:$0xf]
    %v32 = vld [vmem:[%s1 + $0x38] sm:$0xf]
    %v33 = vld [vmem:[%s1 + $0x3c] sm:$0xf]
    %v34 = vld [vmem:[%s1 + $0x40] sm:$0xf]
    %v35 = vld [vmem:[%s1 + $0x44] sm:$0xf]
    %v36 = vld [vmem:[%s1 + $0x48] sm:$0xf]
    %v37 = vld [vmem:[%s1 + $0x4c] sm:$0xf]
    %v38 = vld [vmem:[%s1 + $0x50] sm:$0xf]
    %v39 = vld [vmem:[%s1 + $0x54] sm:$0xf]
    %v40 = vld [vmem:[%s1 + $0x58] sm:$0xf]
    %v41 = vld [vmem:[%s1 + $0x5c] sm:$0xf]
    %v42 = vld [vmem:[%s1 + $0x60] sm:$0xf]
    %v43 = vld [vmem:[%s1 + $0x64] sm:$0xf]
    %v44 = vld [vmem:[%s1 + $0x68] sm:$0xf]
    %v45 = vld [vmem:[%s1 + $0x6c] sm:$0xf]
    %v46 = vld [vmem:[%s1 + $0x70] sm:$0xf]
    %v47 = vld [vmem:[%s1 + $0x74] sm:$0xf]
    %v48 = vld [vmem:[%s1 + $0x78] sm:$0xf]
    %v49 = vld [vmem:[%s1 + $0x7c] sm:$0xf]
    %v50 = vld [vmem:[%s1 + $0x80] sm:$0xf]
    %v51 = vld [vmem:[%s1 + $0x84] sm:$0xf]
    %v52 = vld [vmem:[%s1 + $0x88] sm:$0xf]
    %v53 = vld [vmem:[%s1 + $0x8c] sm:$0xf]
    %v54 = vld [vmem:[%s1 + $0x90] sm:$0xf]
    %v55 = vld [vmem:[%s1 + $0x94] sm:$0xf]
    %v56 = vld [vmem:[%s1 + $0x98] sm:$0xf]
    %v57 = vld [vmem:[%s1 + $0x9c] sm:$0xf]
    %v58 = vld [vmem:[%s1 + $0xa0] sm:$0xf]
    %v59 = vld [vmem:[%s1 + $0xa4] sm:$0xf]
    %v60 = vld [vmem:[%s1 + $0xa8] sm:$0xf]
    %v61 = vld [vmem:[%s1 + $0xac] sm:$0xf]
    %v62 = vld [vmem:[%s1 + $0xb0] sm:$0xf]
    %v63 = vld [vmem:[%s1 + $0xb4] sm:$0xf]
    %v64 = vld [vmem:[%s1 + $0xb8] sm:$0xf]
    %v65 = vld [vmem:[%s1 + $0xbc] sm:$0xf]
    %v66 = vld [vmem:[%s1 + $0xc0] sm:$0xf]
    %v67 = vld [vmem:[%s1 + $0xc4] sm:$0xf]
    %v68 = vld [vmem:[%s1 + $0xc8] sm:$0xf]
    %v69 = vld [vmem:[%s1 + $0xcc] sm:$0xf]
    %v70 = vld [vmem:[%s1 + $0xd0] sm:$0xf]
    %v71 = vld [vmem:[%s1 + $0xd4] sm:$0xf]
    %v72 = vld [vmem:[%s1 + $0xd8] sm:$0xf]
    %v73 = vld [vmem:[%s1 + $0xdc] sm:$0xf]
    %v74 = vld [vmem:[%s1 + $0xe0] sm:$0xf]
    %v75 = vld [vmem:[%s1 + $0xe4] sm:$0xf]
    %v76 = vld [vmem:[%s1 + $0xe8] sm:$0xf]
    %v77 = vld [vmem:[%s1 + $0xec] sm:$0xf]
    %v78 = vld [vmem:[%s1 + $0xf0] sm:$0xf]
    %v79 = vld [vmem:[%s1 + $0xf4] sm:$0xf]
    %v80 = vld [vmem:[%s1 + $0xf8] sm:$0xf]
    %v81 = vld [vmem:[%s1 + $0xfc] sm:$0xf]
    %v82 = vld [vmem:[%s1 + $0x100] sm:$0xf]
    %v83 = vld [vmem:[%s1 + $0x104] sm:$0xf]
    %v84 = vld [vmem:[%s1 + $0x108] sm:$0xf]
    %v85 = vld [vmem:[%s1 + $0x10c] sm:$0xf]
    %v86 = vld [vmem:[%s1 + $0x110] sm:$0xf]
    %v87 = vld [vmem:[%s1 + $0x114] sm:$0xf]
    %v88 = vld [vmem:[%s1 + $0x118] sm:$0xf]
    %v89 = vld [vmem:[%s1 + $0x11c] sm:$0xf]
    %v90 = vld [vmem:[%s1 + $0x120] sm:$0xf]
    %v91 = vld [vmem:[%s1 + $0x124] sm:$0xf]
    %v92 = vld [vmem:[%s1 + $0x128] sm:$0xf]
    %v93 = vld [vmem:[%s1 + $0x12c] sm:$0xf]
    %v94 = vld [vmem:[%s1 + $0x130] sm:$0xf]
    %v95 = vld [vmem:[%s1 + $0x134] sm:$0xf]
    %v96 = vld [vmem:[%s1 + $0x138] sm:$0xf]
    %v97 = vld [vmem:[%s1 + $0x13c] sm:$0xf]
    %v98 = vld [vmem:[%s1 + $0x140] sm:$0xf]
    %v99 = vld [vmem:[%s1 + $0x144] sm:$0xf]
    %v100 = vld [vmem:[%s1 + $0x148] sm:$0xf]
    %v101 = vld [vmem:[%s1 + $0x14c] sm:$0xf]
    %v102 = vld [vmem:[%s1 + $0x150] sm:$0xf]
    %v103 = vld [vmem:[%s1 + $0x154] sm:$0xf]
    %v104 = vld [vmem:[%s1 + $0x158] sm:$0xf]
    %v105 = vld [vmem:[%s1 + $0x15c] sm:$0xf]
    %v106 = vld [vmem:[%s1 + $0x160] sm:$0xf]
    %v107 = vld [vmem:[%s1 + $0x164] sm:$0xf]
    %v108 = vld [vmem:[%s1 + $0x168] sm:$0xf]
    %v109 = vld [vmem:[%s1 + $0x16c] sm:$0xf]
    %v110 = vld [vmem:[%s1 + $0x170] sm:$0xf]
    %v111 = vld [vmem:[%s1 + $0x174] sm:$0xf]
    %v112 = vld [vmem:[%s1 + $0x178] sm:$0xf]
    %v113 = vld [vmem:[%s1 + $0x17c] sm:$0xf]
    %v114 = vld [vmem:[%s1 + $0x180] sm:$0xf]
    %v115 = vld [vmem:[%s1 + $0x184] sm:$0xf]
    %v116 = vld [vmem:[%s1 + $0x188] sm:$0xf]
    %v117 = vld [vmem:[%s1 + $0x18c] sm:$0xf]
    %v118 = vld [vmem:[%s1 + $0x190] sm:$0xf]
    %v119 = vld [vmem:[%s1 + $0x194] sm:$0xf]
    %v120 = vld [vmem:[%s1 + $0x198] sm:$0xf]
    %v121 = vld [vmem:[%s1 + $0x19c] sm:$0xf]
    %v122 = vld [vmem:[%s1 + $0x1a0] sm:$0xf]
    %v123 = vld [vmem:[%s1 + $0x1a4] sm:$0xf]
    %v124 = vld [vmem:[%s1 + $0x1a8] sm:$0xf]
    %v125 = vld [vmem:[%s1 + $0x1ac] sm:$0xf]
    %v126 = vld [vmem:[%s1 + $0x1b0] sm:$0xf]
    %v127 = vld [vmem:[%s1 + $0x1b4] sm:$0xf]
    %v128 = vld [vmem:[%s1 + $0x1b8] sm:$0xf]
    %v129 = vld [vmem:[%s1 + $0x1bc] sm:$0xf]
    %v130 = vld [vmem:[%s1 + $0x1c0] sm:$0xf]
    %v131 = vld [vmem:[%s1 + $0x1c4] sm:$0xf]
    %v132 = vld [vmem:[%s1 + $0x1c8] sm:$0xf]
    %v133 = vld [vmem:[%s1 + $0x1cc] sm:$0xf]
    %v134 = vld [vmem:[%s1 + $0x1d0] sm:$0xf]
    %v135 = vld [vmem:[%s1 + $0x1d4] sm:$0xf]
    %v136 = vld [vmem:[%s1 + $0x1d8] sm:$0xf]
    %v137 = vld [vmem:[%s1 + $0x1dc] sm:$0xf]
    %v138 = vld [vmem:[%s1 + $0x1e0] sm:$0xf]
    %v139 = vld [vmem:[%s1 + $0x1e4] sm:$0xf]
    %v140 = vld [vmem:[%s1 + $0x1e8] sm:$0xf]
    %v141 = vld [vmem:[%s1 + $0x1ec] sm:$0xf]
    %v142 = vld [vmem:[%s1 + $0x1f0] sm:$0xf]
    %v143 = vld [vmem:[%s1 + $0x1f4] sm:$0xf]
    %v144 = vld [vmem:[%s1 + $0x1f8] sm:$0xf]
    %v145 = vld [vmem:[%s1 + $0x1fc] sm:$0xf]
    %v146 = vld [vmem:[%s1 + $0x200] sm:$0xf]
    %v147 = vld [vmem:[%s1 + $0x204] sm:$0xf]
    %v148 = vld [vmem:[%s1 + $0x208] sm:$0xf]
    %v149 = vld [vmem:[%s1 + $0x20c] sm:$0xf]
    %v150 = vld [vmem:[%s1 + $0x210] sm:$0xf]
    %v151 = vld [vmem:[%s1 + $0x214] sm:$0xf]
    %v152 = vld [vmem:[%s1 + $0x218] sm:$0xf]
    %v153 = vld [vmem:[%s1 + $0x21c] sm:$0xf]
    %v154 = vld [vmem:[%s1 + $0x220] sm:$0xf]
    %v155 = vld [vmem:[%s1 + $0x224] sm:$0xf]
    %v156 = vld [vmem:[%s1 + $0x228] sm:$0xf]
    %v157 = vld [vmem:[%s1 + $0x22c] sm:$0xf]
    %v158 = vld [vmem:[%s1 + $0x230] sm:$0xf]
    %v159 = vld [vmem:[%s1 + $0x234] sm:$0xf]
    %v160 = vld [vmem:[%s1 + $0x238] sm:$0xf]
    %v161 = vld [vmem:[%s1 + $0x23c] sm:$0xf]
    %v162 = vld [vmem:[%s1 + $0x240] sm:$0xf]
    %v163 = vld [vmem:[%s1 + $0x244] sm:$0xf]
    %v164 = vld [vmem:[%s1 + $0x248] sm:$0xf]
    %v165 = vld [vmem:[%s1 + $0x24c] sm:$0xf]
    %v166 = vld [vmem:[%s1 + $0x250] sm:$0xf]
    %v167 = vld [vmem:[%s1 + $0x254] sm:$0xf]
    %v168 = vld [vmem:[%s1 + $0x258] sm:$0xf]
    %v169 = vld [vmem:[%s1 + $0x25c] sm:$0xf]
    %v170 = vld [vmem:[%s1 + $0x260] sm:$0xf]
    %v171 = vld [vmem:[%s1 + $0x264] sm:$0xf]
    %v172 = vld [vmem:[%s1 + $0x268] sm:$0xf]
    %v173 = vld [vmem:[%s1 + $0x26c] sm:$0xf]
    %v174 = vld [vmem:[%s1 + $0x270] sm:$0xf]
    %v175 = vld [vmem:[%s1 + $0x274] sm:$0xf]
    %v176 = vld [vmem:[%s1 + $0x278] sm:$0xf]
    %v177 = vld [vmem:[%s1 + $0x27c] sm:$0xf]
    %v178 = vld [vmem:[%s1 + $0x280] sm:$0xf]
    %v179 = vld [vmem:[%s1 + $0x284] sm:$0xf]
    %v180 = vld [vmem:[%s1 + $0x288] sm:$0xf]
    %v181 = vld [vmem:[%s1 + $0x28c] sm:$0xf]
    %v182 = vld [vmem:[%s1 + $0x290] sm:$0xf]
    %v183 = vld [vmem:[%s1 + $0x294] sm:$0xf]
    %v184 = vld [vmem:[%s1 + $0x298] sm:$0xf]
    %v185 = vld [vmem:[%s1 + $0x29c] sm:$0xf]
    %v186 = vld [vmem:[%s1 + $0x2a0] sm:$0xf]
    %v187 = vld [vmem:[%s1 + $0x2a4] sm:$0xf]
    %v188 = vld [vmem:[%s1 + $0x2a8] sm:$0xf]
    %v189 = vld [vmem:[%s1 + $0x2ac] sm:$0xf]
    %v190 = vld [vmem:[%s1 + $0x2b0] sm:$0xf]
    %v191 = vld [vmem:[%s1 + $0x2b4] sm:$0xf]
    %v192 = vld [vmem:[%s1 + $0x2b8] sm:$0xf]
    %v193 = vld [vmem:[%s1 + $0x2bc] sm:$0xf]
    %v194 = vld [vmem:[%s1 + $0x2c0] sm:$0xf]
    %v195 = vld [vmem:[%s1 + $0x2c4] sm:$0xf]
    %v196 = vld [vmem:[%s1 + $0x2c8] sm:$0xf]
    %v197 = vld [vmem:[%s1 + $0x2cc] sm:$0xf]
    %v198 = vld [vmem:[%s1 + $0x2d0] sm:$0xf]
    %v199 = vld [vmem:[%s1 + $0x2d4] sm:$0xf]
    %v200 = vld [vmem:[%s1 + $0x2d8] sm:$0xf]
    %v201 = vld [vmem:[%s1 + $0x2dc] sm:$0xf]
    %v202 = vld [vmem:[%s1 + $0x2e0] sm:$0xf]
    %v203 = vld [vmem:[%s1 + $0x2e4] sm:$0xf]
    %v204 = vld [vmem:[%s1 + $0x2e8] sm:$0xf]
    %v205 = vld [vmem:[%s1 + $0x2ec] sm:$0xf]
    %v206 = vld [vmem:[%s1 + $0x2f0] sm:$0xf]
    %v207 = vld [vmem:[%s1 + $0x2f4] sm:$0xf]
    %v208 = vld [vmem:[%s1 + $0x2f8] sm:$0xf]
    %v209 = vld [vmem:[%s1 + $0x2fc] sm:$0xf]
    %v210 = vld [vmem:[%s1 + $0x300] sm:$0xf]
    %v211 = vld [vmem:[%s1 + $0x304] sm:$0xf]
    %v212 = vld [vmem:[%s1 + $0x308] sm:$0xf]
    %v213 = vld [vmem:[%s1 + $0x30c] sm:$0xf]
    %v214 = vld [vmem:[%s1 + $0x310] sm:$0xf]
    %v215 = vld [vmem:[%s1 + $0x314] sm:$0xf]
    %v216 = vld [vmem:[%s1 + $0x318] sm:$0xf]
    %v217 = vld [vmem:[%s1 + $0x31c] sm:$0xf]
    %v218 = vld [vmem:[%s1 + $0x320] sm:$0xf]
    %v219 = vld [vmem:[%s1 + $0x324] sm:$0xf]
    %v220 = vld [vmem:[%s1 + $0x328] sm:$0xf]
    %v221 = vld [vmem:[%s1 + $0x32c] sm:$0xf]
    %v222 = vld [vmem:[%s1 + $0x330] sm:$0xf]
    %v223 = vld [vmem:[%s1 + $0x334] sm:$0xf]
    %v224 = vld [vmem:[%s1 + $0x338] sm:$0xf]
    %v225 = vld [vmem:[%s1 + $0x33c] sm:$0xf]
    %v226 = vld [vmem:[%s1 + $0x340] sm:$0xf]
    %v227 = vld [vmem:[%s1 + $0x344] sm:$0xf]
    %v228 = vld [vmem:[%s1 + $0x348] sm:$0xf]
    %v229 = vld [vmem:[%s1 + $0x34c] sm:$0xf]
    %v230 = vld [vmem:[%s1 + $0x350] sm:$0xf]
    %v231 = vld [vmem:[%s1 + $0x354] sm:$0xf]
    %v232 = vld [vmem:[%s1 + $0x358] sm:$0xf]
    %v233 = vld [vmem:[%s1 + $0x35c] sm:$0xf]
    %v234 = vld [vmem:[%s1 + $0x360] sm:$0xf]
    %v235 = vld [vmem:[%s1 + $0x364] sm:$0xf]
    %v236 = vld [vmem:[%s1 + $0x368] sm:$0xf]
    %v237 = vld [vmem:[%s1 + $0x36c] sm:$0xf]
    %v238 = vld [vmem:[%s1 + $0x370] sm:$0xf]
    %v239 = vld [vmem:[%s1 + $0x374] sm:$0xf]
    %v240 = vld [vmem:[%s1 + $0x378] sm:$0xf]
    %v241 = vld [vmem:[%s1 + $0x37c] sm:$0xf]
    %v242 = vld [vmem:[%s1 + $0x380] sm:$0xf]
    %v243 = vld [vmem:[%s1 + $0x384] sm:$0xf]
    %v244 = vld [vmem:[%s1 + $0x388] sm:$0xf]
    %v245 = vld [vmem:[%s1 + $0x38c] sm:$0xf]
    %v246 = vld [vmem:[%s1 + $0x390] sm:$0xf]
    %v247 = vld [vmem:[%s1 + $0x394] sm:$0xf]
    %v248 = vld [vmem:[%s1 + $0x398] sm:$0xf]
    %v249 = vld [vmem:[%s1 + $0x39c] sm:$0xf]
    %v250 = vld [vmem:[%s1 + $0x3a0] sm:$0xf]
    %v251 = vld [vmem:[%s1 + $0x3a4] sm:$0xf]
    %v252 = vld [vmem:[%s1 + $0x3a8] sm:$0xf]
    %v253 = vld [vmem:[%s1 + $0x3ac] sm:$0xf]
    %v254 = vld [vmem:[%s1 + $0x3b0] sm:$0xf]
    %v255 = vld [vmem:[%s1 + $0x3b4] sm:$0xf]
    %v256 = vld [vmem:[%s1 + $0x3b8] sm:$0xf]
    %v257 = vld [vmem:[%s1 + $0x3bc] sm:$0xf]
    %v258 = vld [vmem:[%s1 + $0x3c0] sm:$0xf]
    %v259 = vld [vmem:[%s1 + $0x3c4] sm:$0xf]
    %v260 = vld [vmem:[%s1 + $0x3c8] sm:$0xf]
    %v261 = vld [vmem:[%s1 + $0x3cc] sm:$0xf]
    %v262 = vld [vmem:[%s1 + $0x3d0] sm:$0xf]
    %v263 = vld [vmem:[%s1 + $0x3d4] sm:$0xf]
    %v264 = vld [vmem:[%s1 + $0x3d8] sm:$0xf]
    %v265 = vld [vmem:[%s1 + $0x3dc] sm:$0xf]
    %v266 = vld [vmem:[%s1 + $0x3e0] sm:$0xf]
    %v267 = vld [vmem:[%s1 + $0x3e4] sm:$0xf]
    %v268 = vld [vmem:[%s1 + $0x3e8] sm:$0xf]
    %v269 = vld [vmem:[%s1 + $0x3ec] sm:$0xf]
    %v270 = vld [vmem:[%s1 + $0x3f0] sm:$0xf]
    %v271 = vld [vmem:[%s1 + $0x3f4] sm:$0xf]
    %v272 = vld [vmem:[%s1 + $0x3f8] sm:$0xf]
    %v273 = vld [vmem:[%s1 + $0x3fc] sm:$0xf]
    %v274 = vld [vmem:[%s2] sm:$0x1]
    %v276 = vlaneseq
    %v277 = vshrl.u32 %v276, 7
    %v278 = vsub.s32 0, %v277
    %v279 = vrot.slane %v274, %v278
    %v283 = vcombine.high %v16, %v16
    %v285 = vunpack.c.l.s4 1966171168
    %v286 = vunpack.c.0.s8 %v285
    %v287 = vlaneseq
    %v288 = vshrl.u32 %v287, 7
    %v289 = vsub.s32 %v286, %v288
    %v290 = vrot.slane %v16, %v289
    %v292 = vunpack.c.l.s4 1966171168
    %v293 = vunpack.c.0.s8 %v292
    %v294 = vlaneseq
    %v295 = vshrl.u32 %v294, 7
    %v296 = vsub.s32 %v293, %v295
    %v297 = vrot.slane %v283, %v296
    %v298 = vcombine.high %v290, %v290
    %v299 = vcombine.high %v297, %v297
    %v301 = vunpack.c.l.s4 1966171168
    %v302 = vunpack.c.0.s8 %v301
    %v303 = vlaneseq
    %v304 = vshrl.u32 %v303, 7
    %v305 = vsub.s32 %v302, %v304
    %v306 = vrot.slane %v290, %v305
    %v308 = vunpack.c.l.s4 1966171168
    %v309 = vunpack.c.0.s8 %v308
    %v310 = vlaneseq
    %v311 = vshrl.u32 %v310, 7
    %v312 = vsub.s32 %v309, %v311
    %v313 = vrot.slane %v297, %v312
    %v315 = vunpack.c.l.s4 1966171168
    %v316 = vunpack.c.0.s8 %v315
    %v317 = vlaneseq
    %v318 = vshrl.u32 %v317, 7
    %v319 = vsub.s32 %v316, %v318
    %v320 = vrot.slane %v298, %v319
    %v322 = vunpack.c.l.s4 1966171168
    %v323 = vunpack.c.0.s8 %v322
    %v324 = vlaneseq
    %v325 = vshrl.u32 %v324, 7
    %v326 = vsub.s32 %v323, %v325
    %v327 = vrot.slane %v299, %v326
    %v328 = vcombine.high %v306, %v306
    %v329 = vcombine.high %v313, %v313
    %v330 = vcombine.high %v320, %v320
    %v331 = vcombine.high %v327, %v327
    %v332 = vcombine.high %v17, %v17
    %v334 = vunpack.c.l.s4 1966171168
    %v335 = vunpack.c.0.s8 %v334
    %v336 = vlaneseq
    %v337 = vshrl.u32 %v336, 7
    %v338 = vsub.s32 %v335, %v337
    %v339 = vrot.slane %v17, %v338
    %v341 = vunpack.c.l.s4 1966171168
    %v342 = vunpack.c.0.s8 %v341
    %v343 = vlaneseq
    %v344 = vshrl.u32 %v343, 7
    %v345 = vsub.s32 %v342, %v344
    %v346 = vrot.slane %v332, %v345
    %v347 = vcombine.high %v339, %v339
    %v348 = vcombine.high %v346, %v346
    %v350 = vunpack.c.l.s4 1966171168
    %v351 = vunpack.c.0.s8 %v350
    %v352 = vlaneseq
    %v353 = vshrl.u32 %v352, 7
    %v354 = vsub.s32 %v351, %v353
    %v355 = vrot.slane %v339, %v354
    %v357 = vunpack.c.l.s4 1966171168
    %v358 = vunpack.c.0.s8 %v357
    %v359 = vlaneseq
    %v360 = vshrl.u32 %v359, 7
    %v361 = vsub.s32 %v358, %v360
    %v362 = vrot.slane %v346, %v361
    %v364 = vunpack.c.l.s4 1966171168
    %v365 = vunpack.c.0.s8 %v364
    %v366 = vlaneseq
    %v367 = vshrl.u32 %v366, 7
    %v368 = vsub.s32 %v365, %v367
    %v369 = vrot.slane %v347, %v368
    %v371 = vunpack.c.l.s4 1966171168
    %v372 = vunpack.c.0.s8 %v371
    %v373 = vlaneseq
    %v374 = vshrl.u32 %v373, 7
    %v375 = vsub.s32 %v372, %v374
    %v376 = vrot.slane %v348, %v375
    %v377 = vcombine.high %v355, %v355
    %v378 = vcombine.high %v362, %v362
    %v379 = vcombine.high %v369, %v369
    %v380 = vcombine.high %v376, %v376
    %v653 = vunpack.c.l.b16 %v18
    %v654 = vunpack.c.l.b16 %v19
    %v655 = vunpack.c.l.b16 %v20
    %v656 = vunpack.c.l.b16 %v21
    %v657 = vunpack.c.l.b16 %v22
    %v658 = vunpack.c.l.b16 %v23
    %v659 = vunpack.c.l.b16 %v24
    %v660 = vunpack.c.l.b16 %v25
    %v661 = vunpack.c.l.b16 %v26
    %v662 = vunpack.c.l.b16 %v27
    %v663 = vunpack.c.l.b16 %v28
    %v664 = vunpack.c.l.b16 %v29
    %v665 = vunpack.c.l.b16 %v30
    %v666 = vunpack.c.l.b16 %v31
    %v667 = vunpack.c.l.b16 %v32
    %v668 = vunpack.c.l.b16 %v33
    %v669 = vunpack.c.l.b16 %v34
    %v670 = vunpack.c.l.b16 %v35
    %v671 = vunpack.c.l.b16 %v36
    %v672 = vunpack.c.l.b16 %v37
    %v673 = vunpack.c.l.b16 %v38
    %v674 = vunpack.c.l.b16 %v39
    %v675 = vunpack.c.l.b16 %v40
    %v676 = vunpack.c.l.b16 %v41
    %v677 = vunpack.c.l.b16 %v42
    %v678 = vunpack.c.l.b16 %v43
    %v679 = vunpack.c.l.b16 %v44
    %v680 = vunpack.c.l.b16 %v45
    %v681 = vunpack.c.l.b16 %v46
    %v682 = vunpack.c.l.b16 %v47
    %v683 = vunpack.c.l.b16 %v48
    %v684 = vunpack.c.l.b16 %v49
    %v685 = vunpack.c.l.b16 %v50
    %v686 = vunpack.c.l.b16 %v51
    %v687 = vunpack.c.l.b16 %v52
    %v688 = vunpack.c.l.b16 %v53
    %v689 = vunpack.c.l.b16 %v54
    %v690 = vunpack.c.l.b16 %v55
    %v691 = vunpack.c.l.b16 %v56
    %v692 = vunpack.c.l.b16 %v57
    %v693 = vunpack.c.l.b16 %v58
    %v694 = vunpack.c.l.b16 %v59
    %v695 = vunpack.c.l.b16 %v60
    %v696 = vunpack.c.l.b16 %v61
    %v697 = vunpack.c.l.b16 %v62
    %v698 = vunpack.c.l.b16 %v63
    %v699 = vunpack.c.l.b16 %v64
    %v700 = vunpack.c.l.b16 %v65
    %v701 = vunpack.c.l.b16 %v66
    %v702 = vunpack.c.l.b16 %v67
    %v703 = vunpack.c.l.b16 %v68
    %v704 = vunpack.c.l.b16 %v69
    %v705 = vunpack.c.l.b16 %v70
    %v706 = vunpack.c.l.b16 %v71
    %v707 = vunpack.c.l.b16 %v72
    %v708 = vunpack.c.l.b16 %v73
    %v709 = vunpack.c.l.b16 %v74
    %v710 = vunpack.c.l.b16 %v75
    %v711 = vunpack.c.l.b16 %v76
    %v712 = vunpack.c.l.b16 %v77
    %v713 = vunpack.c.l.b16 %v78
    %v714 = vunpack.c.l.b16 %v79
    %v715 = vunpack.c.l.b16 %v80
    %v716 = vunpack.c.l.b16 %v81
    %v717 = vunpack.c.l.b16 %v82
    %v718 = vunpack.c.l.b16 %v83
    %v719 = vunpack.c.l.b16 %v84
    %v720 = vunpack.c.l.b16 %v85
    %v721 = vunpack.c.l.b16 %v86
    %v722 = vunpack.c.l.b16 %v87
    %v723 = vunpack.c.l.b16 %v88
    %v724 = vunpack.c.l.b16 %v89
    %v725 = vunpack.c.l.b16 %v90
    %v726 = vunpack.c.l.b16 %v91
    %v727 = vunpack.c.l.b16 %v92
    %v728 = vunpack.c.l.b16 %v93
    %v729 = vunpack.c.l.b16 %v94
    %v730 = vunpack.c.l.b16 %v95
    %v731 = vunpack.c.l.b16 %v96
    %v732 = vunpack.c.l.b16 %v97
    %v733 = vunpack.c.l.b16 %v98
    %v734 = vunpack.c.l.b16 %v99
    %v735 = vunpack.c.l.b16 %v100
    %v736 = vunpack.c.l.b16 %v101
    %v737 = vunpack.c.l.b16 %v102
    %v738 = vunpack.c.l.b16 %v103
    %v739 = vunpack.c.l.b16 %v104
    %v740 = vunpack.c.l.b16 %v105
    %v741 = vunpack.c.l.b16 %v106
    %v742 = vunpack.c.l.b16 %v107
    %v743 = vunpack.c.l.b16 %v108
    %v744 = vunpack.c.l.b16 %v109
    %v745 = vunpack.c.l.b16 %v110
    %v746 = vunpack.c.l.b16 %v111
    %v747 = vunpack.c.l.b16 %v112
    %v748 = vunpack.c.l.b16 %v113
    %v749 = vunpack.c.l.b16 %v114
    %v750 = vunpack.c.l.b16 %v115
    %v751 = vunpack.c.l.b16 %v116
    %v752 = vunpack.c.l.b16 %v117
    %v753 = vunpack.c.l.b16 %v118
    %v754 = vunpack.c.l.b16 %v119
    %v755 = vunpack.c.l.b16 %v120
    %v756 = vunpack.c.l.b16 %v121
    %v757 = vunpack.c.l.b16 %v122
    %v758 = vunpack.c.l.b16 %v123
    %v759 = vunpack.c.l.b16 %v124
    %v760 = vunpack.c.l.b16 %v125
    %v761 = vunpack.c.l.b16 %v126
    %v762 = vunpack.c.l.b16 %v127
    %v763 = vunpack.c.l.b16 %v128
    %v764 = vunpack.c.l.b16 %v129
    %v765 = vunpack.c.l.b16 %v130
    %v766 = vunpack.c.l.b16 %v131
    %v767 = vunpack.c.l.b16 %v132
    %v768 = vunpack.c.l.b16 %v133
    %v769 = vunpack.c.l.b16 %v134
    %v770 = vunpack.c.l.b16 %v135
    %v771 = vunpack.c.l.b16 %v136
    %v772 = vunpack.c.l.b16 %v137
    %v773 = vunpack.c.l.b16 %v138
    %v774 = vunpack.c.l.b16 %v139
    %v775 = vunpack.c.l.b16 %v140
    %v776 = vunpack.c.l.b16 %v141
    %v777 = vunpack.c.l.b16 %v142
    %v778 = vunpack.c.l.b16 %v143
    %v779 = vunpack.c.l.b16 %v144
    %v780 = vunpack.c.l.b16 %v145
    %v781 = vunpack.c.l.b16 %v146
    %v782 = vunpack.c.l.b16 %v147
    %v783 = vunpack.c.l.b16 %v148
    %v784 = vunpack.c.l.b16 %v149
    %v785 = vunpack.c.l.b16 %v150
    %v786 = vunpack.c.l.b16 %v151
    %v787 = vunpack.c.l.b16 %v152
    %v788 = vunpack.c.l.b16 %v153
    %v789 = vunpack.c.l.b16 %v154
    %v790 = vunpack.c.l.b16 %v155
    %v791 = vunpack.c.l.b16 %v156
    %v792 = vunpack.c.l.b16 %v157
    %v793 = vunpack.c.l.b16 %v158
    %v794 = vunpack.c.l.b16 %v159
    %v795 = vunpack.c.l.b16 %v160
    %v796 = vunpack.c.l.b16 %v161
    %v797 = vunpack.c.l.b16 %v162
    %v798 = vunpack.c.l.b16 %v163
    %v799 = vunpack.c.l.b16 %v164
    %v800 = vunpack.c.l.b16 %v165
    %v801 = vunpack.c.l.b16 %v166
    %v802 = vunpack.c.l.b16 %v167
    %v803 = vunpack.c.l.b16 %v168
    %v804 = vunpack.c.l.b16 %v169
    %v805 = vunpack.c.l.b16 %v170
    %v806 = vunpack.c.l.b16 %v171
    %v807 = vunpack.c.l.b16 %v172
    %v808 = vunpack.c.l.b16 %v173
    %v809 = vunpack.c.l.b16 %v174
    %v810 = vunpack.c.l.b16 %v175
    %v811 = vunpack.c.l.b16 %v176
    %v812 = vunpack.c.l.b16 %v177
    %v813 = vunpack.c.l.b16 %v178
    %v814 = vunpack.c.l.b16 %v179
    %v815 = vunpack.c.l.b16 %v180
    %v816 = vunpack.c.l.b16 %v181
    %v817 = vunpack.c.l.b16 %v182
    %v818 = vunpack.c.l.b16 %v183
    %v819 = vunpack.c.l.b16 %v184
    %v820 = vunpack.c.l.b16 %v185
    %v821 = vunpack.c.l.b16 %v186
    %v822 = vunpack.c.l.b16 %v187
    %v823 = vunpack.c.l.b16 %v188
    %v824 = vunpack.c.l.b16 %v189
    %v825 = vunpack.c.l.b16 %v190
    %v826 = vunpack.c.l.b16 %v191
    %v827 = vunpack.c.l.b16 %v192
    %v828 = vunpack.c.l.b16 %v193
    %v829 = vunpack.c.l.b16 %v194
    %v830 = vunpack.c.l.b16 %v195
    %v831 = vunpack.c.l.b16 %v196
    %v832 = vunpack.c.l.b16 %v197
    %v833 = vunpack.c.l.b16 %v198
    %v834 = vunpack.c.l.b16 %v199
    %v835 = vunpack.c.l.b16 %v200
    %v836 = vunpack.c.l.b16 %v201
    %v837 = vunpack.c.l.b16 %v202
    %v838 = vunpack.c.l.b16 %v203
    %v839 = vunpack.c.l.b16 %v204
    %v840 = vunpack.c.l.b16 %v205
    %v841 = vunpack.c.l.b16 %v206
    %v842 = vunpack.c.l.b16 %v207
    %v843 = vunpack.c.l.b16 %v208
    %v844 = vunpack.c.l.b16 %v209
    %v845 = vunpack.c.l.b16 %v210
    %v846 = vunpack.c.l.b16 %v211
    %v847 = vunpack.c.l.b16 %v212
    %v848 = vunpack.c.l.b16 %v213
    %v849 = vunpack.c.l.b16 %v214
    %v850 = vunpack.c.l.b16 %v215
    %v851 = vunpack.c.l.b16 %v216
    %v852 = vunpack.c.l.b16 %v217
    %v853 = vunpack.c.l.b16 %v218
    %v854 = vunpack.c.l.b16 %v219
    %v855 = vunpack.c.l.b16 %v220
    %v856 = vunpack.c.l.b16 %v221
    %v857 = vunpack.c.l.b16 %v222
    %v858 = vunpack.c.l.b16 %v223
    %v859 = vunpack.c.l.b16 %v224
    %v860 = vunpack.c.l.b16 %v225
    %v861 = vunpack.c.l.b16 %v226
    %v862 = vunpack.c.l.b16 %v227
    %v863 = vunpack.c.l.b16 %v228
    %v864 = vunpack.c.l.b16 %v229
    %v865 = vunpack.c.l.b16 %v230
    %v866 = vunpack.c.l.b16 %v231
    %v867 = vunpack.c.l.b16 %v232
    %v868 = vunpack.c.l.b16 %v233
    %v869 = vunpack.c.l.b16 %v234
    %v870 = vunpack.c.l.b16 %v235
    %v871 = vunpack.c.l.b16 %v236
    %v872 = vunpack.c.l.b16 %v237
    %v873 = vunpack.c.l.b16 %v238
    %v874 = vunpack.c.l.b16 %v239
    %v875 = vunpack.c.l.b16 %v240
    %v876 = vunpack.c.l.b16 %v241
    %v877 = vunpack.c.l.b16 %v242
    %v878 = vunpack.c.l.b16 %v243
    %v879 = vunpack.c.l.b16 %v244
    %v880 = vunpack.c.l.b16 %v245
    %v881 = vunpack.c.l.b16 %v246
    %v882 = vunpack.c.l.b16 %v247
    %v883 = vunpack.c.l.b16 %v248
    %v884 = vunpack.c.l.b16 %v249
    %v885 = vunpack.c.l.b16 %v250
    %v886 = vunpack.c.l.b16 %v251
    %v887 = vunpack.c.l.b16 %v252
    %v888 = vunpack.c.l.b16 %v253
    %v889 = vunpack.c.l.b16 %v254
    %v890 = vunpack.c.l.b16 %v255
    %v891 = vunpack.c.l.b16 %v256
    %v892 = vunpack.c.l.b16 %v257
    %v893 = vunpack.c.l.b16 %v258
    %v894 = vunpack.c.l.b16 %v259
    %v895 = vunpack.c.l.b16 %v260
    %v896 = vunpack.c.l.b16 %v261
    %v897 = vunpack.c.l.b16 %v262
    %v898 = vunpack.c.l.b16 %v263
    %v899 = vunpack.c.l.b16 %v264
    %v900 = vunpack.c.l.b16 %v265
    %v901 = vunpack.c.l.b16 %v266
    %v902 = vunpack.c.l.b16 %v267
    %v903 = vunpack.c.l.b16 %v268
    %v904 = vunpack.c.l.b16 %v269
    %v905 = vunpack.c.l.b16 %v270
    %v906 = vunpack.c.l.b16 %v271
    %v907 = vunpack.c.l.b16 %v272
    %v908 = vunpack.c.l.b16 %v273
    %v909 = vpack.c.b16 %v654, %v653
    %v910 = vpack.c.b16 %v656, %v655
    %v911 = vpack.c.b16 %v658, %v657
    %v912 = vpack.c.b16 %v660, %v659
    %v913 = vpack.c.b16 %v662, %v661
    %v914 = vpack.c.b16 %v664, %v663
    %v915 = vpack.c.b16 %v666, %v665
    %v916 = vpack.c.b16 %v668, %v667
    %v917 = vpack.c.b16 %v670, %v669
    %v918 = vpack.c.b16 %v672, %v671
    %v919 = vpack.c.b16 %v674, %v673
    %v920 = vpack.c.b16 %v676, %v675
    %v921 = vpack.c.b16 %v678, %v677
    %v922 = vpack.c.b16 %v680, %v679
    %v923 = vpack.c.b16 %v682, %v681
    %v924 = vpack.c.b16 %v684, %v683
    %v925 = vpack.c.b16 %v686, %v685
    %v926 = vpack.c.b16 %v688, %v687
    %v927 = vpack.c.b16 %v690, %v689
    %v928 = vpack.c.b16 %v692, %v691
    %v929 = vpack.c.b16 %v694, %v693
    %v930 = vpack.c.b16 %v696, %v695
    %v931 = vpack.c.b16 %v698, %v697
    %v932 = vpack.c.b16 %v700, %v699
    %v933 = vpack.c.b16 %v702, %v701
    %v934 = vpack.c.b16 %v704, %v703
    %v935 = vpack.c.b16 %v706, %v705
    %v936 = vpack.c.b16 %v708, %v707
    %v937 = vpack.c.b16 %v710, %v709
    %v938 = vpack.c.b16 %v712, %v711
    %v939 = vpack.c.b16 %v714, %v713
    %v940 = vpack.c.b16 %v716, %v715
    %v941 = vpack.c.b16 %v718, %v717
    %v942 = vpack.c.b16 %v720, %v719
    %v943 = vpack.c.b16 %v722, %v721
    %v944 = vpack.c.b16 %v724, %v723
    %v945 = vpack.c.b16 %v726, %v725
    %v946 = vpack.c.b16 %v728, %v727
    %v947 = vpack.c.b16 %v730, %v729
    %v948 = vpack.c.b16 %v732, %v731
    %v949 = vpack.c.b16 %v734, %v733
    %v950 = vpack.c.b16 %v736, %v735
    %v951 = vpack.c.b16 %v738, %v737
    %v952 = vpack.c.b16 %v740, %v739
    %v953 = vpack.c.b16 %v742, %v741
    %v954 = vpack.c.b16 %v744, %v743
    %v955 = vpack.c.b16 %v746, %v745
    %v956 = vpack.c.b16 %v748, %v747
    %v957 = vpack.c.b16 %v750, %v749
    %v958 = vpack.c.b16 %v752, %v751
    %v959 = vpack.c.b16 %v754, %v753
    %v960 = vpack.c.b16 %v756, %v755
    %v961 = vpack.c.b16 %v758, %v757
    %v962 = vpack.c.b16 %v760, %v759
    %v963 = vpack.c.b16 %v762, %v761
    %v964 = vpack.c.b16 %v764, %v763
    %v965 = vpack.c.b16 %v766, %v765
    %v966 = vpack.c.b16 %v768, %v767
    %v967 = vpack.c.b16 %v770, %v769
    %v968 = vpack.c.b16 %v772, %v771
    %v969 = vpack.c.b16 %v774, %v773
    %v970 = vpack.c.b16 %v776, %v775
    %v971 = vpack.c.b16 %v778, %v777
    %v972 = vpack.c.b16 %v780, %v779
    %v973 = vpack.c.b16 %v782, %v781
    %v974 = vpack.c.b16 %v784, %v783
    %v975 = vpack.c.b16 %v786, %v785
    %v976 = vpack.c.b16 %v788, %v787
    %v977 = vpack.c.b16 %v790, %v789
    %v978 = vpack.c.b16 %v792, %v791
    %v979 = vpack.c.b16 %v794, %v793
    %v980 = vpack.c.b16 %v796, %v795
    %v981 = vpack.c.b16 %v798, %v797
    %v982 = vpack.c.b16 %v800, %v799
    %v983 = vpack.c.b16 %v802, %v801
    %v984 = vpack.c.b16 %v804, %v803
    %v985 = vpack.c.b16 %v806, %v805
    %v986 = vpack.c.b16 %v808, %v807
    %v987 = vpack.c.b16 %v810, %v809
    %v988 = vpack.c.b16 %v812, %v811
    %v989 = vpack.c.b16 %v814, %v813
    %v990 = vpack.c.b16 %v816, %v815
    %v991 = vpack.c.b16 %v818, %v817
    %v992 = vpack.c.b16 %v820, %v819
    %v993 = vpack.c.b16 %v822, %v821
    %v994 = vpack.c.b16 %v824, %v823
    %v995 = vpack.c.b16 %v826, %v825
    %v996 = vpack.c.b16 %v828, %v827
    %v997 = vpack.c.b16 %v830, %v829
    %v998 = vpack.c.b16 %v832, %v831
    %v999 = vpack.c.b16 %v834, %v833
    %v1000 = vpack.c.b16 %v836, %v835
    %v1001 = vpack.c.b16 %v838, %v837
    %v1002 = vpack.c.b16 %v840, %v839
    %v1003 = vpack.c.b16 %v842, %v841
    %v1004 = vpack.c.b16 %v844, %v843
    %v1005 = vpack.c.b16 %v846, %v845
    %v1006 = vpack.c.b16 %v848, %v847
    %v1007 = vpack.c.b16 %v850, %v849
    %v1008 = vpack.c.b16 %v852, %v851
    %v1009 = vpack.c.b16 %v854, %v853
    %v1010 = vpack.c.b16 %v856, %v855
    %v1011 = vpack.c.b16 %v858, %v857
    %v1012 = vpack.c.b16 %v860, %v859
    %v1013 = vpack.c.b16 %v862, %v861
    %v1014 = vpack.c.b16 %v864, %v863
    %v1015 = vpack.c.b16 %v866, %v865
    %v1016 = vpack.c.b16 %v868, %v867
    %v1017 = vpack.c.b16 %v870, %v869
    %v1018 = vpack.c.b16 %v872, %v871
    %v1019 = vpack.c.b16 %v874, %v873
    %v1020 = vpack.c.b16 %v876, %v875
    %v1021 = vpack.c.b16 %v878, %v877
    %v1022 = vpack.c.b16 %v880, %v879
    %v1023 = vpack.c.b16 %v882, %v881
    %v1024 = vpack.c.b16 %v884, %v883
    %v1025 = vpack.c.b16 %v886, %v885
    %v1026 = vpack.c.b16 %v888, %v887
    %v1027 = vpack.c.b16 %v890, %v889
    %v1028 = vpack.c.b16 %v892, %v891
    %v1029 = vpack.c.b16 %v894, %v893
    %v1030 = vpack.c.b16 %v896, %v895
    %v1031 = vpack.c.b16 %v898, %v897
    %v1032 = vpack.c.b16 %v900, %v899
    %v1033 = vpack.c.b16 %v902, %v901
    %v1034 = vpack.c.b16 %v904, %v903
    %v1035 = vpack.c.b16 %v906, %v905
    %v1036 = vpack.c.b16 %v908, %v907
    %1165 = vmatprep.subr.bf16.mxu0 0
    %1166 = vmatpush1.bf16.msra.mxu0 %v916
    %1167 = vmatprep.subr.bf16.mxu0 0
    %1168 = vmatpush1.bf16.msra.mxu0 %v915
    %1169 = vmatprep.subr.bf16.mxu0 0
    %1170 = vmatpush1.bf16.msra.mxu0 %v914
    %1171 = vmatprep.subr.bf16.mxu0 0
    %1172 = vmatpush1.bf16.msra.mxu0 %v913
    %1173 = vmatprep.subr.bf16.mxu0 0
    %1174 = vmatpush1.bf16.msra.mxu0 %v912
    %1175 = vmatprep.subr.bf16.mxu0 0
    %1176 = vmatpush1.bf16.msra.mxu0 %v911
    %1177 = vmatprep.subr.bf16.mxu0 0
    %1178 = vmatpush1.bf16.msra.mxu0 %v910
    %1179 = vmatprep.subr.bf16.mxu0 0
    %1180 = vmatpush1.bf16.msra.mxu0 %v909
    %1181 = vmatprep.subr.bf16.mxu0 0
    %1182 = vmatpush2.bf16.msra.mxu0 %v924
    %1183 = vmatprep.subr.bf16.mxu0 0
    %1184 = vmatpush2.bf16.msra.mxu0 %v923
    %1185 = vmatprep.subr.bf16.mxu0 0
    %1186 = vmatpush2.bf16.msra.mxu0 %v922
    %1187 = vmatprep.subr.bf16.mxu0 0
    %1188 = vmatpush2.bf16.msra.mxu0 %v921
    %1189 = vmatprep.subr.bf16.mxu0 0
    %1190 = vmatpush2.bf16.msra.mxu0 %v920
    %1191 = vmatprep.subr.bf16.mxu0 0
    %1192 = vmatpush2.bf16.msra.mxu0 %v919
    %1193 = vmatprep.subr.bf16.mxu0 0
    %1194 = vmatpush2.bf16.msra.mxu0 %v918
    %1195 = vmatprep.subr.bf16.mxu0 0
    %1196 = vmatpush2.bf16.msra.mxu0 %v917
    %1197 = vmatprep.mubr.bf16.mxu0 %v320
    %1198 = vmatmul.mubr.bf16.gmra.mxu0 %v306
    %v1199 = vpop.f32.mrf.mxu0
    %v1200 = vadd.f32 %v279, %v1199
    %v1201 = vpop.f32.mrf.mxu0
    %v1202 = vpop.f32.mrf.mxu0
    %v1203 = vpop.f32.mrf.mxu0
    %1204 = vdwg.mxu0
    %1205 = vmatprep.subr.bf16.mxu0 0
    %1206 = vmatpush1.bf16.msra.mxu0 %v932
    %1207 = vmatprep.subr.bf16.mxu0 0
    %1208 = vmatpush1.bf16.msra.mxu0 %v931
    %1209 = vmatprep.subr.bf16.mxu0 0
    %1210 = vmatpush1.bf16.msra.mxu0 %v930
    %1211 = vmatprep.subr.bf16.mxu0 0
    %1212 = vmatpush1.bf16.msra.mxu0 %v929
    %1213 = vmatprep.subr.bf16.mxu0 0
    %1214 = vmatpush1.bf16.msra.mxu0 %v928
    %1215 = vmatprep.subr.bf16.mxu0 0
    %1216 = vmatpush1.bf16.msra.mxu0 %v927
    %1217 = vmatprep.subr.bf16.mxu0 0
    %1218 = vmatpush1.bf16.msra.mxu0 %v926
    %1219 = vmatprep.subr.bf16.mxu0 0
    %1220 = vmatpush1.bf16.msra.mxu0 %v925
    %1221 = vmatprep.subr.bf16.mxu0 0
    %1222 = vmatpush2.bf16.msra.mxu0 %v940
    %1223 = vmatprep.subr.bf16.mxu0 0
    %1224 = vmatpush2.bf16.msra.mxu0 %v939
    %1225 = vmatprep.subr.bf16.mxu0 0
    %1226 = vmatpush2.bf16.msra.mxu0 %v938
    %1227 = vmatprep.subr.bf16.mxu0 0
    %1228 = vmatpush2.bf16.msra.mxu0 %v937
    %1229 = vmatprep.subr.bf16.mxu0 0
    %1230 = vmatpush2.bf16.msra.mxu0 %v936
    %1231 = vmatprep.subr.bf16.mxu0 0
    %1232 = vmatpush2.bf16.msra.mxu0 %v935
    %1233 = vmatprep.subr.bf16.mxu0 0
    %1234 = vmatpush2.bf16.msra.mxu0 %v934
    %1235 = vmatprep.subr.bf16.mxu0 0
    %1236 = vmatpush2.bf16.msra.mxu0 %v933
    %1237 = vmatprep.mubr.bf16.mxu0 %v330
    %1238 = vmatmul.mubr.bf16.gmra.mxu0 %v328
    %v1239 = vpop.f32.mrf.mxu0
    %v1240 = vadd.f32 %v1200, %v1239
    %v1241 = vpop.f32.mrf.mxu0
    %v1242 = vpop.f32.mrf.mxu0
    %v1243 = vpop.f32.mrf.mxu0
    %1244 = vdwg.mxu0
    %1245 = vmatprep.subr.bf16.mxu0 0
    %1246 = vmatpush1.bf16.msra.mxu0 %v948
    %1247 = vmatprep.subr.bf16.mxu0 0
    %1248 = vmatpush1.bf16.msra.mxu0 %v947
    %1249 = vmatprep.subr.bf16.mxu0 0
    %1250 = vmatpush1.bf16.msra.mxu0 %v946
    %1251 = vmatprep.subr.bf16.mxu0 0
    %1252 = vmatpush1.bf16.msra.mxu0 %v945
    %1253 = vmatprep.subr.bf16.mxu0 0
    %1254 = vmatpush1.bf16.msra.mxu0 %v944
    %1255 = vmatprep.subr.bf16.mxu0 0
    %1256 = vmatpush1.bf16.msra.mxu0 %v943
    %1257 = vmatprep.subr.bf16.mxu0 0
    %1258 = vmatpush1.bf16.msra.mxu0 %v942
    %1259 = vmatprep.subr.bf16.mxu0 0
    %1260 = vmatpush1.bf16.msra.mxu0 %v941
    %1261 = vmatprep.subr.bf16.mxu0 0
    %1262 = vmatpush2.bf16.msra.mxu0 %v956
    %1263 = vmatprep.subr.bf16.mxu0 0
    %1264 = vmatpush2.bf16.msra.mxu0 %v955
    %1265 = vmatprep.subr.bf16.mxu0 0
    %1266 = vmatpush2.bf16.msra.mxu0 %v954
    %1267 = vmatprep.subr.bf16.mxu0 0
    %1268 = vmatpush2.bf16.msra.mxu0 %v953
    %1269 = vmatprep.subr.bf16.mxu0 0
    %1270 = vmatpush2.bf16.msra.mxu0 %v952
    %1271 = vmatprep.subr.bf16.mxu0 0
    %1272 = vmatpush2.bf16.msra.mxu0 %v951
    %1273 = vmatprep.subr.bf16.mxu0 0
    %1274 = vmatpush2.bf16.msra.mxu0 %v950
    %1275 = vmatprep.subr.bf16.mxu0 0
    %1276 = vmatpush2.bf16.msra.mxu0 %v949
    %1277 = vmatprep.mubr.bf16.mxu0 %v327
    %1278 = vmatmul.mubr.bf16.gmra.mxu0 %v313
    %v1279 = vpop.f32.mrf.mxu0
    %v1280 = vadd.f32 %v1240, %v1279
    %v1281 = vpop.f32.mrf.mxu0
    %v1282 = vpop.f32.mrf.mxu0
    %v1283 = vpop.f32.mrf.mxu0
    %1284 = vdwg.mxu0
    %1285 = vmatprep.subr.bf16.mxu0 0
    %1286 = vmatpush1.bf16.msra.mxu0 %v964
    %1287 = vmatprep.subr.bf16.mxu0 0
    %1288 = vmatpush1.bf16.msra.mxu0 %v963
    %1289 = vmatprep.subr.bf16.mxu0 0
    %1290 = vmatpush1.bf16.msra.mxu0 %v962
    %1291 = vmatprep.subr.bf16.mxu0 0
    %1292 = vmatpush1.bf16.msra.mxu0 %v961
    %1293 = vmatprep.subr.bf16.mxu0 0
    %1294 = vmatpush1.bf16.msra.mxu0 %v960
    %1295 = vmatprep.subr.bf16.mxu0 0
    %1296 = vmatpush1.bf16.msra.mxu0 %v959
    %1297 = vmatprep.subr.bf16.mxu0 0
    %1298 = vmatpush1.bf16.msra.mxu0 %v958
    %1299 = vmatprep.subr.bf16.mxu0 0
    %1300 = vmatpush1.bf16.msra.mxu0 %v957
    %1301 = vmatprep.subr.bf16.mxu0 0
    %1302 = vmatpush2.bf16.msra.mxu0 %v972
    %1303 = vmatprep.subr.bf16.mxu0 0
    %1304 = vmatpush2.bf16.msra.mxu0 %v971
    %1305 = vmatprep.subr.bf16.mxu0 0
    %1306 = vmatpush2.bf16.msra.mxu0 %v970
    %1307 = vmatprep.subr.bf16.mxu0 0
    %1308 = vmatpush2.bf16.msra.mxu0 %v969
    %1309 = vmatprep.subr.bf16.mxu0 0
    %1310 = vmatpush2.bf16.msra.mxu0 %v968
    %1311 = vmatprep.subr.bf16.mxu0 0
    %1312 = vmatpush2.bf16.msra.mxu0 %v967
    %1313 = vmatprep.subr.bf16.mxu0 0
    %1314 = vmatpush2.bf16.msra.mxu0 %v966
    %1315 = vmatprep.subr.bf16.mxu0 0
    %1316 = vmatpush2.bf16.msra.mxu0 %v965
    %1317 = vmatprep.mubr.bf16.mxu0 %v331
    %1318 = vmatmul.mubr.bf16.gmra.mxu0 %v329
    %v1319 = vpop.f32.mrf.mxu0
    %v1320 = vadd.f32 %v1280, %v1319
    %v1321 = vpop.f32.mrf.mxu0
    %v1322 = vpop.f32.mrf.mxu0
    %v1323 = vpop.f32.mrf.mxu0
    %1324 = vdwg.mxu0
    %1325 = vmatprep.subr.bf16.mxu0 0
    %1326 = vmatpush1.bf16.msra.mxu0 %v980
    %1327 = vmatprep.subr.bf16.mxu0 0
    %1328 = vmatpush1.bf16.msra.mxu0 %v979
    %1329 = vmatprep.subr.bf16.mxu0 0
    %1330 = vmatpush1.bf16.msra.mxu0 %v978
    %1331 = vmatprep.subr.bf16.mxu0 0
    %1332 = vmatpush1.bf16.msra.mxu0 %v977
    %1333 = vmatprep.subr.bf16.mxu0 0
    %1334 = vmatpush1.bf16.msra.mxu0 %v976
    %1335 = vmatprep.subr.bf16.mxu0 0
    %1336 = vmatpush1.bf16.msra.mxu0 %v975
    %1337 = vmatprep.subr.bf16.mxu0 0
    %1338 = vmatpush1.bf16.msra.mxu0 %v974
    %1339 = vmatprep.subr.bf16.mxu0 0
    %1340 = vmatpush1.bf16.msra.mxu0 %v973
    %1341 = vmatprep.subr.bf16.mxu0 0
    %1342 = vmatpush2.bf16.msra.mxu0 %v988
    %1343 = vmatprep.subr.bf16.mxu0 0
    %1344 = vmatpush2.bf16.msra.mxu0 %v987
    %1345 = vmatprep.subr.bf16.mxu0 0
    %1346 = vmatpush2.bf16.msra.mxu0 %v986
    %1347 = vmatprep.subr.bf16.mxu0 0
    %1348 = vmatpush2.bf16.msra.mxu0 %v985
    %1349 = vmatprep.subr.bf16.mxu0 0
    %1350 = vmatpush2.bf16.msra.mxu0 %v984
    %1351 = vmatprep.subr.bf16.mxu0 0
    %1352 = vmatpush2.bf16.msra.mxu0 %v983
    %1353 = vmatprep.subr.bf16.mxu0 0
    %1354 = vmatpush2.bf16.msra.mxu0 %v982
    %1355 = vmatprep.subr.bf16.mxu0 0
    %1356 = vmatpush2.bf16.msra.mxu0 %v981
    %1357 = vmatprep.mubr.bf16.mxu0 %v369
    %1358 = vmatmul.mubr.bf16.gmra.mxu0 %v355
    %v1359 = vpop.f32.mrf.mxu0
    %v1360 = vadd.f32 %v1320, %v1359
    %v1361 = vpop.f32.mrf.mxu0
    %v1362 = vpop.f32.mrf.mxu0
    %v1363 = vpop.f32.mrf.mxu0
    %1364 = vdwg.mxu0
    %1365 = vmatprep.subr.bf16.mxu0 0
    %1366 = vmatpush1.bf16.msra.mxu0 %v996
    %1367 = vmatprep.subr.bf16.mxu0 0
    %1368 = vmatpush1.bf16.msra.mxu0 %v995
    %1369 = vmatprep.subr.bf16.mxu0 0
    %1370 = vmatpush1.bf16.msra.mxu0 %v994
    %1371 = vmatprep.subr.bf16.mxu0 0
    %1372 = vmatpush1.bf16.msra.mxu0 %v993
    %1373 = vmatprep.subr.bf16.mxu0 0
    %1374 = vmatpush1.bf16.msra.mxu0 %v992
    %1375 = vmatprep.subr.bf16.mxu0 0
    %1376 = vmatpush1.bf16.msra.mxu0 %v991
    %1377 = vmatprep.subr.bf16.mxu0 0
    %1378 = vmatpush1.bf16.msra.mxu0 %v990
    %1379 = vmatprep.subr.bf16.mxu0 0
    %1380 = vmatpush1.bf16.msra.mxu0 %v989
    %1381 = vmatprep.subr.bf16.mxu0 0
    %1382 = vmatpush2.bf16.msra.mxu0 %v1004
    %1383 = vmatprep.subr.bf16.mxu0 0
    %1384 = vmatpush2.bf16.msra.mxu0 %v1003
    %1385 = vmatprep.subr.bf16.mxu0 0
    %1386 = vmatpush2.bf16.msra.mxu0 %v1002
    %1387 = vmatprep.subr.bf16.mxu0 0
    %1388 = vmatpush2.bf16.msra.mxu0 %v1001
    %1389 = vmatprep.subr.bf16.mxu0 0
    %1390 = vmatpush2.bf16.msra.mxu0 %v1000
    %1391 = vmatprep.subr.bf16.mxu0 0
    %1392 = vmatpush2.bf16.msra.mxu0 %v999
    %1393 = vmatprep.subr.bf16.mxu0 0
    %1394 = vmatpush2.bf16.msra.mxu0 %v998
    %1395 = vmatprep.subr.bf16.mxu0 0
    %1396 = vmatpush2.bf16.msra.mxu0 %v997
    %1397 = vmatprep.mubr.bf16.mxu0 %v379
    %1398 = vmatmul.mubr.bf16.gmra.mxu0 %v377
    %v1399 = vpop.f32.mrf.mxu0
    %v1400 = vadd.f32 %v1360, %v1399
    %v1401 = vpop.f32.mrf.mxu0
    %v1402 = vpop.f32.mrf.mxu0
    %v1403 = vpop.f32.mrf.mxu0
    %1404 = vdwg.mxu0
    %1405 = vmatprep.subr.bf16.mxu0 0
    %1406 = vmatpush1.bf16.msra.mxu0 %v1012
    %1407 = vmatprep.subr.bf16.mxu0 0
    %1408 = vmatpush1.bf16.msra.mxu0 %v1011
    %1409 = vmatprep.subr.bf16.mxu0 0
    %1410 = vmatpush1.bf16.msra.mxu0 %v1010
    %1411 = vmatprep.subr.bf16.mxu0 0
    %1412 = vmatpush1.bf16.msra.mxu0 %v1009
    %1413 = vmatprep.subr.bf16.mxu0 0
    %1414 = vmatpush1.bf16.msra.mxu0 %v1008
    %1415 = vmatprep.subr.bf16.mxu0 0
    %1416 = vmatpush1.bf16.msra.mxu0 %v1007
    %1417 = vmatprep.subr.bf16.mxu0 0
    %1418 = vmatpush1.bf16.msra.mxu0 %v1006
    %1419 = vmatprep.subr.bf16.mxu0 0
    %1420 = vmatpush1.bf16.msra.mxu0 %v1005
    %1421 = vmatprep.subr.bf16.mxu0 0
    %1422 = vmatpush2.bf16.msra.mxu0 %v1020
    %1423 = vmatprep.subr.bf16.mxu0 0
    %1424 = vmatpush2.bf16.msra.mxu0 %v1019
    %1425 = vmatprep.subr.bf16.mxu0 0
    %1426 = vmatpush2.bf16.msra.mxu0 %v1018
    %1427 = vmatprep.subr.bf16.mxu0 0
    %1428 = vmatpush2.bf16.msra.mxu0 %v1017
    %1429 = vmatprep.subr.bf16.mxu0 0
    %1430 = vmatpush2.bf16.msra.mxu0 %v1016
    %1431 = vmatprep.subr.bf16.mxu0 0
    %1432 = vmatpush2.bf16.msra.mxu0 %v1015
    %1433 = vmatprep.subr.bf16.mxu0 0
    %1434 = vmatpush2.bf16.msra.mxu0 %v1014
    %1435 = vmatprep.subr.bf16.mxu0 0
    %1436 = vmatpush2.bf16.msra.mxu0 %v1013
    %1437 = vmatprep.mubr.bf16.mxu0 %v376
    %1438 = vmatmul.mubr.bf16.gmra.mxu0 %v362
    %v1439 = vpop.f32.mrf.mxu0
    %v1440 = vadd.f32 %v1400, %v1439
    %v1441 = vpop.f32.mrf.mxu0
    %v1442 = vpop.f32.mrf.mxu0
    %v1443 = vpop.f32.mrf.mxu0
    %1444 = vdwg.mxu0
    %1445 = vmatprep.subr.bf16.mxu0 0
    %1446 = vmatpush1.bf16.msra.mxu0 %v1028
    %1447 = vmatprep.subr.bf16.mxu0 0
    %1448 = vmatpush1.bf16.msra.mxu0 %v1027
    %1449 = vmatprep.subr.bf16.mxu0 0
    %1450 = vmatpush1.bf16.msra.mxu0 %v1026
    %1451 = vmatprep.subr.bf16.mxu0 0
    %1452 = vmatpush1.bf16.msra.mxu0 %v1025
    %1453 = vmatprep.subr.bf16.mxu0 0
    %1454 = vmatpush1.bf16.msra.mxu0 %v1024
    %1455 = vmatprep.subr.bf16.mxu0 0
    %1456 = vmatpush1.bf16.msra.mxu0 %v1023
    %1457 = vmatprep.subr.bf16.mxu0 0
    %1458 = vmatpush1.bf16.msra.mxu0 %v1022
    %1459 = vmatprep.subr.bf16.mxu0 0
    %1460 = vmatpush1.bf16.msra.mxu0 %v1021
    %1461 = vmatprep.subr.bf16.mxu0 0
    %1462 = vmatpush2.bf16.msra.mxu0 %v1036
    %1463 = vmatprep.subr.bf16.mxu0 0
    %1464 = vmatpush2.bf16.msra.mxu0 %v1035
    %1465 = vmatprep.subr.bf16.mxu0 0
    %1466 = vmatpush2.bf16.msra.mxu0 %v1034
    %1467 = vmatprep.subr.bf16.mxu0 0
    %1468 = vmatpush2.bf16.msra.mxu0 %v1033
    %1469 = vmatprep.subr.bf16.mxu0 0
    %1470 = vmatpush2.bf16.msra.mxu0 %v1032
    %1471 = vmatprep.subr.bf16.mxu0 0
    %1472 = vmatpush2.bf16.msra.mxu0 %v1031
    %1473 = vmatprep.subr.bf16.mxu0 0
    %1474 = vmatpush2.bf16.msra.mxu0 %v1030
    %1475 = vmatprep.subr.bf16.mxu0 0
    %1476 = vmatpush2.bf16.msra.mxu0 %v1029
    %1477 = vmatprep.mubr.bf16.mxu0 %v380
    %1478 = vmatmul.mubr.bf16.gmra.mxu0 %v378
    %v1479 = vpop.f32.mrf.mxu0
    %v1480 = vadd.f32 %v1440, %v1479
    %v1481 = vpop.f32.mrf.mxu0
    %v1482 = vpop.f32.mrf.mxu0
    %v1483 = vpop.f32.mrf.mxu0
    %1484 = vdwg.mxu0
    %1485 = vst [vmem:[#allocation2] sm:$0x3] %v1480
    // Predicated region
    $region14: #{test_forward.7} parent=1 // pred_check
      _
    $region15: #{test_forward.7} parent=1 // pred_check_branch
      %1487 = sbr.rel (0) target = $region17
    $region16: #{test_forward.7} parent=1 // pred_region
      %s1489 = ssub.s32 32, 32
      %1490 = vsyncadd [#allocation3], %s1489
      %s1492 = sshll.u32 [#allocation2], 4
      %s1493 = int_to_ptr.vmem [resolvable:$true] %s1492
      %1495 = dma.vmem_to_hbm [thread:$0]  %s1493, 32, %s3, [#allocation3]
    $region17: #{test_forward.7} parent=1 // pred_fallthru
      _
    // Predicated region
    $region18: #{test_forward.7} parent=1 // pred_check
      _
    $region19: #{test_forward.7} parent=1 // pred_check_branch
      %1497 = sbr.rel (0) target = $region21
    $region20: #{test_forward.7} parent=1 // pred_region
      %1498 = dma.done [#allocation3], 32
    $region21: #{test_forward.7} parent=1 // pred_fallthru
      _
    %1499 = vsyncpa [#allocation3], 1

</llo_original>
